<compile_context>
chip_gen: v5e
topology: v5e:2x2
jax: 0.10.0
libtpu: 0.0.40
codegen_flags: <defaults>
</compile_context>

<pallas_src>
import functools
import math

import jax
import jax.numpy as jnp
import numpy as np
from jax.experimental import pallas as pl
from jax.experimental.pallas import tpu as pltpu

BN_EPS = 1e-5  # torch.nn.BatchNorm2d default eps


def round_up(x, m):
  return (x + m - 1) // m * m


# --------------------------------------------------------------------- fused kernel
def _upblock_kernel(xp_ref, mask_ref,
                    w1se_ref, b1se_ref, w2se_ref, b2se_ref,
                    w1_ref, s1_ref, wc_ref, s2_ref, w3_ref, b3_ref,
                    o_ref, h1pad_ref, *, H, W):
  """Whole UpBlock for one batch element; everything stays VMEM-resident.

  xp_ref  : (P, Cin)  bf16   spatially zero-padded input, pixels flattened row-major
  mask_ref: (P, 1)    f32    1 on interior pixels, 0 on the conv-padding ring
  wc_ref  : (9, Cm, 4*Cm) bf16  phase-packed upsample+3x3 weights (tap-major)
  w3_ref  : (4*Cm, 4*Cout) bf16 block-diagonal per-phase 1x1 conv weight
  o_ref   : (P, 4*Cout) f32  phase-packed output (phase = 2*row_phase + col_phase)
  h1pad_ref: VMEM scratch (P + 2*(S+1), Cm) bf16, S = W + 2
  """
  S = W + 2
  P = (H + 2) * S
  SP1 = S + 1
  Cm = w1_ref.shape[1]

  xb = xp_ref[...]                                                    # (P, Cin) bf16

  # ---- SEModule head: global avg pool -> fc1 -> relu -> fc2 -> sigmoid
  # (halo rows of xb are zero, so sum over all P rows == sum over the H*W pixels)
  pooled = jnp.sum(xb.astype(jnp.float32), axis=0, keepdims=True) * (1.0 / (H * W))
  pooled8 = jnp.broadcast_to(pooled, (8, pooled.shape[1]))            # avoid M=1 matmul
  h = jnp.dot(pooled8, w1se_ref[...], preferred_element_type=jnp.float32) + b1se_ref[...]
  h = jnp.maximum(h, 0.0)
  g = jnp.dot(h, w2se_ref[...], preferred_element_type=jnp.float32) + b2se_ref[...]
  se_row = (1.0 / (1.0 + jnp.exp(-g)))[0:1, :].astype(jnp.bfloat16)   # (1, Cin)

  # ---- Conv2d(in_c, mid_c, 1) + BN + ReLU, SE gate fused as a per-batch row scale
  xs = xb * se_row                                                    # (P, Cin) bf16
  h1 = jnp.dot(xs, w1_ref[...], preferred_element_type=jnp.float32) + s1_ref[...]
  h1 = jnp.maximum(h1, 0.0) * mask_ref[...]                           # zero the pad ring

  # stash bf16 h1 in a scratch with S+1 extra zero rows on each side so every
  # shifted tap read below stays in bounds.
  h1pad_ref[0:SP1, :] = jnp.zeros((SP1, Cm), jnp.bfloat16)
  h1pad_ref[SP1 + P:SP1 + P + SP1, :] = jnp.zeros((SP1, Cm), jnp.bfloat16)
  h1pad_ref[SP1:SP1 + P, :] = h1.astype(jnp.bfloat16)

  # ---- UpsamplingNearest2d(2x) + Conv2d(3x3, pad=1) + BN + ReLU (phase packed):
  #   out[p, phase*Cm+co] = sum_{u,v} h1[p + (u-1)*S + (v-1), :] @ Wc[u,v][:, phase*Cm+co]
  acc = jnp.zeros((P, 4 * Cm), jnp.float32)
  for t in range(9):                                                  # unrolled
    u, v = divmod(t, 3)
    lhs = h1pad_ref[u * S + v:u * S + v + P, :]                       # (P, Cm) bf16
    acc = acc + jnp.dot(lhs, wc_ref[t], preferred_element_type=jnp.float32)
  a = jnp.maximum(acc + s2_ref[...], 0.0).astype(jnp.bfloat16)        # (P, 4*Cm)

  # ---- Conv2d(mid_c, out_c, 1) + ReLU, per phase via the block-diagonal weight
  y = jnp.dot(a, w3_ref[...], preferred_element_type=jnp.float32) + b3_ref[...]
  o_ref[...] = jnp.maximum(y, 0.0)


# ------------------------------------------------------------------ weight folding
def _bn_affine(bn):
  scale = bn["gamma"] / jnp.sqrt(bn["var"] + BN_EPS)
  return scale, bn["beta"] - bn["mean"] * scale


def _build_upsampled_conv3x3_taps(w_torch):
  """(Cout, Cin, 3, 3) torch weight -> (3, 3, Cin, 4, Cout) phase-packed taps so that

     conv3x3(pad=1)(nearest_up2x(x))[b, 2i+a, 2j+c, co]
       == sum_{dr,dc} x[b, i+dr-1, j+dc-1, :] @ taps[dr, dc, :, 2a+c, co]

  Nearest 2x upsample maps conv-kernel row u of output phase a to source-row
  offset:  a=0 -> (-1, 0, 0),  a=1 -> (0, 0, +1)   (same for columns / phase c).
  """
  Cout, Cin = w_torch.shape[0], w_torch.shape[1]
  w = jnp.transpose(w_torch, (2, 3, 1, 0)).astype(jnp.float32)        # (u, v, Cin, Cout)
  offs = {0: (-1, 0, 0), 1: (0, 0, 1)}
  wc = jnp.zeros((3, 3, Cin, 4, Cout), jnp.float32)
  for a in (0, 1):
    for c in (0, 1):
      p = 2 * a + c
      for u in range(3):
        dr = offs[a][u]
        for v in range(3):
          dc = offs[c][v]
          wc = wc.at[dr + 1, dc + 1, :, p, :].add(w[u, v])
  return wc


def prepare_upblock(params):
  """One-time (outside jit) folding: BN into weights, phase packing, bf16 casts."""
  # SE head (1x1 convs as matmuls), hidden padded to a full 128-lane tile.
  w1se = params["se_fc1_w"][:, :, 0, 0].T.astype(jnp.float32)          # (Cin, Cr)
  w2se = params["se_fc2_w"][:, :, 0, 0].T.astype(jnp.float32)          # (Cr, Cin)
  Cin, Cr = w1se.shape
  SEH = round_up(max(Cr, 128), 128)
  w1se_p = jnp.zeros((Cin, SEH), jnp.float32).at[:, :Cr].set(w1se)
  b1se_p = jnp.zeros((1, SEH), jnp.float32).at[0, :Cr].set(params["se_fc1_b"])
  w2se_p = jnp.zeros((SEH, Cin), jnp.float32).at[:Cr, :].set(w2se)
  b2se_p = params["se_fc2_b"].reshape(1, Cin).astype(jnp.float32)

  # conv1 (1x1) + BN1 folded into the weight columns / one shift vector.
  s1, sh1 = _bn_affine(params["bn1"])
  w1 = (params["conv1_w"][:, :, 0, 0].T * s1[None, :]).astype(jnp.bfloat16)
  shift1 = (params["conv1_b"] * s1 + sh1).reshape(1, -1).astype(jnp.float32)
  Cm = w1.shape[1]

  # nearest-2x upsample + conv2 (3x3) + BN2 folded, phase packed per tap.
  s2, sh2 = _bn_affine(params["bn2"])
  wc = _build_upsampled_conv3x3_taps(params["conv2_w"])                # (3,3,Cm,4,Cm)
  wc = (wc * s2[None, None, None, None, :]).reshape(9, Cm, 4 * Cm).astype(jnp.bfloat16)
  shift2 = jnp.tile(params["conv2_b"] * s2 + sh2, 4).reshape(1, -1).astype(jnp.float32)

  # conv3 (1x1) applied per phase -> block-diagonal weight on the packed layout.
  w3 = params["conv3_w"][:, :, 0, 0].T.astype(jnp.float32)             # (Cm, Cout)
  Cout = w3.shape[1]
  w3blk = jnp.zeros((4 * Cm, 4 * Cout), jnp.float32)
  for p in range(4):
    w3blk = w3blk.at[p * Cm:(p + 1) * Cm, p * Cout:(p + 1) * Cout].set(w3)
  w3blk = w3blk.astype(jnp.bfloat16)
  b3 = jnp.tile(params["conv3_b"], 4).reshape(1, -1).astype(jnp.float32)

  return dict(w1se=w1se_p, b1se=b1se_p, w2se=w2se_p, b2se=b2se_p,
              w1=w1, shift1=shift1, wc=wc, shift2=shift2, w3blk=w3blk, b3=b3)


# ----------------------------------------------------------------------- forward
def upblock_forward(prep, x_nchw):
  B, Cin, H, W = x_nchw.shape
  S, P = W + 2, (H + 2) * (W + 2)
  Cm = prep["w1"].shape[1]
  N2 = 4 * Cm
  N3 = prep["b3"].shape[1]                       # 4 * out_c (phase-packed)
  Cout = N3 // 4
  SEH = prep["w1se"].shape[1]

  # single pass over x: NCHW -> NHWC, spatial zero pad, bf16, flatten pixels
  xp = jnp.transpose(x_nchw, (0, 2, 3, 1))
  xp = jnp.pad(xp, ((0, 0), (1, 1), (1, 1), (0, 0))).astype(jnp.bfloat16)
  xp = xp.reshape(B, P, Cin)

  # interior-pixel mask over the padded flat layout (trace-time constant)
  m2 = np.zeros((H + 2, S), np.float32)
  m2[1:H + 1, 1:W + 1] = 1.0
  mask = jnp.asarray(m2.reshape(P, 1))

  kern = functools.partial(_upblock_kernel, H=H, W=W)
  out = pl.pallas_call(
      kern,
      out_shape=jax.ShapeDtypeStruct((B, P, N3), jnp.float32),
      grid_spec=pltpu.PrefetchScalarGridSpec(
          num_scalar_prefetch=0,
          grid=(B,),
          in_specs=[
              pl.BlockSpec((None, P, Cin), lambda b: (b, 0, 0)),   # x (padded, flat) bf16
              pl.BlockSpec((P, 1), lambda b: (0, 0)),              # interior mask
              pl.BlockSpec((Cin, SEH), lambda b: (0, 0)),          # SE fc1 w
              pl.BlockSpec((1, SEH), lambda b: (0, 0)),            # SE fc1 b
              pl.BlockSpec((SEH, Cin), lambda b: (0, 0)),          # SE fc2 w
              pl.BlockSpec((1, Cin), lambda b: (0, 0)),            # SE fc2 b
              pl.BlockSpec((Cin, Cm), lambda b: (0, 0)),           # conv1 w (BN folded)
              pl.BlockSpec((1, Cm), lambda b: (0, 0)),             # conv1 shift
              pl.BlockSpec((9, Cm, N2), lambda b: (0, 0, 0)),      # upsample+3x3 taps
              pl.BlockSpec((1, N2), lambda b: (0, 0)),             # conv2 shift
              pl.BlockSpec((N2, N3), lambda b: (0, 0)),            # conv3 block-diag w
              pl.BlockSpec((1, N3), lambda b: (0, 0)),             # conv3 bias
          ],
          out_specs=pl.BlockSpec((None, P, N3), lambda b: (b, 0, 0)),
          scratch_shapes=[pltpu.VMEM((P + 2 * (S + 1), Cm), jnp.bfloat16)],
      ),
      compiler_params=pltpu.CompilerParams(dimension_semantics=("parallel",)),
  )(xp, mask, prep["w1se"], prep["b1se"], prep["w2se"], prep["b2se"],
    prep["w1"], prep["shift1"], prep["wc"], prep["shift2"],
    prep["w3blk"], prep["b3"])

  # un-pack phases: column (p=2a+c)*Cout+co at padded-flat pixel (i+1, j+1)
  # -> output pixel (2i+a, 2j+c); then back to NCHW.
  out = out.reshape(B, H + 2, S, 2, 2, Cout)[:, 1:H + 1, 1:W + 1]
  out = jnp.transpose(out, (0, 1, 3, 2, 4, 5)).reshape(B, 2 * H, 2 * W, Cout)
  return jnp.transpose(out, (0, 3, 1, 2))


# --------------------------------------------------------------- params + reference
def init_params(key, in_c, mid_c, out_c):
  ks = jax.random.split(key, 10)
  cr = in_c // 16

  def conv_w(k, cout, cin, kh, kw):
    fan_in = cin * kh * kw
    return jax.random.normal(k, (cout, cin, kh, kw), jnp.float32) * math.sqrt(2.0 / fan_in)

  def bn(k, c):
    k1, k2, k3, k4 = jax.random.split(k, 4)
    return dict(gamma=1.0 + 0.1 * jax.random.normal(k1, (c,), jnp.float32),
                beta=0.1 * jax.random.normal(k2, (c,), jnp.float32),
                mean=0.1 * jax.random.normal(k3, (c,), jnp.float32),
                var=1.0 + 0.1 * jnp.abs(jax.random.normal(k4, (c,), jnp.float32)))

  return dict(
      se_fc1_w=conv_w(ks[0], cr, in_c, 1, 1),
      se_fc1_b=jnp.zeros((cr,), jnp.float32),
      se_fc2_w=conv_w(ks[1], in_c, cr, 1, 1),
      se_fc2_b=jnp.zeros((in_c,), jnp.float32),
      conv1_w=conv_w(ks[2], mid_c, in_c, 1, 1),
      conv1_b=0.05 * jax.random.normal(ks[3], (mid_c,), jnp.float32),
      bn1=bn(ks[4], mid_c),
      conv2_w=conv_w(ks[5], mid_c, mid_c, 3, 3),
      conv2_b=0.05 * jax.random.normal(ks[6], (mid_c,), jnp.float32),
      bn2=bn(ks[7], mid_c),
      conv3_w=conv_w(ks[8], out_c, mid_c, 1, 1),
      conv3_b=0.05 * jax.random.normal(ks[9], (out_c,), jnp.float32),
  )


def upblock_reference(params, x_nchw):
  """Pure-JAX (lax.conv) reference of the PyTorch UpBlock forward, eval mode."""
  x = x_nchw.astype(jnp.float32)

  def conv(z, w, b, pad):
    y = jax.lax.conv_general_dilated(
        z, w, window_strides=(1, 1), padding=((pad, pad), (pad, pad)),
        dimension_numbers=("NCHW", "OIHW", "NCHW"))
    return y + b[None, :, None, None]

  def bn(y, p):
    s = p["gamma"] / jnp.sqrt(p["var"] + BN_EPS)
    return ((y - p["mean"][None, :, None, None]) * s[None, :, None, None]
            + p["beta"][None, :, None, None])

  pooled = jnp.mean(x, axis=(2, 3))
  h = jnp.maximum(pooled @ params["se_fc1_w"][:, :, 0, 0].T + params["se_fc1_b"], 0.0)
  se = jax.nn.sigmoid(h @ params["se_fc2_w"][:, :, 0, 0].T + params["se_fc2_b"])
  x = x * se[:, :, None, None]

  y = jnp.maximum(bn(conv(x, params["conv1_w"], params["conv1_b"], 0), params["bn1"]), 0.0)
  y = jnp.repeat(jnp.repeat(y, 2, axis=2), 2, axis=3)           # nearest 2x
  y = jnp.maximum(bn(conv(y, params["conv2_w"], params["conv2_b"], 1), params["bn2"]), 0.0)
  y = jnp.maximum(conv(y, params["conv3_w"], params["conv3_b"], 0), 0.0)
  return y


# ------------------------------------------------------------------------------ main
if __name__ == "__main__":
  B, IN_C, MID_C, OUT_C, H, W = 2, 64, 64, 16, 16, 16
  key = jax.random.PRNGKey(0)
  kp, kx = jax.random.split(key)
  params = init_params(kp, IN_C, MID_C, OUT_C)
  x = jax.random.normal(kx, (B, IN_C, H, W), jnp.float32)

  prep = prepare_upblock(params)        # one-time weight folding, outside jit
  fwd = jax.jit(upblock_forward)
  out = jax.block_until_ready(fwd(prep, x))

  assert out.shape == (B, OUT_C, 2 * H, 2 * W), out.shape
  assert bool(jnp.all(jnp.isfinite(out)))

  ref = upblock_reference(params, x)
  err = float(jnp.max(jnp.abs(out - ref)) / (jnp.max(jnp.abs(ref)) + 1e-6))
  assert err < 5e-2, f"mismatch vs reference: normalized max err {err}"

  print("KERNEL_OK")
</pallas_src>

<mosaic_0001>
module attributes {stable_mosaic.version = 11 : i64} {
  func.func @_upblock_kernel(%arg0: i32, %arg1: memref<1x324x64xbf16, #tpu.memory_space<vmem>>, %arg2: memref<324x1xf32, #tpu.memory_space<vmem>>, %arg3: memref<64x128xf32, #tpu.memory_space<vmem>>, %arg4: memref<1x128xf32, #tpu.memory_space<vmem>>, %arg5: memref<128x64xf32, #tpu.memory_space<vmem>>, %arg6: memref<1x64xf32, #tpu.memory_space<vmem>>, %arg7: memref<64x64xbf16, #tpu.memory_space<vmem>>, %arg8: memref<1x64xf32, #tpu.memory_space<vmem>>, %arg9: memref<9x64x256xbf16, #tpu.memory_space<vmem>>, %arg10: memref<1x256xf32, #tpu.memory_space<vmem>>, %arg11: memref<256x64xbf16, #tpu.memory_space<vmem>>, %arg12: memref<1x64xf32, #tpu.memory_space<vmem>>, %arg13: memref<1x324x64xf32, #tpu.memory_space<vmem>>, %arg14: memref<362x64xbf16, #tpu.memory_space<vmem>>) attributes {dimension_semantics = [#tpu.dimension_semantics<parallel>], iteration_bounds = array<i64: 2>, scalar_prefetch = 0 : i64, scratch_operands = 1 : i64, tpu.core_type = #tpu.core_type<tc>, window_params = [{transform_indices = @transform_0, window_bounds = array<i64: 1, 324, 64>}, {pipeline_mode = #tpu.pipeline_mode<synchronous>, transform_indices = @transform_1, window_bounds = array<i64: 324, 1>}, {pipeline_mode = #tpu.pipeline_mode<synchronous>, transform_indices = @transform_2, window_bounds = array<i64: 64, 128>}, {pipeline_mode = #tpu.pipeline_mode<synchronous>, transform_indices = @transform_3, window_bounds = array<i64: 1, 128>}, {pipeline_mode = #tpu.pipeline_mode<synchronous>, transform_indices = @transform_4, window_bounds = array<i64: 128, 64>}, {pipeline_mode = #tpu.pipeline_mode<synchronous>, transform_indices = @transform_5, window_bounds = array<i64: 1, 64>}, {pipeline_mode = #tpu.pipeline_mode<synchronous>, transform_indices = @transform_6, window_bounds = array<i64: 64, 64>}, {pipeline_mode = #tpu.pipeline_mode<synchronous>, transform_indices = @transform_7, window_bounds = array<i64: 1, 64>}, {pipeline_mode = #tpu.pipeline_mode<synchronous>, transform_indices = @transform_8, window_bounds = array<i64: 9, 64, 256>}, {pipeline_mode = #tpu.pipeline_mode<synchronous>, transform_indices = @transform_9, window_bounds = array<i64: 1, 256>}, {pipeline_mode = #tpu.pipeline_mode<synchronous>, transform_indices = @transform_10, window_bounds = array<i64: 256, 64>}, {pipeline_mode = #tpu.pipeline_mode<synchronous>, transform_indices = @transform_11, window_bounds = array<i64: 1, 64>}, {transform_indices = @transform_12, window_bounds = array<i64: 1, 324, 64>}]} {
    %c0 = arith.constant 0 : index
    %c0_0 = arith.constant 0 : index
    %c0_1 = arith.constant 0 : index
    %0 = vector.load %arg1[%c0, %c0_0, %c0_1] : memref<1x324x64xbf16, #tpu.memory_space<vmem>>, vector<1x324x64xbf16>
    %1 = vector.shape_cast %0 : vector<1x324x64xbf16> to vector<324x64xbf16>
    %2 = arith.extf %1 : vector<324x64xbf16> to vector<324x64xf32>
    %cst = arith.constant dense<0.000000e+00> : vector<64xf32>
    %3 = vector.multi_reduction <add>, %2, %cst [0] : vector<324x64xf32> to vector<64xf32>
    %4 = vector.shape_cast %3 : vector<64xf32> to vector<1x64xf32>
    %cst_2 = arith.constant 3.906250e-03 : f32
    %5 = vector.broadcast %cst_2 : f32 to vector<1x64xf32>
    %6 = arith.mulf %4, %5 : vector<1x64xf32>
    %7 = vector.shape_cast %6 : vector<1x64xf32> to vector<1x64xf32>
    %8 = vector.broadcast %7 : vector<1x64xf32> to vector<8x64xf32>
    %c0_3 = arith.constant 0 : index
    %c0_4 = arith.constant 0 : index
    %9 = vector.load %arg3[%c0_3, %c0_4] : memref<64x128xf32, #tpu.memory_space<vmem>>, vector<64x128xf32>
    %cst_5 = arith.constant dense<0.000000e+00> : vector<8x128xf32>
    %10 = tpu.matmul %8, %9, %cst_5 {dimension_numbers = #tpu.dot_dimension_numbers<[1], [0], [0], [1], [0, 0, 1, 1], [], []>} : vector<8x64xf32>, vector<64x128xf32>, vector<8x128xf32> -> vector<8x128xf32>
    %c0_6 = arith.constant 0 : index
    %c0_7 = arith.constant 0 : index
    %11 = vector.load %arg4[%c0_6, %c0_7] : memref<1x128xf32, #tpu.memory_space<vmem>>, vector<1x128xf32>
    %12 = vector.broadcast %11 : vector<1x128xf32> to vector<8x128xf32>
    %13 = arith.addf %10, %12 : vector<8x128xf32>
    %cst_8 = arith.constant 0.000000e+00 : f32
    %14 = vector.broadcast %cst_8 : f32 to vector<8x128xf32>
    %15 = arith.maximumf %13, %14 : vector<8x128xf32>
    %c0_9 = arith.constant 0 : index
    %c0_10 = arith.constant 0 : index
    %16 = vector.load %arg5[%c0_9, %c0_10] : memref<128x64xf32, #tpu.memory_space<vmem>>, vector<128x64xf32>
    %cst_11 = arith.constant dense<0.000000e+00> : vector<8x64xf32>
    %17 = tpu.matmul %15, %16, %cst_11 {dimension_numbers = #tpu.dot_dimension_numbers<[1], [0], [0], [1], [0, 0, 1, 1], [], []>} : vector<8x128xf32>, vector<128x64xf32>, vector<8x64xf32> -> vector<8x64xf32>
    %c0_12 = arith.constant 0 : index
    %c0_13 = arith.constant 0 : index
    %18 = vector.load %arg6[%c0_12, %c0_13] : memref<1x64xf32, #tpu.memory_space<vmem>>, vector<1x64xf32>
    %19 = vector.broadcast %18 : vector<1x64xf32> to vector<8x64xf32>
    %20 = arith.addf %17, %19 : vector<8x64xf32>
    %cst_14 = arith.constant 0.000000e+00 : f32
    %21 = vector.broadcast %cst_14 : f32 to vector<8x64xf32>
    %22 = arith.subf %21, %20 : vector<8x64xf32>
    %23 = math.exp %22 : vector<8x64xf32>
    %cst_15 = arith.constant 1.000000e+00 : f32
    %24 = vector.broadcast %cst_15 : f32 to vector<8x64xf32>
    %25 = arith.addf %24, %23 : vector<8x64xf32>
    %cst_16 = arith.constant 1.000000e+00 : f32
    %26 = vector.broadcast %cst_16 : f32 to vector<8x64xf32>
    %27 = arith.divf %26, %25 : vector<8x64xf32>
    %28 = vector.extract_strided_slice %27 {offsets = [0, 0], sizes = [1, 64], strides = [1, 1]} : vector<8x64xf32> to vector<1x64xf32>
    %29 = arith.truncf %28 : vector<1x64xf32> to vector<1x64xbf16>
    %30 = vector.broadcast %29 : vector<1x64xbf16> to vector<324x64xbf16>
    %31 = arith.mulf %1, %30 : vector<324x64xbf16>
    %c0_17 = arith.constant 0 : index
    %c0_18 = arith.constant 0 : index
    %32 = vector.load %arg7[%c0_17, %c0_18] : memref<64x64xbf16, #tpu.memory_space<vmem>>, vector<64x64xbf16>
    %cst_19 = arith.constant dense<0.000000e+00> : vector<324x64xf32>
    %33 = tpu.matmul %31, %32, %cst_19 {dimension_numbers = #tpu.dot_dimension_numbers<[1], [0], [0], [1], [0, 0, 1, 1], [], []>} : vector<324x64xbf16>, vector<64x64xbf16>, vector<324x64xf32> -> vector<324x64xf32>
    %c0_20 = arith.constant 0 : index
    %c0_21 = arith.constant 0 : index
    %34 = vector.load %arg8[%c0_20, %c0_21] : memref<1x64xf32, #tpu.memory_space<vmem>>, vector<1x64xf32>
    %35 = vector.broadcast %34 : vector<1x64xf32> to vector<324x64xf32>
    %36 = arith.addf %33, %35 : vector<324x64xf32>
    %cst_22 = arith.constant 0.000000e+00 : f32
    %37 = vector.broadcast %cst_22 : f32 to vector<324x64xf32>
    %38 = arith.maximumf %36, %37 : vector<324x64xf32>
    %c0_23 = arith.constant 0 : index
    %c0_24 = arith.constant 0 : index
    %39 = vector.load %arg2[%c0_23, %c0_24] : memref<324x1xf32, #tpu.memory_space<vmem>>, vector<324x1xf32>
    %40 = vector.broadcast %39 : vector<324x1xf32> to vector<324x64xf32>
    %41 = arith.mulf %38, %40 : vector<324x64xf32>
    %cst_25 = arith.constant 0.000000e+00 : bf16
    %42 = vector.broadcast %cst_25 : bf16 to vector<19x64xbf16>
    %c0_26 = arith.constant 0 : index
    %c0_27 = arith.constant 0 : index
    %43 = vector.load %arg14[%c0_26, %c0_27] : memref<362x64xbf16, #tpu.memory_space<vmem>>, vector<19x64xbf16>
    tpu.vector_store %arg14[%c0_26, %c0_27], %42 {strides = array<i32>} : memref<362x64xbf16, #tpu.memory_space<vmem>>, vector<19x64xbf16>,
    %cst_28 = arith.constant 0.000000e+00 : bf16
    %44 = vector.broadcast %cst_28 : bf16 to vector<19x64xbf16>
    %c343 = arith.constant 343 : index
    %c0_29 = arith.constant 0 : index
    %45 = vector.load %arg14[%c343, %c0_29] : memref<362x64xbf16, #tpu.memory_space<vmem>>, vector<19x64xbf16>
    tpu.vector_store %arg14[%c343, %c0_29], %44 {strides = array<i32>} : memref<362x64xbf16, #tpu.memory_space<vmem>>, vector<19x64xbf16>,
    %46 = arith.truncf %41 : vector<324x64xf32> to vector<324x64xbf16>
    %c19 = arith.constant 19 : index
    %c0_30 = arith.constant 0 : index
    %47 = vector.load %arg14[%c19, %c0_30] : memref<362x64xbf16, #tpu.memory_space<vmem>>, vector<324x64xbf16>
    tpu.vector_store %arg14[%c19, %c0_30], %46 {strides = array<i32>} : memref<362x64xbf16, #tpu.memory_space<vmem>>, vector<324x64xbf16>,
    %cst_31 = arith.constant 0.000000e+00 : f32
    %48 = vector.broadcast %cst_31 : f32 to vector<324x256xf32>
    %c0_32 = arith.constant 0 : index
    %c0_33 = arith.constant 0 : index
    %49 = vector.load %arg14[%c0_32, %c0_33] : memref<362x64xbf16, #tpu.memory_space<vmem>>, vector<324x64xbf16>
    %c0_34 = arith.constant 0 : index
    %c0_35 = arith.constant 0 : index
    %c0_36 = arith.constant 0 : index
    %50 = vector.load %arg9[%c0_34, %c0_35, %c0_36] : memref<9x64x256xbf16, #tpu.memory_space<vmem>>, vector<1x64x256xbf16>
    %51 = vector.shape_cast %50 : vector<1x64x256xbf16> to vector<64x256xbf16>
    %cst_37 = arith.constant dense<0.000000e+00> : vector<324x256xf32>
    %52 = tpu.matmul %49, %51, %cst_37 {dimension_numbers = #tpu.dot_dimension_numbers<[1], [0], [0], [1], [0, 0, 1, 1], [], []>} : vector<324x64xbf16>, vector<64x256xbf16>, vector<324x256xf32> -> vector<324x256xf32>
    %53 = arith.addf %48, %52 : vector<324x256xf32>
    %c1 = arith.constant 1 : index
    %c0_38 = arith.constant 0 : index
    %54 = vector.load %arg14[%c1, %c0_38] : memref<362x64xbf16, #tpu.memory_space<vmem>>, vector<324x64xbf16>
    %c1_39 = arith.constant 1 : index
    %c0_40 = arith.constant 0 : index
    %c0_41 = arith.constant 0 : index
    %55 = vector.load %arg9[%c1_39, %c0_40, %c0_41] : memref<9x64x256xbf16, #tpu.memory_space<vmem>>, vector<1x64x256xbf16>
    %56 = vector.shape_cast %55 : vector<1x64x256xbf16> to vector<64x256xbf16>
    %cst_42 = arith.constant dense<0.000000e+00> : vector<324x256xf32>
    %57 = tpu.matmul %54, %56, %cst_42 {dimension_numbers = #tpu.dot_dimension_numbers<[1], [0], [0], [1], [0, 0, 1, 1], [], []>} : vector<324x64xbf16>, vector<64x256xbf16>, vector<324x256xf32> -> vector<324x256xf32>
    %58 = arith.addf %53, %57 : vector<324x256xf32>
    %c2 = arith.constant 2 : index
    %c0_43 = arith.constant 0 : index
    %59 = vector.load %arg14[%c2, %c0_43] : memref<362x64xbf16, #tpu.memory_space<vmem>>, vector<324x64xbf16>
    %c2_44 = arith.constant 2 : index
    %c0_45 = arith.constant 0 : index
    %c0_46 = arith.constant 0 : index
    %60 = vector.load %arg9[%c2_44, %c0_45, %c0_46] : memref<9x64x256xbf16, #tpu.memory_space<vmem>>, vector<1x64x256xbf16>
    %61 = vector.shape_cast %60 : vector<1x64x256xbf16> to vector<64x256xbf16>
    %cst_47 = arith.constant dense<0.000000e+00> : vector<324x256xf32>
    %62 = tpu.matmul %59, %61, %cst_47 {dimension_numbers = #tpu.dot_dimension_numbers<[1], [0], [0], [1], [0, 0, 1, 1], [], []>} : vector<324x64xbf16>, vector<64x256xbf16>, vector<324x256xf32> -> vector<324x256xf32>
    %63 = arith.addf %58, %62 : vector<324x256xf32>
    %c18 = arith.constant 18 : index
    %c0_48 = arith.constant 0 : index
    %64 = vector.load %arg14[%c18, %c0_48] : memref<362x64xbf16, #tpu.memory_space<vmem>>, vector<324x64xbf16>
    %c3 = arith.constant 3 : index
    %c0_49 = arith.constant 0 : index
    %c0_50 = arith.constant 0 : index
    %65 = vector.load %arg9[%c3, %c0_49, %c0_50] : memref<9x64x256xbf16, #tpu.memory_space<vmem>>, vector<1x64x256xbf16>
    %66 = vector.shape_cast %65 : vector<1x64x256xbf16> to vector<64x256xbf16>
    %cst_51 = arith.constant dense<0.000000e+00> : vector<324x256xf32>
    %67 = tpu.matmul %64, %66, %cst_51 {dimension_numbers = #tpu.dot_dimension_numbers<[1], [0], [0], [1], [0, 0, 1, 1], [], []>} : vector<324x64xbf16>, vector<64x256xbf16>, vector<324x256xf32> -> vector<324x256xf32>
    %68 = arith.addf %63, %67 : vector<324x256xf32>
    %c19_52 = arith.constant 19 : index
    %c0_53 = arith.constant 0 : index
    %69 = vector.load %arg14[%c19_52, %c0_53] : memref<362x64xbf16, #tpu.memory_space<vmem>>, vector<324x64xbf16>
    %c4 = arith.constant 4 : index
    %c0_54 = arith.constant 0 : index
    %c0_55 = arith.constant 0 : index
    %70 = vector.load %arg9[%c4, %c0_54, %c0_55] : memref<9x64x256xbf16, #tpu.memory_space<vmem>>, vector<1x64x256xbf16>
    %71 = vector.shape_cast %70 : vector<1x64x256xbf16> to vector<64x256xbf16>
    %cst_56 = arith.constant dense<0.000000e+00> : vector<324x256xf32>
    %72 = tpu.matmul %69, %71, %cst_56 {dimension_numbers = #tpu.dot_dimension_numbers<[1], [0], [0], [1], [0, 0, 1, 1], [], []>} : vector<324x64xbf16>, vector<64x256xbf16>, vector<324x256xf32> -> vector<324x256xf32>
    %73 = arith.addf %68, %72 : vector<324x256xf32>
    %c20 = arith.constant 20 : index
    %c0_57 = arith.constant 0 : index
    %74 = vector.load %arg14[%c20, %c0_57] : memref<362x64xbf16, #tpu.memory_space<vmem>>, vector<324x64xbf16>
    %c5 = arith.constant 5 : index
    %c0_58 = arith.constant 0 : index
    %c0_59 = arith.constant 0 : index
    %75 = vector.load %arg9[%c5, %c0_58, %c0_59] : memref<9x64x256xbf16, #tpu.memory_space<vmem>>, vector<1x64x256xbf16>
    %76 = vector.shape_cast %75 : vector<1x64x256xbf16> to vector<64x256xbf16>
    %cst_60 = arith.constant dense<0.000000e+00> : vector<324x256xf32>
    %77 = tpu.matmul %74, %76, %cst_60 {dimension_numbers = #tpu.dot_dimension_numbers<[1], [0], [0], [1], [0, 0, 1, 1], [], []>} : vector<324x64xbf16>, vector<64x256xbf16>, vector<324x256xf32> -> vector<324x256xf32>
    %78 = arith.addf %73, %77 : vector<324x256xf32>
    %c36 = arith.constant 36 : index
    %c0_61 = arith.constant 0 : index
    %79 = vector.load %arg14[%c36, %c0_61] : memref<362x64xbf16, #tpu.memory_space<vmem>>, vector<324x64xbf16>
    %c6 = arith.constant 6 : index
    %c0_62 = arith.constant 0 : index
    %c0_63 = arith.constant 0 : index
    %80 = vector.load %arg9[%c6, %c0_62, %c0_63] : memref<9x64x256xbf16, #tpu.memory_space<vmem>>, vector<1x64x256xbf16>
    %81 = vector.shape_cast %80 : vector<1x64x256xbf16> to vector<64x256xbf16>
    %cst_64 = arith.constant dense<0.000000e+00> : vector<324x256xf32>
    %82 = tpu.matmul %79, %81, %cst_64 {dimension_numbers = #tpu.dot_dimension_numbers<[1], [0], [0], [1], [0, 0, 1, 1], [], []>} : vector<324x64xbf16>, vector<64x256xbf16>, vector<324x256xf32> -> vector<324x256xf32>
    %83 = arith.addf %78, %82 : vector<324x256xf32>
    %c37 = arith.constant 37 : index
    %c0_65 = arith.constant 0 : index
    %84 = vector.load %arg14[%c37, %c0_65] : memref<362x64xbf16, #tpu.memory_space<vmem>>, vector<324x64xbf16>
    %c7 = arith.constant 7 : index
    %c0_66 = arith.constant 0 : index
    %c0_67 = arith.constant 0 : index
    %85 = vector.load %arg9[%c7, %c0_66, %c0_67] : memref<9x64x256xbf16, #tpu.memory_space<vmem>>, vector<1x64x256xbf16>
    %86 = vector.shape_cast %85 : vector<1x64x256xbf16> to vector<64x256xbf16>
    %cst_68 = arith.constant dense<0.000000e+00> : vector<324x256xf32>
    %87 = tpu.matmul %84, %86, %cst_68 {dimension_numbers = #tpu.dot_dimension_numbers<[1], [0], [0], [1], [0, 0, 1, 1], [], []>} : vector<324x64xbf16>, vector<64x256xbf16>, vector<324x256xf32> -> vector<324x256xf32>
    %88 = arith.addf %83, %87 : vector<324x256xf32>
    %c38 = arith.constant 38 : index
    %c0_69 = arith.constant 0 : index
    %89 = vector.load %arg14[%c38, %c0_69] : memref<362x64xbf16, #tpu.memory_space<vmem>>, vector<324x64xbf16>
    %c8 = arith.constant 8 : index
    %c0_70 = arith.constant 0 : index
    %c0_71 = arith.constant 0 : index
    %90 = vector.load %arg9[%c8, %c0_70, %c0_71] : memref<9x64x256xbf16, #tpu.memory_space<vmem>>, vector<1x64x256xbf16>
    %91 = vector.shape_cast %90 : vector<1x64x256xbf16> to vector<64x256xbf16>
    %cst_72 = arith.constant dense<0.000000e+00> : vector<324x256xf32>
    %92 = tpu.matmul %89, %91, %cst_72 {dimension_numbers = #tpu.dot_dimension_numbers<[1], [0], [0], [1], [0, 0, 1, 1], [], []>} : vector<324x64xbf16>, vector<64x256xbf16>, vector<324x256xf32> -> vector<324x256xf32>
    %93 = arith.addf %88, %92 : vector<324x256xf32>
    %c0_73 = arith.constant 0 : index
    %c0_74 = arith.constant 0 : index
    %94 = vector.load %arg10[%c0_73, %c0_74] : memref<1x256xf32, #tpu.memory_space<vmem>>, vector<1x256xf32>
    %95 = vector.broadcast %94 : vector<1x256xf32> to vector<324x256xf32>
    %96 = arith.addf %93, %95 : vector<324x256xf32>
    %cst_75 = arith.constant 0.000000e+00 : f32
    %97 = vector.broadcast %cst_75 : f32 to vector<324x256xf32>
    %98 = arith.maximumf %96, %97 : vector<324x256xf32>
    %99 = arith.truncf %98 : vector<324x256xf32> to vector<324x256xbf16>
    %c0_76 = arith.constant 0 : index
    %c0_77 = arith.constant 0 : index
    %100 = vector.load %arg11[%c0_76, %c0_77] : memref<256x64xbf16, #tpu.memory_space<vmem>>, vector<256x64xbf16>
    %cst_78 = arith.constant dense<0.000000e+00> : vector<324x64xf32>
    %101 = tpu.matmul %99, %100, %cst_78 {dimension_numbers = #tpu.dot_dimension_numbers<[1], [0], [0], [1], [0, 0, 1, 1], [], []>} : vector<324x256xbf16>, vector<256x64xbf16>, vector<324x64xf32> -> vector<324x64xf32>
    %c0_79 = arith.constant 0 : index
    %c0_80 = arith.constant 0 : index
    %102 = vector.load %arg12[%c0_79, %c0_80] : memref<1x64xf32, #tpu.memory_space<vmem>>, vector<1x64xf32>
    %103 = vector.broadcast %102 : vector<1x64xf32> to vector<324x64xf32>
    %104 = arith.addf %101, %103 : vector<324x64xf32>
    %cst_81 = arith.constant 0.000000e+00 : f32
    %105 = vector.broadcast %cst_81 : f32 to vector<324x64xf32>
    %106 = arith.maximumf %104, %105 : vector<324x64xf32>
    %c0_82 = arith.constant 0 : index
    %c0_83 = arith.constant 0 : index
    %c0_84 = arith.constant 0 : index
    %107 = vector.load %arg13[%c0_82, %c0_83, %c0_84] : memref<1x324x64xf32, #tpu.memory_space<vmem>>, vector<1x324x64xf32>
    %108 = vector.shape_cast %107 : vector<1x324x64xf32> to vector<324x64xf32>
    %109 = vector.shape_cast %106 : vector<324x64xf32> to vector<1x324x64xf32>
    tpu.vector_store %arg13[%c0_82, %c0_83, %c0_84], %109 {strides = array<i32>} : memref<1x324x64xf32, #tpu.memory_space<vmem>>, vector<1x324x64xf32>,
    return
  }
  func.func @transform_0(%arg0: i32) -> (i32, i32, i32) {
    %c0_i32 = arith.constant 0 : i32
    %c0_i32_0 = arith.constant 0 : i32
    %c0_i32_1 = arith.constant 0 : i32
    return %arg0, %c0_i32, %c0_i32_0 : i32, i32, i32
  }
  func.func @transform_1(%arg0: i32) -> (i32, i32) {
    %c0_i32 = arith.constant 0 : i32
    %c0_i32_0 = arith.constant 0 : i32
    %c0_i32_1 = arith.constant 0 : i32
    return %c0_i32, %c0_i32_0 : i32, i32
  }
  func.func @transform_2(%arg0: i32) -> (i32, i32) {
    %c0_i32 = arith.constant 0 : i32
    %c0_i32_0 = arith.constant 0 : i32
    %c0_i32_1 = arith.constant 0 : i32
    return %c0_i32, %c0_i32_0 : i32, i32
  }
  func.func @transform_3(%arg0: i32) -> (i32, i32) {
    %c0_i32 = arith.constant 0 : i32
    %c0_i32_0 = arith.constant 0 : i32
    %c0_i32_1 = arith.constant 0 : i32
    return %c0_i32, %c0_i32_0 : i32, i32
  }
  func.func @transform_4(%arg0: i32) -> (i32, i32) {
    %c0_i32 = arith.constant 0 : i32
    %c0_i32_0 = arith.constant 0 : i32
    %c0_i32_1 = arith.constant 0 : i32
    return %c0_i32, %c0_i32_0 : i32, i32
  }
  func.func @transform_5(%arg0: i32) -> (i32, i32) {
    %c0_i32 = arith.constant 0 : i32
    %c0_i32_0 = arith.constant 0 : i32
    %c0_i32_1 = arith.constant 0 : i32
    return %c0_i32, %c0_i32_0 : i32, i32
  }
  func.func @transform_6(%arg0: i32) -> (i32, i32) {
    %c0_i32 = arith.constant 0 : i32
    %c0_i32_0 = arith.constant 0 : i32
    %c0_i32_1 = arith.constant 0 : i32
    return %c0_i32, %c0_i32_0 : i32, i32
  }
  func.func @transform_7(%arg0: i32) -> (i32, i32) {
    %c0_i32 = arith.constant 0 : i32
    %c0_i32_0 = arith.constant 0 : i32
    %c0_i32_1 = arith.constant 0 : i32
    return %c0_i32, %c0_i32_0 : i32, i32
  }
  func.func @transform_8(%arg0: i32) -> (i32, i32, i32) {
    %c0_i32 = arith.constant 0 : i32
    %c0_i32_0 = arith.constant 0 : i32
    %c0_i32_1 = arith.constant 0 : i32
    %c0_i32_2 = arith.constant 0 : i32
    return %c0_i32, %c0_i32_0, %c0_i32_1 : i32, i32, i32
  }
  func.func @transform_9(%arg0: i32) -> (i32, i32) {
    %c0_i32 = arith.constant 0 : i32
    %c0_i32_0 = arith.constant 0 : i32
    %c0_i32_1 = arith.constant 0 : i32
    return %c0_i32, %c0_i32_0 : i32, i32
  }
  func.func @transform_10(%arg0: i32) -> (i32, i32) {
    %c0_i32 = arith.constant 0 : i32
    %c0_i32_0 = arith.constant 0 : i32
    %c0_i32_1 = arith.constant 0 : i32
    return %c0_i32, %c0_i32_0 : i32, i32
  }
  func.func @transform_11(%arg0: i32) -> (i32, i32) {
    %c0_i32 = arith.constant 0 : i32
    %c0_i32_0 = arith.constant 0 : i32
    %c0_i32_1 = arith.constant 0 : i32
    return %c0_i32, %c0_i32_0 : i32, i32
  }
  func.func @transform_12(%arg0: i32) -> (i32, i32, i32) {
    %c0_i32 = arith.constant 0 : i32
    %c0_i32_0 = arith.constant 0 : i32
    %c0_i32_1 = arith.constant 0 : i32
    return %arg0, %c0_i32, %c0_i32_0 : i32, i32, i32
  }
}

</mosaic_0001>

<llo_original>
// kernel: upblock_forward.1
$region0: #{upblock_forward.1}
  #allocation0 [shape = 'u32[]', space=smem, size = 0x4, offset = 0x4, fixed_abs, tag = 'smem constant byte address 0x4 - core index']
  #allocation1 [shape = 'u32[72,128]{1,0:T(1,128)}', space=vmem, size = 0x9000, scoped, tag = 'internal scratch']
  #allocation2 [shape = 'bf16[362,64]{1,0:T(8,128)(2,1)}', space=vmem, size = 0x17000, scoped, tag = 'scratch operand']
  %s0 = inlined_call_operand.vmem [shape: bf16[2,324,64], index: 0, kind: input, shape index: {}]
  %s1 = inlined_call_operand.vmem [shape: f32[324,1], index: 1, kind: input, shape index: {}]
  %s2 = inlined_call_operand.vmem [shape: f32[64,128], index: 2, kind: input, shape index: {}]
  %s3 = inlined_call_operand.vmem [shape: f32[1,128], index: 3, kind: input, shape index: {}]
  %s4 = inlined_call_operand.vmem [shape: f32[128,64], index: 4, kind: input, shape index: {}]
  %s5 = inlined_call_operand.vmem [shape: f32[1,64], index: 5, kind: input, shape index: {}]
  %s6 = inlined_call_operand.vmem [shape: bf16[64,64], index: 6, kind: input, shape index: {}]
  %s7 = inlined_call_operand.vmem [shape: f32[1,64], index: 7, kind: input, shape index: {}]
  %s8 = inlined_call_operand.vmem [shape: bf16[9,64,256], index: 8, kind: input, shape index: {}]
  %s9 = inlined_call_operand.vmem [shape: f32[1,256], index: 9, kind: input, shape index: {}]
  %s10 = inlined_call_operand.vmem [shape: bf16[256,64], index: 10, kind: input, shape index: {}]
  %s11 = inlined_call_operand.vmem [shape: f32[1,64], index: 11, kind: input, shape index: {}]
  %s12 = inlined_call_operand.vmem [shape: f32[2,324,64], index: 12, kind: output, shape index: {}]
  %s13 = sld [smem:[#allocation0]]
  $region81: #{upblock_forward.1} parent=0
    _
  %s15 = ssub.s32 1, %s13
  %s16 = scalar_select 0, %s15, %s13
  loop: start=0, step=1, limit=4
  $region2: #{upblock_forward.1} parent=0 // loop_pre_header
    _
  $region3: #{upblock_forward.1} parent=0 // loop_header
    %s18 = sphi 0, %s22
    %p19 = scmp.ge.s32.totalorder %s18, 4
    %s28 = sphi 0, %s30
    %s31 = sphi 0, %s28
    %s32 = sphi 0, %s31
    %s48 = sphi 0, %s32
    %s52 = sphi 0, %s52
    %s54 = sphi 0, %s52
    %s55 = sphi 0, %s54
    %s69 = sphi 0, %s55
    %s73 = sphi 0, %s73
    %s75 = sphi 0, %s73
    %s76 = sphi 0, %s75
    %s90 = sphi 0, %s76
    %s94 = sphi 0, %s94
    %s96 = sphi 0, %s94
    %s97 = sphi 0, %s96
    %s111 = sphi 0, %s97
    %s115 = sphi 0, %s115
    %s117 = sphi 0, %s115
    %s118 = sphi 0, %s117
    %s132 = sphi 0, %s118
    %s136 = sphi 0, %s136
    %s138 = sphi 0, %s136
    %s139 = sphi 0, %s138
    %s153 = sphi 0, %s139
    %s157 = sphi 0, %s157
    %s159 = sphi 0, %s157
    %s160 = sphi 0, %s159
    %s174 = sphi 0, %s160
    %s178 = sphi 0, %s178
    %s180 = sphi 0, %s178
    %s181 = sphi 0, %s180
    %s195 = sphi 0, %s181
    %s199 = sphi 0, %s199
    %s201 = sphi 0, %s199
    %s202 = sphi 0, %s201
    %s216 = sphi 0, %s202
    %s220 = sphi 0, %s220
    %s222 = sphi 0, %s220
    %s223 = sphi 0, %s222
    %s237 = sphi 0, %s223
    %s241 = sphi 0, %s241
    %s243 = sphi 0, %s241
    %s244 = sphi 0, %s243
    %s258 = sphi 0, %s244
    %s262 = sphi 0, %s262
    %s264 = sphi 0, %s262
    %s265 = sphi 0, %s264
    %s279 = sphi 0, %s265
    %s285 = sphi 0, %s287
    %s288 = sphi 0, %s285
    %s289 = sphi 0, %s288
    %s305 = sphi 0, %s289
  $region4: #{upblock_forward.1} parent=0 // loop_header_branch
    %21 = sbr.rel (%p19) target = $region8
  $region5: #{upblock_forward.1} parent=0 // loop_body
    %s23 = ssub.s32 %s18, 1
    %s24 = ssub.s32 %s18, 2
    %s25 = sadd.s32 %s18, 1
    %s26 = ssub.s32 %s18, %s25
    %p27 = scmp.eq.s32.totalorder %s26, 0
    %s29 = sadd.s32 %s28, 1
    %s30 = scalar_select %p27, %s28, %s29
    %p33 = pneg %p27
    %p34 = scmp.eq.s32.totalorder %s18, 1
    %p35 = por %p33, %p34
    %p36 = scmp.ne.s32.totalorder %s28, %s31
    %p37 = scmp.eq.s32.totalorder %s18, 0
    %p38 = por %p36, %p37
    %p39 = scmp.ne.s32.totalorder %s28, %s31
    %p40 = scmp.eq.s32.totalorder %s23, 1
    %p41 = por %p39, %p40
    %p42 = scmp.ne.s32.totalorder %s31, %s32
    %p43 = scmp.eq.s32.totalorder %s23, 0
    %p44 = por %p42, %p43
    %p45 = scmp.ne.s32.totalorder %s31, %s32
    %p46 = scmp.eq.s32.totalorder %s24, 1
    %p47 = por %p45, %p46
    %p49 = scmp.ne.s32.totalorder %s32, %s48
    %p50 = scmp.eq.s32.totalorder %s24, 0
    %p51 = por %p49, %p50
    %s53 = sadd.s32 %s52, 1
    %p56 = scmp.eq.s32.totalorder %s18, 1
    %p57 = scmp.ne.s32.totalorder %s52, %s54
    %p58 = scmp.eq.s32.totalorder %s18, 0
    %p59 = por %p57, %p58
    %p60 = scmp.ne.s32.totalorder %s52, %s54
    %p61 = scmp.eq.s32.totalorder %s23, 1
    %p62 = por %p60, %p61
    %p63 = scmp.ne.s32.totalorder %s54, %s55
    %p64 = scmp.eq.s32.totalorder %s23, 0
    %p65 = por %p63, %p64
    %p66 = scmp.ne.s32.totalorder %s54, %s55
    %p67 = scmp.eq.s32.totalorder %s24, 1
    %p68 = por %p66, %p67
    %p70 = scmp.ne.s32.totalorder %s55, %s69
    %p71 = scmp.eq.s32.totalorder %s24, 0
    %p72 = por %p70, %p71
    %s74 = sadd.s32 %s73, 1
    %p77 = scmp.eq.s32.totalorder %s18, 1
    %p78 = scmp.ne.s32.totalorder %s73, %s75
    %p79 = scmp.eq.s32.totalorder %s18, 0
    %p80 = por %p78, %p79
    %p81 = scmp.ne.s32.totalorder %s73, %s75
    %p82 = scmp.eq.s32.totalorder %s23, 1
    %p83 = por %p81, %p82
    %p84 = scmp.ne.s32.totalorder %s75, %s76
    %p85 = scmp.eq.s32.totalorder %s23, 0
    %p86 = por %p84, %p85
    %p87 = scmp.ne.s32.totalorder %s75, %s76
    %p88 = scmp.eq.s32.totalorder %s24, 1
    %p89 = por %p87, %p88
    %p91 = scmp.ne.s32.totalorder %s76, %s90
    %p92 = scmp.eq.s32.totalorder %s24, 0
    %p93 = por %p91, %p92
    %s95 = sadd.s32 %s94, 1
    %p98 = scmp.eq.s32.totalorder %s18, 1
    %p99 = scmp.ne.s32.totalorder %s94, %s96
    %p100 = scmp.eq.s32.totalorder %s18, 0
    %p101 = por %p99, %p100
    %p102 = scmp.ne.s32.totalorder %s94, %s96
    %p103 = scmp.eq.s32.totalorder %s23, 1
    %p104 = por %p102, %p103
    %p105 = scmp.ne.s32.totalorder %s96, %s97
    %p106 = scmp.eq.s32.totalorder %s23, 0
    %p107 = por %p105, %p106
    %p108 = scmp.ne.s32.totalorder %s96, %s97
    %p109 = scmp.eq.s32.totalorder %s24, 1
    %p110 = por %p108, %p109
    %p112 = scmp.ne.s32.totalorder %s97, %s111
    %p113 = scmp.eq.s32.totalorder %s24, 0
    %p114 = por %p112, %p113
    %s116 = sadd.s32 %s115, 1
    %p119 = scmp.eq.s32.totalorder %s18, 1
    %p120 = scmp.ne.s32.totalorder %s115, %s117
    %p121 = scmp.eq.s32.totalorder %s18, 0
    %p122 = por %p120, %p121
    %p123 = scmp.ne.s32.totalorder %s115, %s117
    %p124 = scmp.eq.s32.totalorder %s23, 1
    %p125 = por %p123, %p124
    %p126 = scmp.ne.s32.totalorder %s117, %s118
    %p127 = scmp.eq.s32.totalorder %s23, 0
    %p128 = por %p126, %p127
    %p129 = scmp.ne.s32.totalorder %s117, %s118
    %p130 = scmp.eq.s32.totalorder %s24, 1
    %p131 = por %p129, %p130
    %p133 = scmp.ne.s32.totalorder %s118, %s132
    %p134 = scmp.eq.s32.totalorder %s24, 0
    %p135 = por %p133, %p134
    %s137 = sadd.s32 %s136, 1
    %p140 = scmp.eq.s32.totalorder %s18, 1
    %p141 = scmp.ne.s32.totalorder %s136, %s138
    %p142 = scmp.eq.s32.totalorder %s18, 0
    %p143 = por %p141, %p142
    %p144 = scmp.ne.s32.totalorder %s136, %s138
    %p145 = scmp.eq.s32.totalorder %s23, 1
    %p146 = por %p144, %p145
    %p147 = scmp.ne.s32.totalorder %s138, %s139
    %p148 = scmp.eq.s32.totalorder %s23, 0
    %p149 = por %p147, %p148
    %p150 = scmp.ne.s32.totalorder %s138, %s139
    %p151 = scmp.eq.s32.totalorder %s24, 1
    %p152 = por %p150, %p151
    %p154 = scmp.ne.s32.totalorder %s139, %s153
    %p155 = scmp.eq.s32.totalorder %s24, 0
    %p156 = por %p154, %p155
    %s158 = sadd.s32 %s157, 1
    %p161 = scmp.eq.s32.totalorder %s18, 1
    %p162 = scmp.ne.s32.totalorder %s157, %s159
    %p163 = scmp.eq.s32.totalorder %s18, 0
    %p164 = por %p162, %p163
    %p165 = scmp.ne.s32.totalorder %s157, %s159
    %p166 = scmp.eq.s32.totalorder %s23, 1
    %p167 = por %p165, %p166
    %p168 = scmp.ne.s32.totalorder %s159, %s160
    %p169 = scmp.eq.s32.totalorder %s23, 0
    %p170 = por %p168, %p169
    %p171 = scmp.ne.s32.totalorder %s159, %s160
    %p172 = scmp.eq.s32.totalorder %s24, 1
    %p173 = por %p171, %p172
    %p175 = scmp.ne.s32.totalorder %s160, %s174
    %p176 = scmp.eq.s32.totalorder %s24, 0
    %p177 = por %p175, %p176
    %s179 = sadd.s32 %s178, 1
    %p182 = scmp.eq.s32.totalorder %s18, 1
    %p183 = scmp.ne.s32.totalorder %s178, %s180
    %p184 = scmp.eq.s32.totalorder %s18, 0
    %p185 = por %p183, %p184
    %p186 = scmp.ne.s32.totalorder %s178, %s180
    %p187 = scmp.eq.s32.totalorder %s23, 1
    %p188 = por %p186, %p187
    %p189 = scmp.ne.s32.totalorder %s180, %s181
    %p190 = scmp.eq.s32.totalorder %s23, 0
    %p191 = por %p189, %p190
    %p192 = scmp.ne.s32.totalorder %s180, %s181
    %p193 = scmp.eq.s32.totalorder %s24, 1
    %p194 = por %p192, %p193
    %p196 = scmp.ne.s32.totalorder %s181, %s195
    %p197 = scmp.eq.s32.totalorder %s24, 0
    %p198 = por %p196, %p197
    %s200 = sadd.s32 %s199, 1
    %p203 = scmp.eq.s32.totalorder %s18, 1
    %p204 = scmp.ne.s32.totalorder %s199, %s201
    %p205 = scmp.eq.s32.totalorder %s18, 0
    %p206 = por %p204, %p205
    %p207 = scmp.ne.s32.totalorder %s199, %s201
    %p208 = scmp.eq.s32.totalorder %s23, 1
    %p209 = por %p207, %p208
    %p210 = scmp.ne.s32.totalorder %s201, %s202
    %p211 = scmp.eq.s32.totalorder %s23, 0
    %p212 = por %p210, %p211
    %p213 = scmp.ne.s32.totalorder %s201, %s202
    %p214 = scmp.eq.s32.totalorder %s24, 1
    %p215 = por %p213, %p214
    %p217 = scmp.ne.s32.totalorder %s202, %s216
    %p218 = scmp.eq.s32.totalorder %s24, 0
    %p219 = por %p217, %p218
    %s221 = sadd.s32 %s220, 1
    %p224 = scmp.eq.s32.totalorder %s18, 1
    %p225 = scmp.ne.s32.totalorder %s220, %s222
    %p226 = scmp.eq.s32.totalorder %s18, 0
    %p227 = por %p225, %p226
    %p228 = scmp.ne.s32.totalorder %s220, %s222
    %p229 = scmp.eq.s32.totalorder %s23, 1
    %p230 = por %p228, %p229
    %p231 = scmp.ne.s32.totalorder %s222, %s223
    %p232 = scmp.eq.s32.totalorder %s23, 0
    %p233 = por %p231, %p232
    %p234 = scmp.ne.s32.totalorder %s222, %s223
    %p235 = scmp.eq.s32.totalorder %s24, 1
    %p236 = por %p234, %p235
    %p238 = scmp.ne.s32.totalorder %s223, %s237
    %p239 = scmp.eq.s32.totalorder %s24, 0
    %p240 = por %p238, %p239
    %s242 = sadd.s32 %s241, 1
    %p245 = scmp.eq.s32.totalorder %s18, 1
    %p246 = scmp.ne.s32.totalorder %s241, %s243
    %p247 = scmp.eq.s32.totalorder %s18, 0
    %p248 = por %p246, %p247
    %p249 = scmp.ne.s32.totalorder %s241, %s243
    %p250 = scmp.eq.s32.totalorder %s23, 1
    %p251 = por %p249, %p250
    %p252 = scmp.ne.s32.totalorder %s243, %s244
    %p253 = scmp.eq.s32.totalorder %s23, 0
    %p254 = por %p252, %p253
    %p255 = scmp.ne.s32.totalorder %s243, %s244
    %p256 = scmp.eq.s32.totalorder %s24, 1
    %p257 = por %p255, %p256
    %p259 = scmp.ne.s32.totalorder %s244, %s258
    %p260 = scmp.eq.s32.totalorder %s24, 0
    %p261 = por %p259, %p260
    %s263 = sadd.s32 %s262, 1
    %p266 = scmp.eq.s32.totalorder %s18, 1
    %p267 = scmp.ne.s32.totalorder %s262, %s264
    %p268 = scmp.eq.s32.totalorder %s18, 0
    %p269 = por %p267, %p268
    %p270 = scmp.ne.s32.totalorder %s262, %s264
    %p271 = scmp.eq.s32.totalorder %s23, 1
    %p272 = por %p270, %p271
    %p273 = scmp.ne.s32.totalorder %s264, %s265
    %p274 = scmp.eq.s32.totalorder %s23, 0
    %p275 = por %p273, %p274
    %p276 = scmp.ne.s32.totalorder %s264, %s265
    %p277 = scmp.eq.s32.totalorder %s24, 1
    %p278 = por %p276, %p277
    %p280 = scmp.ne.s32.totalorder %s265, %s279
    %p281 = scmp.eq.s32.totalorder %s24, 0
    %p282 = por %p280, %p281
    %s283 = ssub.s32 %s18, %s25
    %p284 = scmp.eq.s32.totalorder %s283, 0
    %s286 = sadd.s32 %s285, 1
    %s287 = scalar_select %p284, %s285, %s286
    %p290 = pneg %p284
    %p291 = scmp.eq.s32.totalorder %s18, 1
    %p292 = por %p290, %p291
    %p293 = scmp.ne.s32.totalorder %s285, %s288
    %p294 = scmp.eq.s32.totalorder %s18, 0
    %p295 = por %p293, %p294
    %p296 = scmp.ne.s32.totalorder %s285, %s288
    %p297 = scmp.eq.s32.totalorder %s23, 1
    %p298 = por %p296, %p297
    %p299 = scmp.ne.s32.totalorder %s288, %s289
    %p300 = scmp.eq.s32.totalorder %s23, 0
    %p301 = por %p299, %p300
    %p302 = scmp.ne.s32.totalorder %s288, %s289
    %p303 = scmp.eq.s32.totalorder %s24, 1
    %p304 = por %p302, %p303
    %p306 = scmp.ne.s32.totalorder %s289, %s305
    %p307 = scmp.eq.s32.totalorder %s24, 0
    %p308 = por %p306, %p307
    %p309 = scmp.le.s32.totalorder 1, %s18
    %p310 = scmp.lt.s32.totalorder %s18, 3
    %p311 = pnand %p309, %p310
    %p312 = pneg %p311
    // Predicated region
    $region9: #{upblock_forward.1} parent=5 // pred_check
      _
    $region10: #{upblock_forward.1} parent=5 // pred_check_branch
      %314 = sbr.rel (%p311) target = $region12
    $region11: #{upblock_forward.1} parent=5 // pred_region
      %s315 = ssub.s32 %s18, 1
      // Predicated region
      $region13: #{upblock_forward.1} parent=11 // pred_check
        %p316 = pneg %p65
      $region14: #{upblock_forward.1} parent=11 // pred_check_branch
        %318 = sbr.rel (%p316) target = $region16
      $region15: #{upblock_forward.1} parent=11 // pred_region
        _
      $region16: #{upblock_forward.1} parent=11 // pred_fallthru
        _
      // Predicated region
      $region17: #{upblock_forward.1} parent=11 // pred_check
        %p319 = pneg %p86
      $region18: #{upblock_forward.1} parent=11 // pred_check_branch
        %321 = sbr.rel (%p319) target = $region20
      $region19: #{upblock_forward.1} parent=11 // pred_region
        _
      $region20: #{upblock_forward.1} parent=11 // pred_fallthru
        _
      // Predicated region
      $region21: #{upblock_forward.1} parent=11 // pred_check
        %p322 = pneg %p107
      $region22: #{upblock_forward.1} parent=11 // pred_check_branch
        %324 = sbr.rel (%p322) target = $region24
      $region23: #{upblock_forward.1} parent=11 // pred_region
        _
      $region24: #{upblock_forward.1} parent=11 // pred_fallthru
        _
      // Predicated region
      $region25: #{upblock_forward.1} parent=11 // pred_check
        %p325 = pneg %p128
      $region26: #{upblock_forward.1} parent=11 // pred_check_branch
        %327 = sbr.rel (%p325) target = $region28
      $region27: #{upblock_forward.1} parent=11 // pred_region
        _
      $region28: #{upblock_forward.1} parent=11 // pred_fallthru
        _
      // Predicated region
      $region29: #{upblock_forward.1} parent=11 // pred_check
        %p328 = pneg %p149
      $region30: #{upblock_forward.1} parent=11 // pred_check_branch
        %330 = sbr.rel (%p328) target = $region32
      $region31: #{upblock_forward.1} parent=11 // pred_region
        _
      $region32: #{upblock_forward.1} parent=11 // pred_fallthru
        _
      // Predicated region
      $region33: #{upblock_forward.1} parent=11 // pred_check
        %p331 = pneg %p170
      $region34: #{upblock_forward.1} parent=11 // pred_check_branch
        %333 = sbr.rel (%p331) target = $region36
      $region35: #{upblock_forward.1} parent=11 // pred_region
        _
      $region36: #{upblock_forward.1} parent=11 // pred_fallthru
        _
      // Predicated region
      $region37: #{upblock_forward.1} parent=11 // pred_check
        %p334 = pneg %p191
      $region38: #{upblock_forward.1} parent=11 // pred_check_branch
        %336 = sbr.rel (%p334) target = $region40
      $region39: #{upblock_forward.1} parent=11 // pred_region
        _
      $region40: #{upblock_forward.1} parent=11 // pred_fallthru
        _
      // Predicated region
      $region41: #{upblock_forward.1} parent=11 // pred_check
        %p337 = pneg %p212
      $region42: #{upblock_forward.1} parent=11 // pred_check_branch
        %339 = sbr.rel (%p337) target = $region44
      $region43: #{upblock_forward.1} parent=11 // pred_region
        _
      $region44: #{upblock_forward.1} parent=11 // pred_fallthru
        _
      // Predicated region
      $region45: #{upblock_forward.1} parent=11 // pred_check
        %p340 = pneg %p233
      $region46: #{upblock_forward.1} parent=11 // pred_check_branch
        %342 = sbr.rel (%p340) target = $region48
      $region47: #{upblock_forward.1} parent=11 // pred_region
        _
      $region48: #{upblock_forward.1} parent=11 // pred_fallthru
        _
      // Predicated region
      $region49: #{upblock_forward.1} parent=11 // pred_check
        %p343 = pneg %p254
      $region50: #{upblock_forward.1} parent=11 // pred_check_branch
        %345 = sbr.rel (%p343) target = $region52
      $region51: #{upblock_forward.1} parent=11 // pred_region
        _
      $region52: #{upblock_forward.1} parent=11 // pred_fallthru
        _
      // Predicated region
      $region53: #{upblock_forward.1} parent=11 // pred_check
        %p346 = pneg %p275
      $region54: #{upblock_forward.1} parent=11 // pred_check_branch
        %348 = sbr.rel (%p346) target = $region56
      $region55: #{upblock_forward.1} parent=11 // pred_region
        _
      $region56: #{upblock_forward.1} parent=11 // pred_fallthru
        _
    $region12: #{upblock_forward.1} parent=5 // pred_fallthru
      _
    %p349 = scmp.lt.s32.totalorder %s18, 2
    // Predicated region
    $region57: #{upblock_forward.1} parent=5 // pred_check
      %p350 = pneg %p349
    $region58: #{upblock_forward.1} parent=5 // pred_check_branch
      %352 = sbr.rel (%p350) target = $region60
    $region59: #{upblock_forward.1} parent=5 // pred_region
      // Predicated region
      $region61: #{upblock_forward.1} parent=59 // pred_check
        %p353 = pneg %p38
      $region62: #{upblock_forward.1} parent=59 // pred_check_branch
        %355 = sbr.rel (%p353) target = $region64
      $region63: #{upblock_forward.1} parent=59 // pred_region
        %p356 = scmp.lt.s32.totalorder %s18, 1
        %s357 = scalar_select %p356, %s18, 1
        %s358 = smul.addr %s357, 41
        %s359 = smul.addr %s358, 4
        %s360 = scalar_lea.vmem %s0, %s359
      $region64: #{upblock_forward.1} parent=59 // pred_fallthru
        _
    $region60: #{upblock_forward.1} parent=5 // pred_fallthru
      _
    %p361 = scmp.le.s32.totalorder 1, %s18
    %p362 = scmp.lt.s32.totalorder %s18, 3
    %p363 = pnand %p361, %p362
    %p364 = pneg %p363
    // Predicated region
    $region65: #{upblock_forward.1} parent=5 // pred_check
      _
    $region66: #{upblock_forward.1} parent=5 // pred_check_branch
      %366 = sbr.rel (%p363) target = $region68
    $region67: #{upblock_forward.1} parent=5 // pred_region
      %s367 = ssub.s32 %s18, 1
      %p368 = scmp.lt.s32.totalorder %s23, 1
      %s369 = scalar_select %p368, %s23, 1
      %s370 = smul.addr %s369, 41
      %s371 = smul.addr %s370, 4
      %s372 = scalar_lea.vmem %s0, %s371
      %p373 = pneg %p44
      %p374 = pneg %p41
      %p375 = pneg %p65
      %p376 = pneg %p62
      %p377 = pneg %p86
      %p378 = pneg %p83
      %p379 = pneg %p107
      %p380 = pneg %p104
      %p381 = pneg %p128
      %p382 = pneg %p125
      %p383 = pneg %p149
      %p384 = pneg %p146
      %p385 = pneg %p170
      %p386 = pneg %p167
      %p387 = pneg %p191
      %p388 = pneg %p188
      %p389 = pneg %p212
      %p390 = pneg %p209
      %p391 = pneg %p233
      %p392 = pneg %p230
      %p393 = pneg %p254
      %p394 = pneg %p251
      %p395 = pneg %p275
      %p396 = pneg %p272
      %p397 = pneg %p301
      %p398 = pneg %p298
      %p399 = scmp.lt.s32.totalorder %s23, 1
      %s400 = scalar_select %p399, %s23, 1
      %s401 = smul.addr %s400, 41
      %s402 = smul.addr %s401, 8
      %s403 = scalar_lea.vmem %s12, %s402
      %p404 = scmp.lt.s32.totalorder %s23, 1
      %s405 = scalar_select %p404, %s23, 1
      %s406 = smul.addr %s405, 41
      %s407 = smul.addr %s406, 4
      %s408 = scalar_lea.vmem %s0, %s407
      %p409 = scmp.lt.s32.totalorder %s23, 1
      %s410 = scalar_select %p409, %s23, 1
      %s411 = smul.addr %s410, 41
      %s412 = smul.addr %s411, 8
      %s413 = scalar_lea.vmem %s12, %s412
      %v415 = vld [vmem:[%s408] sm:$0xf]
      %v416 = vld [vmem:[%s408 + $0x4] sm:$0xf]
      %v417 = vld [vmem:[%s408 + $0x8] sm:$0xf]
      %v418 = vld [vmem:[%s408 + $0xc] sm:$0xf]
      %v419 = vld [vmem:[%s408 + $0x10] sm:$0xf]
      %v420 = vld [vmem:[%s408 + $0x14] sm:$0xf]
      %v421 = vld [vmem:[%s408 + $0x18] sm:$0xf]
      %v422 = vld [vmem:[%s408 + $0x1c] sm:$0xf]
      %v423 = vld [vmem:[%s408 + $0x20] sm:$0xf]
      %v424 = vld [vmem:[%s408 + $0x24] sm:$0xf]
      %v425 = vld [vmem:[%s408 + $0x28] sm:$0xf]
      %v426 = vld [vmem:[%s408 + $0x2c] sm:$0xf]
      %v427 = vld [vmem:[%s408 + $0x30] sm:$0xf]
      %v428 = vld [vmem:[%s408 + $0x34] sm:$0xf]
      %v429 = vld [vmem:[%s408 + $0x38] sm:$0xf]
      %v430 = vld [vmem:[%s408 + $0x3c] sm:$0xf]
      %v431 = vld [vmem:[%s408 + $0x40] sm:$0xf]
      %v432 = vld [vmem:[%s408 + $0x44] sm:$0xf]
      %v433 = vld [vmem:[%s408 + $0x48] sm:$0xf]
      %v434 = vld [vmem:[%s408 + $0x4c] sm:$0xf]
      %v435 = vld [vmem:[%s408 + $0x50] sm:$0xf]
      %v436 = vld [vmem:[%s408 + $0x54] sm:$0xf]
      %v437 = vld [vmem:[%s408 + $0x58] sm:$0xf]
      %v438 = vld [vmem:[%s408 + $0x5c] sm:$0xf]
      %v439 = vld [vmem:[%s408 + $0x60] sm:$0xf]
      %v440 = vld [vmem:[%s408 + $0x64] sm:$0xf]
      %v441 = vld [vmem:[%s408 + $0x68] sm:$0xf]
      %v442 = vld [vmem:[%s408 + $0x6c] sm:$0xf]
      %v443 = vld [vmem:[%s408 + $0x70] sm:$0xf]
      %v444 = vld [vmem:[%s408 + $0x74] sm:$0xf]
      %v445 = vld [vmem:[%s408 + $0x78] sm:$0xf]
      %v446 = vld [vmem:[%s408 + $0x7c] sm:$0xf]
      %v447 = vld [vmem:[%s408 + $0x80] sm:$0xf]
      %v448 = vld [vmem:[%s408 + $0x84] sm:$0xf]
      %v449 = vld [vmem:[%s408 + $0x88] sm:$0xf]
      %v450 = vld [vmem:[%s408 + $0x8c] sm:$0xf]
      %v451 = vld [vmem:[%s408 + $0x90] sm:$0xf]
      %v452 = vld [vmem:[%s408 + $0x94] sm:$0xf]
      %v453 = vld [vmem:[%s408 + $0x98] sm:$0xf]
      %v454 = vld [vmem:[%s408 + $0x9c] sm:$0xf]
      %v455 = vld [vmem:[%s408 + $0xa0] sm:$0x3]
      %v456 = vunpack.c.l.bf16 %v415
      %v457 = vunpack.c.l.bf16 %v416
      %v458 = vunpack.c.l.bf16 %v417
      %v459 = vunpack.c.l.bf16 %v418
      %v460 = vunpack.c.l.bf16 %v419
      %v461 = vunpack.c.l.bf16 %v420
      %v462 = vunpack.c.l.bf16 %v421
      %v463 = vunpack.c.l.bf16 %v422
      %v464 = vunpack.c.l.bf16 %v423
      %v465 = vunpack.c.l.bf16 %v424
      %v466 = vunpack.c.l.bf16 %v425
      %v467 = vunpack.c.l.bf16 %v426
      %v468 = vunpack.c.l.bf16 %v427
      %v469 = vunpack.c.l.bf16 %v428
      %v470 = vunpack.c.l.bf16 %v429
      %v471 = vunpack.c.l.bf16 %v430
      %v472 = vunpack.c.l.bf16 %v431
      %v473 = vunpack.c.l.bf16 %v432
      %v474 = vunpack.c.l.bf16 %v433
      %v475 = vunpack.c.l.bf16 %v434
      %v476 = vunpack.c.l.bf16 %v435
      %v477 = vunpack.c.l.bf16 %v436
      %v478 = vunpack.c.l.bf16 %v437
      %v479 = vunpack.c.l.bf16 %v438
      %v480 = vunpack.c.l.bf16 %v439
      %v481 = vunpack.c.l.bf16 %v440
      %v482 = vunpack.c.l.bf16 %v441
      %v483 = vunpack.c.l.bf16 %v442
      %v484 = vunpack.c.l.bf16 %v443
      %v485 = vunpack.c.l.bf16 %v444
      %v486 = vunpack.c.l.bf16 %v445
      %v487 = vunpack.c.l.bf16 %v446
      %v488 = vunpack.c.l.bf16 %v447
      %v489 = vunpack.c.l.bf16 %v448
      %v490 = vunpack.c.l.bf16 %v449
      %v491 = vunpack.c.l.bf16 %v450
      %v492 = vunpack.c.l.bf16 %v451
      %v493 = vunpack.c.l.bf16 %v452
      %v494 = vunpack.c.l.bf16 %v453
      %v495 = vunpack.c.l.bf16 %v454
      %v496 = vunpack.c.l.bf16 %v455
      %vm497 = vcmask 523264
      %v498 = vsel %vm497, %v456, 0.0
      %v499 = vsel %vm497, %v457, 0.0
      %v500 = vadd.f32 %v498, %v499
      %v501 = vsel %vm497, %v458, 0.0
      %v502 = vadd.f32 %v500, %v501
      %v503 = vsel %vm497, %v459, 0.0
      %v504 = vadd.f32 %v502, %v503
      %v505 = vsel %vm497, %v460, 0.0
      %v506 = vadd.f32 %v504, %v505
      %v507 = vsel %vm497, %v461, 0.0
      %v508 = vadd.f32 %v506, %v507
      %v509 = vsel %vm497, %v462, 0.0
      %v510 = vadd.f32 %v508, %v509
      %v511 = vsel %vm497, %v463, 0.0
      %v512 = vadd.f32 %v510, %v511
      %v513 = vsel %vm497, %v464, 0.0
      %v514 = vadd.f32 %v512, %v513
      %v515 = vsel %vm497, %v465, 0.0
      %v516 = vadd.f32 %v514, %v515
      %v517 = vsel %vm497, %v466, 0.0
      %v518 = vadd.f32 %v516, %v517
      %v519 = vsel %vm497, %v467, 0.0
      %v520 = vadd.f32 %v518, %v519
      %v521 = vsel %vm497, %v468, 0.0
      %v522 = vadd.f32 %v520, %v521
      %v523 = vsel %vm497, %v469, 0.0
      %v524 = vadd.f32 %v522, %v523
      %v525 = vsel %vm497, %v470, 0.0
      %v526 = vadd.f32 %v524, %v525
      %v527 = vsel %vm497, %v471, 0.0
      %v528 = vadd.f32 %v526, %v527
      %v529 = vsel %vm497, %v472, 0.0
      %v530 = vadd.f32 %v528, %v529
      %v531 = vsel %vm497, %v473, 0.0
      %v532 = vadd.f32 %v530, %v531
      %v533 = vsel %vm497, %v474, 0.0
      %v534 = vadd.f32 %v532, %v533
      %v535 = vsel %vm497, %v475, 0.0
      %v536 = vadd.f32 %v534, %v535
      %v537 = vsel %vm497, %v476, 0.0
      %v538 = vadd.f32 %v536, %v537
      %v539 = vsel %vm497, %v477, 0.0
      %v540 = vadd.f32 %v538, %v539
      %v541 = vsel %vm497, %v478, 0.0
      %v542 = vadd.f32 %v540, %v541
      %v543 = vsel %vm497, %v479, 0.0
      %v544 = vadd.f32 %v542, %v543
      %v545 = vsel %vm497, %v480, 0.0
      %v546 = vadd.f32 %v544, %v545
      %v547 = vsel %vm497, %v481, 0.0
      %v548 = vadd.f32 %v546, %v547
      %v549 = vsel %vm497, %v482, 0.0
      %v550 = vadd.f32 %v548, %v549
      %v551 = vsel %vm497, %v483, 0.0
      %v552 = vadd.f32 %v550, %v551
      %v553 = vsel %vm497, %v484, 0.0
      %v554 = vadd.f32 %v552, %v553
      %v555 = vsel %vm497, %v485, 0.0
      %v556 = vadd.f32 %v554, %v555
      %v557 = vsel %vm497, %v486, 0.0
      %v558 = vadd.f32 %v556, %v557
      %v559 = vsel %vm497, %v487, 0.0
      %v560 = vadd.f32 %v558, %v559
      %v561 = vsel %vm497, %v488, 0.0
      %v562 = vadd.f32 %v560, %v561
      %v563 = vsel %vm497, %v489, 0.0
      %v564 = vadd.f32 %v562, %v563
      %v565 = vsel %vm497, %v490, 0.0
      %v566 = vadd.f32 %v564, %v565
      %v567 = vsel %vm497, %v491, 0.0
      %v568 = vadd.f32 %v566, %v567
      %v569 = vsel %vm497, %v492, 0.0
      %v570 = vadd.f32 %v568, %v569
      %v571 = vsel %vm497, %v493, 0.0
      %v572 = vadd.f32 %v570, %v571
      %v573 = vsel %vm497, %v494, 0.0
      %v574 = vadd.f32 %v572, %v573
      %v575 = vsel %vm497, %v495, 0.0
      %v576 = vadd.f32 %v574, %v575
      %vm577 = vcmask 519168
      %v578 = vsel %vm577, %v496, 0.0
      %v579 = vadd.f32 %v576, %v578
      %v580 = vrot.slane %v579, 4
      %v581 = vadd.f32 %v579, %v580
      %v582 = vrot.slane %v581, 2
      %v583 = vadd.f32 %v581, %v582
      %v584 = vrot.slane %v583, 1
      %v585 = vadd.f32 %v583, %v584
      %v586 = vmul.f32 %v585, 0.00390625
      %v587 = vld [vmem:[%s2] sm:$0xff]
      %v588 = vld [vmem:[%s2 + $0x8] sm:$0xff]
      %v589 = vld [vmem:[%s2 + $0x10] sm:$0xff]
      %v590 = vld [vmem:[%s2 + $0x18] sm:$0xff]
      %v591 = vld [vmem:[%s2 + $0x20] sm:$0xff]
      %v592 = vld [vmem:[%s2 + $0x28] sm:$0xff]
      %v593 = vld [vmem:[%s2 + $0x30] sm:$0xff]
      %v594 = vld [vmem:[%s2 + $0x38] sm:$0xff]
      %v595 = vld [vmem:[%s3] sm:$0x1]
      %v597 = vperm.slane %v595, 0
      %v600 = vsel %vm497, %v586, 0
      %602 = vmatpush.msra.mxu0 0.0
      %603 = vmatpush.msra.mxu0 0.0
      %604 = vmatpush.msra.mxu0 0.0
      %605 = vmatpush.msra.mxu0 0.0
      %606 = vmatpush.msra.mxu0 0.0
      %607 = vmatpush.msra.mxu0 0.0
      %608 = vmatpush.msra.mxu0 0.0
      %609 = vmatpush.msra.mxu0 0.0
      %610 = vmatpush.msra.mxu0 %v594
      %611 = vmatpush.msra.mxu0 %v593
      %612 = vmatpush.msra.mxu0 %v592
      %613 = vmatpush.msra.mxu0 %v591
      %614 = vmatpush.msra.mxu0 %v590
      %615 = vmatpush.msra.mxu0 %v589
      %616 = vmatpush.msra.mxu0 %v588
      %617 = vmatpush.msra.mxu0 %v587
      %618 = vmatmul.f32.gmra.mxu0 %v600
      %v619 = vpop.f32.mrf.mxu0
      %v620 = vadd.f32 %v597, %v619
      %621 = vdwg.mxu0
      %v622 = vmax.f32 %v620, 0.0
      %v623 = vld [vmem:[%s4] sm:$0xff]
      %v624 = vld [vmem:[%s4 + $0x8] sm:$0xff]
      %v625 = vld [vmem:[%s4 + $0x10] sm:$0xff]
      %v626 = vld [vmem:[%s4 + $0x18] sm:$0xff]
      %v627 = vld [vmem:[%s4 + $0x20] sm:$0xff]
      %v628 = vld [vmem:[%s4 + $0x28] sm:$0xff]
      %v629 = vld [vmem:[%s4 + $0x30] sm:$0xff]
      %v630 = vld [vmem:[%s4 + $0x38] sm:$0xff]
      %v631 = vld [vmem:[%s4 + $0x40] sm:$0xff]
      %v632 = vld [vmem:[%s4 + $0x48] sm:$0xff]
      %v633 = vld [vmem:[%s4 + $0x50] sm:$0xff]
      %v634 = vld [vmem:[%s4 + $0x58] sm:$0xff]
      %v635 = vld [vmem:[%s4 + $0x60] sm:$0xff]
      %v636 = vld [vmem:[%s4 + $0x68] sm:$0xff]
      %v637 = vld [vmem:[%s4 + $0x70] sm:$0xff]
      %v638 = vld [vmem:[%s4 + $0x78] sm:$0xff]
      %v639 = vld [vmem:[%s5] sm:$0x1]
      %v641 = vperm.slane %v639, 0
      %643 = vmatpush.msra.mxu0 %v638
      %644 = vmatpush.msra.mxu0 %v637
      %645 = vmatpush.msra.mxu0 %v636
      %646 = vmatpush.msra.mxu0 %v635
      %647 = vmatpush.msra.mxu0 %v634
      %648 = vmatpush.msra.mxu0 %v633
      %649 = vmatpush.msra.mxu0 %v632
      %650 = vmatpush.msra.mxu0 %v631
      %651 = vmatpush.msra.mxu0 %v630
      %652 = vmatpush.msra.mxu0 %v629
      %653 = vmatpush.msra.mxu0 %v628
      %654 = vmatpush.msra.mxu0 %v627
      %655 = vmatpush.msra.mxu0 %v626
      %656 = vmatpush.msra.mxu0 %v625
      %657 = vmatpush.msra.mxu0 %v624
      %658 = vmatpush.msra.mxu0 %v623
      %659 = vmatmul.f32.gmra.mxu0 %v622
      %v660 = vpop.f32.mrf.mxu0
      %v661 = vadd.f32 %v641, %v660
      %662 = vdwg.mxu0
      %v663 = vsub.f32 0.0, %v661
      %v664 = vmul.f32 %v663, 1.442695
      %v665 = vpow.pop %v664
      %v666 = vadd.f32 %v665, 1.0
      %v667 = vrcp.pop %v666
      %v668 = vmul.f32 %v666, %v667
      %v669 = vsub.f32 1.0, %v668
      %v670 = vmul.f32 %v667, %v669
      %v671 = vadd.f32 %v667, %v670
      %vm672 = vweird.f32 %v666
      %vm673 = vweird.f32 %v667
      %vm674 = vmor %vm672, %vm673
      %v675 = vsel %vm674, %v667, %v671
      %v676 = vand.u32 2147483647, %v666
      %vm677 = vcmp.eq.f32.partialorder %v676, 8.507059e+37
      %v678 = vand.u32 %v666, 2147483648
      %v679 = vor.u32 1.1754944e-38, %v678
      %v680 = vsel %vm677, %v679, %v675
      %v681 = vmul.f32 1.0, %v680
      %v682 = vpack.c.bf16 %v681, %v681
      %v684 = vpack.i.b16 %v682, %v682
      %v686 = vperm.slane %v684, 0
      %v687 = vunpack.c.l.bf16 %v686
      %v688 = vmul.f32 %v456, %v687
      %v689 = vmul.f32 %v457, %v687
      %v690 = vmul.f32 %v458, %v687
      %v691 = vmul.f32 %v459, %v687
      %v692 = vmul.f32 %v460, %v687
      %v693 = vmul.f32 %v461, %v687
      %v694 = vmul.f32 %v462, %v687
      %v695 = vmul.f32 %v463, %v687
      %v696 = vmul.f32 %v464, %v687
      %v697 = vmul.f32 %v465, %v687
      %v698 = vmul.f32 %v466, %v687
      %v699 = vmul.f32 %v467, %v687
      %v700 = vmul.f32 %v468, %v687
      %v701 = vmul.f32 %v469, %v687
      %v702 = vmul.f32 %v470, %v687
      %v703 = vmul.f32 %v471, %v687
      %v704 = vmul.f32 %v472, %v687
      %v705 = vmul.f32 %v473, %v687
      %v706 = vmul.f32 %v474, %v687
      %v707 = vmul.f32 %v475, %v687
      %v708 = vmul.f32 %v476, %v687
      %v709 = vmul.f32 %v477, %v687
      %v710 = vmul.f32 %v478, %v687
      %v711 = vmul.f32 %v479, %v687
      %v712 = vmul.f32 %v480, %v687
      %v713 = vmul.f32 %v481, %v687
      %v714 = vmul.f32 %v482, %v687
      %v715 = vmul.f32 %v483, %v687
      %v716 = vmul.f32 %v484, %v687
      %v717 = vmul.f32 %v485, %v687
      %v718 = vmul.f32 %v486, %v687
      %v719 = vmul.f32 %v487, %v687
      %v720 = vmul.f32 %v488, %v687
      %v721 = vmul.f32 %v489, %v687
      %v722 = vmul.f32 %v490, %v687
      %v723 = vmul.f32 %v491, %v687
      %v724 = vmul.f32 %v492, %v687
      %v725 = vmul.f32 %v493, %v687
      %v726 = vmul.f32 %v494, %v687
      %v727 = vmul.f32 %v495, %v687
      %v728 = vmul.f32 %v496, %v687
      %v729 = vpack.c.bf16 %v689, %v688
      %v730 = vpack.c.bf16 %v691, %v690
      %v731 = vpack.c.bf16 %v693, %v692
      %v732 = vpack.c.bf16 %v695, %v694
      %v733 = vpack.c.bf16 %v697, %v696
      %v734 = vpack.c.bf16 %v699, %v698
      %v735 = vpack.c.bf16 %v701, %v700
      %v736 = vpack.c.bf16 %v703, %v702
      %v737 = vpack.c.bf16 %v705, %v704
      %v738 = vpack.c.bf16 %v707, %v706
      %v739 = vpack.c.bf16 %v709, %v708
      %v740 = vpack.c.bf16 %v711, %v710
      %v741 = vpack.c.bf16 %v713, %v712
      %v742 = vpack.c.bf16 %v715, %v714
      %v743 = vpack.c.bf16 %v717, %v716
      %v744 = vpack.c.bf16 %v719, %v718
      %v745 = vpack.c.bf16 %v721, %v720
      %v746 = vpack.c.bf16 %v723, %v722
      %v747 = vpack.c.bf16 %v725, %v724
      %v748 = vpack.c.bf16 %v727, %v726
      %v749 = vpack.c.bf16 %v728, %v728
      %v750 = vld [vmem:[%s6] sm:$0xf]
      %v751 = vld [vmem:[%s6 + $0x4] sm:$0xf]
      %v752 = vld [vmem:[%s6 + $0x8] sm:$0xf]
      %v753 = vld [vmem:[%s6 + $0xc] sm:$0xf]
      %v754 = vld [vmem:[%s6 + $0x10] sm:$0xf]
      %v755 = vld [vmem:[%s6 + $0x14] sm:$0xf]
      %v756 = vld [vmem:[%s6 + $0x18] sm:$0xf]
      %v757 = vld [vmem:[%s6 + $0x1c] sm:$0xf]
      %v758 = vld [vmem:[%s7] sm:$0x1]
      %v760 = vperm.slane %v758, 0
      %v770 = vunpack.c.l.b16 %v750
      %v771 = vunpack.c.l.b16 %v751
      %v772 = vunpack.c.l.b16 %v752
      %v773 = vunpack.c.l.b16 %v753
      %v774 = vunpack.c.l.b16 %v754
      %v775 = vunpack.c.l.b16 %v755
      %v776 = vunpack.c.l.b16 %v756
      %v777 = vunpack.c.l.b16 %v757
      %v778 = vpack.c.b16 %v771, %v770
      %v779 = vpack.c.b16 %v773, %v772
      %v780 = vpack.c.b16 %v775, %v774
      %v781 = vpack.c.b16 %v777, %v776
      %v787 = vsel %vm497, %v729, 0
      %v790 = vsel %vm497, %v730, 0
      %v793 = vsel %vm497, %v731, 0
      %v796 = vsel %vm497, %v732, 0
      %v799 = vsel %vm497, %v733, 0
      %v802 = vsel %vm497, %v734, 0
      %v805 = vsel %vm497, %v735, 0
      %v808 = vsel %vm497, %v736, 0
      %v811 = vsel %vm497, %v737, 0
      %v814 = vsel %vm497, %v738, 0
      %v817 = vsel %vm497, %v739, 0
      %v820 = vsel %vm497, %v740, 0
      %v823 = vsel %vm497, %v741, 0
      %v826 = vsel %vm497, %v742, 0
      %v829 = vsel %vm497, %v743, 0
      %v832 = vsel %vm497, %v744, 0
      %v835 = vsel %vm497, %v745, 0
      %v838 = vsel %vm497, %v746, 0
      %v841 = vsel %vm497, %v747, 0
      %v844 = vsel %vm497, %v748, 0
      %v847 = vsel %vm497, %v749, 0
      %849 = vmatpush.bf16.msra.mxu0 0
      %850 = vmatpush.bf16.msra.mxu0 0
      %851 = vmatpush.bf16.msra.mxu0 0
      %852 = vmatpush.bf16.msra.mxu0 0
      %853 = vmatpush.bf16.msra.mxu0 %v781
      %854 = vmatpush.bf16.msra.mxu0 %v780
      %855 = vmatpush.bf16.msra.mxu0 %v779
      %856 = vmatpush.bf16.msra.mxu0 %v778
      %857 = vmatmul.bf16.gmra.mxu0 %v787
      %v858 = vpop.f32.mrf.mxu0
      %v859 = vadd.f32 %v760, %v858
      %v860 = vpop.f32.mrf.mxu0
      %v861 = vadd.f32 %v760, %v860
      %862 = vmatmul.bf16.gmra.mxu0 %v790
      %v863 = vpop.f32.mrf.mxu0
      %v864 = vadd.f32 %v760, %v863
      %v865 = vpop.f32.mrf.mxu0
      %v866 = vadd.f32 %v760, %v865
      %867 = vmatmul.bf16.gmra.mxu0 %v793
      %v868 = vpop.f32.mrf.mxu0
      %v869 = vadd.f32 %v760, %v868
      %v870 = vpop.f32.mrf.mxu0
      %v871 = vadd.f32 %v760, %v870
      %872 = vmatmul.bf16.gmra.mxu0 %v796
      %v873 = vpop.f32.mrf.mxu0
      %v874 = vadd.f32 %v760, %v873
      %v875 = vpop.f32.mrf.mxu0
      %v876 = vadd.f32 %v760, %v875
      %877 = vmatmul.bf16.gmra.mxu0 %v799
      %v878 = vpop.f32.mrf.mxu0
      %v879 = vadd.f32 %v760, %v878
      %v880 = vpop.f32.mrf.mxu0
      %v881 = vadd.f32 %v760, %v880
      %882 = vmatmul.bf16.gmra.mxu0 %v802
      %v883 = vpop.f32.mrf.mxu0
      %v884 = vadd.f32 %v760, %v883
      %v885 = vpop.f32.mrf.mxu0
      %v886 = vadd.f32 %v760, %v885
      %887 = vmatmul.bf16.gmra.mxu0 %v805
      %v888 = vpop.f32.mrf.mxu0
      %v889 = vadd.f32 %v760, %v888
      %v890 = vpop.f32.mrf.mxu0
      %v891 = vadd.f32 %v760, %v890
      %892 = vmatmul.bf16.gmra.mxu0 %v808
      %v893 = vpop.f32.mrf.mxu0
      %v894 = vadd.f32 %v760, %v893
      %v895 = vpop.f32.mrf.mxu0
      %v896 = vadd.f32 %v760, %v895
      %897 = vmatmul.bf16.gmra.mxu0 %v811
      %v898 = vpop.f32.mrf.mxu0
      %v899 = vadd.f32 %v760, %v898
      %v900 = vpop.f32.mrf.mxu0
      %v901 = vadd.f32 %v760, %v900
      %902 = vmatmul.bf16.gmra.mxu0 %v814
      %v903 = vpop.f32.mrf.mxu0
      %v904 = vadd.f32 %v760, %v903
      %v905 = vpop.f32.mrf.mxu0
      %v906 = vadd.f32 %v760, %v905
      %907 = vmatmul.bf16.gmra.mxu0 %v817
      %v908 = vpop.f32.mrf.mxu0
      %v909 = vadd.f32 %v760, %v908
      %v910 = vpop.f32.mrf.mxu0
      %v911 = vadd.f32 %v760, %v910
      %912 = vmatmul.bf16.gmra.mxu0 %v820
      %v913 = vpop.f32.mrf.mxu0
      %v914 = vadd.f32 %v760, %v913
      %v915 = vpop.f32.mrf.mxu0
      %v916 = vadd.f32 %v760, %v915
      %917 = vmatmul.bf16.gmra.mxu0 %v823
      %v918 = vpop.f32.mrf.mxu0
      %v919 = vadd.f32 %v760, %v918
      %v920 = vpop.f32.mrf.mxu0
      %v921 = vadd.f32 %v760, %v920
      %922 = vmatmul.bf16.gmra.mxu0 %v826
      %v923 = vpop.f32.mrf.mxu0
      %v924 = vadd.f32 %v760, %v923
      %v925 = vpop.f32.mrf.mxu0
      %v926 = vadd.f32 %v760, %v925
      %927 = vmatmul.bf16.gmra.mxu0 %v829
      %v928 = vpop.f32.mrf.mxu0
      %v929 = vadd.f32 %v760, %v928
      %v930 = vpop.f32.mrf.mxu0
      %v931 = vadd.f32 %v760, %v930
      %932 = vmatmul.bf16.gmra.mxu0 %v832
      %v933 = vpop.f32.mrf.mxu0
      %v934 = vadd.f32 %v760, %v933
      %v935 = vpop.f32.mrf.mxu0
      %v936 = vadd.f32 %v760, %v935
      %937 = vmatmul.bf16.gmra.mxu0 %v835
      %v938 = vpop.f32.mrf.mxu0
      %v939 = vadd.f32 %v760, %v938
      %v940 = vpop.f32.mrf.mxu0
      %v941 = vadd.f32 %v760, %v940
      %942 = vmatmul.bf16.gmra.mxu0 %v838
      %v943 = vpop.f32.mrf.mxu0
      %v944 = vadd.f32 %v760, %v943
      %v945 = vpop.f32.mrf.mxu0
      %v946 = vadd.f32 %v760, %v945
      %947 = vmatmul.bf16.gmra.mxu0 %v841
      %v948 = vpop.f32.mrf.mxu0
      %v949 = vadd.f32 %v760, %v948
      %v950 = vpop.f32.mrf.mxu0
      %v951 = vadd.f32 %v760, %v950
      %952 = vmatmul.bf16.gmra.mxu0 %v844
      %v953 = vpop.f32.mrf.mxu0
      %v954 = vadd.f32 %v760, %v953
      %v955 = vpop.f32.mrf.mxu0
      %v956 = vadd.f32 %v760, %v955
      %957 = vmatmul.bf16.gmra.mxu0 %v847
      %v958 = vpop.f32.mrf.mxu0
      %v959 = vadd.f32 %v760, %v958
      %v960 = vpop.f32.mrf.mxu0
      %961 = vdwg.mxu0
      %v962 = vmax.f32 %v859, 0.0
      %v963 = vmax.f32 %v861, 0.0
      %v964 = vmax.f32 %v864, 0.0
      %v965 = vmax.f32 %v866, 0.0
      %v966 = vmax.f32 %v869, 0.0
      %v967 = vmax.f32 %v871, 0.0
      %v968 = vmax.f32 %v874, 0.0
      %v969 = vmax.f32 %v876, 0.0
      %v970 = vmax.f32 %v879, 0.0
      %v971 = vmax.f32 %v881, 0.0
      %v972 = vmax.f32 %v884, 0.0
      %v973 = vmax.f32 %v886, 0.0
      %v974 = vmax.f32 %v889, 0.0
      %v975 = vmax.f32 %v891, 0.0
      %v976 = vmax.f32 %v894, 0.0
      %v977 = vmax.f32 %v896, 0.0
      %v978 = vmax.f32 %v899, 0.0
      %v979 = vmax.f32 %v901, 0.0
      %v980 = vmax.f32 %v904, 0.0
      %v981 = vmax.f32 %v906, 0.0
      %v982 = vmax.f32 %v909, 0.0
      %v983 = vmax.f32 %v911, 0.0
      %v984 = vmax.f32 %v914, 0.0
      %v985 = vmax.f32 %v916, 0.0
      %v986 = vmax.f32 %v919, 0.0
      %v987 = vmax.f32 %v921, 0.0
      %v988 = vmax.f32 %v924, 0.0
      %v989 = vmax.f32 %v926, 0.0
      %v990 = vmax.f32 %v929, 0.0
      %v991 = vmax.f32 %v931, 0.0
      %v992 = vmax.f32 %v934, 0.0
      %v993 = vmax.f32 %v936, 0.0
      %v994 = vmax.f32 %v939, 0.0
      %v995 = vmax.f32 %v941, 0.0
      %v996 = vmax.f32 %v944, 0.0
      %v997 = vmax.f32 %v946, 0.0
      %v998 = vmax.f32 %v949, 0.0
      %v999 = vmax.f32 %v951, 0.0
      %v1000 = vmax.f32 %v954, 0.0
      %v1001 = vmax.f32 %v956, 0.0
      %v1002 = vmax.f32 %v959, 0.0
      %v1003 = vld [vmem:[%s1] sm:$0xff]
      %v1004 = vld [vmem:[%s1 + $0x8] sm:$0xff]
      %v1005 = vld [vmem:[%s1 + $0x10] sm:$0xff]
      %v1006 = vld [vmem:[%s1 + $0x18] sm:$0xff]
      %v1007 = vld [vmem:[%s1 + $0x20] sm:$0xff]
      %v1008 = vld [vmem:[%s1 + $0x28] sm:$0xff]
      %v1009 = vld [vmem:[%s1 + $0x30] sm:$0xff]
      %v1010 = vld [vmem:[%s1 + $0x38] sm:$0xff]
      %v1011 = vld [vmem:[%s1 + $0x40] sm:$0xff]
      %v1012 = vld [vmem:[%s1 + $0x48] sm:$0xff]
      %v1013 = vld [vmem:[%s1 + $0x50] sm:$0xff]
      %v1014 = vld [vmem:[%s1 + $0x58] sm:$0xff]
      %v1015 = vld [vmem:[%s1 + $0x60] sm:$0xff]
      %v1016 = vld [vmem:[%s1 + $0x68] sm:$0xff]
      %v1017 = vld [vmem:[%s1 + $0x70] sm:$0xff]
      %v1018 = vld [vmem:[%s1 + $0x78] sm:$0xff]
      %v1019 = vld [vmem:[%s1 + $0x80] sm:$0xff]
      %v1020 = vld [vmem:[%s1 + $0x88] sm:$0xff]
      %v1021 = vld [vmem:[%s1 + $0x90] sm:$0xff]
      %v1022 = vld [vmem:[%s1 + $0x98] sm:$0xff]
      %v1023 = vld [vmem:[%s1 + $0xa0] sm:$0xff]
      %v1024 = vld [vmem:[%s1 + $0xa8] sm:$0xff]
      %v1025 = vld [vmem:[%s1 + $0xb0] sm:$0xff]
      %v1026 = vld [vmem:[%s1 + $0xb8] sm:$0xff]
      %v1027 = vld [vmem:[%s1 + $0xc0] sm:$0xff]
      %v1028 = vld [vmem:[%s1 + $0xc8] sm:$0xff]
      %v1029 = vld [vmem:[%s1 + $0xd0] sm:$0xff]
      %v1030 = vld [vmem:[%s1 + $0xd8] sm:$0xff]
      %v1031 = vld [vmem:[%s1 + $0xe0] sm:$0xff]
      %v1032 = vld [vmem:[%s1 + $0xe8] sm:$0xff]
      %v1033 = vld [vmem:[%s1 + $0xf0] sm:$0xff]
      %v1034 = vld [vmem:[%s1 + $0xf8] sm:$0xff]
      %v1035 = vld [vmem:[%s1 + $0x100] sm:$0xff]
      %v1036 = vld [vmem:[%s1 + $0x108] sm:$0xff]
      %v1037 = vld [vmem:[%s1 + $0x110] sm:$0xff]
      %v1038 = vld [vmem:[%s1 + $0x118] sm:$0xff]
      %v1039 = vld [vmem:[%s1 + $0x120] sm:$0xff]
      %v1040 = vld [vmem:[%s1 + $0x128] sm:$0xff]
      %v1041 = vld [vmem:[%s1 + $0x130] sm:$0xff]
      %v1042 = vld [vmem:[%s1 + $0x138] sm:$0xff]
      %v1043 = vld [vmem:[%s1 + $0x140] sm:$0xf]
      %1045 = vset.pattern.permute.xlu0 0
      %1046 = vperm.xlu0 %1045, %v1003
      %v1047 = vpop.permute.xlu0 %1046
      %1050 = vset.pattern.permute.xlu0 0
      %1051 = vperm.xlu0 %1050, %v1004
      %v1052 = vpop.permute.xlu0 %1051
      %1055 = vset.pattern.permute.xlu0 0
      %1056 = vperm.xlu0 %1055, %v1005
      %v1057 = vpop.permute.xlu0 %1056
      %1060 = vset.pattern.permute.xlu0 0
      %1061 = vperm.xlu0 %1060, %v1006
      %v1062 = vpop.permute.xlu0 %1061
      %1065 = vset.pattern.permute.xlu0 0
      %1066 = vperm.xlu0 %1065, %v1007
      %v1067 = vpop.permute.xlu0 %1066
      %1070 = vset.pattern.permute.xlu0 0
      %1071 = vperm.xlu0 %1070, %v1008
      %v1072 = vpop.permute.xlu0 %1071
      %1075 = vset.pattern.permute.xlu0 0
      %1076 = vperm.xlu0 %1075, %v1009
      %v1077 = vpop.permute.xlu0 %1076
      %1080 = vset.pattern.permute.xlu0 0
      %1081 = vperm.xlu0 %1080, %v1010
      %v1082 = vpop.permute.xlu0 %1081
      %1085 = vset.pattern.permute.xlu0 0
      %1086 = vperm.xlu0 %1085, %v1011
      %v1087 = vpop.permute.xlu0 %1086
      %1090 = vset.pattern.permute.xlu0 0
      %1091 = vperm.xlu0 %1090, %v1012
      %v1092 = vpop.permute.xlu0 %1091
      %1095 = vset.pattern.permute.xlu0 0
      %1096 = vperm.xlu0 %1095, %v1013
      %v1097 = vpop.permute.xlu0 %1096
      %1100 = vset.pattern.permute.xlu0 0
      %1101 = vperm.xlu0 %1100, %v1014
      %v1102 = vpop.permute.xlu0 %1101
      %1105 = vset.pattern.permute.xlu0 0
      %1106 = vperm.xlu0 %1105, %v1015
      %v1107 = vpop.permute.xlu0 %1106
      %1110 = vset.pattern.permute.xlu0 0
      %1111 = vperm.xlu0 %1110, %v1016
      %v1112 = vpop.permute.xlu0 %1111
      %1115 = vset.pattern.permute.xlu0 0
      %1116 = vperm.xlu0 %1115, %v1017
      %v1117 = vpop.permute.xlu0 %1116
      %1120 = vset.pattern.permute.xlu0 0
      %1121 = vperm.xlu0 %1120, %v1018
      %v1122 = vpop.permute.xlu0 %1121
      %1125 = vset.pattern.permute.xlu0 0
      %1126 = vperm.xlu0 %1125, %v1019
      %v1127 = vpop.permute.xlu0 %1126
      %1130 = vset.pattern.permute.xlu0 0
      %1131 = vperm.xlu0 %1130, %v1020
      %v1132 = vpop.permute.xlu0 %1131
      %1135 = vset.pattern.permute.xlu0 0
      %1136 = vperm.xlu0 %1135, %v1021
      %v1137 = vpop.permute.xlu0 %1136
      %1140 = vset.pattern.permute.xlu0 0
      %1141 = vperm.xlu0 %1140, %v1022
      %v1142 = vpop.permute.xlu0 %1141
      %1145 = vset.pattern.permute.xlu0 0
      %1146 = vperm.xlu0 %1145, %v1023
      %v1147 = vpop.permute.xlu0 %1146
      %1150 = vset.pattern.permute.xlu0 0
      %1151 = vperm.xlu0 %1150, %v1024
      %v1152 = vpop.permute.xlu0 %1151
      %1155 = vset.pattern.permute.xlu0 0
      %1156 = vperm.xlu0 %1155, %v1025
      %v1157 = vpop.permute.xlu0 %1156
      %1160 = vset.pattern.permute.xlu0 0
      %1161 = vperm.xlu0 %1160, %v1026
      %v1162 = vpop.permute.xlu0 %1161
      %1165 = vset.pattern.permute.xlu0 0
      %1166 = vperm.xlu0 %1165, %v1027
      %v1167 = vpop.permute.xlu0 %1166
      %1170 = vset.pattern.permute.xlu0 0
      %1171 = vperm.xlu0 %1170, %v1028
      %v1172 = vpop.permute.xlu0 %1171
      %1175 = vset.pattern.permute.xlu0 0
      %1176 = vperm.xlu0 %1175, %v1029
      %v1177 = vpop.permute.xlu0 %1176
      %1180 = vset.pattern.permute.xlu0 0
      %1181 = vperm.xlu0 %1180, %v1030
      %v1182 = vpop.permute.xlu0 %1181
      %1185 = vset.pattern.permute.xlu0 0
      %1186 = vperm.xlu0 %1185, %v1031
      %v1187 = vpop.permute.xlu0 %1186
      %1190 = vset.pattern.permute.xlu0 0
      %1191 = vperm.xlu0 %1190, %v1032
      %v1192 = vpop.permute.xlu0 %1191
      %1195 = vset.pattern.permute.xlu0 0
      %1196 = vperm.xlu0 %1195, %v1033
      %v1197 = vpop.permute.xlu0 %1196
      %1200 = vset.pattern.permute.xlu0 0
      %1201 = vperm.xlu0 %1200, %v1034
      %v1202 = vpop.permute.xlu0 %1201
      %1205 = vset.pattern.permute.xlu0 0
      %1206 = vperm.xlu0 %1205, %v1035
      %v1207 = vpop.permute.xlu0 %1206
      %1210 = vset.pattern.permute.xlu0 0
      %1211 = vperm.xlu0 %1210, %v1036
      %v1212 = vpop.permute.xlu0 %1211
      %1215 = vset.pattern.permute.xlu0 0
      %1216 = vperm.xlu0 %1215, %v1037
      %v1217 = vpop.permute.xlu0 %1216
      %1220 = vset.pattern.permute.xlu0 0
      %1221 = vperm.xlu0 %1220, %v1038
      %v1222 = vpop.permute.xlu0 %1221
      %1225 = vset.pattern.permute.xlu0 0
      %1226 = vperm.xlu0 %1225, %v1039
      %v1227 = vpop.permute.xlu0 %1226
      %1230 = vset.pattern.permute.xlu0 0
      %1231 = vperm.xlu0 %1230, %v1040
      %v1232 = vpop.permute.xlu0 %1231
      %1235 = vset.pattern.permute.xlu0 0
      %1236 = vperm.xlu0 %1235, %v1041
      %v1237 = vpop.permute.xlu0 %1236
      %1240 = vset.pattern.permute.xlu0 0
      %1241 = vperm.xlu0 %1240, %v1042
      %v1242 = vpop.permute.xlu0 %1241
      %1245 = vset.pattern.permute.xlu0 0
      %1246 = vperm.xlu0 %1245, %v1043
      %v1247 = vpop.permute.xlu0 %1246
      %v1249 = vmul.f32 %v962, %v1047
      %v1250 = vmul.f32 %v963, %v1052
      %v1251 = vmul.f32 %v964, %v1057
      %v1252 = vmul.f32 %v965, %v1062
      %v1253 = vmul.f32 %v966, %v1067
      %v1254 = vmul.f32 %v967, %v1072
      %v1255 = vmul.f32 %v968, %v1077
      %v1256 = vmul.f32 %v969, %v1082
      %v1257 = vmul.f32 %v970, %v1087
      %v1258 = vmul.f32 %v971, %v1092
      %v1259 = vmul.f32 %v972, %v1097
      %v1260 = vmul.f32 %v973, %v1102
      %v1261 = vmul.f32 %v974, %v1107
      %v1262 = vmul.f32 %v975, %v1112
      %v1263 = vmul.f32 %v976, %v1117
      %v1264 = vmul.f32 %v977, %v1122
      %v1265 = vmul.f32 %v978, %v1127
      %v1266 = vmul.f32 %v979, %v1132
      %v1267 = vmul.f32 %v980, %v1137
      %v1268 = vmul.f32 %v981, %v1142
      %v1269 = vmul.f32 %v982, %v1147
      %v1270 = vmul.f32 %v983, %v1152
      %v1271 = vmul.f32 %v984, %v1157
      %v1272 = vmul.f32 %v985, %v1162
      %v1273 = vmul.f32 %v986, %v1167
      %v1274 = vmul.f32 %v987, %v1172
      %v1275 = vmul.f32 %v988, %v1177
      %v1276 = vmul.f32 %v989, %v1182
      %v1277 = vmul.f32 %v990, %v1187
      %v1278 = vmul.f32 %v991, %v1192
      %v1279 = vmul.f32 %v992, %v1197
      %v1280 = vmul.f32 %v993, %v1202
      %v1281 = vmul.f32 %v994, %v1207
      %v1282 = vmul.f32 %v995, %v1212
      %v1283 = vmul.f32 %v996, %v1217
      %v1284 = vmul.f32 %v997, %v1222
      %v1285 = vmul.f32 %v998, %v1227
      %v1286 = vmul.f32 %v999, %v1232
      %v1287 = vmul.f32 %v1000, %v1237
      %v1288 = vmul.f32 %v1001, %v1242
      %v1289 = vmul.f32 %v1002, %v1247
      %1290 = vst.msk [vmem:[#allocation2] sm:$0xf] %vm577, 0
      %1291 = vst.msk [vmem:[#allocation2 + $0x4] sm:$0xf] %vm577, 0
      %vm1292 = vcmask 517120
      %vm1293 = vsmask.f32 1280
      %vm1294 = vmand %vm1292, %vm1293
      %v1295 = vld [vmem:[#allocation2 + $0x8] sm:$0x3]
      %v1296 = vsel %vm1294, 0, %v1295
      %1297 = vst [vmem:[#allocation2 + $0x8] sm:$0x3] %v1296
      %vm1298 = vcmask 519171
      %vm1299 = vsmask.f32 7950
      %vm1300 = vmand %vm1298, %vm1299
      %v1301 = vld [vmem:[#allocation2 + $0xa8] sm:$0x8]
      %v1302 = vsel %vm1300, 0, %v1301
      %1303 = vst [vmem:[#allocation2 + $0xa8] sm:$0x8] %v1302
      %1304 = vst.msk [vmem:[#allocation2 + $0xac] sm:$0xf] %vm577, 0
      %1305 = vst.msk [vmem:[#allocation2 + $0xb0] sm:$0xf] %vm577, 0
      %vm1306 = vcmask 516096
      %1307 = vst.msk [vmem:[#allocation2 + $0xb4] sm:$0x1] %vm1306, 0
      %v1308 = vpack.c.bf16 %v1249, %v1249
      %v1309 = vpack.c.bf16 %v1250, %v1250
      %v1310 = vpack.c.bf16 %v1251, %v1251
      %v1311 = vpack.c.bf16 %v1252, %v1252
      %v1312 = vpack.c.bf16 %v1253, %v1253
      %v1313 = vpack.c.bf16 %v1254, %v1254
      %v1314 = vpack.c.bf16 %v1255, %v1255
      %v1315 = vpack.c.bf16 %v1256, %v1256
      %v1316 = vpack.c.bf16 %v1257, %v1257
      %v1317 = vpack.c.bf16 %v1258, %v1258
      %v1318 = vpack.c.bf16 %v1259, %v1259
      %v1319 = vpack.c.bf16 %v1260, %v1260
      %v1320 = vpack.c.bf16 %v1261, %v1261
      %v1321 = vpack.c.bf16 %v1262, %v1262
      %v1322 = vpack.c.bf16 %v1263, %v1263
      %v1323 = vpack.c.bf16 %v1264, %v1264
      %v1324 = vpack.c.bf16 %v1265, %v1265
      %v1325 = vpack.c.bf16 %v1266, %v1266
      %v1326 = vpack.c.bf16 %v1267, %v1267
      %v1327 = vpack.c.bf16 %v1268, %v1268
      %v1328 = vpack.c.bf16 %v1269, %v1269
      %v1329 = vpack.c.bf16 %v1270, %v1270
      %v1330 = vpack.c.bf16 %v1271, %v1271
      %v1331 = vpack.c.bf16 %v1272, %v1272
      %v1332 = vpack.c.bf16 %v1273, %v1273
      %v1333 = vpack.c.bf16 %v1274, %v1274
      %v1334 = vpack.c.bf16 %v1275, %v1275
      %v1335 = vpack.c.bf16 %v1276, %v1276
      %v1336 = vpack.c.bf16 %v1277, %v1277
      %v1337 = vpack.c.bf16 %v1278, %v1278
      %v1338 = vpack.c.bf16 %v1279, %v1279
      %v1339 = vpack.c.bf16 %v1280, %v1280
      %v1340 = vpack.c.bf16 %v1281, %v1281
      %v1341 = vpack.c.bf16 %v1282, %v1282
      %v1342 = vpack.c.bf16 %v1283, %v1283
      %v1343 = vpack.c.bf16 %v1284, %v1284
      %v1344 = vpack.c.bf16 %v1285, %v1285
      %v1345 = vpack.c.bf16 %v1286, %v1286
      %v1346 = vpack.c.bf16 %v1287, %v1287
      %v1347 = vpack.c.bf16 %v1288, %v1288
      %v1348 = vpack.c.bf16 %v1289, %v1289
      %vm1349 = vsmask.f32 5392
      %vm1350 = vmor %vm1293, %vm1349
      %v1352 = vshrl.u32 %v1308, 16
      %v1354 = vrot.slane %v1352, 6
      %v1355 = vshll.u32 %v1308, 16
      %v1357 = vrot.slane %v1355, 7
      %v1358 = vor.u32 %v1354, %v1357
      %v1359 = vrot.slane %v1358, 4
      %v1361 = vshrl.u32 %v1309, 16
      %v1363 = vrot.slane %v1361, 6
      %v1364 = vshll.u32 %v1309, 16
      %v1366 = vrot.slane %v1364, 7
      %v1367 = vor.u32 %v1363, %v1366
      %v1368 = vsel %vm1350, %v1359, %v1367
      %v1369 = vrot.slane %v1367, 4
      %v1371 = vshrl.u32 %v1310, 16
      %v1373 = vrot.slane %v1371, 6
      %v1374 = vshll.u32 %v1310, 16
      %v1376 = vrot.slane %v1374, 7
      %v1377 = vor.u32 %v1373, %v1376
      %v1378 = vsel %vm1350, %v1369, %v1377
      %v1379 = vrot.slane %v1377, 4
      %v1381 = vshrl.u32 %v1311, 16
      %v1383 = vrot.slane %v1381, 6
      %v1384 = vshll.u32 %v1311, 16
      %v1386 = vrot.slane %v1384, 7
      %v1387 = vor.u32 %v1383, %v1386
      %v1388 = vsel %vm1350, %v1379, %v1387
      %v1389 = vrot.slane %v1387, 4
      %v1391 = vshrl.u32 %v1312, 16
      %v1393 = vrot.slane %v1391, 6
      %v1394 = vshll.u32 %v1312, 16
      %v1396 = vrot.slane %v1394, 7
      %v1397 = vor.u32 %v1393, %v1396
      %v1398 = vsel %vm1350, %v1389, %v1397
      %v1399 = vrot.slane %v1397, 4
      %v1401 = vshrl.u32 %v1313, 16
      %v1403 = vrot.slane %v1401, 6
      %v1404 = vshll.u32 %v1313, 16
      %v1406 = vrot.slane %v1404, 7
      %v1407 = vor.u32 %v1403, %v1406
      %v1408 = vsel %vm1350, %v1399, %v1407
      %v1409 = vrot.slane %v1407, 4
      %v1411 = vshrl.u32 %v1314, 16
      %v1413 = vrot.slane %v1411, 6
      %v1414 = vshll.u32 %v1314, 16
      %v1416 = vrot.slane %v1414, 7
      %v1417 = vor.u32 %v1413, %v1416
      %v1418 = vsel %vm1350, %v1409, %v1417
      %v1419 = vrot.slane %v1417, 4
      %v1421 = vshrl.u32 %v1315, 16
      %v1423 = vrot.slane %v1421, 6
      %v1424 = vshll.u32 %v1315, 16
      %v1426 = vrot.slane %v1424, 7
      %v1427 = vor.u32 %v1423, %v1426
      %v1428 = vsel %vm1350, %v1419, %v1427
      %v1429 = vrot.slane %v1427, 4
      %v1431 = vshrl.u32 %v1316, 16
      %v1433 = vrot.slane %v1431, 6
      %v1434 = vshll.u32 %v1316, 16
      %v1436 = vrot.slane %v1434, 7
      %v1437 = vor.u32 %v1433, %v1436
      %v1438 = vsel %vm1350, %v1429, %v1437
      %v1439 = vrot.slane %v1437, 4
      %v1441 = vshrl.u32 %v1317, 16
      %v1443 = vrot.slane %v1441, 6
      %v1444 = vshll.u32 %v1317, 16
      %v1446 = vrot.slane %v1444, 7
      %v1447 = vor.u32 %v1443, %v1446
      %v1448 = vsel %vm1350, %v1439, %v1447
      %v1449 = vrot.slane %v1447, 4
      %v1451 = vshrl.u32 %v1318, 16
      %v1453 = vrot.slane %v1451, 6
      %v1454 = vshll.u32 %v1318, 16
      %v1456 = vrot.slane %v1454, 7
      %v1457 = vor.u32 %v1453, %v1456
      %v1458 = vsel %vm1350, %v1449, %v1457
      %v1459 = vrot.slane %v1457, 4
      %v1461 = vshrl.u32 %v1319, 16
      %v1463 = vrot.slane %v1461, 6
      %v1464 = vshll.u32 %v1319, 16
      %v1466 = vrot.slane %v1464, 7
      %v1467 = vor.u32 %v1463, %v1466
      %v1468 = vsel %vm1350, %v1459, %v1467
      %v1469 = vrot.slane %v1467, 4
      %v1471 = vshrl.u32 %v1320, 16
      %v1473 = vrot.slane %v1471, 6
      %v1474 = vshll.u32 %v1320, 16
      %v1476 = vrot.slane %v1474, 7
      %v1477 = vor.u32 %v1473, %v1476
      %v1478 = vsel %vm1350, %v1469, %v1477
      %v1479 = vrot.slane %v1477, 4
      %v1481 = vshrl.u32 %v1321, 16
      %v1483 = vrot.slane %v1481, 6
      %v1484 = vshll.u32 %v1321, 16
      %v1486 = vrot.slane %v1484, 7
      %v1487 = vor.u32 %v1483, %v1486
      %v1488 = vsel %vm1350, %v1479, %v1487
      %v1489 = vrot.slane %v1487, 4
      %v1491 = vshrl.u32 %v1322, 16
      %v1493 = vrot.slane %v1491, 6
      %v1494 = vshll.u32 %v1322, 16
      %v1496 = vrot.slane %v1494, 7
      %v1497 = vor.u32 %v1493, %v1496
      %v1498 = vsel %vm1350, %v1489, %v1497
      %v1499 = vrot.slane %v1497, 4
      %v1501 = vshrl.u32 %v1323, 16
      %v1503 = vrot.slane %v1501, 6
      %v1504 = vshll.u32 %v1323, 16
      %v1506 = vrot.slane %v1504, 7
      %v1507 = vor.u32 %v1503, %v1506
      %v1508 = vsel %vm1350, %v1499, %v1507
      %v1509 = vrot.slane %v1507, 4
      %v1511 = vshrl.u32 %v1324, 16
      %v1513 = vrot.slane %v1511, 6
      %v1514 = vshll.u32 %v1324, 16
      %v1516 = vrot.slane %v1514, 7
      %v1517 = vor.u32 %v1513, %v1516
      %v1518 = vsel %vm1350, %v1509, %v1517
      %v1519 = vrot.slane %v1517, 4
      %v1521 = vshrl.u32 %v1325, 16
      %v1523 = vrot.slane %v1521, 6
      %v1524 = vshll.u32 %v1325, 16
      %v1526 = vrot.slane %v1524, 7
      %v1527 = vor.u32 %v1523, %v1526
      %v1528 = vsel %vm1350, %v1519, %v1527
      %v1529 = vrot.slane %v1527, 4
      %v1531 = vshrl.u32 %v1326, 16
      %v1533 = vrot.slane %v1531, 6
      %v1534 = vshll.u32 %v1326, 16
      %v1536 = vrot.slane %v1534, 7
      %v1537 = vor.u32 %v1533, %v1536
      %v1538 = vsel %vm1350, %v1529, %v1537
      %v1539 = vrot.slane %v1537, 4
      %v1541 = vshrl.u32 %v1327, 16
      %v1543 = vrot.slane %v1541, 6
      %v1544 = vshll.u32 %v1327, 16
      %v1546 = vrot.slane %v1544, 7
      %v1547 = vor.u32 %v1543, %v1546
      %v1548 = vsel %vm1350, %v1539, %v1547
      %v1549 = vrot.slane %v1547, 4
      %v1551 = vshrl.u32 %v1328, 16
      %v1553 = vrot.slane %v1551, 6
      %v1554 = vshll.u32 %v1328, 16
      %v1556 = vrot.slane %v1554, 7
      %v1557 = vor.u32 %v1553, %v1556
      %v1558 = vsel %vm1350, %v1549, %v1557
      %v1559 = vrot.slane %v1557, 4
      %v1561 = vshrl.u32 %v1329, 16
      %v1563 = vrot.slane %v1561, 6
      %v1564 = vshll.u32 %v1329, 16
      %v1566 = vrot.slane %v1564, 7
      %v1567 = vor.u32 %v1563, %v1566
      %v1568 = vsel %vm1350, %v1559, %v1567
      %v1569 = vrot.slane %v1567, 4
      %v1571 = vshrl.u32 %v1330, 16
      %v1573 = vrot.slane %v1571, 6
      %v1574 = vshll.u32 %v1330, 16
      %v1576 = vrot.slane %v1574, 7
      %v1577 = vor.u32 %v1573, %v1576
      %v1578 = vsel %vm1350, %v1569, %v1577
      %v1579 = vrot.slane %v1577, 4
      %v1581 = vshrl.u32 %v1331, 16
      %v1583 = vrot.slane %v1581, 6
      %v1584 = vshll.u32 %v1331, 16
      %v1586 = vrot.slane %v1584, 7
      %v1587 = vor.u32 %v1583, %v1586
      %v1588 = vsel %vm1350, %v1579, %v1587
      %v1589 = vrot.slane %v1587, 4
      %v1591 = vshrl.u32 %v1332, 16
      %v1593 = vrot.slane %v1591, 6
      %v1594 = vshll.u32 %v1332, 16
      %v1596 = vrot.slane %v1594, 7
      %v1597 = vor.u32 %v1593, %v1596
      %v1598 = vsel %vm1350, %v1589, %v1597
      %v1599 = vrot.slane %v1597, 4
      %v1601 = vshrl.u32 %v1333, 16
      %v1603 = vrot.slane %v1601, 6
      %v1604 = vshll.u32 %v1333, 16
      %v1606 = vrot.slane %v1604, 7
      %v1607 = vor.u32 %v1603, %v1606
      %v1608 = vsel %vm1350, %v1599, %v1607
      %v1609 = vrot.slane %v1607, 4
      %v1611 = vshrl.u32 %v1334, 16
      %v1613 = vrot.slane %v1611, 6
      %v1614 = vshll.u32 %v1334, 16
      %v1616 = vrot.slane %v1614, 7
      %v1617 = vor.u32 %v1613, %v1616
      %v1618 = vsel %vm1350, %v1609, %v1617
      %v1619 = vrot.slane %v1617, 4
      %v1621 = vshrl.u32 %v1335, 16
      %v1623 = vrot.slane %v1621, 6
      %v1624 = vshll.u32 %v1335, 16
      %v1626 = vrot.slane %v1624, 7
      %v1627 = vor.u32 %v1623, %v1626
      %v1628 = vsel %vm1350, %v1619, %v1627
      %v1629 = vrot.slane %v1627, 4
      %v1631 = vshrl.u32 %v1336, 16
      %v1633 = vrot.slane %v1631, 6
      %v1634 = vshll.u32 %v1336, 16
      %v1636 = vrot.slane %v1634, 7
      %v1637 = vor.u32 %v1633, %v1636
      %v1638 = vsel %vm1350, %v1629, %v1637
      %v1639 = vrot.slane %v1637, 4
      %v1641 = vshrl.u32 %v1337, 16
      %v1643 = vrot.slane %v1641, 6
      %v1644 = vshll.u32 %v1337, 16
      %v1646 = vrot.slane %v1644, 7
      %v1647 = vor.u32 %v1643, %v1646
      %v1648 = vsel %vm1350, %v1639, %v1647
      %v1649 = vrot.slane %v1647, 4
      %v1651 = vshrl.u32 %v1338, 16
      %v1653 = vrot.slane %v1651, 6
      %v1654 = vshll.u32 %v1338, 16
      %v1656 = vrot.slane %v1654, 7
      %v1657 = vor.u32 %v1653, %v1656
      %v1658 = vsel %vm1350, %v1649, %v1657
      %v1659 = vrot.slane %v1657, 4
      %v1661 = vshrl.u32 %v1339, 16
      %v1663 = vrot.slane %v1661, 6
      %v1664 = vshll.u32 %v1339, 16
      %v1666 = vrot.slane %v1664, 7
      %v1667 = vor.u32 %v1663, %v1666
      %v1668 = vsel %vm1350, %v1659, %v1667
      %v1669 = vrot.slane %v1667, 4
      %v1671 = vshrl.u32 %v1340, 16
      %v1673 = vrot.slane %v1671, 6
      %v1674 = vshll.u32 %v1340, 16
      %v1676 = vrot.slane %v1674, 7
      %v1677 = vor.u32 %v1673, %v1676
      %v1678 = vsel %vm1350, %v1669, %v1677
      %v1679 = vrot.slane %v1677, 4
      %v1681 = vshrl.u32 %v1341, 16
      %v1683 = vrot.slane %v1681, 6
      %v1684 = vshll.u32 %v1341, 16
      %v1686 = vrot.slane %v1684, 7
      %v1687 = vor.u32 %v1683, %v1686
      %v1688 = vsel %vm1350, %v1679, %v1687
      %v1689 = vrot.slane %v1687, 4
      %v1691 = vshrl.u32 %v1342, 16
      %v1693 = vrot.slane %v1691, 6
      %v1694 = vshll.u32 %v1342, 16
      %v1696 = vrot.slane %v1694, 7
      %v1697 = vor.u32 %v1693, %v1696
      %v1698 = vsel %vm1350, %v1689, %v1697
      %v1699 = vrot.slane %v1697, 4
      %v1701 = vshrl.u32 %v1343, 16
      %v1703 = vrot.slane %v1701, 6
      %v1704 = vshll.u32 %v1343, 16
      %v1706 = vrot.slane %v1704, 7
      %v1707 = vor.u32 %v1703, %v1706
      %v1708 = vsel %vm1350, %v1699, %v1707
      %v1709 = vrot.slane %v1707, 4
      %v1711 = vshrl.u32 %v1344, 16
      %v1713 = vrot.slane %v1711, 6
      %v1714 = vshll.u32 %v1344, 16
      %v1716 = vrot.slane %v1714, 7
      %v1717 = vor.u32 %v1713, %v1716
      %v1718 = vsel %vm1350, %v1709, %v1717
      %v1719 = vrot.slane %v1717, 4
      %v1721 = vshrl.u32 %v1345, 16
      %v1723 = vrot.slane %v1721, 6
      %v1724 = vshll.u32 %v1345, 16
      %v1726 = vrot.slane %v1724, 7
      %v1727 = vor.u32 %v1723, %v1726
      %v1728 = vsel %vm1350, %v1719, %v1727
      %v1729 = vrot.slane %v1727, 4
      %v1731 = vshrl.u32 %v1346, 16
      %v1733 = vrot.slane %v1731, 6
      %v1734 = vshll.u32 %v1346, 16
      %v1736 = vrot.slane %v1734, 7
      %v1737 = vor.u32 %v1733, %v1736
      %v1738 = vsel %vm1350, %v1729, %v1737
      %v1739 = vrot.slane %v1737, 4
      %v1741 = vshrl.u32 %v1347, 16
      %v1743 = vrot.slane %v1741, 6
      %v1744 = vshll.u32 %v1347, 16
      %v1746 = vrot.slane %v1744, 7
      %v1747 = vor.u32 %v1743, %v1746
      %v1748 = vsel %vm1350, %v1739, %v1747
      %v1749 = vrot.slane %v1747, 4
      %v1751 = vshrl.u32 %v1348, 16
      %v1753 = vrot.slane %v1751, 6
      %v1754 = vshll.u32 %v1348, 16
      %v1756 = vrot.slane %v1754, 7
      %v1757 = vor.u32 %v1753, %v1756
      %v1758 = vsel %vm1350, %v1749, %v1757
      %vm1800 = vcmask 519169
      %vm1801 = vsmask.f32 7942
      %vm1802 = vmand %vm1800, %vm1801
      %v1803 = vld [vmem:[#allocation2 + $0x8] sm:$0xe]
      %v1804 = vsel %vm1802, %v1358, %v1803
      %1805 = vst [vmem:[#allocation2 + $0x8] sm:$0xe] %v1804
      %1806 = vst.msk [vmem:[#allocation2 + $0xc] sm:$0xf] %vm577, %v1368
      %1807 = vst.msk [vmem:[#allocation2 + $0x10] sm:$0xf] %vm577, %v1378
      %1808 = vst.msk [vmem:[#allocation2 + $0x14] sm:$0xf] %vm577, %v1388
      %1809 = vst.msk [vmem:[#allocation2 + $0x18] sm:$0xf] %vm577, %v1398
      %1810 = vst.msk [vmem:[#allocation2 + $0x1c] sm:$0xf] %vm577, %v1408
      %1811 = vst.msk [vmem:[#allocation2 + $0x20] sm:$0xf] %vm577, %v1418
      %1812 = vst.msk [vmem:[#allocation2 + $0x24] sm:$0xf] %vm577, %v1428
      %1813 = vst.msk [vmem:[#allocation2 + $0x28] sm:$0xf] %vm577, %v1438
      %1814 = vst.msk [vmem:[#allocation2 + $0x2c] sm:$0xf] %vm577, %v1448
      %1815 = vst.msk [vmem:[#allocation2 + $0x30] sm:$0xf] %vm577, %v1458
      %1816 = vst.msk [vmem:[#allocation2 + $0x34] sm:$0xf] %vm577, %v1468
      %1817 = vst.msk [vmem:[#allocation2 + $0x38] sm:$0xf] %vm577, %v1478
      %1818 = vst.msk [vmem:[#allocation2 + $0x3c] sm:$0xf] %vm577, %v1488
      %1819 = vst.msk [vmem:[#allocation2 + $0x40] sm:$0xf] %vm577, %v1498
      %1820 = vst.msk [vmem:[#allocation2 + $0x44] sm:$0xf] %vm577, %v1508
      %1821 = vst.msk [vmem:[#allocation2 + $0x48] sm:$0xf] %vm577, %v1518
      %1822 = vst.msk [vmem:[#allocation2 + $0x4c] sm:$0xf] %vm577, %v1528
      %1823 = vst.msk [vmem:[#allocation2 + $0x50] sm:$0xf] %vm577, %v1538
      %1824 = vst.msk [vmem:[#allocation2 + $0x54] sm:$0xf] %vm577, %v1548
      %1825 = vst.msk [vmem:[#allocation2 + $0x58] sm:$0xf] %vm577, %v1558
      %1826 = vst.msk [vmem:[#allocation2 + $0x5c] sm:$0xf] %vm577, %v1568
      %1827 = vst.msk [vmem:[#allocation2 + $0x60] sm:$0xf] %vm577, %v1578
      %1828 = vst.msk [vmem:[#allocation2 + $0x64] sm:$0xf] %vm577, %v1588
      %1829 = vst.msk [vmem:[#allocation2 + $0x68] sm:$0xf] %vm577, %v1598
      %1830 = vst.msk [vmem:[#allocation2 + $0x6c] sm:$0xf] %vm577, %v1608
      %1831 = vst.msk [vmem:[#allocation2 + $0x70] sm:$0xf] %vm577, %v1618
      %1832 = vst.msk [vmem:[#allocation2 + $0x74] sm:$0xf] %vm577, %v1628
      %1833 = vst.msk [vmem:[#allocation2 + $0x78] sm:$0xf] %vm577, %v1638
      %1834 = vst.msk [vmem:[#allocation2 + $0x7c] sm:$0xf] %vm577, %v1648
      %1835 = vst.msk [vmem:[#allocation2 + $0x80] sm:$0xf] %vm577, %v1658
      %1836 = vst.msk [vmem:[#allocation2 + $0x84] sm:$0xf] %vm577, %v1668
      %1837 = vst.msk [vmem:[#allocation2 + $0x88] sm:$0xf] %vm577, %v1678
      %1838 = vst.msk [vmem:[#allocation2 + $0x8c] sm:$0xf] %vm577, %v1688
      %1839 = vst.msk [vmem:[#allocation2 + $0x90] sm:$0xf] %vm577, %v1698
      %1840 = vst.msk [vmem:[#allocation2 + $0x94] sm:$0xf] %vm577, %v1708
      %1841 = vst.msk [vmem:[#allocation2 + $0x98] sm:$0xf] %vm577, %v1718
      %1842 = vst.msk [vmem:[#allocation2 + $0x9c] sm:$0xf] %vm577, %v1728
      %1843 = vst.msk [vmem:[#allocation2 + $0xa0] sm:$0xf] %vm577, %v1738
      %1844 = vst.msk [vmem:[#allocation2 + $0xa4] sm:$0xf] %vm577, %v1748
      %vm1845 = vcmask 519168
      %vm1846 = vsmask.f32 3328
      %vm1847 = vmand %vm1845, %vm1846
      %v1848 = vld [vmem:[#allocation2 + $0xa8] sm:$0xf]
      %v1849 = vsel %vm1847, %v1758, %v1848
      %1850 = vst [vmem:[#allocation2 + $0xa8] sm:$0xf] %v1849
      %v1851 = vld [vmem:[#allocation2] sm:$0xf]
      %v1852 = vld [vmem:[#allocation2 + $0x4] sm:$0xf]
      %v1853 = vld [vmem:[#allocation2 + $0x8] sm:$0xf]
      %v1854 = vld [vmem:[#allocation2 + $0xc] sm:$0xf]
      %v1855 = vld [vmem:[#allocation2 + $0x10] sm:$0xf]
      %v1856 = vld [vmem:[#allocation2 + $0x14] sm:$0xf]
      %v1857 = vld [vmem:[#allocation2 + $0x18] sm:$0xf]
      %v1858 = vld [vmem:[#allocation2 + $0x1c] sm:$0xf]
      %v1859 = vld [vmem:[#allocation2 + $0x20] sm:$0xf]
      %v1860 = vld [vmem:[#allocation2 + $0x24] sm:$0xf]
      %v1861 = vld [vmem:[#allocation2 + $0x28] sm:$0xf]
      %v1862 = vld [vmem:[#allocation2 + $0x2c] sm:$0xf]
      %v1863 = vld [vmem:[#allocation2 + $0x30] sm:$0xf]
      %v1864 = vld [vmem:[#allocation2 + $0x34] sm:$0xf]
      %v1865 = vld [vmem:[#allocation2 + $0x38] sm:$0xf]
      %v1866 = vld [vmem:[#allocation2 + $0x3c] sm:$0xf]
      %v1867 = vld [vmem:[#allocation2 + $0x40] sm:$0xf]
      %v1868 = vld [vmem:[#allocation2 + $0x44] sm:$0xf]
      %v1869 = vld [vmem:[#allocation2 + $0x48] sm:$0xf]
      %v1870 = vld [vmem:[#allocation2 + $0x4c] sm:$0xf]
      %v1871 = vld [vmem:[#allocation2 + $0x50] sm:$0xf]
      %v1872 = vld [vmem:[#allocation2 + $0x54] sm:$0xf]
      %v1873 = vld [vmem:[#allocation2 + $0x58] sm:$0xf]
      %v1874 = vld [vmem:[#allocation2 + $0x5c] sm:$0xf]
      %v1875 = vld [vmem:[#allocation2 + $0x60] sm:$0xf]
      %v1876 = vld [vmem:[#allocation2 + $0x64] sm:$0xf]
      %v1877 = vld [vmem:[#allocation2 + $0x68] sm:$0xf]
      %v1878 = vld [vmem:[#allocation2 + $0x6c] sm:$0xf]
      %v1879 = vld [vmem:[#allocation2 + $0x70] sm:$0xf]
      %v1880 = vld [vmem:[#allocation2 + $0x74] sm:$0xf]
      %v1881 = vld [vmem:[#allocation2 + $0x78] sm:$0xf]
      %v1882 = vld [vmem:[#allocation2 + $0x7c] sm:$0xf]
      %v1883 = vld [vmem:[#allocation2 + $0x80] sm:$0xf]
      %v1884 = vld [vmem:[#allocation2 + $0x84] sm:$0xf]
      %v1885 = vld [vmem:[#allocation2 + $0x88] sm:$0xf]
      %v1886 = vld [vmem:[#allocation2 + $0x8c] sm:$0xf]
      %v1887 = vld [vmem:[#allocation2 + $0x90] sm:$0xf]
      %v1888 = vld [vmem:[#allocation2 + $0x94] sm:$0xf]
      %v1889 = vld [vmem:[#allocation2 + $0x98] sm:$0xf]
      %v1890 = vld [vmem:[#allocation2 + $0x9c] sm:$0xf]
      %v1891 = vld [vmem:[#allocation2 + $0xa0] sm:$0x3]
      %v1892 = vld [vmem:[%s8] sm:$0xff]
      %v1893 = vld [vmem:[%s8 + $0x8] sm:$0xff]
      %v1894 = vld [vmem:[%s8 + $0x10] sm:$0xff]
      %v1895 = vld [vmem:[%s8 + $0x18] sm:$0xff]
      %v1896 = vld [vmem:[%s8 + $0x20] sm:$0xff]
      %v1897 = vld [vmem:[%s8 + $0x28] sm:$0xff]
      %v1898 = vld [vmem:[%s8 + $0x30] sm:$0xff]
      %v1899 = vld [vmem:[%s8 + $0x38] sm:$0xff]
      %v1900 = vld [vmem:[#allocation2 + $0xa0] sm:$0x7]
      %s1901 = scalar_lea.vmem %s8, 64
      %v1902 = vld [vmem:[%s1901] sm:$0xff]
      %v1903 = vld [vmem:[%s1901 + $0x8] sm:$0xff]
      %v1904 = vld [vmem:[%s1901 + $0x10] sm:$0xff]
      %v1905 = vld [vmem:[%s1901 + $0x18] sm:$0xff]
      %v1906 = vld [vmem:[%s1901 + $0x20] sm:$0xff]
      %v1907 = vld [vmem:[%s1901 + $0x28] sm:$0xff]
      %v1908 = vld [vmem:[%s1901 + $0x30] sm:$0xff]
      %v1909 = vld [vmem:[%s1901 + $0x38] sm:$0xff]
      %v1951 = vunpack.c.l.b16 %v1851
      %v1952 = vunpack.c.l.b16 %v1852
      %v1953 = vunpack.c.l.b16 %v1853
      %v1954 = vunpack.c.l.b16 %v1854
      %v1955 = vunpack.c.l.b16 %v1855
      %v1956 = vunpack.c.l.b16 %v1856
      %v1957 = vunpack.c.l.b16 %v1857
      %v1958 = vunpack.c.l.b16 %v1858
      %v1959 = vunpack.c.l.b16 %v1859
      %v1960 = vunpack.c.l.b16 %v1860
      %v1961 = vunpack.c.l.b16 %v1861
      %v1962 = vunpack.c.l.b16 %v1862
      %v1963 = vunpack.c.l.b16 %v1863
      %v1964 = vunpack.c.l.b16 %v1864
      %v1965 = vunpack.c.l.b16 %v1865
      %v1966 = vunpack.c.l.b16 %v1866
      %v1967 = vunpack.c.l.b16 %v1867
      %v1968 = vunpack.c.l.b16 %v1868
      %v1969 = vunpack.c.l.b16 %v1869
      %v1970 = vunpack.c.l.b16 %v1870
      %v1971 = vunpack.c.l.b16 %v1871
      %v1972 = vunpack.c.l.b16 %v1872
      %v1973 = vunpack.c.l.b16 %v1873
      %v1974 = vunpack.c.l.b16 %v1874
      %v1975 = vunpack.c.l.b16 %v1875
      %v1976 = vunpack.c.l.b16 %v1876
      %v1977 = vunpack.c.l.b16 %v1877
      %v1978 = vunpack.c.l.b16 %v1878
      %v1979 = vunpack.c.l.b16 %v1879
      %v1980 = vunpack.c.l.b16 %v1880
      %v1981 = vunpack.c.l.b16 %v1881
      %v1982 = vunpack.c.l.b16 %v1882
      %v1983 = vunpack.c.l.b16 %v1883
      %v1984 = vunpack.c.l.b16 %v1884
      %v1985 = vunpack.c.l.b16 %v1885
      %v1986 = vunpack.c.l.b16 %v1886
      %v1987 = vunpack.c.l.b16 %v1887
      %v1988 = vunpack.c.l.b16 %v1888
      %v1989 = vunpack.c.l.b16 %v1889
      %v1990 = vunpack.c.l.b16 %v1890
      %v1991 = vunpack.c.l.b16 %v1900
      %v1992 = vpack.c.b16 %v1952, %v1951
      %v1993 = vpack.c.b16 %v1954, %v1953
      %v1994 = vpack.c.b16 %v1956, %v1955
      %v1995 = vpack.c.b16 %v1958, %v1957
      %v1996 = vpack.c.b16 %v1960, %v1959
      %v1997 = vpack.c.b16 %v1962, %v1961
      %v1998 = vpack.c.b16 %v1964, %v1963
      %v1999 = vpack.c.b16 %v1966, %v1965
      %v2000 = vpack.c.b16 %v1968, %v1967
      %v2001 = vpack.c.b16 %v1970, %v1969
      %v2002 = vpack.c.b16 %v1972, %v1971
      %v2003 = vpack.c.b16 %v1974, %v1973
      %v2004 = vpack.c.b16 %v1976, %v1975
      %v2005 = vpack.c.b16 %v1978, %v1977
      %v2006 = vpack.c.b16 %v1980, %v1979
      %v2007 = vpack.c.b16 %v1982, %v1981
      %v2008 = vpack.c.b16 %v1984, %v1983
      %v2009 = vpack.c.b16 %v1986, %v1985
      %v2010 = vpack.c.b16 %v1988, %v1987
      %v2011 = vpack.c.b16 %v1990, %v1989
      %v2012 = vpack.c.b16 %v1991, %v1991
      %vm2013 = vsmask.f32 7424
      %v2015 = vshrl.u32 %v1992, 16
      %v2017 = vshll.u32 %v1992, 16
      %v2019 = vrot.slane %v2017, 1
      %v2020 = vor.u32 %v2015, %v2019
      %v2022 = vshll.u32 %v1993, 16
      %v2024 = vrot.slane %v2022, 1
      %v2025 = vsel %vm2013, %v2020, %v2024
      %v2026 = vshrl.u32 %v1993, 16
      %v2028 = vor.u32 %v2026, %v2024
      %v2030 = vshll.u32 %v1994, 16
      %v2032 = vrot.slane %v2030, 1
      %v2033 = vsel %vm2013, %v2028, %v2032
      %v2034 = vshrl.u32 %v1994, 16
      %v2036 = vor.u32 %v2034, %v2032
      %v2038 = vshll.u32 %v1995, 16
      %v2040 = vrot.slane %v2038, 1
      %v2041 = vsel %vm2013, %v2036, %v2040
      %v2042 = vshrl.u32 %v1995, 16
      %v2044 = vor.u32 %v2042, %v2040
      %v2046 = vshll.u32 %v1996, 16
      %v2048 = vrot.slane %v2046, 1
      %v2049 = vsel %vm2013, %v2044, %v2048
      %v2050 = vshrl.u32 %v1996, 16
      %v2052 = vor.u32 %v2050, %v2048
      %v2054 = vshll.u32 %v1997, 16
      %v2056 = vrot.slane %v2054, 1
      %v2057 = vsel %vm2013, %v2052, %v2056
      %v2058 = vshrl.u32 %v1997, 16
      %v2060 = vor.u32 %v2058, %v2056
      %v2062 = vshll.u32 %v1998, 16
      %v2064 = vrot.slane %v2062, 1
      %v2065 = vsel %vm2013, %v2060, %v2064
      %v2066 = vshrl.u32 %v1998, 16
      %v2068 = vor.u32 %v2066, %v2064
      %v2070 = vshll.u32 %v1999, 16
      %v2072 = vrot.slane %v2070, 1
      %v2073 = vsel %vm2013, %v2068, %v2072
      %v2074 = vshrl.u32 %v1999, 16
      %v2076 = vor.u32 %v2074, %v2072
      %v2078 = vshll.u32 %v2000, 16
      %v2080 = vrot.slane %v2078, 1
      %v2081 = vsel %vm2013, %v2076, %v2080
      %v2082 = vshrl.u32 %v2000, 16
      %v2084 = vor.u32 %v2082, %v2080
      %v2086 = vshll.u32 %v2001, 16
      %v2088 = vrot.slane %v2086, 1
      %v2089 = vsel %vm2013, %v2084, %v2088
      %v2090 = vshrl.u32 %v2001, 16
      %v2092 = vor.u32 %v2090, %v2088
      %v2094 = vshll.u32 %v2002, 16
      %v2096 = vrot.slane %v2094, 1
      %v2097 = vsel %vm2013, %v2092, %v2096
      %v2098 = vshrl.u32 %v2002, 16
      %v2100 = vor.u32 %v2098, %v2096
      %v2102 = vshll.u32 %v2003, 16
      %v2104 = vrot.slane %v2102, 1
      %v2105 = vsel %vm2013, %v2100, %v2104
      %v2106 = vshrl.u32 %v2003, 16
      %v2108 = vor.u32 %v2106, %v2104
      %v2110 = vshll.u32 %v2004, 16
      %v2112 = vrot.slane %v2110, 1
      %v2113 = vsel %vm2013, %v2108, %v2112
      %v2114 = vshrl.u32 %v2004, 16
      %v2116 = vor.u32 %v2114, %v2112
      %v2118 = vshll.u32 %v2005, 16
      %v2120 = vrot.slane %v2118, 1
      %v2121 = vsel %vm2013, %v2116, %v2120
      %v2122 = vshrl.u32 %v2005, 16
      %v2124 = vor.u32 %v2122, %v2120
      %v2126 = vshll.u32 %v2006, 16
      %v2128 = vrot.slane %v2126, 1
      %v2129 = vsel %vm2013, %v2124, %v2128
      %v2130 = vshrl.u32 %v2006, 16
      %v2132 = vor.u32 %v2130, %v2128
      %v2134 = vshll.u32 %v2007, 16
      %v2136 = vrot.slane %v2134, 1
      %v2137 = vsel %vm2013, %v2132, %v2136
      %v2138 = vshrl.u32 %v2007, 16
      %v2140 = vor.u32 %v2138, %v2136
      %v2142 = vshll.u32 %v2008, 16
      %v2144 = vrot.slane %v2142, 1
      %v2145 = vsel %vm2013, %v2140, %v2144
      %v2146 = vshrl.u32 %v2008, 16
      %v2148 = vor.u32 %v2146, %v2144
      %v2150 = vshll.u32 %v2009, 16
      %v2152 = vrot.slane %v2150, 1
      %v2153 = vsel %vm2013, %v2148, %v2152
      %v2154 = vshrl.u32 %v2009, 16
      %v2156 = vor.u32 %v2154, %v2152
      %v2158 = vshll.u32 %v2010, 16
      %v2160 = vrot.slane %v2158, 1
      %v2161 = vsel %vm2013, %v2156, %v2160
      %v2162 = vshrl.u32 %v2010, 16
      %v2164 = vor.u32 %v2162, %v2160
      %v2166 = vshll.u32 %v2011, 16
      %v2168 = vrot.slane %v2166, 1
      %v2169 = vsel %vm2013, %v2164, %v2168
      %v2170 = vshrl.u32 %v2011, 16
      %v2172 = vor.u32 %v2170, %v2168
      %v2174 = vshll.u32 %v2012, 16
      %v2176 = vrot.slane %v2174, 1
      %v2177 = vsel %vm2013, %v2172, %v2176
      %v2178 = vshrl.u32 %v2012, 16
      %v2180 = vor.u32 %v2178, %v2176
      %v2189 = vunpack.c.l.b16 %v1902
      %v2190 = vunpack.c.h.b16 %v1902
      %v2191 = vunpack.c.l.b16 %v1903
      %v2192 = vunpack.c.h.b16 %v1903
      %v2193 = vunpack.c.l.b16 %v1904
      %v2194 = vunpack.c.h.b16 %v1904
      %v2195 = vunpack.c.l.b16 %v1905
      %v2196 = vunpack.c.h.b16 %v1905
      %v2197 = vunpack.c.l.b16 %v1906
      %v2198 = vunpack.c.h.b16 %v1906
      %v2199 = vunpack.c.l.b16 %v1907
      %v2200 = vunpack.c.h.b16 %v1907
      %v2201 = vunpack.c.l.b16 %v1908
      %v2202 = vunpack.c.h.b16 %v1908
      %v2203 = vunpack.c.l.b16 %v1909
      %v2204 = vunpack.c.h.b16 %v1909
      %v2205 = vpack.c.b16 %v2191, %v2189
      %v2206 = vpack.c.b16 %v2192, %v2190
      %v2207 = vpack.c.b16 %v2195, %v2193
      %v2208 = vpack.c.b16 %v2196, %v2194
      %v2209 = vpack.c.b16 %v2199, %v2197
      %v2210 = vpack.c.b16 %v2200, %v2198
      %v2211 = vpack.c.b16 %v2203, %v2201
      %v2212 = vpack.c.b16 %v2204, %v2202
      %v2222 = vsel %vm497, %v2025, 0
      %v2225 = vsel %vm497, %v2033, 0
      %v2228 = vsel %vm497, %v2041, 0
      %v2231 = vsel %vm497, %v2049, 0
      %v2234 = vsel %vm497, %v2057, 0
      %v2237 = vsel %vm497, %v2065, 0
      %v2240 = vsel %vm497, %v2073, 0
      %v2243 = vsel %vm497, %v2081, 0
      %v2246 = vsel %vm497, %v2089, 0
      %v2249 = vsel %vm497, %v2097, 0
      %v2252 = vsel %vm497, %v2105, 0
      %v2255 = vsel %vm497, %v2113, 0
      %v2258 = vsel %vm497, %v2121, 0
      %v2261 = vsel %vm497, %v2129, 0
      %v2264 = vsel %vm497, %v2137, 0
      %v2267 = vsel %vm497, %v2145, 0
      %v2270 = vsel %vm497, %v2153, 0
      %v2273 = vsel %vm497, %v2161, 0
      %v2276 = vsel %vm497, %v2169, 0
      %v2279 = vsel %vm497, %v2177, 0
      %v2282 = vsel %vm497, %v2180, 0
      %2284 = vmatpush.bf16.msra.mxu0 0
      %2285 = vmatpush.bf16.msra.mxu0 0
      %2286 = vmatpush.bf16.msra.mxu0 0
      %2287 = vmatpush.bf16.msra.mxu0 0
      %2288 = vmatpush.bf16.msra.mxu0 %v2211
      %2289 = vmatpush.bf16.msra.mxu0 %v2209
      %2290 = vmatpush.bf16.msra.mxu0 %v2207
      %2291 = vmatpush.bf16.msra.mxu0 %v2205
      %2292 = vmatmul.bf16.gmra.mxu0 %v2222
      %v2293 = vpop.f32.mrf.mxu0
      %v2294 = vadd.f32 0.0, %v2293
      %v2295 = vpop.f32.mrf.mxu0
      %v2296 = vadd.f32 0.0, %v2295
      %2297 = vmatmul.bf16.gmra.mxu0 %v2225
      %v2298 = vpop.f32.mrf.mxu0
      %v2299 = vadd.f32 0.0, %v2298
      %v2300 = vpop.f32.mrf.mxu0
      %v2301 = vadd.f32 0.0, %v2300
      %2302 = vmatmul.bf16.gmra.mxu0 %v2228
      %v2303 = vpop.f32.mrf.mxu0
      %v2304 = vadd.f32 0.0, %v2303
      %v2305 = vpop.f32.mrf.mxu0
      %v2306 = vadd.f32 0.0, %v2305
      %2307 = vmatmul.bf16.gmra.mxu0 %v2231
      %v2308 = vpop.f32.mrf.mxu0
      %v2309 = vadd.f32 0.0, %v2308
      %v2310 = vpop.f32.mrf.mxu0
      %v2311 = vadd.f32 0.0, %v2310
      %2312 = vmatmul.bf16.gmra.mxu0 %v2234
      %v2313 = vpop.f32.mrf.mxu0
      %v2314 = vadd.f32 0.0, %v2313
      %v2315 = vpop.f32.mrf.mxu0
      %v2316 = vadd.f32 0.0, %v2315
      %2317 = vmatmul.bf16.gmra.mxu0 %v2237
      %v2318 = vpop.f32.mrf.mxu0
      %v2319 = vadd.f32 0.0, %v2318
      %v2320 = vpop.f32.mrf.mxu0
      %v2321 = vadd.f32 0.0, %v2320
      %2322 = vmatmul.bf16.gmra.mxu0 %v2240
      %v2323 = vpop.f32.mrf.mxu0
      %v2324 = vadd.f32 0.0, %v2323
      %v2325 = vpop.f32.mrf.mxu0
      %v2326 = vadd.f32 0.0, %v2325
      %2327 = vmatmul.bf16.gmra.mxu0 %v2243
      %v2328 = vpop.f32.mrf.mxu0
      %v2329 = vadd.f32 0.0, %v2328
      %v2330 = vpop.f32.mrf.mxu0
      %v2331 = vadd.f32 0.0, %v2330
      %2332 = vmatmul.bf16.gmra.mxu0 %v2246
      %v2333 = vpop.f32.mrf.mxu0
      %v2334 = vadd.f32 0.0, %v2333
      %v2335 = vpop.f32.mrf.mxu0
      %v2336 = vadd.f32 0.0, %v2335
      %2337 = vmatmul.bf16.gmra.mxu0 %v2249
      %v2338 = vpop.f32.mrf.mxu0
      %v2339 = vadd.f32 0.0, %v2338
      %v2340 = vpop.f32.mrf.mxu0
      %v2341 = vadd.f32 0.0, %v2340
      %2342 = vmatmul.bf16.gmra.mxu0 %v2252
      %v2343 = vpop.f32.mrf.mxu0
      %v2344 = vadd.f32 0.0, %v2343
      %v2345 = vpop.f32.mrf.mxu0
      %v2346 = vadd.f32 0.0, %v2345
      %2347 = vmatmul.bf16.gmra.mxu0 %v2255
      %v2348 = vpop.f32.mrf.mxu0
      %v2349 = vadd.f32 0.0, %v2348
      %v2350 = vpop.f32.mrf.mxu0
      %v2351 = vadd.f32 0.0, %v2350
      %2352 = vmatmul.bf16.gmra.mxu0 %v2258
      %v2353 = vpop.f32.mrf.mxu0
      %v2354 = vadd.f32 0.0, %v2353
      %v2355 = vpop.f32.mrf.mxu0
      %v2356 = vadd.f32 0.0, %v2355
      %2357 = vmatmul.bf16.gmra.mxu0 %v2261
      %v2358 = vpop.f32.mrf.mxu0
      %v2359 = vadd.f32 0.0, %v2358
      %v2360 = vpop.f32.mrf.mxu0
      %v2361 = vadd.f32 0.0, %v2360
      %2362 = vmatmul.bf16.gmra.mxu0 %v2264
      %v2363 = vpop.f32.mrf.mxu0
      %v2364 = vadd.f32 0.0, %v2363
      %v2365 = vpop.f32.mrf.mxu0
      %v2366 = vadd.f32 0.0, %v2365
      %2367 = vmatmul.bf16.gmra.mxu0 %v2267
      %v2368 = vpop.f32.mrf.mxu0
      %v2369 = vadd.f32 0.0, %v2368
      %v2370 = vpop.f32.mrf.mxu0
      %v2371 = vadd.f32 0.0, %v2370
      %2372 = vmatmul.bf16.gmra.mxu0 %v2270
      %v2373 = vpop.f32.mrf.mxu0
      %v2374 = vadd.f32 0.0, %v2373
      %v2375 = vpop.f32.mrf.mxu0
      %v2376 = vadd.f32 0.0, %v2375
      %2377 = vmatmul.bf16.gmra.mxu0 %v2273
      %v2378 = vpop.f32.mrf.mxu0
      %v2379 = vadd.f32 0.0, %v2378
      %v2380 = vpop.f32.mrf.mxu0
      %v2381 = vadd.f32 0.0, %v2380
      %2382 = vmatmul.bf16.gmra.mxu0 %v2276
      %v2383 = vpop.f32.mrf.mxu0
      %v2384 = vadd.f32 0.0, %v2383
      %v2385 = vpop.f32.mrf.mxu0
      %v2386 = vadd.f32 0.0, %v2385
      %2387 = vmatmul.bf16.gmra.mxu0 %v2279
      %v2388 = vpop.f32.mrf.mxu0
      %v2389 = vadd.f32 0.0, %v2388
      %v2390 = vpop.f32.mrf.mxu0
      %v2391 = vadd.f32 0.0, %v2390
      %2392 = vmatmul.bf16.gmra.mxu0 %v2282
      %v2393 = vpop.f32.mrf.mxu0
      %v2394 = vadd.f32 0.0, %v2393
      %v2395 = vpop.f32.mrf.mxu0
      %2396 = vdwg.mxu0
      %2397 = vmatpush.bf16.msra.mxu0 0
      %2398 = vmatpush.bf16.msra.mxu0 0
      %2399 = vmatpush.bf16.msra.mxu0 0
      %2400 = vmatpush.bf16.msra.mxu0 0
      %2401 = vmatpush.bf16.msra.mxu0 %v2212
      %2402 = vmatpush.bf16.msra.mxu0 %v2210
      %2403 = vmatpush.bf16.msra.mxu0 %v2208
      %2404 = vmatpush.bf16.msra.mxu0 %v2206
      %2405 = vmatmul.bf16.gmra.mxu0 %v2222
      %v2406 = vpop.f32.mrf.mxu0
      %v2407 = vadd.f32 0.0, %v2406
      %v2408 = vpop.f32.mrf.mxu0
      %v2409 = vadd.f32 0.0, %v2408
      %2410 = vmatmul.bf16.gmra.mxu0 %v2225
      %v2411 = vpop.f32.mrf.mxu0
      %v2412 = vadd.f32 0.0, %v2411
      %v2413 = vpop.f32.mrf.mxu0
      %v2414 = vadd.f32 0.0, %v2413
      %2415 = vmatmul.bf16.gmra.mxu0 %v2228
      %v2416 = vpop.f32.mrf.mxu0
      %v2417 = vadd.f32 0.0, %v2416
      %v2418 = vpop.f32.mrf.mxu0
      %v2419 = vadd.f32 0.0, %v2418
      %2420 = vmatmul.bf16.gmra.mxu0 %v2231
      %v2421 = vpop.f32.mrf.mxu0
      %v2422 = vadd.f32 0.0, %v2421
      %v2423 = vpop.f32.mrf.mxu0
      %v2424 = vadd.f32 0.0, %v2423
      %2425 = vmatmul.bf16.gmra.mxu0 %v2234
      %v2426 = vpop.f32.mrf.mxu0
      %v2427 = vadd.f32 0.0, %v2426
      %v2428 = vpop.f32.mrf.mxu0
      %v2429 = vadd.f32 0.0, %v2428
      %2430 = vmatmul.bf16.gmra.mxu0 %v2237
      %v2431 = vpop.f32.mrf.mxu0
      %v2432 = vadd.f32 0.0, %v2431
      %v2433 = vpop.f32.mrf.mxu0
      %v2434 = vadd.f32 0.0, %v2433
      %2435 = vmatmul.bf16.gmra.mxu0 %v2240
      %v2436 = vpop.f32.mrf.mxu0
      %v2437 = vadd.f32 0.0, %v2436
      %v2438 = vpop.f32.mrf.mxu0
      %v2439 = vadd.f32 0.0, %v2438
      %2440 = vmatmul.bf16.gmra.mxu0 %v2243
      %v2441 = vpop.f32.mrf.mxu0
      %v2442 = vadd.f32 0.0, %v2441
      %v2443 = vpop.f32.mrf.mxu0
      %v2444 = vadd.f32 0.0, %v2443
      %2445 = vmatmul.bf16.gmra.mxu0 %v2246
      %v2446 = vpop.f32.mrf.mxu0
      %v2447 = vadd.f32 0.0, %v2446
      %v2448 = vpop.f32.mrf.mxu0
      %v2449 = vadd.f32 0.0, %v2448
      %2450 = vmatmul.bf16.gmra.mxu0 %v2249
      %v2451 = vpop.f32.mrf.mxu0
      %v2452 = vadd.f32 0.0, %v2451
      %v2453 = vpop.f32.mrf.mxu0
      %v2454 = vadd.f32 0.0, %v2453
      %2455 = vmatmul.bf16.gmra.mxu0 %v2252
      %v2456 = vpop.f32.mrf.mxu0
      %v2457 = vadd.f32 0.0, %v2456
      %v2458 = vpop.f32.mrf.mxu0
      %v2459 = vadd.f32 0.0, %v2458
      %2460 = vmatmul.bf16.gmra.mxu0 %v2255
      %v2461 = vpop.f32.mrf.mxu0
      %v2462 = vadd.f32 0.0, %v2461
      %v2463 = vpop.f32.mrf.mxu0
      %v2464 = vadd.f32 0.0, %v2463
      %2465 = vmatmul.bf16.gmra.mxu0 %v2258
      %v2466 = vpop.f32.mrf.mxu0
      %v2467 = vadd.f32 0.0, %v2466
      %v2468 = vpop.f32.mrf.mxu0
      %v2469 = vadd.f32 0.0, %v2468
      %2470 = vmatmul.bf16.gmra.mxu0 %v2261
      %v2471 = vpop.f32.mrf.mxu0
      %v2472 = vadd.f32 0.0, %v2471
      %v2473 = vpop.f32.mrf.mxu0
      %v2474 = vadd.f32 0.0, %v2473
      %2475 = vmatmul.bf16.gmra.mxu0 %v2264
      %v2476 = vpop.f32.mrf.mxu0
      %v2477 = vadd.f32 0.0, %v2476
      %v2478 = vpop.f32.mrf.mxu0
      %v2479 = vadd.f32 0.0, %v2478
      %2480 = vmatmul.bf16.gmra.mxu0 %v2267
      %v2481 = vpop.f32.mrf.mxu0
      %v2482 = vadd.f32 0.0, %v2481
      %v2483 = vpop.f32.mrf.mxu0
      %v2484 = vadd.f32 0.0, %v2483
      %2485 = vmatmul.bf16.gmra.mxu0 %v2270
      %v2486 = vpop.f32.mrf.mxu0
      %v2487 = vadd.f32 0.0, %v2486
      %v2488 = vpop.f32.mrf.mxu0
      %v2489 = vadd.f32 0.0, %v2488
      %2490 = vmatmul.bf16.gmra.mxu0 %v2273
      %v2491 = vpop.f32.mrf.mxu0
      %v2492 = vadd.f32 0.0, %v2491
      %v2493 = vpop.f32.mrf.mxu0
      %v2494 = vadd.f32 0.0, %v2493
      %2495 = vmatmul.bf16.gmra.mxu0 %v2276
      %v2496 = vpop.f32.mrf.mxu0
      %v2497 = vadd.f32 0.0, %v2496
      %v2498 = vpop.f32.mrf.mxu0
      %v2499 = vadd.f32 0.0, %v2498
      %2500 = vmatmul.bf16.gmra.mxu0 %v2279
      %v2501 = vpop.f32.mrf.mxu0
      %v2502 = vadd.f32 0.0, %v2501
      %v2503 = vpop.f32.mrf.mxu0
      %v2504 = vadd.f32 0.0, %v2503
      %2505 = vmatmul.bf16.gmra.mxu0 %v2282
      %v2506 = vpop.f32.mrf.mxu0
      %v2507 = vadd.f32 0.0, %v2506
      %v2508 = vpop.f32.mrf.mxu0
      %2509 = vdwg.mxu0
      %v2511 = vunpack.c.l.b16 %v1891
      %v2512 = vpack.c.b16 %v2511, %v2511
      %v2521 = vunpack.c.l.b16 %v1892
      %v2522 = vunpack.c.h.b16 %v1892
      %v2523 = vunpack.c.l.b16 %v1893
      %v2524 = vunpack.c.h.b16 %v1893
      %v2525 = vunpack.c.l.b16 %v1894
      %v2526 = vunpack.c.h.b16 %v1894
      %v2527 = vunpack.c.l.b16 %v1895
      %v2528 = vunpack.c.h.b16 %v1895
      %v2529 = vunpack.c.l.b16 %v1896
      %v2530 = vunpack.c.h.b16 %v1896
      %v2531 = vunpack.c.l.b16 %v1897
      %v2532 = vunpack.c.h.b16 %v1897
      %v2533 = vunpack.c.l.b16 %v1898
      %v2534 = vunpack.c.h.b16 %v1898
      %v2535 = vunpack.c.l.b16 %v1899
      %v2536 = vunpack.c.h.b16 %v1899
      %v2537 = vpack.c.b16 %v2523, %v2521
      %v2538 = vpack.c.b16 %v2524, %v2522
      %v2539 = vpack.c.b16 %v2527, %v2525
      %v2540 = vpack.c.b16 %v2528, %v2526
      %v2541 = vpack.c.b16 %v2531, %v2529
      %v2542 = vpack.c.b16 %v2532, %v2530
      %v2543 = vpack.c.b16 %v2535, %v2533
      %v2544 = vpack.c.b16 %v2536, %v2534
      %v2553 = vsel %vm497, %v1992, 0
      %v2555 = vsel %vm497, %v1993, 0
      %v2557 = vsel %vm497, %v1994, 0
      %v2559 = vsel %vm497, %v1995, 0
      %v2561 = vsel %vm497, %v1996, 0
      %v2563 = vsel %vm497, %v1997, 0
      %v2565 = vsel %vm497, %v1998, 0
      %v2567 = vsel %vm497, %v1999, 0
      %v2569 = vsel %vm497, %v2000, 0
      %v2571 = vsel %vm497, %v2001, 0
      %v2573 = vsel %vm497, %v2002, 0
      %v2575 = vsel %vm497, %v2003, 0
      %v2577 = vsel %vm497, %v2004, 0
      %v2579 = vsel %vm497, %v2005, 0
      %v2581 = vsel %vm497, %v2006, 0
      %v2583 = vsel %vm497, %v2007, 0
      %v2585 = vsel %vm497, %v2008, 0
      %v2587 = vsel %vm497, %v2009, 0
      %v2589 = vsel %vm497, %v2010, 0
      %v2591 = vsel %vm497, %v2011, 0
      %v2594 = vsel %vm497, %v2512, 0
      %2596 = vmatpush.bf16.msra.mxu0 0
      %2597 = vmatpush.bf16.msra.mxu0 0
      %2598 = vmatpush.bf16.msra.mxu0 0
      %2599 = vmatpush.bf16.msra.mxu0 0
      %2600 = vmatpush.bf16.msra.mxu0 %v2543
      %2601 = vmatpush.bf16.msra.mxu0 %v2541
      %2602 = vmatpush.bf16.msra.mxu0 %v2539
      %2603 = vmatpush.bf16.msra.mxu0 %v2537
      %2604 = vmatmul.bf16.gmra.mxu0 %v2553
      %v2605 = vpop.f32.mrf.mxu0
      %v2606 = vadd.f32 %v2294, %v2605
      %v2607 = vpop.f32.mrf.mxu0
      %v2608 = vadd.f32 %v2296, %v2607
      %2609 = vmatmul.bf16.gmra.mxu0 %v2555
      %v2610 = vpop.f32.mrf.mxu0
      %v2611 = vadd.f32 %v2299, %v2610
      %v2612 = vpop.f32.mrf.mxu0
      %v2613 = vadd.f32 %v2301, %v2612
      %2614 = vmatmul.bf16.gmra.mxu0 %v2557
      %v2615 = vpop.f32.mrf.mxu0
      %v2616 = vadd.f32 %v2304, %v2615
      %v2617 = vpop.f32.mrf.mxu0
      %v2618 = vadd.f32 %v2306, %v2617
      %2619 = vmatmul.bf16.gmra.mxu0 %v2559
      %v2620 = vpop.f32.mrf.mxu0
      %v2621 = vadd.f32 %v2309, %v2620
      %v2622 = vpop.f32.mrf.mxu0
      %v2623 = vadd.f32 %v2311, %v2622
      %2624 = vmatmul.bf16.gmra.mxu0 %v2561
      %v2625 = vpop.f32.mrf.mxu0
      %v2626 = vadd.f32 %v2314, %v2625
      %v2627 = vpop.f32.mrf.mxu0
      %v2628 = vadd.f32 %v2316, %v2627
      %2629 = vmatmul.bf16.gmra.mxu0 %v2563
      %v2630 = vpop.f32.mrf.mxu0
      %v2631 = vadd.f32 %v2319, %v2630
      %v2632 = vpop.f32.mrf.mxu0
      %v2633 = vadd.f32 %v2321, %v2632
      %2634 = vmatmul.bf16.gmra.mxu0 %v2565
      %v2635 = vpop.f32.mrf.mxu0
      %v2636 = vadd.f32 %v2324, %v2635
      %v2637 = vpop.f32.mrf.mxu0
      %v2638 = vadd.f32 %v2326, %v2637
      %2639 = vmatmul.bf16.gmra.mxu0 %v2567
      %v2640 = vpop.f32.mrf.mxu0
      %v2641 = vadd.f32 %v2329, %v2640
      %v2642 = vpop.f32.mrf.mxu0
      %v2643 = vadd.f32 %v2331, %v2642
      %2644 = vmatmul.bf16.gmra.mxu0 %v2569
      %v2645 = vpop.f32.mrf.mxu0
      %v2646 = vadd.f32 %v2334, %v2645
      %v2647 = vpop.f32.mrf.mxu0
      %v2648 = vadd.f32 %v2336, %v2647
      %2649 = vmatmul.bf16.gmra.mxu0 %v2571
      %v2650 = vpop.f32.mrf.mxu0
      %v2651 = vadd.f32 %v2339, %v2650
      %v2652 = vpop.f32.mrf.mxu0
      %v2653 = vadd.f32 %v2341, %v2652
      %2654 = vmatmul.bf16.gmra.mxu0 %v2573
      %v2655 = vpop.f32.mrf.mxu0
      %v2656 = vadd.f32 %v2344, %v2655
      %v2657 = vpop.f32.mrf.mxu0
      %v2658 = vadd.f32 %v2346, %v2657
      %2659 = vmatmul.bf16.gmra.mxu0 %v2575
      %v2660 = vpop.f32.mrf.mxu0
      %v2661 = vadd.f32 %v2349, %v2660
      %v2662 = vpop.f32.mrf.mxu0
      %v2663 = vadd.f32 %v2351, %v2662
      %2664 = vmatmul.bf16.gmra.mxu0 %v2577
      %v2665 = vpop.f32.mrf.mxu0
      %v2666 = vadd.f32 %v2354, %v2665
      %v2667 = vpop.f32.mrf.mxu0
      %v2668 = vadd.f32 %v2356, %v2667
      %2669 = vmatmul.bf16.gmra.mxu0 %v2579
      %v2670 = vpop.f32.mrf.mxu0
      %v2671 = vadd.f32 %v2359, %v2670
      %v2672 = vpop.f32.mrf.mxu0
      %v2673 = vadd.f32 %v2361, %v2672
      %2674 = vmatmul.bf16.gmra.mxu0 %v2581
      %v2675 = vpop.f32.mrf.mxu0
      %v2676 = vadd.f32 %v2364, %v2675
      %v2677 = vpop.f32.mrf.mxu0
      %v2678 = vadd.f32 %v2366, %v2677
      %2679 = vmatmul.bf16.gmra.mxu0 %v2583
      %v2680 = vpop.f32.mrf.mxu0
      %v2681 = vadd.f32 %v2369, %v2680
      %v2682 = vpop.f32.mrf.mxu0
      %v2683 = vadd.f32 %v2371, %v2682
      %2684 = vmatmul.bf16.gmra.mxu0 %v2585
      %v2685 = vpop.f32.mrf.mxu0
      %v2686 = vadd.f32 %v2374, %v2685
      %v2687 = vpop.f32.mrf.mxu0
      %v2688 = vadd.f32 %v2376, %v2687
      %2689 = vmatmul.bf16.gmra.mxu0 %v2587
      %v2690 = vpop.f32.mrf.mxu0
      %v2691 = vadd.f32 %v2379, %v2690
      %v2692 = vpop.f32.mrf.mxu0
      %v2693 = vadd.f32 %v2381, %v2692
      %2694 = vmatmul.bf16.gmra.mxu0 %v2589
      %v2695 = vpop.f32.mrf.mxu0
      %v2696 = vadd.f32 %v2384, %v2695
      %v2697 = vpop.f32.mrf.mxu0
      %v2698 = vadd.f32 %v2386, %v2697
      %2699 = vmatmul.bf16.gmra.mxu0 %v2591
      %v2700 = vpop.f32.mrf.mxu0
      %v2701 = vadd.f32 %v2389, %v2700
      %v2702 = vpop.f32.mrf.mxu0
      %v2703 = vadd.f32 %v2391, %v2702
      %2704 = vmatmul.bf16.gmra.mxu0 %v2594
      %v2705 = vpop.f32.mrf.mxu0
      %v2706 = vadd.f32 %v2394, %v2705
      %v2707 = vpop.f32.mrf.mxu0
      %2708 = vdwg.mxu0
      %2709 = vmatpush.bf16.msra.mxu0 0
      %2710 = vmatpush.bf16.msra.mxu0 0
      %2711 = vmatpush.bf16.msra.mxu0 0
      %2712 = vmatpush.bf16.msra.mxu0 0
      %2713 = vmatpush.bf16.msra.mxu0 %v2544
      %2714 = vmatpush.bf16.msra.mxu0 %v2542
      %2715 = vmatpush.bf16.msra.mxu0 %v2540
      %2716 = vmatpush.bf16.msra.mxu0 %v2538
      %2717 = vmatmul.bf16.gmra.mxu0 %v2553
      %v2718 = vpop.f32.mrf.mxu0
      %v2719 = vadd.f32 %v2407, %v2718
      %v2720 = vpop.f32.mrf.mxu0
      %v2721 = vadd.f32 %v2409, %v2720
      %2722 = vmatmul.bf16.gmra.mxu0 %v2555
      %v2723 = vpop.f32.mrf.mxu0
      %v2724 = vadd.f32 %v2412, %v2723
      %v2725 = vpop.f32.mrf.mxu0
      %v2726 = vadd.f32 %v2414, %v2725
      %2727 = vmatmul.bf16.gmra.mxu0 %v2557
      %v2728 = vpop.f32.mrf.mxu0
      %v2729 = vadd.f32 %v2417, %v2728
      %v2730 = vpop.f32.mrf.mxu0
      %v2731 = vadd.f32 %v2419, %v2730
      %2732 = vmatmul.bf16.gmra.mxu0 %v2559
      %v2733 = vpop.f32.mrf.mxu0
      %v2734 = vadd.f32 %v2422, %v2733
      %v2735 = vpop.f32.mrf.mxu0
      %v2736 = vadd.f32 %v2424, %v2735
      %2737 = vmatmul.bf16.gmra.mxu0 %v2561
      %v2738 = vpop.f32.mrf.mxu0
      %v2739 = vadd.f32 %v2427, %v2738
      %v2740 = vpop.f32.mrf.mxu0
      %v2741 = vadd.f32 %v2429, %v2740
      %2742 = vmatmul.bf16.gmra.mxu0 %v2563
      %v2743 = vpop.f32.mrf.mxu0
      %v2744 = vadd.f32 %v2432, %v2743
      %v2745 = vpop.f32.mrf.mxu0
      %v2746 = vadd.f32 %v2434, %v2745
      %2747 = vmatmul.bf16.gmra.mxu0 %v2565
      %v2748 = vpop.f32.mrf.mxu0
      %v2749 = vadd.f32 %v2437, %v2748
      %v2750 = vpop.f32.mrf.mxu0
      %v2751 = vadd.f32 %v2439, %v2750
      %2752 = vmatmul.bf16.gmra.mxu0 %v2567
      %v2753 = vpop.f32.mrf.mxu0
      %v2754 = vadd.f32 %v2442, %v2753
      %v2755 = vpop.f32.mrf.mxu0
      %v2756 = vadd.f32 %v2444, %v2755
      %2757 = vmatmul.bf16.gmra.mxu0 %v2569
      %v2758 = vpop.f32.mrf.mxu0
      %v2759 = vadd.f32 %v2447, %v2758
      %v2760 = vpop.f32.mrf.mxu0
      %v2761 = vadd.f32 %v2449, %v2760
      %2762 = vmatmul.bf16.gmra.mxu0 %v2571
      %v2763 = vpop.f32.mrf.mxu0
      %v2764 = vadd.f32 %v2452, %v2763
      %v2765 = vpop.f32.mrf.mxu0
      %v2766 = vadd.f32 %v2454, %v2765
      %2767 = vmatmul.bf16.gmra.mxu0 %v2573
      %v2768 = vpop.f32.mrf.mxu0
      %v2769 = vadd.f32 %v2457, %v2768
      %v2770 = vpop.f32.mrf.mxu0
      %v2771 = vadd.f32 %v2459, %v2770
      %2772 = vmatmul.bf16.gmra.mxu0 %v2575
      %v2773 = vpop.f32.mrf.mxu0
      %v2774 = vadd.f32 %v2462, %v2773
      %v2775 = vpop.f32.mrf.mxu0
      %v2776 = vadd.f32 %v2464, %v2775
      %2777 = vmatmul.bf16.gmra.mxu0 %v2577
      %v2778 = vpop.f32.mrf.mxu0
      %v2779 = vadd.f32 %v2467, %v2778
      %v2780 = vpop.f32.mrf.mxu0
      %v2781 = vadd.f32 %v2469, %v2780
      %2782 = vmatmul.bf16.gmra.mxu0 %v2579
      %v2783 = vpop.f32.mrf.mxu0
      %v2784 = vadd.f32 %v2472, %v2783
      %v2785 = vpop.f32.mrf.mxu0
      %v2786 = vadd.f32 %v2474, %v2785
      %2787 = vmatmul.bf16.gmra.mxu0 %v2581
      %v2788 = vpop.f32.mrf.mxu0
      %v2789 = vadd.f32 %v2477, %v2788
      %v2790 = vpop.f32.mrf.mxu0
      %v2791 = vadd.f32 %v2479, %v2790
      %2792 = vmatmul.bf16.gmra.mxu0 %v2583
      %v2793 = vpop.f32.mrf.mxu0
      %v2794 = vadd.f32 %v2482, %v2793
      %v2795 = vpop.f32.mrf.mxu0
      %v2796 = vadd.f32 %v2484, %v2795
      %2797 = vmatmul.bf16.gmra.mxu0 %v2585
      %v2798 = vpop.f32.mrf.mxu0
      %v2799 = vadd.f32 %v2487, %v2798
      %v2800 = vpop.f32.mrf.mxu0
      %v2801 = vadd.f32 %v2489, %v2800
      %2802 = vmatmul.bf16.gmra.mxu0 %v2587
      %v2803 = vpop.f32.mrf.mxu0
      %v2804 = vadd.f32 %v2492, %v2803
      %v2805 = vpop.f32.mrf.mxu0
      %v2806 = vadd.f32 %v2494, %v2805
      %2807 = vmatmul.bf16.gmra.mxu0 %v2589
      %v2808 = vpop.f32.mrf.mxu0
      %v2809 = vadd.f32 %v2497, %v2808
      %v2810 = vpop.f32.mrf.mxu0
      %v2811 = vadd.f32 %v2499, %v2810
      %2812 = vmatmul.bf16.gmra.mxu0 %v2591
      %v2813 = vpop.f32.mrf.mxu0
      %v2814 = vadd.f32 %v2502, %v2813
      %v2815 = vpop.f32.mrf.mxu0
      %v2816 = vadd.f32 %v2504, %v2815
      %2817 = vmatmul.bf16.gmra.mxu0 %v2594
      %v2818 = vpop.f32.mrf.mxu0
      %v2819 = vadd.f32 %v2507, %v2818
      %v2820 = vpop.f32.mrf.mxu0
      %2821 = vdwg.mxu0
      %v2822 = vld [vmem:[#allocation2] sm:$0xe]
      %s2823 = scalar_lea.vmem %s8, 128
      %v2824 = vld [vmem:[%s2823] sm:$0xff]
      %v2825 = vld [vmem:[%s2823 + $0x8] sm:$0xff]
      %v2826 = vld [vmem:[%s2823 + $0x10] sm:$0xff]
      %v2827 = vld [vmem:[%s2823 + $0x18] sm:$0xff]
      %v2828 = vld [vmem:[%s2823 + $0x20] sm:$0xff]
      %v2829 = vld [vmem:[%s2823 + $0x28] sm:$0xff]
      %v2830 = vld [vmem:[%s2823 + $0x30] sm:$0xff]
      %v2831 = vld [vmem:[%s2823 + $0x38] sm:$0xff]
      %v2833 = vunpack.c.l.b16 %v2822
      %v2834 = vpack.c.b16 %v1952, %v2833
      %vm2835 = vcmask 1046528
      %v2836 = vrot.slane %v2834, 1
      %v2837 = vrot.slane %v1993, 1
      %v2838 = vsel %vm2835, %v2836, %v2837
      %v2839 = vrot.slane %v1994, 1
      %v2840 = vsel %vm2835, %v2837, %v2839
      %v2841 = vrot.slane %v1995, 1
      %v2842 = vsel %vm2835, %v2839, %v2841
      %v2843 = vrot.slane %v1996, 1
      %v2844 = vsel %vm2835, %v2841, %v2843
      %v2845 = vrot.slane %v1997, 1
      %v2846 = vsel %vm2835, %v2843, %v2845
      %v2847 = vrot.slane %v1998, 1
      %v2848 = vsel %vm2835, %v2845, %v2847
      %v2849 = vrot.slane %v1999, 1
      %v2850 = vsel %vm2835, %v2847, %v2849
      %v2851 = vrot.slane %v2000, 1
      %v2852 = vsel %vm2835, %v2849, %v2851
      %v2853 = vrot.slane %v2001, 1
      %v2854 = vsel %vm2835, %v2851, %v2853
      %v2855 = vrot.slane %v2002, 1
      %v2856 = vsel %vm2835, %v2853, %v2855
      %v2857 = vrot.slane %v2003, 1
      %v2858 = vsel %vm2835, %v2855, %v2857
      %v2859 = vrot.slane %v2004, 1
      %v2860 = vsel %vm2835, %v2857, %v2859
      %v2861 = vrot.slane %v2005, 1
      %v2862 = vsel %vm2835, %v2859, %v2861
      %v2863 = vrot.slane %v2006, 1
      %v2864 = vsel %vm2835, %v2861, %v2863
      %v2865 = vrot.slane %v2007, 1
      %v2866 = vsel %vm2835, %v2863, %v2865
      %v2867 = vrot.slane %v2008, 1
      %v2868 = vsel %vm2835, %v2865, %v2867
      %v2869 = vrot.slane %v2009, 1
      %v2870 = vsel %vm2835, %v2867, %v2869
      %v2871 = vrot.slane %v2010, 1
      %v2872 = vsel %vm2835, %v2869, %v2871
      %v2873 = vrot.slane %v2011, 1
      %v2874 = vsel %vm2835, %v2871, %v2873
      %v2875 = vrot.slane %v2012, 1
      %v2876 = vsel %vm2835, %v2873, %v2875
      %v2885 = vunpack.c.l.b16 %v2824
      %v2886 = vunpack.c.h.b16 %v2824
      %v2887 = vunpack.c.l.b16 %v2825
      %v2888 = vunpack.c.h.b16 %v2825
      %v2889 = vunpack.c.l.b16 %v2826
      %v2890 = vunpack.c.h.b16 %v2826
      %v2891 = vunpack.c.l.b16 %v2827
      %v2892 = vunpack.c.h.b16 %v2827
      %v2893 = vunpack.c.l.b16 %v2828
      %v2894 = vunpack.c.h.b16 %v2828
      %v2895 = vunpack.c.l.b16 %v2829
      %v2896 = vunpack.c.h.b16 %v2829
      %v2897 = vunpack.c.l.b16 %v2830
      %v2898 = vunpack.c.h.b16 %v2830
      %v2899 = vunpack.c.l.b16 %v2831
      %v2900 = vunpack.c.h.b16 %v2831
      %v2901 = vpack.c.b16 %v2887, %v2885
      %v2902 = vpack.c.b16 %v2888, %v2886
      %v2903 = vpack.c.b16 %v2891, %v2889
      %v2904 = vpack.c.b16 %v2892, %v2890
      %v2905 = vpack.c.b16 %v2895, %v2893
      %v2906 = vpack.c.b16 %v2896, %v2894
      %v2907 = vpack.c.b16 %v2899, %v2897
      %v2908 = vpack.c.b16 %v2900, %v2898
      %v2918 = vsel %vm497, %v2838, 0
      %v2921 = vsel %vm497, %v2840, 0
      %v2924 = vsel %vm497, %v2842, 0
      %v2927 = vsel %vm497, %v2844, 0
      %v2930 = vsel %vm497, %v2846, 0
      %v2933 = vsel %vm497, %v2848, 0
      %v2936 = vsel %vm497, %v2850, 0
      %v2939 = vsel %vm497, %v2852, 0
      %v2942 = vsel %vm497, %v2854, 0
      %v2945 = vsel %vm497, %v2856, 0
      %v2948 = vsel %vm497, %v2858, 0
      %v2951 = vsel %vm497, %v2860, 0
      %v2954 = vsel %vm497, %v2862, 0
      %v2957 = vsel %vm497, %v2864, 0
      %v2960 = vsel %vm497, %v2866, 0
      %v2963 = vsel %vm497, %v2868, 0
      %v2966 = vsel %vm497, %v2870, 0
      %v2969 = vsel %vm497, %v2872, 0
      %v2972 = vsel %vm497, %v2874, 0
      %v2975 = vsel %vm497, %v2876, 0
      %v2978 = vsel %vm497, %v2875, 0
      %2980 = vmatpush.bf16.msra.mxu0 0
      %2981 = vmatpush.bf16.msra.mxu0 0
      %2982 = vmatpush.bf16.msra.mxu0 0
      %2983 = vmatpush.bf16.msra.mxu0 0
      %2984 = vmatpush.bf16.msra.mxu0 %v2907
      %2985 = vmatpush.bf16.msra.mxu0 %v2905
      %2986 = vmatpush.bf16.msra.mxu0 %v2903
      %2987 = vmatpush.bf16.msra.mxu0 %v2901
      %2988 = vmatmul.bf16.gmra.mxu0 %v2918
      %v2989 = vpop.f32.mrf.mxu0
      %v2990 = vadd.f32 0.0, %v2989
      %v2991 = vpop.f32.mrf.mxu0
      %v2992 = vadd.f32 0.0, %v2991
      %2993 = vmatmul.bf16.gmra.mxu0 %v2921
      %v2994 = vpop.f32.mrf.mxu0
      %v2995 = vadd.f32 0.0, %v2994
      %v2996 = vpop.f32.mrf.mxu0
      %v2997 = vadd.f32 0.0, %v2996
      %2998 = vmatmul.bf16.gmra.mxu0 %v2924
      %v2999 = vpop.f32.mrf.mxu0
      %v3000 = vadd.f32 0.0, %v2999
      %v3001 = vpop.f32.mrf.mxu0
      %v3002 = vadd.f32 0.0, %v3001
      %3003 = vmatmul.bf16.gmra.mxu0 %v2927
      %v3004 = vpop.f32.mrf.mxu0
      %v3005 = vadd.f32 0.0, %v3004
      %v3006 = vpop.f32.mrf.mxu0
      %v3007 = vadd.f32 0.0, %v3006
      %3008 = vmatmul.bf16.gmra.mxu0 %v2930
      %v3009 = vpop.f32.mrf.mxu0
      %v3010 = vadd.f32 0.0, %v3009
      %v3011 = vpop.f32.mrf.mxu0
      %v3012 = vadd.f32 0.0, %v3011
      %3013 = vmatmul.bf16.gmra.mxu0 %v2933
      %v3014 = vpop.f32.mrf.mxu0
      %v3015 = vadd.f32 0.0, %v3014
      %v3016 = vpop.f32.mrf.mxu0
      %v3017 = vadd.f32 0.0, %v3016
      %3018 = vmatmul.bf16.gmra.mxu0 %v2936
      %v3019 = vpop.f32.mrf.mxu0
      %v3020 = vadd.f32 0.0, %v3019
      %v3021 = vpop.f32.mrf.mxu0
      %v3022 = vadd.f32 0.0, %v3021
      %3023 = vmatmul.bf16.gmra.mxu0 %v2939
      %v3024 = vpop.f32.mrf.mxu0
      %v3025 = vadd.f32 0.0, %v3024
      %v3026 = vpop.f32.mrf.mxu0
      %v3027 = vadd.f32 0.0, %v3026
      %3028 = vmatmul.bf16.gmra.mxu0 %v2942
      %v3029 = vpop.f32.mrf.mxu0
      %v3030 = vadd.f32 0.0, %v3029
      %v3031 = vpop.f32.mrf.mxu0
      %v3032 = vadd.f32 0.0, %v3031
      %3033 = vmatmul.bf16.gmra.mxu0 %v2945
      %v3034 = vpop.f32.mrf.mxu0
      %v3035 = vadd.f32 0.0, %v3034
      %v3036 = vpop.f32.mrf.mxu0
      %v3037 = vadd.f32 0.0, %v3036
      %3038 = vmatmul.bf16.gmra.mxu0 %v2948
      %v3039 = vpop.f32.mrf.mxu0
      %v3040 = vadd.f32 0.0, %v3039
      %v3041 = vpop.f32.mrf.mxu0
      %v3042 = vadd.f32 0.0, %v3041
      %3043 = vmatmul.bf16.gmra.mxu0 %v2951
      %v3044 = vpop.f32.mrf.mxu0
      %v3045 = vadd.f32 0.0, %v3044
      %v3046 = vpop.f32.mrf.mxu0
      %v3047 = vadd.f32 0.0, %v3046
      %3048 = vmatmul.bf16.gmra.mxu0 %v2954
      %v3049 = vpop.f32.mrf.mxu0
      %v3050 = vadd.f32 0.0, %v3049
      %v3051 = vpop.f32.mrf.mxu0
      %v3052 = vadd.f32 0.0, %v3051
      %3053 = vmatmul.bf16.gmra.mxu0 %v2957
      %v3054 = vpop.f32.mrf.mxu0
      %v3055 = vadd.f32 0.0, %v3054
      %v3056 = vpop.f32.mrf.mxu0
      %v3057 = vadd.f32 0.0, %v3056
      %3058 = vmatmul.bf16.gmra.mxu0 %v2960
      %v3059 = vpop.f32.mrf.mxu0
      %v3060 = vadd.f32 0.0, %v3059
      %v3061 = vpop.f32.mrf.mxu0
      %v3062 = vadd.f32 0.0, %v3061
      %3063 = vmatmul.bf16.gmra.mxu0 %v2963
      %v3064 = vpop.f32.mrf.mxu0
      %v3065 = vadd.f32 0.0, %v3064
      %v3066 = vpop.f32.mrf.mxu0
      %v3067 = vadd.f32 0.0, %v3066
      %3068 = vmatmul.bf16.gmra.mxu0 %v2966
      %v3069 = vpop.f32.mrf.mxu0
      %v3070 = vadd.f32 0.0, %v3069
      %v3071 = vpop.f32.mrf.mxu0
      %v3072 = vadd.f32 0.0, %v3071
      %3073 = vmatmul.bf16.gmra.mxu0 %v2969
      %v3074 = vpop.f32.mrf.mxu0
      %v3075 = vadd.f32 0.0, %v3074
      %v3076 = vpop.f32.mrf.mxu0
      %v3077 = vadd.f32 0.0, %v3076
      %3078 = vmatmul.bf16.gmra.mxu0 %v2972
      %v3079 = vpop.f32.mrf.mxu0
      %v3080 = vadd.f32 0.0, %v3079
      %v3081 = vpop.f32.mrf.mxu0
      %v3082 = vadd.f32 0.0, %v3081
      %3083 = vmatmul.bf16.gmra.mxu0 %v2975
      %v3084 = vpop.f32.mrf.mxu0
      %v3085 = vadd.f32 0.0, %v3084
      %v3086 = vpop.f32.mrf.mxu0
      %v3087 = vadd.f32 0.0, %v3086
      %3088 = vmatmul.bf16.gmra.mxu0 %v2978
      %v3089 = vpop.f32.mrf.mxu0
      %v3090 = vadd.f32 0.0, %v3089
      %v3091 = vpop.f32.mrf.mxu0
      %3092 = vdwg.mxu0
      %3093 = vmatpush.bf16.msra.mxu0 0
      %3094 = vmatpush.bf16.msra.mxu0 0
      %3095 = vmatpush.bf16.msra.mxu0 0
      %3096 = vmatpush.bf16.msra.mxu0 0
      %3097 = vmatpush.bf16.msra.mxu0 %v2908
      %3098 = vmatpush.bf16.msra.mxu0 %v2906
      %3099 = vmatpush.bf16.msra.mxu0 %v2904
      %3100 = vmatpush.bf16.msra.mxu0 %v2902
      %3101 = vmatmul.bf16.gmra.mxu0 %v2918
      %v3102 = vpop.f32.mrf.mxu0
      %v3103 = vadd.f32 0.0, %v3102
      %v3104 = vpop.f32.mrf.mxu0
      %v3105 = vadd.f32 0.0, %v3104
      %3106 = vmatmul.bf16.gmra.mxu0 %v2921
      %v3107 = vpop.f32.mrf.mxu0
      %v3108 = vadd.f32 0.0, %v3107
      %v3109 = vpop.f32.mrf.mxu0
      %v3110 = vadd.f32 0.0, %v3109
      %3111 = vmatmul.bf16.gmra.mxu0 %v2924
      %v3112 = vpop.f32.mrf.mxu0
      %v3113 = vadd.f32 0.0, %v3112
      %v3114 = vpop.f32.mrf.mxu0
      %v3115 = vadd.f32 0.0, %v3114
      %3116 = vmatmul.bf16.gmra.mxu0 %v2927
      %v3117 = vpop.f32.mrf.mxu0
      %v3118 = vadd.f32 0.0, %v3117
      %v3119 = vpop.f32.mrf.mxu0
      %v3120 = vadd.f32 0.0, %v3119
      %3121 = vmatmul.bf16.gmra.mxu0 %v2930
      %v3122 = vpop.f32.mrf.mxu0
      %v3123 = vadd.f32 0.0, %v3122
      %v3124 = vpop.f32.mrf.mxu0
      %v3125 = vadd.f32 0.0, %v3124
      %3126 = vmatmul.bf16.gmra.mxu0 %v2933
      %v3127 = vpop.f32.mrf.mxu0
      %v3128 = vadd.f32 0.0, %v3127
      %v3129 = vpop.f32.mrf.mxu0
      %v3130 = vadd.f32 0.0, %v3129
      %3131 = vmatmul.bf16.gmra.mxu0 %v2936
      %v3132 = vpop.f32.mrf.mxu0
      %v3133 = vadd.f32 0.0, %v3132
      %v3134 = vpop.f32.mrf.mxu0
      %v3135 = vadd.f32 0.0, %v3134
      %3136 = vmatmul.bf16.gmra.mxu0 %v2939
      %v3137 = vpop.f32.mrf.mxu0
      %v3138 = vadd.f32 0.0, %v3137
      %v3139 = vpop.f32.mrf.mxu0
      %v3140 = vadd.f32 0.0, %v3139
      %3141 = vmatmul.bf16.gmra.mxu0 %v2942
      %v3142 = vpop.f32.mrf.mxu0
      %v3143 = vadd.f32 0.0, %v3142
      %v3144 = vpop.f32.mrf.mxu0
      %v3145 = vadd.f32 0.0, %v3144
      %3146 = vmatmul.bf16.gmra.mxu0 %v2945
      %v3147 = vpop.f32.mrf.mxu0
      %v3148 = vadd.f32 0.0, %v3147
      %v3149 = vpop.f32.mrf.mxu0
      %v3150 = vadd.f32 0.0, %v3149
      %3151 = vmatmul.bf16.gmra.mxu0 %v2948
      %v3152 = vpop.f32.mrf.mxu0
      %v3153 = vadd.f32 0.0, %v3152
      %v3154 = vpop.f32.mrf.mxu0
      %v3155 = vadd.f32 0.0, %v3154
      %3156 = vmatmul.bf16.gmra.mxu0 %v2951
      %v3157 = vpop.f32.mrf.mxu0
      %v3158 = vadd.f32 0.0, %v3157
      %v3159 = vpop.f32.mrf.mxu0
      %v3160 = vadd.f32 0.0, %v3159
      %3161 = vmatmul.bf16.gmra.mxu0 %v2954
      %v3162 = vpop.f32.mrf.mxu0
      %v3163 = vadd.f32 0.0, %v3162
      %v3164 = vpop.f32.mrf.mxu0
      %v3165 = vadd.f32 0.0, %v3164
      %3166 = vmatmul.bf16.gmra.mxu0 %v2957
      %v3167 = vpop.f32.mrf.mxu0
      %v3168 = vadd.f32 0.0, %v3167
      %v3169 = vpop.f32.mrf.mxu0
      %v3170 = vadd.f32 0.0, %v3169
      %3171 = vmatmul.bf16.gmra.mxu0 %v2960
      %v3172 = vpop.f32.mrf.mxu0
      %v3173 = vadd.f32 0.0, %v3172
      %v3174 = vpop.f32.mrf.mxu0
      %v3175 = vadd.f32 0.0, %v3174
      %3176 = vmatmul.bf16.gmra.mxu0 %v2963
      %v3177 = vpop.f32.mrf.mxu0
      %v3178 = vadd.f32 0.0, %v3177
      %v3179 = vpop.f32.mrf.mxu0
      %v3180 = vadd.f32 0.0, %v3179
      %3181 = vmatmul.bf16.gmra.mxu0 %v2966
      %v3182 = vpop.f32.mrf.mxu0
      %v3183 = vadd.f32 0.0, %v3182
      %v3184 = vpop.f32.mrf.mxu0
      %v3185 = vadd.f32 0.0, %v3184
      %3186 = vmatmul.bf16.gmra.mxu0 %v2969
      %v3187 = vpop.f32.mrf.mxu0
      %v3188 = vadd.f32 0.0, %v3187
      %v3189 = vpop.f32.mrf.mxu0
      %v3190 = vadd.f32 0.0, %v3189
      %3191 = vmatmul.bf16.gmra.mxu0 %v2972
      %v3192 = vpop.f32.mrf.mxu0
      %v3193 = vadd.f32 0.0, %v3192
      %v3194 = vpop.f32.mrf.mxu0
      %v3195 = vadd.f32 0.0, %v3194
      %3196 = vmatmul.bf16.gmra.mxu0 %v2975
      %v3197 = vpop.f32.mrf.mxu0
      %v3198 = vadd.f32 0.0, %v3197
      %v3199 = vpop.f32.mrf.mxu0
      %v3200 = vadd.f32 0.0, %v3199
      %3201 = vmatmul.bf16.gmra.mxu0 %v2978
      %v3202 = vpop.f32.mrf.mxu0
      %v3203 = vadd.f32 0.0, %v3202
      %v3204 = vpop.f32.mrf.mxu0
      %3205 = vdwg.mxu0
      %v3206 = vadd.f32 %v2606, %v2990
      %v3207 = vadd.f32 %v2719, %v3103
      %v3208 = vadd.f32 %v2608, %v2992
      %v3209 = vadd.f32 %v2721, %v3105
      %v3210 = vadd.f32 %v2611, %v2995
      %v3211 = vadd.f32 %v2724, %v3108
      %v3212 = vadd.f32 %v2613, %v2997
      %v3213 = vadd.f32 %v2726, %v3110
      %v3214 = vadd.f32 %v2616, %v3000
      %v3215 = vadd.f32 %v2729, %v3113
      %v3216 = vadd.f32 %v2618, %v3002
      %v3217 = vadd.f32 %v2731, %v3115
      %v3218 = vadd.f32 %v2621, %v3005
      %v3219 = vadd.f32 %v2734, %v3118
      %v3220 = vadd.f32 %v2623, %v3007
      %v3221 = vadd.f32 %v2736, %v3120
      %v3222 = vadd.f32 %v2626, %v3010
      %v3223 = vadd.f32 %v2739, %v3123
      %v3224 = vadd.f32 %v2628, %v3012
      %v3225 = vadd.f32 %v2741, %v3125
      %v3226 = vadd.f32 %v2631, %v3015
      %v3227 = vadd.f32 %v2744, %v3128
      %v3228 = vadd.f32 %v2633, %v3017
      %v3229 = vadd.f32 %v2746, %v3130
      %v3230 = vadd.f32 %v2636, %v3020
      %v3231 = vadd.f32 %v2749, %v3133
      %v3232 = vadd.f32 %v2638, %v3022
      %v3233 = vadd.f32 %v2751, %v3135
      %v3234 = vadd.f32 %v2641, %v3025
      %v3235 = vadd.f32 %v2754, %v3138
      %v3236 = vadd.f32 %v2643, %v3027
      %v3237 = vadd.f32 %v2756, %v3140
      %v3238 = vadd.f32 %v2646, %v3030
      %v3239 = vadd.f32 %v2759, %v3143
      %v3240 = vadd.f32 %v2648, %v3032
      %v3241 = vadd.f32 %v2761, %v3145
      %v3242 = vadd.f32 %v2651, %v3035
      %v3243 = vadd.f32 %v2764, %v3148
      %v3244 = vadd.f32 %v2653, %v3037
      %v3245 = vadd.f32 %v2766, %v3150
      %v3246 = vadd.f32 %v2656, %v3040
      %v3247 = vadd.f32 %v2769, %v3153
      %v3248 = vadd.f32 %v2658, %v3042
      %v3249 = vadd.f32 %v2771, %v3155
      %v3250 = vadd.f32 %v2661, %v3045
      %v3251 = vadd.f32 %v2774, %v3158
      %v3252 = vadd.f32 %v2663, %v3047
      %v3253 = vadd.f32 %v2776, %v3160
      %v3254 = vadd.f32 %v2666, %v3050
      %v3255 = vadd.f32 %v2779, %v3163
      %v3256 = vadd.f32 %v2668, %v3052
      %v3257 = vadd.f32 %v2781, %v3165
      %v3258 = vadd.f32 %v2671, %v3055
      %v3259 = vadd.f32 %v2784, %v3168
      %v3260 = vadd.f32 %v2673, %v3057
      %v3261 = vadd.f32 %v2786, %v3170
      %v3262 = vadd.f32 %v2676, %v3060
      %v3263 = vadd.f32 %v2789, %v3173
      %v3264 = vadd.f32 %v2678, %v3062
      %v3265 = vadd.f32 %v2791, %v3175
      %v3266 = vadd.f32 %v2681, %v3065
      %v3267 = vadd.f32 %v2794, %v3178
      %v3268 = vadd.f32 %v2683, %v3067
      %v3269 = vadd.f32 %v2796, %v3180
      %v3270 = vadd.f32 %v2686, %v3070
      %v3271 = vadd.f32 %v2799, %v3183
      %v3272 = vadd.f32 %v2688, %v3072
      %v3273 = vadd.f32 %v2801, %v3185
      %v3274 = vadd.f32 %v2691, %v3075
      %v3275 = vadd.f32 %v2804, %v3188
      %v3276 = vadd.f32 %v2693, %v3077
      %v3277 = vadd.f32 %v2806, %v3190
      %v3278 = vadd.f32 %v2696, %v3080
      %v3279 = vadd.f32 %v2809, %v3193
      %v3280 = vadd.f32 %v2698, %v3082
      %v3281 = vadd.f32 %v2811, %v3195
      %v3282 = vadd.f32 %v2701, %v3085
      %v3283 = vadd.f32 %v2814, %v3198
      %v3284 = vadd.f32 %v2703, %v3087
      %v3285 = vadd.f32 %v2816, %v3200
      %v3286 = vadd.f32 %v2706, %v3090
      %v3287 = vadd.f32 %v2819, %v3203
      %v3288 = vld [vmem:[#allocation2 + $0x8] sm:$0xe]
      %v3289 = vld [vmem:[#allocation2 + $0xc] sm:$0xf]
      %v3290 = vld [vmem:[#allocation2 + $0x10] sm:$0xf]
      %v3291 = vld [vmem:[#allocation2 + $0x14] sm:$0xf]
      %v3292 = vld [vmem:[#allocation2 + $0x18] sm:$0xf]
      %v3293 = vld [vmem:[#allocation2 + $0x1c] sm:$0xf]
      %v3294 = vld [vmem:[#allocation2 + $0x20] sm:$0xf]
      %v3295 = vld [vmem:[#allocation2 + $0x24] sm:$0xf]
      %v3296 = vld [vmem:[#allocation2 + $0x28] sm:$0xf]
      %v3297 = vld [vmem:[#allocation2 + $0x2c] sm:$0xf]
      %v3298 = vld [vmem:[#allocation2 + $0x30] sm:$0xf]
      %v3299 = vld [vmem:[#allocation2 + $0x34] sm:$0xf]
      %v3300 = vld [vmem:[#allocation2 + $0x38] sm:$0xf]
      %v3301 = vld [vmem:[#allocation2 + $0x3c] sm:$0xf]
      %v3302 = vld [vmem:[#allocation2 + $0x40] sm:$0xf]
      %v3303 = vld [vmem:[#allocation2 + $0x44] sm:$0xf]
      %v3304 = vld [vmem:[#allocation2 + $0x48] sm:$0xf]
      %v3305 = vld [vmem:[#allocation2 + $0x4c] sm:$0xf]
      %v3306 = vld [vmem:[#allocation2 + $0x50] sm:$0xf]
      %v3307 = vld [vmem:[#allocation2 + $0x54] sm:$0xf]
      %v3308 = vld [vmem:[#allocation2 + $0x58] sm:$0xf]
      %v3309 = vld [vmem:[#allocation2 + $0x5c] sm:$0xf]
      %v3310 = vld [vmem:[#allocation2 + $0x60] sm:$0xf]
      %v3311 = vld [vmem:[#allocation2 + $0x64] sm:$0xf]
      %v3312 = vld [vmem:[#allocation2 + $0x68] sm:$0xf]
      %v3313 = vld [vmem:[#allocation2 + $0x6c] sm:$0xf]
      %v3314 = vld [vmem:[#allocation2 + $0x70] sm:$0xf]
      %v3315 = vld [vmem:[#allocation2 + $0x74] sm:$0xf]
      %v3316 = vld [vmem:[#allocation2 + $0x78] sm:$0xf]
      %v3317 = vld [vmem:[#allocation2 + $0x7c] sm:$0xf]
      %v3318 = vld [vmem:[#allocation2 + $0x80] sm:$0xf]
      %v3319 = vld [vmem:[#allocation2 + $0x84] sm:$0xf]
      %v3320 = vld [vmem:[#allocation2 + $0x88] sm:$0xf]
      %v3321 = vld [vmem:[#allocation2 + $0x8c] sm:$0xf]
      %v3322 = vld [vmem:[#allocation2 + $0x90] sm:$0xf]
      %v3323 = vld [vmem:[#allocation2 + $0x94] sm:$0xf]
      %v3324 = vld [vmem:[#allocation2 + $0x98] sm:$0xf]
      %v3325 = vld [vmem:[#allocation2 + $0x9c] sm:$0xf]
      %v3326 = vld [vmem:[#allocation2 + $0xa0] sm:$0xf]
      %v3327 = vld [vmem:[#allocation2 + $0xa4] sm:$0xf]
      %v3328 = vld [vmem:[#allocation2 + $0xa8] sm:$0x7]
      %s3329 = scalar_lea.vmem %s8, 192
      %v3330 = vld [vmem:[%s3329] sm:$0xff]
      %v3331 = vld [vmem:[%s3329 + $0x8] sm:$0xff]
      %v3332 = vld [vmem:[%s3329 + $0x10] sm:$0xff]
      %v3333 = vld [vmem:[%s3329 + $0x18] sm:$0xff]
      %v3334 = vld [vmem:[%s3329 + $0x20] sm:$0xff]
      %v3335 = vld [vmem:[%s3329 + $0x28] sm:$0xff]
      %v3336 = vld [vmem:[%s3329 + $0x30] sm:$0xff]
      %v3337 = vld [vmem:[%s3329 + $0x38] sm:$0xff]
      %v3379 = vunpack.c.l.b16 %v3288
      %v3380 = vunpack.c.l.b16 %v3289
      %v3381 = vunpack.c.l.b16 %v3290
      %v3382 = vunpack.c.l.b16 %v3291
      %v3383 = vunpack.c.l.b16 %v3292
      %v3384 = vunpack.c.l.b16 %v3293
      %v3385 = vunpack.c.l.b16 %v3294
      %v3386 = vunpack.c.l.b16 %v3295
      %v3387 = vunpack.c.l.b16 %v3296
      %v3388 = vunpack.c.l.b16 %v3297
      %v3389 = vunpack.c.l.b16 %v3298
      %v3390 = vunpack.c.l.b16 %v3299
      %v3391 = vunpack.c.l.b16 %v3300
      %v3392 = vunpack.c.l.b16 %v3301
      %v3393 = vunpack.c.l.b16 %v3302
      %v3394 = vunpack.c.l.b16 %v3303
      %v3395 = vunpack.c.l.b16 %v3304
      %v3396 = vunpack.c.l.b16 %v3305
      %v3397 = vunpack.c.l.b16 %v3306
      %v3398 = vunpack.c.l.b16 %v3307
      %v3399 = vunpack.c.l.b16 %v3308
      %v3400 = vunpack.c.l.b16 %v3309
      %v3401 = vunpack.c.l.b16 %v3310
      %v3402 = vunpack.c.l.b16 %v3311
      %v3403 = vunpack.c.l.b16 %v3312
      %v3404 = vunpack.c.l.b16 %v3313
      %v3405 = vunpack.c.l.b16 %v3314
      %v3406 = vunpack.c.l.b16 %v3315
      %v3407 = vunpack.c.l.b16 %v3316
      %v3408 = vunpack.c.l.b16 %v3317
      %v3409 = vunpack.c.l.b16 %v3318
      %v3410 = vunpack.c.l.b16 %v3319
      %v3411 = vunpack.c.l.b16 %v3320
      %v3412 = vunpack.c.l.b16 %v3321
      %v3413 = vunpack.c.l.b16 %v3322
      %v3414 = vunpack.c.l.b16 %v3323
      %v3415 = vunpack.c.l.b16 %v3324
      %v3416 = vunpack.c.l.b16 %v3325
      %v3417 = vunpack.c.l.b16 %v3326
      %v3418 = vunpack.c.l.b16 %v3327
      %v3419 = vunpack.c.l.b16 %v3328
      %v3420 = vpack.c.b16 %v3380, %v3379
      %v3421 = vpack.c.b16 %v3382, %v3381
      %v3422 = vpack.c.b16 %v3384, %v3383
      %v3423 = vpack.c.b16 %v3386, %v3385
      %v3424 = vpack.c.b16 %v3388, %v3387
      %v3425 = vpack.c.b16 %v3390, %v3389
      %v3426 = vpack.c.b16 %v3392, %v3391
      %v3427 = vpack.c.b16 %v3394, %v3393
      %v3428 = vpack.c.b16 %v3396, %v3395
      %v3429 = vpack.c.b16 %v3398, %v3397
      %v3430 = vpack.c.b16 %v3400, %v3399
      %v3431 = vpack.c.b16 %v3402, %v3401
      %v3432 = vpack.c.b16 %v3404, %v3403
      %v3433 = vpack.c.b16 %v3406, %v3405
      %v3434 = vpack.c.b16 %v3408, %v3407
      %v3435 = vpack.c.b16 %v3410, %v3409
      %v3436 = vpack.c.b16 %v3412, %v3411
      %v3437 = vpack.c.b16 %v3414, %v3413
      %v3438 = vpack.c.b16 %v3416, %v3415
      %v3439 = vpack.c.b16 %v3418, %v3417
      %v3440 = vpack.c.b16 %v3419, %v3419
      %v3441 = vrot.slane %v3420, 1
      %v3442 = vrot.slane %v3421, 1
      %v3443 = vsel %vm2835, %v3441, %v3442
      %v3444 = vrot.slane %v3422, 1
      %v3445 = vsel %vm2835, %v3442, %v3444
      %v3446 = vrot.slane %v3423, 1
      %v3447 = vsel %vm2835, %v3444, %v3446
      %v3448 = vrot.slane %v3424, 1
      %v3449 = vsel %vm2835, %v3446, %v3448
      %v3450 = vrot.slane %v3425, 1
      %v3451 = vsel %vm2835, %v3448, %v3450
      %v3452 = vrot.slane %v3426, 1
      %v3453 = vsel %vm2835, %v3450, %v3452
      %v3454 = vrot.slane %v3427, 1
      %v3455 = vsel %vm2835, %v3452, %v3454
      %v3456 = vrot.slane %v3428, 1
      %v3457 = vsel %vm2835, %v3454, %v3456
      %v3458 = vrot.slane %v3429, 1
      %v3459 = vsel %vm2835, %v3456, %v3458
      %v3460 = vrot.slane %v3430, 1
      %v3461 = vsel %vm2835, %v3458, %v3460
      %v3462 = vrot.slane %v3431, 1
      %v3463 = vsel %vm2835, %v3460, %v3462
      %v3464 = vrot.slane %v3432, 1
      %v3465 = vsel %vm2835, %v3462, %v3464
      %v3466 = vrot.slane %v3433, 1
      %v3467 = vsel %vm2835, %v3464, %v3466
      %v3468 = vrot.slane %v3434, 1
      %v3469 = vsel %vm2835, %v3466, %v3468
      %v3470 = vrot.slane %v3435, 1
      %v3471 = vsel %vm2835, %v3468, %v3470
      %v3472 = vrot.slane %v3436, 1
      %v3473 = vsel %vm2835, %v3470, %v3472
      %v3474 = vrot.slane %v3437, 1
      %v3475 = vsel %vm2835, %v3472, %v3474
      %v3476 = vrot.slane %v3438, 1
      %v3477 = vsel %vm2835, %v3474, %v3476
      %v3478 = vrot.slane %v3439, 1
      %v3479 = vsel %vm2835, %v3476, %v3478
      %v3480 = vrot.slane %v3440, 1
      %v3481 = vsel %vm2835, %v3478, %v3480
      %v3490 = vunpack.c.l.b16 %v3330
      %v3491 = vunpack.c.h.b16 %v3330
      %v3492 = vunpack.c.l.b16 %v3331
      %v3493 = vunpack.c.h.b16 %v3331
      %v3494 = vunpack.c.l.b16 %v3332
      %v3495 = vunpack.c.h.b16 %v3332
      %v3496 = vunpack.c.l.b16 %v3333
      %v3497 = vunpack.c.h.b16 %v3333
      %v3498 = vunpack.c.l.b16 %v3334
      %v3499 = vunpack.c.h.b16 %v3334
      %v3500 = vunpack.c.l.b16 %v3335
      %v3501 = vunpack.c.h.b16 %v3335
      %v3502 = vunpack.c.l.b16 %v3336
      %v3503 = vunpack.c.h.b16 %v3336
      %v3504 = vunpack.c.l.b16 %v3337
      %v3505 = vunpack.c.h.b16 %v3337
      %v3506 = vpack.c.b16 %v3492, %v3490
      %v3507 = vpack.c.b16 %v3493, %v3491
      %v3508 = vpack.c.b16 %v3496, %v3494
      %v3509 = vpack.c.b16 %v3497, %v3495
      %v3510 = vpack.c.b16 %v3500, %v3498
      %v3511 = vpack.c.b16 %v3501, %v3499
      %v3512 = vpack.c.b16 %v3504, %v3502
      %v3513 = vpack.c.b16 %v3505, %v3503
      %v3523 = vsel %vm497, %v3443, 0
      %v3526 = vsel %vm497, %v3445, 0
      %v3529 = vsel %vm497, %v3447, 0
      %v3532 = vsel %vm497, %v3449, 0
      %v3535 = vsel %vm497, %v3451, 0
      %v3538 = vsel %vm497, %v3453, 0
      %v3541 = vsel %vm497, %v3455, 0
      %v3544 = vsel %vm497, %v3457, 0
      %v3547 = vsel %vm497, %v3459, 0
      %v3550 = vsel %vm497, %v3461, 0
      %v3553 = vsel %vm497, %v3463, 0
      %v3556 = vsel %vm497, %v3465, 0
      %v3559 = vsel %vm497, %v3467, 0
      %v3562 = vsel %vm497, %v3469, 0
      %v3565 = vsel %vm497, %v3471, 0
      %v3568 = vsel %vm497, %v3473, 0
      %v3571 = vsel %vm497, %v3475, 0
      %v3574 = vsel %vm497, %v3477, 0
      %v3577 = vsel %vm497, %v3479, 0
      %v3580 = vsel %vm497, %v3481, 0
      %v3583 = vsel %vm497, %v3480, 0
      %3585 = vmatpush.bf16.msra.mxu0 0
      %3586 = vmatpush.bf16.msra.mxu0 0
      %3587 = vmatpush.bf16.msra.mxu0 0
      %3588 = vmatpush.bf16.msra.mxu0 0
      %3589 = vmatpush.bf16.msra.mxu0 %v3512
      %3590 = vmatpush.bf16.msra.mxu0 %v3510
      %3591 = vmatpush.bf16.msra.mxu0 %v3508
      %3592 = vmatpush.bf16.msra.mxu0 %v3506
      %3593 = vmatmul.bf16.gmra.mxu0 %v3523
      %v3594 = vpop.f32.mrf.mxu0
      %v3595 = vadd.f32 0.0, %v3594
      %v3596 = vpop.f32.mrf.mxu0
      %v3597 = vadd.f32 0.0, %v3596
      %3598 = vmatmul.bf16.gmra.mxu0 %v3526
      %v3599 = vpop.f32.mrf.mxu0
      %v3600 = vadd.f32 0.0, %v3599
      %v3601 = vpop.f32.mrf.mxu0
      %v3602 = vadd.f32 0.0, %v3601
      %3603 = vmatmul.bf16.gmra.mxu0 %v3529
      %v3604 = vpop.f32.mrf.mxu0
      %v3605 = vadd.f32 0.0, %v3604
      %v3606 = vpop.f32.mrf.mxu0
      %v3607 = vadd.f32 0.0, %v3606
      %3608 = vmatmul.bf16.gmra.mxu0 %v3532
      %v3609 = vpop.f32.mrf.mxu0
      %v3610 = vadd.f32 0.0, %v3609
      %v3611 = vpop.f32.mrf.mxu0
      %v3612 = vadd.f32 0.0, %v3611
      %3613 = vmatmul.bf16.gmra.mxu0 %v3535
      %v3614 = vpop.f32.mrf.mxu0
      %v3615 = vadd.f32 0.0, %v3614
      %v3616 = vpop.f32.mrf.mxu0
      %v3617 = vadd.f32 0.0, %v3616
      %3618 = vmatmul.bf16.gmra.mxu0 %v3538
      %v3619 = vpop.f32.mrf.mxu0
      %v3620 = vadd.f32 0.0, %v3619
      %v3621 = vpop.f32.mrf.mxu0
      %v3622 = vadd.f32 0.0, %v3621
      %3623 = vmatmul.bf16.gmra.mxu0 %v3541
      %v3624 = vpop.f32.mrf.mxu0
      %v3625 = vadd.f32 0.0, %v3624
      %v3626 = vpop.f32.mrf.mxu0
      %v3627 = vadd.f32 0.0, %v3626
      %3628 = vmatmul.bf16.gmra.mxu0 %v3544
      %v3629 = vpop.f32.mrf.mxu0
      %v3630 = vadd.f32 0.0, %v3629
      %v3631 = vpop.f32.mrf.mxu0
      %v3632 = vadd.f32 0.0, %v3631
      %3633 = vmatmul.bf16.gmra.mxu0 %v3547
      %v3634 = vpop.f32.mrf.mxu0
      %v3635 = vadd.f32 0.0, %v3634
      %v3636 = vpop.f32.mrf.mxu0
      %v3637 = vadd.f32 0.0, %v3636
      %3638 = vmatmul.bf16.gmra.mxu0 %v3550
      %v3639 = vpop.f32.mrf.mxu0
      %v3640 = vadd.f32 0.0, %v3639
      %v3641 = vpop.f32.mrf.mxu0
      %v3642 = vadd.f32 0.0, %v3641
      %3643 = vmatmul.bf16.gmra.mxu0 %v3553
      %v3644 = vpop.f32.mrf.mxu0
      %v3645 = vadd.f32 0.0, %v3644
      %v3646 = vpop.f32.mrf.mxu0
      %v3647 = vadd.f32 0.0, %v3646
      %3648 = vmatmul.bf16.gmra.mxu0 %v3556
      %v3649 = vpop.f32.mrf.mxu0
      %v3650 = vadd.f32 0.0, %v3649
      %v3651 = vpop.f32.mrf.mxu0
      %v3652 = vadd.f32 0.0, %v3651
      %3653 = vmatmul.bf16.gmra.mxu0 %v3559
      %v3654 = vpop.f32.mrf.mxu0
      %v3655 = vadd.f32 0.0, %v3654
      %v3656 = vpop.f32.mrf.mxu0
      %v3657 = vadd.f32 0.0, %v3656
      %3658 = vmatmul.bf16.gmra.mxu0 %v3562
      %v3659 = vpop.f32.mrf.mxu0
      %v3660 = vadd.f32 0.0, %v3659
      %v3661 = vpop.f32.mrf.mxu0
      %v3662 = vadd.f32 0.0, %v3661
      %3663 = vmatmul.bf16.gmra.mxu0 %v3565
      %v3664 = vpop.f32.mrf.mxu0
      %v3665 = vadd.f32 0.0, %v3664
      %v3666 = vpop.f32.mrf.mxu0
      %v3667 = vadd.f32 0.0, %v3666
      %3668 = vmatmul.bf16.gmra.mxu0 %v3568
      %v3669 = vpop.f32.mrf.mxu0
      %v3670 = vadd.f32 0.0, %v3669
      %v3671 = vpop.f32.mrf.mxu0
      %v3672 = vadd.f32 0.0, %v3671
      %3673 = vmatmul.bf16.gmra.mxu0 %v3571
      %v3674 = vpop.f32.mrf.mxu0
      %v3675 = vadd.f32 0.0, %v3674
      %v3676 = vpop.f32.mrf.mxu0
      %v3677 = vadd.f32 0.0, %v3676
      %3678 = vmatmul.bf16.gmra.mxu0 %v3574
      %v3679 = vpop.f32.mrf.mxu0
      %v3680 = vadd.f32 0.0, %v3679
      %v3681 = vpop.f32.mrf.mxu0
      %v3682 = vadd.f32 0.0, %v3681
      %3683 = vmatmul.bf16.gmra.mxu0 %v3577
      %v3684 = vpop.f32.mrf.mxu0
      %v3685 = vadd.f32 0.0, %v3684
      %v3686 = vpop.f32.mrf.mxu0
      %v3687 = vadd.f32 0.0, %v3686
      %3688 = vmatmul.bf16.gmra.mxu0 %v3580
      %v3689 = vpop.f32.mrf.mxu0
      %v3690 = vadd.f32 0.0, %v3689
      %v3691 = vpop.f32.mrf.mxu0
      %v3692 = vadd.f32 0.0, %v3691
      %3693 = vmatmul.bf16.gmra.mxu0 %v3583
      %v3694 = vpop.f32.mrf.mxu0
      %v3695 = vadd.f32 0.0, %v3694
      %v3696 = vpop.f32.mrf.mxu0
      %3697 = vdwg.mxu0
      %3698 = vmatpush.bf16.msra.mxu0 0
      %3699 = vmatpush.bf16.msra.mxu0 0
      %3700 = vmatpush.bf16.msra.mxu0 0
      %3701 = vmatpush.bf16.msra.mxu0 0
      %3702 = vmatpush.bf16.msra.mxu0 %v3513
      %3703 = vmatpush.bf16.msra.mxu0 %v3511
      %3704 = vmatpush.bf16.msra.mxu0 %v3509
      %3705 = vmatpush.bf16.msra.mxu0 %v3507
      %3706 = vmatmul.bf16.gmra.mxu0 %v3523
      %v3707 = vpop.f32.mrf.mxu0
      %v3708 = vadd.f32 0.0, %v3707
      %v3709 = vpop.f32.mrf.mxu0
      %v3710 = vadd.f32 0.0, %v3709
      %3711 = vmatmul.bf16.gmra.mxu0 %v3526
      %v3712 = vpop.f32.mrf.mxu0
      %v3713 = vadd.f32 0.0, %v3712
      %v3714 = vpop.f32.mrf.mxu0
      %v3715 = vadd.f32 0.0, %v3714
      %3716 = vmatmul.bf16.gmra.mxu0 %v3529
      %v3717 = vpop.f32.mrf.mxu0
      %v3718 = vadd.f32 0.0, %v3717
      %v3719 = vpop.f32.mrf.mxu0
      %v3720 = vadd.f32 0.0, %v3719
      %3721 = vmatmul.bf16.gmra.mxu0 %v3532
      %v3722 = vpop.f32.mrf.mxu0
      %v3723 = vadd.f32 0.0, %v3722
      %v3724 = vpop.f32.mrf.mxu0
      %v3725 = vadd.f32 0.0, %v3724
      %3726 = vmatmul.bf16.gmra.mxu0 %v3535
      %v3727 = vpop.f32.mrf.mxu0
      %v3728 = vadd.f32 0.0, %v3727
      %v3729 = vpop.f32.mrf.mxu0
      %v3730 = vadd.f32 0.0, %v3729
      %3731 = vmatmul.bf16.gmra.mxu0 %v3538
      %v3732 = vpop.f32.mrf.mxu0
      %v3733 = vadd.f32 0.0, %v3732
      %v3734 = vpop.f32.mrf.mxu0
      %v3735 = vadd.f32 0.0, %v3734
      %3736 = vmatmul.bf16.gmra.mxu0 %v3541
      %v3737 = vpop.f32.mrf.mxu0
      %v3738 = vadd.f32 0.0, %v3737
      %v3739 = vpop.f32.mrf.mxu0
      %v3740 = vadd.f32 0.0, %v3739
      %3741 = vmatmul.bf16.gmra.mxu0 %v3544
      %v3742 = vpop.f32.mrf.mxu0
      %v3743 = vadd.f32 0.0, %v3742
      %v3744 = vpop.f32.mrf.mxu0
      %v3745 = vadd.f32 0.0, %v3744
      %3746 = vmatmul.bf16.gmra.mxu0 %v3547
      %v3747 = vpop.f32.mrf.mxu0
      %v3748 = vadd.f32 0.0, %v3747
      %v3749 = vpop.f32.mrf.mxu0
      %v3750 = vadd.f32 0.0, %v3749
      %3751 = vmatmul.bf16.gmra.mxu0 %v3550
      %v3752 = vpop.f32.mrf.mxu0
      %v3753 = vadd.f32 0.0, %v3752
      %v3754 = vpop.f32.mrf.mxu0
      %v3755 = vadd.f32 0.0, %v3754
      %3756 = vmatmul.bf16.gmra.mxu0 %v3553
      %v3757 = vpop.f32.mrf.mxu0
      %v3758 = vadd.f32 0.0, %v3757
      %v3759 = vpop.f32.mrf.mxu0
      %v3760 = vadd.f32 0.0, %v3759
      %3761 = vmatmul.bf16.gmra.mxu0 %v3556
      %v3762 = vpop.f32.mrf.mxu0
      %v3763 = vadd.f32 0.0, %v3762
      %v3764 = vpop.f32.mrf.mxu0
      %v3765 = vadd.f32 0.0, %v3764
      %3766 = vmatmul.bf16.gmra.mxu0 %v3559
      %v3767 = vpop.f32.mrf.mxu0
      %v3768 = vadd.f32 0.0, %v3767
      %v3769 = vpop.f32.mrf.mxu0
      %v3770 = vadd.f32 0.0, %v3769
      %3771 = vmatmul.bf16.gmra.mxu0 %v3562
      %v3772 = vpop.f32.mrf.mxu0
      %v3773 = vadd.f32 0.0, %v3772
      %v3774 = vpop.f32.mrf.mxu0
      %v3775 = vadd.f32 0.0, %v3774
      %3776 = vmatmul.bf16.gmra.mxu0 %v3565
      %v3777 = vpop.f32.mrf.mxu0
      %v3778 = vadd.f32 0.0, %v3777
      %v3779 = vpop.f32.mrf.mxu0
      %v3780 = vadd.f32 0.0, %v3779
      %3781 = vmatmul.bf16.gmra.mxu0 %v3568
      %v3782 = vpop.f32.mrf.mxu0
      %v3783 = vadd.f32 0.0, %v3782
      %v3784 = vpop.f32.mrf.mxu0
      %v3785 = vadd.f32 0.0, %v3784
      %3786 = vmatmul.bf16.gmra.mxu0 %v3571
      %v3787 = vpop.f32.mrf.mxu0
      %v3788 = vadd.f32 0.0, %v3787
      %v3789 = vpop.f32.mrf.mxu0
      %v3790 = vadd.f32 0.0, %v3789
      %3791 = vmatmul.bf16.gmra.mxu0 %v3574
      %v3792 = vpop.f32.mrf.mxu0
      %v3793 = vadd.f32 0.0, %v3792
      %v3794 = vpop.f32.mrf.mxu0
      %v3795 = vadd.f32 0.0, %v3794
      %3796 = vmatmul.bf16.gmra.mxu0 %v3577
      %v3797 = vpop.f32.mrf.mxu0
      %v3798 = vadd.f32 0.0, %v3797
      %v3799 = vpop.f32.mrf.mxu0
      %v3800 = vadd.f32 0.0, %v3799
      %3801 = vmatmul.bf16.gmra.mxu0 %v3580
      %v3802 = vpop.f32.mrf.mxu0
      %v3803 = vadd.f32 0.0, %v3802
      %v3804 = vpop.f32.mrf.mxu0
      %v3805 = vadd.f32 0.0, %v3804
      %3806 = vmatmul.bf16.gmra.mxu0 %v3583
      %v3807 = vpop.f32.mrf.mxu0
      %v3808 = vadd.f32 0.0, %v3807
      %v3809 = vpop.f32.mrf.mxu0
      %3810 = vdwg.mxu0
      %v3811 = vadd.f32 %v3206, %v3595
      %v3812 = vadd.f32 %v3207, %v3708
      %v3813 = vadd.f32 %v3208, %v3597
      %v3814 = vadd.f32 %v3209, %v3710
      %v3815 = vadd.f32 %v3210, %v3600
      %v3816 = vadd.f32 %v3211, %v3713
      %v3817 = vadd.f32 %v3212, %v3602
      %v3818 = vadd.f32 %v3213, %v3715
      %v3819 = vadd.f32 %v3214, %v3605
      %v3820 = vadd.f32 %v3215, %v3718
      %v3821 = vadd.f32 %v3216, %v3607
      %v3822 = vadd.f32 %v3217, %v3720
      %v3823 = vadd.f32 %v3218, %v3610
      %v3824 = vadd.f32 %v3219, %v3723
      %v3825 = vadd.f32 %v3220, %v3612
      %v3826 = vadd.f32 %v3221, %v3725
      %v3827 = vadd.f32 %v3222, %v3615
      %v3828 = vadd.f32 %v3223, %v3728
      %v3829 = vadd.f32 %v3224, %v3617
      %v3830 = vadd.f32 %v3225, %v3730
      %v3831 = vadd.f32 %v3226, %v3620
      %v3832 = vadd.f32 %v3227, %v3733
      %v3833 = vadd.f32 %v3228, %v3622
      %v3834 = vadd.f32 %v3229, %v3735
      %v3835 = vadd.f32 %v3230, %v3625
      %v3836 = vadd.f32 %v3231, %v3738
      %v3837 = vadd.f32 %v3232, %v3627
      %v3838 = vadd.f32 %v3233, %v3740
      %v3839 = vadd.f32 %v3234, %v3630
      %v3840 = vadd.f32 %v3235, %v3743
      %v3841 = vadd.f32 %v3236, %v3632
      %v3842 = vadd.f32 %v3237, %v3745
      %v3843 = vadd.f32 %v3238, %v3635
      %v3844 = vadd.f32 %v3239, %v3748
      %v3845 = vadd.f32 %v3240, %v3637
      %v3846 = vadd.f32 %v3241, %v3750
      %v3847 = vadd.f32 %v3242, %v3640
      %v3848 = vadd.f32 %v3243, %v3753
      %v3849 = vadd.f32 %v3244, %v3642
      %v3850 = vadd.f32 %v3245, %v3755
      %v3851 = vadd.f32 %v3246, %v3645
      %v3852 = vadd.f32 %v3247, %v3758
      %v3853 = vadd.f32 %v3248, %v3647
      %v3854 = vadd.f32 %v3249, %v3760
      %v3855 = vadd.f32 %v3250, %v3650
      %v3856 = vadd.f32 %v3251, %v3763
      %v3857 = vadd.f32 %v3252, %v3652
      %v3858 = vadd.f32 %v3253, %v3765
      %v3859 = vadd.f32 %v3254, %v3655
      %v3860 = vadd.f32 %v3255, %v3768
      %v3861 = vadd.f32 %v3256, %v3657
      %v3862 = vadd.f32 %v3257, %v3770
      %v3863 = vadd.f32 %v3258, %v3660
      %v3864 = vadd.f32 %v3259, %v3773
      %v3865 = vadd.f32 %v3260, %v3662
      %v3866 = vadd.f32 %v3261, %v3775
      %v3867 = vadd.f32 %v3262, %v3665
      %v3868 = vadd.f32 %v3263, %v3778
      %v3869 = vadd.f32 %v3264, %v3667
      %v3870 = vadd.f32 %v3265, %v3780
      %v3871 = vadd.f32 %v3266, %v3670
      %v3872 = vadd.f32 %v3267, %v3783
      %v3873 = vadd.f32 %v3268, %v3672
      %v3874 = vadd.f32 %v3269, %v3785
      %v3875 = vadd.f32 %v3270, %v3675
      %v3876 = vadd.f32 %v3271, %v3788
      %v3877 = vadd.f32 %v3272, %v3677
      %v3878 = vadd.f32 %v3273, %v3790
      %v3879 = vadd.f32 %v3274, %v3680
      %v3880 = vadd.f32 %v3275, %v3793
      %v3881 = vadd.f32 %v3276, %v3682
      %v3882 = vadd.f32 %v3277, %v3795
      %v3883 = vadd.f32 %v3278, %v3685
      %v3884 = vadd.f32 %v3279, %v3798
      %v3885 = vadd.f32 %v3280, %v3687
      %v3886 = vadd.f32 %v3281, %v3800
      %v3887 = vadd.f32 %v3282, %v3690
      %v3888 = vadd.f32 %v3283, %v3803
      %v3889 = vadd.f32 %v3284, %v3692
      %v3890 = vadd.f32 %v3285, %v3805
      %v3891 = vadd.f32 %v3286, %v3695
      %v3892 = vadd.f32 %v3287, %v3808
      %v3893 = vld [vmem:[#allocation2 + $0xa8] sm:$0xf]
      %s3894 = scalar_lea.vmem %s8, 256
      %v3895 = vld [vmem:[%s3894] sm:$0xff]
      %v3896 = vld [vmem:[%s3894 + $0x8] sm:$0xff]
      %v3897 = vld [vmem:[%s3894 + $0x10] sm:$0xff]
      %v3898 = vld [vmem:[%s3894 + $0x18] sm:$0xff]
      %v3899 = vld [vmem:[%s3894 + $0x20] sm:$0xff]
      %v3900 = vld [vmem:[%s3894 + $0x28] sm:$0xff]
      %v3901 = vld [vmem:[%s3894 + $0x30] sm:$0xff]
      %v3902 = vld [vmem:[%s3894 + $0x38] sm:$0xff]
      %v3904 = vunpack.c.l.b16 %v3893
      %v3905 = vpack.c.b16 %v3904, %v3904
      %vm3906 = vsmask.f32 6400
      %v3908 = vshrl.u32 %v3420, 16
      %v3910 = vrot.slane %v3908, 1
      %v3911 = vshll.u32 %v3420, 16
      %v3913 = vrot.slane %v3911, 2
      %v3914 = vor.u32 %v3910, %v3913
      %v3916 = vshrl.u32 %v3421, 16
      %v3918 = vrot.slane %v3916, 1
      %v3919 = vshll.u32 %v3421, 16
      %v3921 = vrot.slane %v3919, 2
      %v3922 = vor.u32 %v3918, %v3921
      %v3923 = vsel %vm3906, %v3914, %v3922
      %v3925 = vshrl.u32 %v3422, 16
      %v3927 = vrot.slane %v3925, 1
      %v3928 = vshll.u32 %v3422, 16
      %v3930 = vrot.slane %v3928, 2
      %v3931 = vor.u32 %v3927, %v3930
      %v3932 = vsel %vm3906, %v3922, %v3931
      %v3934 = vshrl.u32 %v3423, 16
      %v3936 = vrot.slane %v3934, 1
      %v3937 = vshll.u32 %v3423, 16
      %v3939 = vrot.slane %v3937, 2
      %v3940 = vor.u32 %v3936, %v3939
      %v3941 = vsel %vm3906, %v3931, %v3940
      %v3943 = vshrl.u32 %v3424, 16
      %v3945 = vrot.slane %v3943, 1
      %v3946 = vshll.u32 %v3424, 16
      %v3948 = vrot.slane %v3946, 2
      %v3949 = vor.u32 %v3945, %v3948
      %v3950 = vsel %vm3906, %v3940, %v3949
      %v3952 = vshrl.u32 %v3425, 16
      %v3954 = vrot.slane %v3952, 1
      %v3955 = vshll.u32 %v3425, 16
      %v3957 = vrot.slane %v3955, 2
      %v3958 = vor.u32 %v3954, %v3957
      %v3959 = vsel %vm3906, %v3949, %v3958
      %v3961 = vshrl.u32 %v3426, 16
      %v3963 = vrot.slane %v3961, 1
      %v3964 = vshll.u32 %v3426, 16
      %v3966 = vrot.slane %v3964, 2
      %v3967 = vor.u32 %v3963, %v3966
      %v3968 = vsel %vm3906, %v3958, %v3967
      %v3970 = vshrl.u32 %v3427, 16
      %v3972 = vrot.slane %v3970, 1
      %v3973 = vshll.u32 %v3427, 16
      %v3975 = vrot.slane %v3973, 2
      %v3976 = vor.u32 %v3972, %v3975
      %v3977 = vsel %vm3906, %v3967, %v3976
      %v3979 = vshrl.u32 %v3428, 16
      %v3981 = vrot.slane %v3979, 1
      %v3982 = vshll.u32 %v3428, 16
      %v3984 = vrot.slane %v3982, 2
      %v3985 = vor.u32 %v3981, %v3984
      %v3986 = vsel %vm3906, %v3976, %v3985
      %v3988 = vshrl.u32 %v3429, 16
      %v3990 = vrot.slane %v3988, 1
      %v3991 = vshll.u32 %v3429, 16
      %v3993 = vrot.slane %v3991, 2
      %v3994 = vor.u32 %v3990, %v3993
      %v3995 = vsel %vm3906, %v3985, %v3994
      %v3997 = vshrl.u32 %v3430, 16
      %v3999 = vrot.slane %v3997, 1
      %v4000 = vshll.u32 %v3430, 16
      %v4002 = vrot.slane %v4000, 2
      %v4003 = vor.u32 %v3999, %v4002
      %v4004 = vsel %vm3906, %v3994, %v4003
      %v4006 = vshrl.u32 %v3431, 16
      %v4008 = vrot.slane %v4006, 1
      %v4009 = vshll.u32 %v3431, 16
      %v4011 = vrot.slane %v4009, 2
      %v4012 = vor.u32 %v4008, %v4011
      %v4013 = vsel %vm3906, %v4003, %v4012
      %v4015 = vshrl.u32 %v3432, 16
      %v4017 = vrot.slane %v4015, 1
      %v4018 = vshll.u32 %v3432, 16
      %v4020 = vrot.slane %v4018, 2
      %v4021 = vor.u32 %v4017, %v4020
      %v4022 = vsel %vm3906, %v4012, %v4021
      %v4024 = vshrl.u32 %v3433, 16
      %v4026 = vrot.slane %v4024, 1
      %v4027 = vshll.u32 %v3433, 16
      %v4029 = vrot.slane %v4027, 2
      %v4030 = vor.u32 %v4026, %v4029
      %v4031 = vsel %vm3906, %v4021, %v4030
      %v4033 = vshrl.u32 %v3434, 16
      %v4035 = vrot.slane %v4033, 1
      %v4036 = vshll.u32 %v3434, 16
      %v4038 = vrot.slane %v4036, 2
      %v4039 = vor.u32 %v4035, %v4038
      %v4040 = vsel %vm3906, %v4030, %v4039
      %v4042 = vshrl.u32 %v3435, 16
      %v4044 = vrot.slane %v4042, 1
      %v4045 = vshll.u32 %v3435, 16
      %v4047 = vrot.slane %v4045, 2
      %v4048 = vor.u32 %v4044, %v4047
      %v4049 = vsel %vm3906, %v4039, %v4048
      %v4051 = vshrl.u32 %v3436, 16
      %v4053 = vrot.slane %v4051, 1
      %v4054 = vshll.u32 %v3436, 16
      %v4056 = vrot.slane %v4054, 2
      %v4057 = vor.u32 %v4053, %v4056
      %v4058 = vsel %vm3906, %v4048, %v4057
      %v4060 = vshrl.u32 %v3437, 16
      %v4062 = vrot.slane %v4060, 1
      %v4063 = vshll.u32 %v3437, 16
      %v4065 = vrot.slane %v4063, 2
      %v4066 = vor.u32 %v4062, %v4065
      %v4067 = vsel %vm3906, %v4057, %v4066
      %v4069 = vshrl.u32 %v3438, 16
      %v4071 = vrot.slane %v4069, 1
      %v4072 = vshll.u32 %v3438, 16
      %v4074 = vrot.slane %v4072, 2
      %v4075 = vor.u32 %v4071, %v4074
      %v4076 = vsel %vm3906, %v4066, %v4075
      %v4078 = vshrl.u32 %v3439, 16
      %v4080 = vrot.slane %v4078, 1
      %v4081 = vshll.u32 %v3439, 16
      %v4083 = vrot.slane %v4081, 2
      %v4084 = vor.u32 %v4080, %v4083
      %v4085 = vsel %vm3906, %v4075, %v4084
      %v4087 = vshrl.u32 %v3905, 16
      %v4089 = vrot.slane %v4087, 1
      %v4090 = vshll.u32 %v3905, 16
      %v4092 = vrot.slane %v4090, 2
      %v4093 = vor.u32 %v4089, %v4092
      %v4094 = vsel %vm3906, %v4084, %v4093
      %v4103 = vunpack.c.l.b16 %v3895
      %v4104 = vunpack.c.h.b16 %v3895
      %v4105 = vunpack.c.l.b16 %v3896
      %v4106 = vunpack.c.h.b16 %v3896
      %v4107 = vunpack.c.l.b16 %v3897
      %v4108 = vunpack.c.h.b16 %v3897
      %v4109 = vunpack.c.l.b16 %v3898
      %v4110 = vunpack.c.h.b16 %v3898
      %v4111 = vunpack.c.l.b16 %v3899
      %v4112 = vunpack.c.h.b16 %v3899
      %v4113 = vunpack.c.l.b16 %v3900
      %v4114 = vunpack.c.h.b16 %v3900
      %v4115 = vunpack.c.l.b16 %v3901
      %v4116 = vunpack.c.h.b16 %v3901
      %v4117 = vunpack.c.l.b16 %v3902
      %v4118 = vunpack.c.h.b16 %v3902
      %v4119 = vpack.c.b16 %v4105, %v4103
      %v4120 = vpack.c.b16 %v4106, %v4104
      %v4121 = vpack.c.b16 %v4109, %v4107
      %v4122 = vpack.c.b16 %v4110, %v4108
      %v4123 = vpack.c.b16 %v4113, %v4111
      %v4124 = vpack.c.b16 %v4114, %v4112
      %v4125 = vpack.c.b16 %v4117, %v4115
      %v4126 = vpack.c.b16 %v4118, %v4116
      %v4136 = vsel %vm497, %v3923, 0
      %v4139 = vsel %vm497, %v3932, 0
      %v4142 = vsel %vm497, %v3941, 0
      %v4145 = vsel %vm497, %v3950, 0
      %v4148 = vsel %vm497, %v3959, 0
      %v4151 = vsel %vm497, %v3968, 0
      %v4154 = vsel %vm497, %v3977, 0
      %v4157 = vsel %vm497, %v3986, 0
      %v4160 = vsel %vm497, %v3995, 0
      %v4163 = vsel %vm497, %v4004, 0
      %v4166 = vsel %vm497, %v4013, 0
      %v4169 = vsel %vm497, %v4022, 0
      %v4172 = vsel %vm497, %v4031, 0
      %v4175 = vsel %vm497, %v4040, 0
      %v4178 = vsel %vm497, %v4049, 0
      %v4181 = vsel %vm497, %v4058, 0
      %v4184 = vsel %vm497, %v4067, 0
      %v4187 = vsel %vm497, %v4076, 0
      %v4190 = vsel %vm497, %v4085, 0
      %v4193 = vsel %vm497, %v4094, 0
      %v4196 = vsel %vm497, %v4093, 0
      %4198 = vmatpush.bf16.msra.mxu0 0
      %4199 = vmatpush.bf16.msra.mxu0 0
      %4200 = vmatpush.bf16.msra.mxu0 0
      %4201 = vmatpush.bf16.msra.mxu0 0
      %4202 = vmatpush.bf16.msra.mxu0 %v4125
      %4203 = vmatpush.bf16.msra.mxu0 %v4123
      %4204 = vmatpush.bf16.msra.mxu0 %v4121
      %4205 = vmatpush.bf16.msra.mxu0 %v4119
      %4206 = vmatmul.bf16.gmra.mxu0 %v4136
      %v4207 = vpop.f32.mrf.mxu0
      %v4208 = vadd.f32 0.0, %v4207
      %v4209 = vpop.f32.mrf.mxu0
      %v4210 = vadd.f32 0.0, %v4209
      %4211 = vmatmul.bf16.gmra.mxu0 %v4139
      %v4212 = vpop.f32.mrf.mxu0
      %v4213 = vadd.f32 0.0, %v4212
      %v4214 = vpop.f32.mrf.mxu0
      %v4215 = vadd.f32 0.0, %v4214
      %4216 = vmatmul.bf16.gmra.mxu0 %v4142
      %v4217 = vpop.f32.mrf.mxu0
      %v4218 = vadd.f32 0.0, %v4217
      %v4219 = vpop.f32.mrf.mxu0
      %v4220 = vadd.f32 0.0, %v4219
      %4221 = vmatmul.bf16.gmra.mxu0 %v4145
      %v4222 = vpop.f32.mrf.mxu0
      %v4223 = vadd.f32 0.0, %v4222
      %v4224 = vpop.f32.mrf.mxu0
      %v4225 = vadd.f32 0.0, %v4224
      %4226 = vmatmul.bf16.gmra.mxu0 %v4148
      %v4227 = vpop.f32.mrf.mxu0
      %v4228 = vadd.f32 0.0, %v4227
      %v4229 = vpop.f32.mrf.mxu0
      %v4230 = vadd.f32 0.0, %v4229
      %4231 = vmatmul.bf16.gmra.mxu0 %v4151
      %v4232 = vpop.f32.mrf.mxu0
      %v4233 = vadd.f32 0.0, %v4232
      %v4234 = vpop.f32.mrf.mxu0
      %v4235 = vadd.f32 0.0, %v4234
      %4236 = vmatmul.bf16.gmra.mxu0 %v4154
      %v4237 = vpop.f32.mrf.mxu0
      %v4238 = vadd.f32 0.0, %v4237
      %v4239 = vpop.f32.mrf.mxu0
      %v4240 = vadd.f32 0.0, %v4239
      %4241 = vmatmul.bf16.gmra.mxu0 %v4157
      %v4242 = vpop.f32.mrf.mxu0
      %v4243 = vadd.f32 0.0, %v4242
      %v4244 = vpop.f32.mrf.mxu0
      %v4245 = vadd.f32 0.0, %v4244
      %4246 = vmatmul.bf16.gmra.mxu0 %v4160
      %v4247 = vpop.f32.mrf.mxu0
      %v4248 = vadd.f32 0.0, %v4247
      %v4249 = vpop.f32.mrf.mxu0
      %v4250 = vadd.f32 0.0, %v4249
      %4251 = vmatmul.bf16.gmra.mxu0 %v4163
      %v4252 = vpop.f32.mrf.mxu0
      %v4253 = vadd.f32 0.0, %v4252
      %v4254 = vpop.f32.mrf.mxu0
      %v4255 = vadd.f32 0.0, %v4254
      %4256 = vmatmul.bf16.gmra.mxu0 %v4166
      %v4257 = vpop.f32.mrf.mxu0
      %v4258 = vadd.f32 0.0, %v4257
      %v4259 = vpop.f32.mrf.mxu0
      %v4260 = vadd.f32 0.0, %v4259
      %4261 = vmatmul.bf16.gmra.mxu0 %v4169
      %v4262 = vpop.f32.mrf.mxu0
      %v4263 = vadd.f32 0.0, %v4262
      %v4264 = vpop.f32.mrf.mxu0
      %v4265 = vadd.f32 0.0, %v4264
      %4266 = vmatmul.bf16.gmra.mxu0 %v4172
      %v4267 = vpop.f32.mrf.mxu0
      %v4268 = vadd.f32 0.0, %v4267
      %v4269 = vpop.f32.mrf.mxu0
      %v4270 = vadd.f32 0.0, %v4269
      %4271 = vmatmul.bf16.gmra.mxu0 %v4175
      %v4272 = vpop.f32.mrf.mxu0
      %v4273 = vadd.f32 0.0, %v4272
      %v4274 = vpop.f32.mrf.mxu0
      %v4275 = vadd.f32 0.0, %v4274
      %4276 = vmatmul.bf16.gmra.mxu0 %v4178
      %v4277 = vpop.f32.mrf.mxu0
      %v4278 = vadd.f32 0.0, %v4277
      %v4279 = vpop.f32.mrf.mxu0
      %v4280 = vadd.f32 0.0, %v4279
      %4281 = vmatmul.bf16.gmra.mxu0 %v4181
      %v4282 = vpop.f32.mrf.mxu0
      %v4283 = vadd.f32 0.0, %v4282
      %v4284 = vpop.f32.mrf.mxu0
      %v4285 = vadd.f32 0.0, %v4284
      %4286 = vmatmul.bf16.gmra.mxu0 %v4184
      %v4287 = vpop.f32.mrf.mxu0
      %v4288 = vadd.f32 0.0, %v4287
      %v4289 = vpop.f32.mrf.mxu0
      %v4290 = vadd.f32 0.0, %v4289
      %4291 = vmatmul.bf16.gmra.mxu0 %v4187
      %v4292 = vpop.f32.mrf.mxu0
      %v4293 = vadd.f32 0.0, %v4292
      %v4294 = vpop.f32.mrf.mxu0
      %v4295 = vadd.f32 0.0, %v4294
      %4296 = vmatmul.bf16.gmra.mxu0 %v4190
      %v4297 = vpop.f32.mrf.mxu0
      %v4298 = vadd.f32 0.0, %v4297
      %v4299 = vpop.f32.mrf.mxu0
      %v4300 = vadd.f32 0.0, %v4299
      %4301 = vmatmul.bf16.gmra.mxu0 %v4193
      %v4302 = vpop.f32.mrf.mxu0
      %v4303 = vadd.f32 0.0, %v4302
      %v4304 = vpop.f32.mrf.mxu0
      %v4305 = vadd.f32 0.0, %v4304
      %4306 = vmatmul.bf16.gmra.mxu0 %v4196
      %v4307 = vpop.f32.mrf.mxu0
      %v4308 = vadd.f32 0.0, %v4307
      %v4309 = vpop.f32.mrf.mxu0
      %4310 = vdwg.mxu0
      %4311 = vmatpush.bf16.msra.mxu0 0
      %4312 = vmatpush.bf16.msra.mxu0 0
      %4313 = vmatpush.bf16.msra.mxu0 0
      %4314 = vmatpush.bf16.msra.mxu0 0
      %4315 = vmatpush.bf16.msra.mxu0 %v4126
      %4316 = vmatpush.bf16.msra.mxu0 %v4124
      %4317 = vmatpush.bf16.msra.mxu0 %v4122
      %4318 = vmatpush.bf16.msra.mxu0 %v4120
      %4319 = vmatmul.bf16.gmra.mxu0 %v4136
      %v4320 = vpop.f32.mrf.mxu0
      %v4321 = vadd.f32 0.0, %v4320
      %v4322 = vpop.f32.mrf.mxu0
      %v4323 = vadd.f32 0.0, %v4322
      %4324 = vmatmul.bf16.gmra.mxu0 %v4139
      %v4325 = vpop.f32.mrf.mxu0
      %v4326 = vadd.f32 0.0, %v4325
      %v4327 = vpop.f32.mrf.mxu0
      %v4328 = vadd.f32 0.0, %v4327
      %4329 = vmatmul.bf16.gmra.mxu0 %v4142
      %v4330 = vpop.f32.mrf.mxu0
      %v4331 = vadd.f32 0.0, %v4330
      %v4332 = vpop.f32.mrf.mxu0
      %v4333 = vadd.f32 0.0, %v4332
      %4334 = vmatmul.bf16.gmra.mxu0 %v4145
      %v4335 = vpop.f32.mrf.mxu0
      %v4336 = vadd.f32 0.0, %v4335
      %v4337 = vpop.f32.mrf.mxu0
      %v4338 = vadd.f32 0.0, %v4337
      %4339 = vmatmul.bf16.gmra.mxu0 %v4148
      %v4340 = vpop.f32.mrf.mxu0
      %v4341 = vadd.f32 0.0, %v4340
      %v4342 = vpop.f32.mrf.mxu0
      %v4343 = vadd.f32 0.0, %v4342
      %4344 = vmatmul.bf16.gmra.mxu0 %v4151
      %v4345 = vpop.f32.mrf.mxu0
      %v4346 = vadd.f32 0.0, %v4345
      %v4347 = vpop.f32.mrf.mxu0
      %v4348 = vadd.f32 0.0, %v4347
      %4349 = vmatmul.bf16.gmra.mxu0 %v4154
      %v4350 = vpop.f32.mrf.mxu0
      %v4351 = vadd.f32 0.0, %v4350
      %v4352 = vpop.f32.mrf.mxu0
      %v4353 = vadd.f32 0.0, %v4352
      %4354 = vmatmul.bf16.gmra.mxu0 %v4157
      %v4355 = vpop.f32.mrf.mxu0
      %v4356 = vadd.f32 0.0, %v4355
      %v4357 = vpop.f32.mrf.mxu0
      %v4358 = vadd.f32 0.0, %v4357
      %4359 = vmatmul.bf16.gmra.mxu0 %v4160
      %v4360 = vpop.f32.mrf.mxu0
      %v4361 = vadd.f32 0.0, %v4360
      %v4362 = vpop.f32.mrf.mxu0
      %v4363 = vadd.f32 0.0, %v4362
      %4364 = vmatmul.bf16.gmra.mxu0 %v4163
      %v4365 = vpop.f32.mrf.mxu0
      %v4366 = vadd.f32 0.0, %v4365
      %v4367 = vpop.f32.mrf.mxu0
      %v4368 = vadd.f32 0.0, %v4367
      %4369 = vmatmul.bf16.gmra.mxu0 %v4166
      %v4370 = vpop.f32.mrf.mxu0
      %v4371 = vadd.f32 0.0, %v4370
      %v4372 = vpop.f32.mrf.mxu0
      %v4373 = vadd.f32 0.0, %v4372
      %4374 = vmatmul.bf16.gmra.mxu0 %v4169
      %v4375 = vpop.f32.mrf.mxu0
      %v4376 = vadd.f32 0.0, %v4375
      %v4377 = vpop.f32.mrf.mxu0
      %v4378 = vadd.f32 0.0, %v4377
      %4379 = vmatmul.bf16.gmra.mxu0 %v4172
      %v4380 = vpop.f32.mrf.mxu0
      %v4381 = vadd.f32 0.0, %v4380
      %v4382 = vpop.f32.mrf.mxu0
      %v4383 = vadd.f32 0.0, %v4382
      %4384 = vmatmul.bf16.gmra.mxu0 %v4175
      %v4385 = vpop.f32.mrf.mxu0
      %v4386 = vadd.f32 0.0, %v4385
      %v4387 = vpop.f32.mrf.mxu0
      %v4388 = vadd.f32 0.0, %v4387
      %4389 = vmatmul.bf16.gmra.mxu0 %v4178
      %v4390 = vpop.f32.mrf.mxu0
      %v4391 = vadd.f32 0.0, %v4390
      %v4392 = vpop.f32.mrf.mxu0
      %v4393 = vadd.f32 0.0, %v4392
      %4394 = vmatmul.bf16.gmra.mxu0 %v4181
      %v4395 = vpop.f32.mrf.mxu0
      %v4396 = vadd.f32 0.0, %v4395
      %v4397 = vpop.f32.mrf.mxu0
      %v4398 = vadd.f32 0.0, %v4397
      %4399 = vmatmul.bf16.gmra.mxu0 %v4184
      %v4400 = vpop.f32.mrf.mxu0
      %v4401 = vadd.f32 0.0, %v4400
      %v4402 = vpop.f32.mrf.mxu0
      %v4403 = vadd.f32 0.0, %v4402
      %4404 = vmatmul.bf16.gmra.mxu0 %v4187
      %v4405 = vpop.f32.mrf.mxu0
      %v4406 = vadd.f32 0.0, %v4405
      %v4407 = vpop.f32.mrf.mxu0
      %v4408 = vadd.f32 0.0, %v4407
      %4409 = vmatmul.bf16.gmra.mxu0 %v4190
      %v4410 = vpop.f32.mrf.mxu0
      %v4411 = vadd.f32 0.0, %v4410
      %v4412 = vpop.f32.mrf.mxu0
      %v4413 = vadd.f32 0.0, %v4412
      %4414 = vmatmul.bf16.gmra.mxu0 %v4193
      %v4415 = vpop.f32.mrf.mxu0
      %v4416 = vadd.f32 0.0, %v4415
      %v4417 = vpop.f32.mrf.mxu0
      %v4418 = vadd.f32 0.0, %v4417
      %4419 = vmatmul.bf16.gmra.mxu0 %v4196
      %v4420 = vpop.f32.mrf.mxu0
      %v4421 = vadd.f32 0.0, %v4420
      %v4422 = vpop.f32.mrf.mxu0
      %4423 = vdwg.mxu0
      %v4424 = vadd.f32 %v3811, %v4208
      %v4425 = vadd.f32 %v3812, %v4321
      %v4426 = vadd.f32 %v3813, %v4210
      %v4427 = vadd.f32 %v3814, %v4323
      %v4428 = vadd.f32 %v3815, %v4213
      %v4429 = vadd.f32 %v3816, %v4326
      %v4430 = vadd.f32 %v3817, %v4215
      %v4431 = vadd.f32 %v3818, %v4328
      %v4432 = vadd.f32 %v3819, %v4218
      %v4433 = vadd.f32 %v3820, %v4331
      %v4434 = vadd.f32 %v3821, %v4220
      %v4435 = vadd.f32 %v3822, %v4333
      %v4436 = vadd.f32 %v3823, %v4223
      %v4437 = vadd.f32 %v3824, %v4336
      %v4438 = vadd.f32 %v3825, %v4225
      %v4439 = vadd.f32 %v3826, %v4338
      %v4440 = vadd.f32 %v3827, %v4228
      %v4441 = vadd.f32 %v3828, %v4341
      %v4442 = vadd.f32 %v3829, %v4230
      %v4443 = vadd.f32 %v3830, %v4343
      %v4444 = vadd.f32 %v3831, %v4233
      %v4445 = vadd.f32 %v3832, %v4346
      %v4446 = vadd.f32 %v3833, %v4235
      %v4447 = vadd.f32 %v3834, %v4348
      %v4448 = vadd.f32 %v3835, %v4238
      %v4449 = vadd.f32 %v3836, %v4351
      %v4450 = vadd.f32 %v3837, %v4240
      %v4451 = vadd.f32 %v3838, %v4353
      %v4452 = vadd.f32 %v3839, %v4243
      %v4453 = vadd.f32 %v3840, %v4356
      %v4454 = vadd.f32 %v3841, %v4245
      %v4455 = vadd.f32 %v3842, %v4358
      %v4456 = vadd.f32 %v3843, %v4248
      %v4457 = vadd.f32 %v3844, %v4361
      %v4458 = vadd.f32 %v3845, %v4250
      %v4459 = vadd.f32 %v3846, %v4363
      %v4460 = vadd.f32 %v3847, %v4253
      %v4461 = vadd.f32 %v3848, %v4366
      %v4462 = vadd.f32 %v3849, %v4255
      %v4463 = vadd.f32 %v3850, %v4368
      %v4464 = vadd.f32 %v3851, %v4258
      %v4465 = vadd.f32 %v3852, %v4371
      %v4466 = vadd.f32 %v3853, %v4260
      %v4467 = vadd.f32 %v3854, %v4373
      %v4468 = vadd.f32 %v3855, %v4263
      %v4469 = vadd.f32 %v3856, %v4376
      %v4470 = vadd.f32 %v3857, %v4265
      %v4471 = vadd.f32 %v3858, %v4378
      %v4472 = vadd.f32 %v3859, %v4268
      %v4473 = vadd.f32 %v3860, %v4381
      %v4474 = vadd.f32 %v3861, %v4270
      %v4475 = vadd.f32 %v3862, %v4383
      %v4476 = vadd.f32 %v3863, %v4273
      %v4477 = vadd.f32 %v3864, %v4386
      %v4478 = vadd.f32 %v3865, %v4275
      %v4479 = vadd.f32 %v3866, %v4388
      %v4480 = vadd.f32 %v3867, %v4278
      %v4481 = vadd.f32 %v3868, %v4391
      %v4482 = vadd.f32 %v3869, %v4280
      %v4483 = vadd.f32 %v3870, %v4393
      %v4484 = vadd.f32 %v3871, %v4283
      %v4485 = vadd.f32 %v3872, %v4396
      %v4486 = vadd.f32 %v3873, %v4285
      %v4487 = vadd.f32 %v3874, %v4398
      %v4488 = vadd.f32 %v3875, %v4288
      %v4489 = vadd.f32 %v3876, %v4401
      %v4490 = vadd.f32 %v3877, %v4290
      %v4491 = vadd.f32 %v3878, %v4403
      %v4492 = vadd.f32 %v3879, %v4293
      %v4493 = vadd.f32 %v3880, %v4406
      %v4494 = vadd.f32 %v3881, %v4295
      %v4495 = vadd.f32 %v3882, %v4408
      %v4496 = vadd.f32 %v3883, %v4298
      %v4497 = vadd.f32 %v3884, %v4411
      %v4498 = vadd.f32 %v3885, %v4300
      %v4499 = vadd.f32 %v3886, %v4413
      %v4500 = vadd.f32 %v3887, %v4303
      %v4501 = vadd.f32 %v3888, %v4416
      %v4502 = vadd.f32 %v3889, %v4305
      %v4503 = vadd.f32 %v3890, %v4418
      %v4504 = vadd.f32 %v3891, %v4308
      %v4505 = vadd.f32 %v3892, %v4421
      %v4506 = vld [vmem:[#allocation2 + $0x8] sm:$0xc]
      %s4507 = scalar_lea.vmem %s8, 320
      %v4508 = vld [vmem:[%s4507] sm:$0xff]
      %v4509 = vld [vmem:[%s4507 + $0x8] sm:$0xff]
      %v4510 = vld [vmem:[%s4507 + $0x10] sm:$0xff]
      %v4511 = vld [vmem:[%s4507 + $0x18] sm:$0xff]
      %v4512 = vld [vmem:[%s4507 + $0x20] sm:$0xff]
      %v4513 = vld [vmem:[%s4507 + $0x28] sm:$0xff]
      %v4514 = vld [vmem:[%s4507 + $0x30] sm:$0xff]
      %v4515 = vld [vmem:[%s4507 + $0x38] sm:$0xff]
      %v4517 = vunpack.c.l.b16 %v4506
      %v4518 = vpack.c.b16 %v3380, %v4517
      %vm4519 = vcmask 1045504
      %v4520 = vrot.slane %v4518, 2
      %v4521 = vrot.slane %v3421, 2
      %v4522 = vsel %vm4519, %v4520, %v4521
      %v4523 = vrot.slane %v3422, 2
      %v4524 = vsel %vm4519, %v4521, %v4523
      %v4525 = vrot.slane %v3423, 2
      %v4526 = vsel %vm4519, %v4523, %v4525
      %v4527 = vrot.slane %v3424, 2
      %v4528 = vsel %vm4519, %v4525, %v4527
      %v4529 = vrot.slane %v3425, 2
      %v4530 = vsel %vm4519, %v4527, %v4529
      %v4531 = vrot.slane %v3426, 2
      %v4532 = vsel %vm4519, %v4529, %v4531
      %v4533 = vrot.slane %v3427, 2
      %v4534 = vsel %vm4519, %v4531, %v4533
      %v4535 = vrot.slane %v3428, 2
      %v4536 = vsel %vm4519, %v4533, %v4535
      %v4537 = vrot.slane %v3429, 2
      %v4538 = vsel %vm4519, %v4535, %v4537
      %v4539 = vrot.slane %v3430, 2
      %v4540 = vsel %vm4519, %v4537, %v4539
      %v4541 = vrot.slane %v3431, 2
      %v4542 = vsel %vm4519, %v4539, %v4541
      %v4543 = vrot.slane %v3432, 2
      %v4544 = vsel %vm4519, %v4541, %v4543
      %v4545 = vrot.slane %v3433, 2
      %v4546 = vsel %vm4519, %v4543, %v4545
      %v4547 = vrot.slane %v3434, 2
      %v4548 = vsel %vm4519, %v4545, %v4547
      %v4549 = vrot.slane %v3435, 2
      %v4550 = vsel %vm4519, %v4547, %v4549
      %v4551 = vrot.slane %v3436, 2
      %v4552 = vsel %vm4519, %v4549, %v4551
      %v4553 = vrot.slane %v3437, 2
      %v4554 = vsel %vm4519, %v4551, %v4553
      %v4555 = vrot.slane %v3438, 2
      %v4556 = vsel %vm4519, %v4553, %v4555
      %v4557 = vrot.slane %v3439, 2
      %v4558 = vsel %vm4519, %v4555, %v4557
      %v4559 = vrot.slane %v3905, 2
      %v4560 = vsel %vm4519, %v4557, %v4559
      %v4569 = vunpack.c.l.b16 %v4508
      %v4570 = vunpack.c.h.b16 %v4508
      %v4571 = vunpack.c.l.b16 %v4509
      %v4572 = vunpack.c.h.b16 %v4509
      %v4573 = vunpack.c.l.b16 %v4510
      %v4574 = vunpack.c.h.b16 %v4510
      %v4575 = vunpack.c.l.b16 %v4511
      %v4576 = vunpack.c.h.b16 %v4511
      %v4577 = vunpack.c.l.b16 %v4512
      %v4578 = vunpack.c.h.b16 %v4512
      %v4579 = vunpack.c.l.b16 %v4513
      %v4580 = vunpack.c.h.b16 %v4513
      %v4581 = vunpack.c.l.b16 %v4514
      %v4582 = vunpack.c.h.b16 %v4514
      %v4583 = vunpack.c.l.b16 %v4515
      %v4584 = vunpack.c.h.b16 %v4515
      %v4585 = vpack.c.b16 %v4571, %v4569
      %v4586 = vpack.c.b16 %v4572, %v4570
      %v4587 = vpack.c.b16 %v4575, %v4573
      %v4588 = vpack.c.b16 %v4576, %v4574
      %v4589 = vpack.c.b16 %v4579, %v4577
      %v4590 = vpack.c.b16 %v4580, %v4578
      %v4591 = vpack.c.b16 %v4583, %v4581
      %v4592 = vpack.c.b16 %v4584, %v4582
      %v4602 = vsel %vm497, %v4522, 0
      %v4605 = vsel %vm497, %v4524, 0
      %v4608 = vsel %vm497, %v4526, 0
      %v4611 = vsel %vm497, %v4528, 0
      %v4614 = vsel %vm497, %v4530, 0
      %v4617 = vsel %vm497, %v4532, 0
      %v4620 = vsel %vm497, %v4534, 0
      %v4623 = vsel %vm497, %v4536, 0
      %v4626 = vsel %vm497, %v4538, 0
      %v4629 = vsel %vm497, %v4540, 0
      %v4632 = vsel %vm497, %v4542, 0
      %v4635 = vsel %vm497, %v4544, 0
      %v4638 = vsel %vm497, %v4546, 0
      %v4641 = vsel %vm497, %v4548, 0
      %v4644 = vsel %vm497, %v4550, 0
      %v4647 = vsel %vm497, %v4552, 0
      %v4650 = vsel %vm497, %v4554, 0
      %v4653 = vsel %vm497, %v4556, 0
      %v4656 = vsel %vm497, %v4558, 0
      %v4659 = vsel %vm497, %v4560, 0
      %v4662 = vsel %vm497, %v4559, 0
      %4664 = vmatpush.bf16.msra.mxu0 0
      %4665 = vmatpush.bf16.msra.mxu0 0
      %4666 = vmatpush.bf16.msra.mxu0 0
      %4667 = vmatpush.bf16.msra.mxu0 0
      %4668 = vmatpush.bf16.msra.mxu0 %v4591
      %4669 = vmatpush.bf16.msra.mxu0 %v4589
      %4670 = vmatpush.bf16.msra.mxu0 %v4587
      %4671 = vmatpush.bf16.msra.mxu0 %v4585
      %4672 = vmatmul.bf16.gmra.mxu0 %v4602
      %v4673 = vpop.f32.mrf.mxu0
      %v4674 = vadd.f32 0.0, %v4673
      %v4675 = vpop.f32.mrf.mxu0
      %v4676 = vadd.f32 0.0, %v4675
      %4677 = vmatmul.bf16.gmra.mxu0 %v4605
      %v4678 = vpop.f32.mrf.mxu0
      %v4679 = vadd.f32 0.0, %v4678
      %v4680 = vpop.f32.mrf.mxu0
      %v4681 = vadd.f32 0.0, %v4680
      %4682 = vmatmul.bf16.gmra.mxu0 %v4608
      %v4683 = vpop.f32.mrf.mxu0
      %v4684 = vadd.f32 0.0, %v4683
      %v4685 = vpop.f32.mrf.mxu0
      %v4686 = vadd.f32 0.0, %v4685
      %4687 = vmatmul.bf16.gmra.mxu0 %v4611
      %v4688 = vpop.f32.mrf.mxu0
      %v4689 = vadd.f32 0.0, %v4688
      %v4690 = vpop.f32.mrf.mxu0
      %v4691 = vadd.f32 0.0, %v4690
      %4692 = vmatmul.bf16.gmra.mxu0 %v4614
      %v4693 = vpop.f32.mrf.mxu0
      %v4694 = vadd.f32 0.0, %v4693
      %v4695 = vpop.f32.mrf.mxu0
      %v4696 = vadd.f32 0.0, %v4695
      %4697 = vmatmul.bf16.gmra.mxu0 %v4617
      %v4698 = vpop.f32.mrf.mxu0
      %v4699 = vadd.f32 0.0, %v4698
      %v4700 = vpop.f32.mrf.mxu0
      %v4701 = vadd.f32 0.0, %v4700
      %4702 = vmatmul.bf16.gmra.mxu0 %v4620
      %v4703 = vpop.f32.mrf.mxu0
      %v4704 = vadd.f32 0.0, %v4703
      %v4705 = vpop.f32.mrf.mxu0
      %v4706 = vadd.f32 0.0, %v4705
      %4707 = vmatmul.bf16.gmra.mxu0 %v4623
      %v4708 = vpop.f32.mrf.mxu0
      %v4709 = vadd.f32 0.0, %v4708
      %v4710 = vpop.f32.mrf.mxu0
      %v4711 = vadd.f32 0.0, %v4710
      %4712 = vmatmul.bf16.gmra.mxu0 %v4626
      %v4713 = vpop.f32.mrf.mxu0
      %v4714 = vadd.f32 0.0, %v4713
      %v4715 = vpop.f32.mrf.mxu0
      %v4716 = vadd.f32 0.0, %v4715
      %4717 = vmatmul.bf16.gmra.mxu0 %v4629
      %v4718 = vpop.f32.mrf.mxu0
      %v4719 = vadd.f32 0.0, %v4718
      %v4720 = vpop.f32.mrf.mxu0
      %v4721 = vadd.f32 0.0, %v4720
      %4722 = vmatmul.bf16.gmra.mxu0 %v4632
      %v4723 = vpop.f32.mrf.mxu0
      %v4724 = vadd.f32 0.0, %v4723
      %v4725 = vpop.f32.mrf.mxu0
      %v4726 = vadd.f32 0.0, %v4725
      %4727 = vmatmul.bf16.gmra.mxu0 %v4635
      %v4728 = vpop.f32.mrf.mxu0
      %v4729 = vadd.f32 0.0, %v4728
      %v4730 = vpop.f32.mrf.mxu0
      %v4731 = vadd.f32 0.0, %v4730
      %4732 = vmatmul.bf16.gmra.mxu0 %v4638
      %v4733 = vpop.f32.mrf.mxu0
      %v4734 = vadd.f32 0.0, %v4733
      %v4735 = vpop.f32.mrf.mxu0
      %v4736 = vadd.f32 0.0, %v4735
      %4737 = vmatmul.bf16.gmra.mxu0 %v4641
      %v4738 = vpop.f32.mrf.mxu0
      %v4739 = vadd.f32 0.0, %v4738
      %v4740 = vpop.f32.mrf.mxu0
      %v4741 = vadd.f32 0.0, %v4740
      %4742 = vmatmul.bf16.gmra.mxu0 %v4644
      %v4743 = vpop.f32.mrf.mxu0
      %v4744 = vadd.f32 0.0, %v4743
      %v4745 = vpop.f32.mrf.mxu0
      %v4746 = vadd.f32 0.0, %v4745
      %4747 = vmatmul.bf16.gmra.mxu0 %v4647
      %v4748 = vpop.f32.mrf.mxu0
      %v4749 = vadd.f32 0.0, %v4748
      %v4750 = vpop.f32.mrf.mxu0
      %v4751 = vadd.f32 0.0, %v4750
      %4752 = vmatmul.bf16.gmra.mxu0 %v4650
      %v4753 = vpop.f32.mrf.mxu0
      %v4754 = vadd.f32 0.0, %v4753
      %v4755 = vpop.f32.mrf.mxu0
      %v4756 = vadd.f32 0.0, %v4755
      %4757 = vmatmul.bf16.gmra.mxu0 %v4653
      %v4758 = vpop.f32.mrf.mxu0
      %v4759 = vadd.f32 0.0, %v4758
      %v4760 = vpop.f32.mrf.mxu0
      %v4761 = vadd.f32 0.0, %v4760
      %4762 = vmatmul.bf16.gmra.mxu0 %v4656
      %v4763 = vpop.f32.mrf.mxu0
      %v4764 = vadd.f32 0.0, %v4763
      %v4765 = vpop.f32.mrf.mxu0
      %v4766 = vadd.f32 0.0, %v4765
      %4767 = vmatmul.bf16.gmra.mxu0 %v4659
      %v4768 = vpop.f32.mrf.mxu0
      %v4769 = vadd.f32 0.0, %v4768
      %v4770 = vpop.f32.mrf.mxu0
      %v4771 = vadd.f32 0.0, %v4770
      %4772 = vmatmul.bf16.gmra.mxu0 %v4662
      %v4773 = vpop.f32.mrf.mxu0
      %v4774 = vadd.f32 0.0, %v4773
      %v4775 = vpop.f32.mrf.mxu0
      %4776 = vdwg.mxu0
      %4777 = vmatpush.bf16.msra.mxu0 0
      %4778 = vmatpush.bf16.msra.mxu0 0
      %4779 = vmatpush.bf16.msra.mxu0 0
      %4780 = vmatpush.bf16.msra.mxu0 0
      %4781 = vmatpush.bf16.msra.mxu0 %v4592
      %4782 = vmatpush.bf16.msra.mxu0 %v4590
      %4783 = vmatpush.bf16.msra.mxu0 %v4588
      %4784 = vmatpush.bf16.msra.mxu0 %v4586
      %4785 = vmatmul.bf16.gmra.mxu0 %v4602
      %v4786 = vpop.f32.mrf.mxu0
      %v4787 = vadd.f32 0.0, %v4786
      %v4788 = vpop.f32.mrf.mxu0
      %v4789 = vadd.f32 0.0, %v4788
      %4790 = vmatmul.bf16.gmra.mxu0 %v4605
      %v4791 = vpop.f32.mrf.mxu0
      %v4792 = vadd.f32 0.0, %v4791
      %v4793 = vpop.f32.mrf.mxu0
      %v4794 = vadd.f32 0.0, %v4793
      %4795 = vmatmul.bf16.gmra.mxu0 %v4608
      %v4796 = vpop.f32.mrf.mxu0
      %v4797 = vadd.f32 0.0, %v4796
      %v4798 = vpop.f32.mrf.mxu0
      %v4799 = vadd.f32 0.0, %v4798
      %4800 = vmatmul.bf16.gmra.mxu0 %v4611
      %v4801 = vpop.f32.mrf.mxu0
      %v4802 = vadd.f32 0.0, %v4801
      %v4803 = vpop.f32.mrf.mxu0
      %v4804 = vadd.f32 0.0, %v4803
      %4805 = vmatmul.bf16.gmra.mxu0 %v4614
      %v4806 = vpop.f32.mrf.mxu0
      %v4807 = vadd.f32 0.0, %v4806
      %v4808 = vpop.f32.mrf.mxu0
      %v4809 = vadd.f32 0.0, %v4808
      %4810 = vmatmul.bf16.gmra.mxu0 %v4617
      %v4811 = vpop.f32.mrf.mxu0
      %v4812 = vadd.f32 0.0, %v4811
      %v4813 = vpop.f32.mrf.mxu0
      %v4814 = vadd.f32 0.0, %v4813
      %4815 = vmatmul.bf16.gmra.mxu0 %v4620
      %v4816 = vpop.f32.mrf.mxu0
      %v4817 = vadd.f32 0.0, %v4816
      %v4818 = vpop.f32.mrf.mxu0
      %v4819 = vadd.f32 0.0, %v4818
      %4820 = vmatmul.bf16.gmra.mxu0 %v4623
      %v4821 = vpop.f32.mrf.mxu0
      %v4822 = vadd.f32 0.0, %v4821
      %v4823 = vpop.f32.mrf.mxu0
      %v4824 = vadd.f32 0.0, %v4823
      %4825 = vmatmul.bf16.gmra.mxu0 %v4626
      %v4826 = vpop.f32.mrf.mxu0
      %v4827 = vadd.f32 0.0, %v4826
      %v4828 = vpop.f32.mrf.mxu0
      %v4829 = vadd.f32 0.0, %v4828
      %4830 = vmatmul.bf16.gmra.mxu0 %v4629
      %v4831 = vpop.f32.mrf.mxu0
      %v4832 = vadd.f32 0.0, %v4831
      %v4833 = vpop.f32.mrf.mxu0
      %v4834 = vadd.f32 0.0, %v4833
      %4835 = vmatmul.bf16.gmra.mxu0 %v4632
      %v4836 = vpop.f32.mrf.mxu0
      %v4837 = vadd.f32 0.0, %v4836
      %v4838 = vpop.f32.mrf.mxu0
      %v4839 = vadd.f32 0.0, %v4838
      %4840 = vmatmul.bf16.gmra.mxu0 %v4635
      %v4841 = vpop.f32.mrf.mxu0
      %v4842 = vadd.f32 0.0, %v4841
      %v4843 = vpop.f32.mrf.mxu0
      %v4844 = vadd.f32 0.0, %v4843
      %4845 = vmatmul.bf16.gmra.mxu0 %v4638
      %v4846 = vpop.f32.mrf.mxu0
      %v4847 = vadd.f32 0.0, %v4846
      %v4848 = vpop.f32.mrf.mxu0
      %v4849 = vadd.f32 0.0, %v4848
      %4850 = vmatmul.bf16.gmra.mxu0 %v4641
      %v4851 = vpop.f32.mrf.mxu0
      %v4852 = vadd.f32 0.0, %v4851
      %v4853 = vpop.f32.mrf.mxu0
      %v4854 = vadd.f32 0.0, %v4853
      %4855 = vmatmul.bf16.gmra.mxu0 %v4644
      %v4856 = vpop.f32.mrf.mxu0
      %v4857 = vadd.f32 0.0, %v4856
      %v4858 = vpop.f32.mrf.mxu0
      %v4859 = vadd.f32 0.0, %v4858
      %4860 = vmatmul.bf16.gmra.mxu0 %v4647
      %v4861 = vpop.f32.mrf.mxu0
      %v4862 = vadd.f32 0.0, %v4861
      %v4863 = vpop.f32.mrf.mxu0
      %v4864 = vadd.f32 0.0, %v4863
      %4865 = vmatmul.bf16.gmra.mxu0 %v4650
      %v4866 = vpop.f32.mrf.mxu0
      %v4867 = vadd.f32 0.0, %v4866
      %v4868 = vpop.f32.mrf.mxu0
      %v4869 = vadd.f32 0.0, %v4868
      %4870 = vmatmul.bf16.gmra.mxu0 %v4653
      %v4871 = vpop.f32.mrf.mxu0
      %v4872 = vadd.f32 0.0, %v4871
      %v4873 = vpop.f32.mrf.mxu0
      %v4874 = vadd.f32 0.0, %v4873
      %4875 = vmatmul.bf16.gmra.mxu0 %v4656
      %v4876 = vpop.f32.mrf.mxu0
      %v4877 = vadd.f32 0.0, %v4876
      %v4878 = vpop.f32.mrf.mxu0
      %v4879 = vadd.f32 0.0, %v4878
      %4880 = vmatmul.bf16.gmra.mxu0 %v4659
      %v4881 = vpop.f32.mrf.mxu0
      %v4882 = vadd.f32 0.0, %v4881
      %v4883 = vpop.f32.mrf.mxu0
      %v4884 = vadd.f32 0.0, %v4883
      %4885 = vmatmul.bf16.gmra.mxu0 %v4662
      %v4886 = vpop.f32.mrf.mxu0
      %v4887 = vadd.f32 0.0, %v4886
      %v4888 = vpop.f32.mrf.mxu0
      %4889 = vdwg.mxu0
      %v4890 = vadd.f32 %v4424, %v4674
      %v4891 = vadd.f32 %v4425, %v4787
      %v4892 = vadd.f32 %v4426, %v4676
      %v4893 = vadd.f32 %v4427, %v4789
      %v4894 = vadd.f32 %v4428, %v4679
      %v4895 = vadd.f32 %v4429, %v4792
      %v4896 = vadd.f32 %v4430, %v4681
      %v4897 = vadd.f32 %v4431, %v4794
      %v4898 = vadd.f32 %v4432, %v4684
      %v4899 = vadd.f32 %v4433, %v4797
      %v4900 = vadd.f32 %v4434, %v4686
      %v4901 = vadd.f32 %v4435, %v4799
      %v4902 = vadd.f32 %v4436, %v4689
      %v4903 = vadd.f32 %v4437, %v4802
      %v4904 = vadd.f32 %v4438, %v4691
      %v4905 = vadd.f32 %v4439, %v4804
      %v4906 = vadd.f32 %v4440, %v4694
      %v4907 = vadd.f32 %v4441, %v4807
      %v4908 = vadd.f32 %v4442, %v4696
      %v4909 = vadd.f32 %v4443, %v4809
      %v4910 = vadd.f32 %v4444, %v4699
      %v4911 = vadd.f32 %v4445, %v4812
      %v4912 = vadd.f32 %v4446, %v4701
      %v4913 = vadd.f32 %v4447, %v4814
      %v4914 = vadd.f32 %v4448, %v4704
      %v4915 = vadd.f32 %v4449, %v4817
      %v4916 = vadd.f32 %v4450, %v4706
      %v4917 = vadd.f32 %v4451, %v4819
      %v4918 = vadd.f32 %v4452, %v4709
      %v4919 = vadd.f32 %v4453, %v4822
      %v4920 = vadd.f32 %v4454, %v4711
      %v4921 = vadd.f32 %v4455, %v4824
      %v4922 = vadd.f32 %v4456, %v4714
      %v4923 = vadd.f32 %v4457, %v4827
      %v4924 = vadd.f32 %v4458, %v4716
      %v4925 = vadd.f32 %v4459, %v4829
      %v4926 = vadd.f32 %v4460, %v4719
      %v4927 = vadd.f32 %v4461, %v4832
      %v4928 = vadd.f32 %v4462, %v4721
      %v4929 = vadd.f32 %v4463, %v4834
      %v4930 = vadd.f32 %v4464, %v4724
      %v4931 = vadd.f32 %v4465, %v4837
      %v4932 = vadd.f32 %v4466, %v4726
      %v4933 = vadd.f32 %v4467, %v4839
      %v4934 = vadd.f32 %v4468, %v4729
      %v4935 = vadd.f32 %v4469, %v4842
      %v4936 = vadd.f32 %v4470, %v4731
      %v4937 = vadd.f32 %v4471, %v4844
      %v4938 = vadd.f32 %v4472, %v4734
      %v4939 = vadd.f32 %v4473, %v4847
      %v4940 = vadd.f32 %v4474, %v4736
      %v4941 = vadd.f32 %v4475, %v4849
      %v4942 = vadd.f32 %v4476, %v4739
      %v4943 = vadd.f32 %v4477, %v4852
      %v4944 = vadd.f32 %v4478, %v4741
      %v4945 = vadd.f32 %v4479, %v4854
      %v4946 = vadd.f32 %v4480, %v4744
      %v4947 = vadd.f32 %v4481, %v4857
      %v4948 = vadd.f32 %v4482, %v4746
      %v4949 = vadd.f32 %v4483, %v4859
      %v4950 = vadd.f32 %v4484, %v4749
      %v4951 = vadd.f32 %v4485, %v4862
      %v4952 = vadd.f32 %v4486, %v4751
      %v4953 = vadd.f32 %v4487, %v4864
      %v4954 = vadd.f32 %v4488, %v4754
      %v4955 = vadd.f32 %v4489, %v4867
      %v4956 = vadd.f32 %v4490, %v4756
      %v4957 = vadd.f32 %v4491, %v4869
      %v4958 = vadd.f32 %v4492, %v4759
      %v4959 = vadd.f32 %v4493, %v4872
      %v4960 = vadd.f32 %v4494, %v4761
      %v4961 = vadd.f32 %v4495, %v4874
      %v4962 = vadd.f32 %v4496, %v4764
      %v4963 = vadd.f32 %v4497, %v4877
      %v4964 = vadd.f32 %v4498, %v4766
      %v4965 = vadd.f32 %v4499, %v4879
      %v4966 = vadd.f32 %v4500, %v4769
      %v4967 = vadd.f32 %v4501, %v4882
      %v4968 = vadd.f32 %v4502, %v4771
      %v4969 = vadd.f32 %v4503, %v4884
      %v4970 = vadd.f32 %v4504, %v4774
      %v4971 = vadd.f32 %v4505, %v4887
      %v4972 = vld [vmem:[#allocation2 + $0x10] sm:$0xc]
      %v4973 = vld [vmem:[#allocation2 + $0x14] sm:$0xf]
      %v4974 = vld [vmem:[#allocation2 + $0x18] sm:$0xf]
      %v4975 = vld [vmem:[#allocation2 + $0x1c] sm:$0xf]
      %v4976 = vld [vmem:[#allocation2 + $0x20] sm:$0xf]
      %v4977 = vld [vmem:[#allocation2 + $0x24] sm:$0xf]
      %v4978 = vld [vmem:[#allocation2 + $0x28] sm:$0xf]
      %v4979 = vld [vmem:[#allocation2 + $0x2c] sm:$0xf]
      %v4980 = vld [vmem:[#allocation2 + $0x30] sm:$0xf]
      %v4981 = vld [vmem:[#allocation2 + $0x34] sm:$0xf]
      %v4982 = vld [vmem:[#allocation2 + $0x38] sm:$0xf]
      %v4983 = vld [vmem:[#allocation2 + $0x3c] sm:$0xf]
      %v4984 = vld [vmem:[#allocation2 + $0x40] sm:$0xf]
      %v4985 = vld [vmem:[#allocation2 + $0x44] sm:$0xf]
      %v4986 = vld [vmem:[#allocation2 + $0x48] sm:$0xf]
      %v4987 = vld [vmem:[#allocation2 + $0x4c] sm:$0xf]
      %v4988 = vld [vmem:[#allocation2 + $0x50] sm:$0xf]
      %v4989 = vld [vmem:[#allocation2 + $0x54] sm:$0xf]
      %v4990 = vld [vmem:[#allocation2 + $0x58] sm:$0xf]
      %v4991 = vld [vmem:[#allocation2 + $0x5c] sm:$0xf]
      %v4992 = vld [vmem:[#allocation2 + $0x60] sm:$0xf]
      %v4993 = vld [vmem:[#allocation2 + $0x64] sm:$0xf]
      %v4994 = vld [vmem:[#allocation2 + $0x68] sm:$0xf]
      %v4995 = vld [vmem:[#allocation2 + $0x6c] sm:$0xf]
      %v4996 = vld [vmem:[#allocation2 + $0x70] sm:$0xf]
      %v4997 = vld [vmem:[#allocation2 + $0x74] sm:$0xf]
      %v4998 = vld [vmem:[#allocation2 + $0x78] sm:$0xf]
      %v4999 = vld [vmem:[#allocation2 + $0x7c] sm:$0xf]
      %v5000 = vld [vmem:[#allocation2 + $0x80] sm:$0xf]
      %v5001 = vld [vmem:[#allocation2 + $0x84] sm:$0xf]
      %v5002 = vld [vmem:[#allocation2 + $0x88] sm:$0xf]
      %v5003 = vld [vmem:[#allocation2 + $0x8c] sm:$0xf]
      %v5004 = vld [vmem:[#allocation2 + $0x90] sm:$0xf]
      %v5005 = vld [vmem:[#allocation2 + $0x94] sm:$0xf]
      %v5006 = vld [vmem:[#allocation2 + $0x98] sm:$0xf]
      %v5007 = vld [vmem:[#allocation2 + $0x9c] sm:$0xf]
      %v5008 = vld [vmem:[#allocation2 + $0xa0] sm:$0xf]
      %v5009 = vld [vmem:[#allocation2 + $0xa4] sm:$0xf]
      %v5010 = vld [vmem:[#allocation2 + $0xa8] sm:$0xf]
      %v5011 = vld [vmem:[#allocation2 + $0xac] sm:$0xf]
      %v5012 = vld [vmem:[#allocation2 + $0xb0] sm:$0xf]
      %s5013 = scalar_lea.vmem %s8, 384
      %v5014 = vld [vmem:[%s5013] sm:$0xff]
      %v5015 = vld [vmem:[%s5013 + $0x8] sm:$0xff]
      %v5016 = vld [vmem:[%s5013 + $0x10] sm:$0xff]
      %v5017 = vld [vmem:[%s5013 + $0x18] sm:$0xff]
      %v5018 = vld [vmem:[%s5013 + $0x20] sm:$0xff]
      %v5019 = vld [vmem:[%s5013 + $0x28] sm:$0xff]
      %v5020 = vld [vmem:[%s5013 + $0x30] sm:$0xff]
      %v5021 = vld [vmem:[%s5013 + $0x38] sm:$0xff]
      %v5063 = vunpack.c.l.b16 %v4972
      %v5064 = vunpack.c.l.b16 %v4973
      %v5065 = vunpack.c.l.b16 %v4974
      %v5066 = vunpack.c.l.b16 %v4975
      %v5067 = vunpack.c.l.b16 %v4976
      %v5068 = vunpack.c.l.b16 %v4977
      %v5069 = vunpack.c.l.b16 %v4978
      %v5070 = vunpack.c.l.b16 %v4979
      %v5071 = vunpack.c.l.b16 %v4980
      %v5072 = vunpack.c.l.b16 %v4981
      %v5073 = vunpack.c.l.b16 %v4982
      %v5074 = vunpack.c.l.b16 %v4983
      %v5075 = vunpack.c.l.b16 %v4984
      %v5076 = vunpack.c.l.b16 %v4985
      %v5077 = vunpack.c.l.b16 %v4986
      %v5078 = vunpack.c.l.b16 %v4987
      %v5079 = vunpack.c.l.b16 %v4988
      %v5080 = vunpack.c.l.b16 %v4989
      %v5081 = vunpack.c.l.b16 %v4990
      %v5082 = vunpack.c.l.b16 %v4991
      %v5083 = vunpack.c.l.b16 %v4992
      %v5084 = vunpack.c.l.b16 %v4993
      %v5085 = vunpack.c.l.b16 %v4994
      %v5086 = vunpack.c.l.b16 %v4995
      %v5087 = vunpack.c.l.b16 %v4996
      %v5088 = vunpack.c.l.b16 %v4997
      %v5089 = vunpack.c.l.b16 %v4998
      %v5090 = vunpack.c.l.b16 %v4999
      %v5091 = vunpack.c.l.b16 %v5000
      %v5092 = vunpack.c.l.b16 %v5001
      %v5093 = vunpack.c.l.b16 %v5002
      %v5094 = vunpack.c.l.b16 %v5003
      %v5095 = vunpack.c.l.b16 %v5004
      %v5096 = vunpack.c.l.b16 %v5005
      %v5097 = vunpack.c.l.b16 %v5006
      %v5098 = vunpack.c.l.b16 %v5007
      %v5099 = vunpack.c.l.b16 %v5008
      %v5100 = vunpack.c.l.b16 %v5009
      %v5101 = vunpack.c.l.b16 %v5010
      %v5102 = vunpack.c.l.b16 %v5011
      %v5103 = vunpack.c.l.b16 %v5012
      %v5104 = vpack.c.b16 %v5064, %v5063
      %v5105 = vpack.c.b16 %v5066, %v5065
      %v5106 = vpack.c.b16 %v5068, %v5067
      %v5107 = vpack.c.b16 %v5070, %v5069
      %v5108 = vpack.c.b16 %v5072, %v5071
      %v5109 = vpack.c.b16 %v5074, %v5073
      %v5110 = vpack.c.b16 %v5076, %v5075
      %v5111 = vpack.c.b16 %v5078, %v5077
      %v5112 = vpack.c.b16 %v5080, %v5079
      %v5113 = vpack.c.b16 %v5082, %v5081
      %v5114 = vpack.c.b16 %v5084, %v5083
      %v5115 = vpack.c.b16 %v5086, %v5085
      %v5116 = vpack.c.b16 %v5088, %v5087
      %v5117 = vpack.c.b16 %v5090, %v5089
      %v5118 = vpack.c.b16 %v5092, %v5091
      %v5119 = vpack.c.b16 %v5094, %v5093
      %v5120 = vpack.c.b16 %v5096, %v5095
      %v5121 = vpack.c.b16 %v5098, %v5097
      %v5122 = vpack.c.b16 %v5100, %v5099
      %v5123 = vpack.c.b16 %v5102, %v5101
      %v5124 = vpack.c.b16 %v5103, %v5103
      %v5125 = vrot.slane %v5104, 2
      %v5126 = vrot.slane %v5105, 2
      %v5127 = vsel %vm4519, %v5125, %v5126
      %v5128 = vrot.slane %v5106, 2
      %v5129 = vsel %vm4519, %v5126, %v5128
      %v5130 = vrot.slane %v5107, 2
      %v5131 = vsel %vm4519, %v5128, %v5130
      %v5132 = vrot.slane %v5108, 2
      %v5133 = vsel %vm4519, %v5130, %v5132
      %v5134 = vrot.slane %v5109, 2
      %v5135 = vsel %vm4519, %v5132, %v5134
      %v5136 = vrot.slane %v5110, 2
      %v5137 = vsel %vm4519, %v5134, %v5136
      %v5138 = vrot.slane %v5111, 2
      %v5139 = vsel %vm4519, %v5136, %v5138
      %v5140 = vrot.slane %v5112, 2
      %v5141 = vsel %vm4519, %v5138, %v5140
      %v5142 = vrot.slane %v5113, 2
      %v5143 = vsel %vm4519, %v5140, %v5142
      %v5144 = vrot.slane %v5114, 2
      %v5145 = vsel %vm4519, %v5142, %v5144
      %v5146 = vrot.slane %v5115, 2
      %v5147 = vsel %vm4519, %v5144, %v5146
      %v5148 = vrot.slane %v5116, 2
      %v5149 = vsel %vm4519, %v5146, %v5148
      %v5150 = vrot.slane %v5117, 2
      %v5151 = vsel %vm4519, %v5148, %v5150
      %v5152 = vrot.slane %v5118, 2
      %v5153 = vsel %vm4519, %v5150, %v5152
      %v5154 = vrot.slane %v5119, 2
      %v5155 = vsel %vm4519, %v5152, %v5154
      %v5156 = vrot.slane %v5120, 2
      %v5157 = vsel %vm4519, %v5154, %v5156
      %v5158 = vrot.slane %v5121, 2
      %v5159 = vsel %vm4519, %v5156, %v5158
      %v5160 = vrot.slane %v5122, 2
      %v5161 = vsel %vm4519, %v5158, %v5160
      %v5162 = vrot.slane %v5123, 2
      %v5163 = vsel %vm4519, %v5160, %v5162
      %v5164 = vrot.slane %v5124, 2
      %v5165 = vsel %vm4519, %v5162, %v5164
      %v5174 = vunpack.c.l.b16 %v5014
      %v5175 = vunpack.c.h.b16 %v5014
      %v5176 = vunpack.c.l.b16 %v5015
      %v5177 = vunpack.c.h.b16 %v5015
      %v5178 = vunpack.c.l.b16 %v5016
      %v5179 = vunpack.c.h.b16 %v5016
      %v5180 = vunpack.c.l.b16 %v5017
      %v5181 = vunpack.c.h.b16 %v5017
      %v5182 = vunpack.c.l.b16 %v5018
      %v5183 = vunpack.c.h.b16 %v5018
      %v5184 = vunpack.c.l.b16 %v5019
      %v5185 = vunpack.c.h.b16 %v5019
      %v5186 = vunpack.c.l.b16 %v5020
      %v5187 = vunpack.c.h.b16 %v5020
      %v5188 = vunpack.c.l.b16 %v5021
      %v5189 = vunpack.c.h.b16 %v5021
      %v5190 = vpack.c.b16 %v5176, %v5174
      %v5191 = vpack.c.b16 %v5177, %v5175
      %v5192 = vpack.c.b16 %v5180, %v5178
      %v5193 = vpack.c.b16 %v5181, %v5179
      %v5194 = vpack.c.b16 %v5184, %v5182
      %v5195 = vpack.c.b16 %v5185, %v5183
      %v5196 = vpack.c.b16 %v5188, %v5186
      %v5197 = vpack.c.b16 %v5189, %v5187
      %v5207 = vsel %vm497, %v5127, 0
      %v5210 = vsel %vm497, %v5129, 0
      %v5213 = vsel %vm497, %v5131, 0
      %v5216 = vsel %vm497, %v5133, 0
      %v5219 = vsel %vm497, %v5135, 0
      %v5222 = vsel %vm497, %v5137, 0
      %v5225 = vsel %vm497, %v5139, 0
      %v5228 = vsel %vm497, %v5141, 0
      %v5231 = vsel %vm497, %v5143, 0
      %v5234 = vsel %vm497, %v5145, 0
      %v5237 = vsel %vm497, %v5147, 0
      %v5240 = vsel %vm497, %v5149, 0
      %v5243 = vsel %vm497, %v5151, 0
      %v5246 = vsel %vm497, %v5153, 0
      %v5249 = vsel %vm497, %v5155, 0
      %v5252 = vsel %vm497, %v5157, 0
      %v5255 = vsel %vm497, %v5159, 0
      %v5258 = vsel %vm497, %v5161, 0
      %v5261 = vsel %vm497, %v5163, 0
      %v5264 = vsel %vm497, %v5165, 0
      %v5267 = vsel %vm497, %v5164, 0
      %5269 = vmatpush.bf16.msra.mxu0 0
      %5270 = vmatpush.bf16.msra.mxu0 0
      %5271 = vmatpush.bf16.msra.mxu0 0
      %5272 = vmatpush.bf16.msra.mxu0 0
      %5273 = vmatpush.bf16.msra.mxu0 %v5196
      %5274 = vmatpush.bf16.msra.mxu0 %v5194
      %5275 = vmatpush.bf16.msra.mxu0 %v5192
      %5276 = vmatpush.bf16.msra.mxu0 %v5190
      %5277 = vmatmul.bf16.gmra.mxu0 %v5207
      %v5278 = vpop.f32.mrf.mxu0
      %v5279 = vadd.f32 0.0, %v5278
      %v5280 = vpop.f32.mrf.mxu0
      %v5281 = vadd.f32 0.0, %v5280
      %5282 = vmatmul.bf16.gmra.mxu0 %v5210
      %v5283 = vpop.f32.mrf.mxu0
      %v5284 = vadd.f32 0.0, %v5283
      %v5285 = vpop.f32.mrf.mxu0
      %v5286 = vadd.f32 0.0, %v5285
      %5287 = vmatmul.bf16.gmra.mxu0 %v5213
      %v5288 = vpop.f32.mrf.mxu0
      %v5289 = vadd.f32 0.0, %v5288
      %v5290 = vpop.f32.mrf.mxu0
      %v5291 = vadd.f32 0.0, %v5290
      %5292 = vmatmul.bf16.gmra.mxu0 %v5216
      %v5293 = vpop.f32.mrf.mxu0
      %v5294 = vadd.f32 0.0, %v5293
      %v5295 = vpop.f32.mrf.mxu0
      %v5296 = vadd.f32 0.0, %v5295
      %5297 = vmatmul.bf16.gmra.mxu0 %v5219
      %v5298 = vpop.f32.mrf.mxu0
      %v5299 = vadd.f32 0.0, %v5298
      %v5300 = vpop.f32.mrf.mxu0
      %v5301 = vadd.f32 0.0, %v5300
      %5302 = vmatmul.bf16.gmra.mxu0 %v5222
      %v5303 = vpop.f32.mrf.mxu0
      %v5304 = vadd.f32 0.0, %v5303
      %v5305 = vpop.f32.mrf.mxu0
      %v5306 = vadd.f32 0.0, %v5305
      %5307 = vmatmul.bf16.gmra.mxu0 %v5225
      %v5308 = vpop.f32.mrf.mxu0
      %v5309 = vadd.f32 0.0, %v5308
      %v5310 = vpop.f32.mrf.mxu0
      %v5311 = vadd.f32 0.0, %v5310
      %5312 = vmatmul.bf16.gmra.mxu0 %v5228
      %v5313 = vpop.f32.mrf.mxu0
      %v5314 = vadd.f32 0.0, %v5313
      %v5315 = vpop.f32.mrf.mxu0
      %v5316 = vadd.f32 0.0, %v5315
      %5317 = vmatmul.bf16.gmra.mxu0 %v5231
      %v5318 = vpop.f32.mrf.mxu0
      %v5319 = vadd.f32 0.0, %v5318
      %v5320 = vpop.f32.mrf.mxu0
      %v5321 = vadd.f32 0.0, %v5320
      %5322 = vmatmul.bf16.gmra.mxu0 %v5234
      %v5323 = vpop.f32.mrf.mxu0
      %v5324 = vadd.f32 0.0, %v5323
      %v5325 = vpop.f32.mrf.mxu0
      %v5326 = vadd.f32 0.0, %v5325
      %5327 = vmatmul.bf16.gmra.mxu0 %v5237
      %v5328 = vpop.f32.mrf.mxu0
      %v5329 = vadd.f32 0.0, %v5328
      %v5330 = vpop.f32.mrf.mxu0
      %v5331 = vadd.f32 0.0, %v5330
      %5332 = vmatmul.bf16.gmra.mxu0 %v5240
      %v5333 = vpop.f32.mrf.mxu0
      %v5334 = vadd.f32 0.0, %v5333
      %v5335 = vpop.f32.mrf.mxu0
      %v5336 = vadd.f32 0.0, %v5335
      %5337 = vmatmul.bf16.gmra.mxu0 %v5243
      %v5338 = vpop.f32.mrf.mxu0
      %v5339 = vadd.f32 0.0, %v5338
      %v5340 = vpop.f32.mrf.mxu0
      %v5341 = vadd.f32 0.0, %v5340
      %5342 = vmatmul.bf16.gmra.mxu0 %v5246
      %v5343 = vpop.f32.mrf.mxu0
      %v5344 = vadd.f32 0.0, %v5343
      %v5345 = vpop.f32.mrf.mxu0
      %v5346 = vadd.f32 0.0, %v5345
      %5347 = vmatmul.bf16.gmra.mxu0 %v5249
      %v5348 = vpop.f32.mrf.mxu0
      %v5349 = vadd.f32 0.0, %v5348
      %v5350 = vpop.f32.mrf.mxu0
      %v5351 = vadd.f32 0.0, %v5350
      %5352 = vmatmul.bf16.gmra.mxu0 %v5252
      %v5353 = vpop.f32.mrf.mxu0
      %v5354 = vadd.f32 0.0, %v5353
      %v5355 = vpop.f32.mrf.mxu0
      %v5356 = vadd.f32 0.0, %v5355
      %5357 = vmatmul.bf16.gmra.mxu0 %v5255
      %v5358 = vpop.f32.mrf.mxu0
      %v5359 = vadd.f32 0.0, %v5358
      %v5360 = vpop.f32.mrf.mxu0
      %v5361 = vadd.f32 0.0, %v5360
      %5362 = vmatmul.bf16.gmra.mxu0 %v5258
      %v5363 = vpop.f32.mrf.mxu0
      %v5364 = vadd.f32 0.0, %v5363
      %v5365 = vpop.f32.mrf.mxu0
      %v5366 = vadd.f32 0.0, %v5365
      %5367 = vmatmul.bf16.gmra.mxu0 %v5261
      %v5368 = vpop.f32.mrf.mxu0
      %v5369 = vadd.f32 0.0, %v5368
      %v5370 = vpop.f32.mrf.mxu0
      %v5371 = vadd.f32 0.0, %v5370
      %5372 = vmatmul.bf16.gmra.mxu0 %v5264
      %v5373 = vpop.f32.mrf.mxu0
      %v5374 = vadd.f32 0.0, %v5373
      %v5375 = vpop.f32.mrf.mxu0
      %v5376 = vadd.f32 0.0, %v5375
      %5377 = vmatmul.bf16.gmra.mxu0 %v5267
      %v5378 = vpop.f32.mrf.mxu0
      %v5379 = vadd.f32 0.0, %v5378
      %v5380 = vpop.f32.mrf.mxu0
      %5381 = vdwg.mxu0
      %5382 = vmatpush.bf16.msra.mxu0 0
      %5383 = vmatpush.bf16.msra.mxu0 0
      %5384 = vmatpush.bf16.msra.mxu0 0
      %5385 = vmatpush.bf16.msra.mxu0 0
      %5386 = vmatpush.bf16.msra.mxu0 %v5197
      %5387 = vmatpush.bf16.msra.mxu0 %v5195
      %5388 = vmatpush.bf16.msra.mxu0 %v5193
      %5389 = vmatpush.bf16.msra.mxu0 %v5191
      %5390 = vmatmul.bf16.gmra.mxu0 %v5207
      %v5391 = vpop.f32.mrf.mxu0
      %v5392 = vadd.f32 0.0, %v5391
      %v5393 = vpop.f32.mrf.mxu0
      %v5394 = vadd.f32 0.0, %v5393
      %5395 = vmatmul.bf16.gmra.mxu0 %v5210
      %v5396 = vpop.f32.mrf.mxu0
      %v5397 = vadd.f32 0.0, %v5396
      %v5398 = vpop.f32.mrf.mxu0
      %v5399 = vadd.f32 0.0, %v5398
      %5400 = vmatmul.bf16.gmra.mxu0 %v5213
      %v5401 = vpop.f32.mrf.mxu0
      %v5402 = vadd.f32 0.0, %v5401
      %v5403 = vpop.f32.mrf.mxu0
      %v5404 = vadd.f32 0.0, %v5403
      %5405 = vmatmul.bf16.gmra.mxu0 %v5216
      %v5406 = vpop.f32.mrf.mxu0
      %v5407 = vadd.f32 0.0, %v5406
      %v5408 = vpop.f32.mrf.mxu0
      %v5409 = vadd.f32 0.0, %v5408
      %5410 = vmatmul.bf16.gmra.mxu0 %v5219
      %v5411 = vpop.f32.mrf.mxu0
      %v5412 = vadd.f32 0.0, %v5411
      %v5413 = vpop.f32.mrf.mxu0
      %v5414 = vadd.f32 0.0, %v5413
      %5415 = vmatmul.bf16.gmra.mxu0 %v5222
      %v5416 = vpop.f32.mrf.mxu0
      %v5417 = vadd.f32 0.0, %v5416
      %v5418 = vpop.f32.mrf.mxu0
      %v5419 = vadd.f32 0.0, %v5418
      %5420 = vmatmul.bf16.gmra.mxu0 %v5225
      %v5421 = vpop.f32.mrf.mxu0
      %v5422 = vadd.f32 0.0, %v5421
      %v5423 = vpop.f32.mrf.mxu0
      %v5424 = vadd.f32 0.0, %v5423
      %5425 = vmatmul.bf16.gmra.mxu0 %v5228
      %v5426 = vpop.f32.mrf.mxu0
      %v5427 = vadd.f32 0.0, %v5426
      %v5428 = vpop.f32.mrf.mxu0
      %v5429 = vadd.f32 0.0, %v5428
      %5430 = vmatmul.bf16.gmra.mxu0 %v5231
      %v5431 = vpop.f32.mrf.mxu0
      %v5432 = vadd.f32 0.0, %v5431
      %v5433 = vpop.f32.mrf.mxu0
      %v5434 = vadd.f32 0.0, %v5433
      %5435 = vmatmul.bf16.gmra.mxu0 %v5234
      %v5436 = vpop.f32.mrf.mxu0
      %v5437 = vadd.f32 0.0, %v5436
      %v5438 = vpop.f32.mrf.mxu0
      %v5439 = vadd.f32 0.0, %v5438
      %5440 = vmatmul.bf16.gmra.mxu0 %v5237
      %v5441 = vpop.f32.mrf.mxu0
      %v5442 = vadd.f32 0.0, %v5441
      %v5443 = vpop.f32.mrf.mxu0
      %v5444 = vadd.f32 0.0, %v5443
      %5445 = vmatmul.bf16.gmra.mxu0 %v5240
      %v5446 = vpop.f32.mrf.mxu0
      %v5447 = vadd.f32 0.0, %v5446
      %v5448 = vpop.f32.mrf.mxu0
      %v5449 = vadd.f32 0.0, %v5448
      %5450 = vmatmul.bf16.gmra.mxu0 %v5243
      %v5451 = vpop.f32.mrf.mxu0
      %v5452 = vadd.f32 0.0, %v5451
      %v5453 = vpop.f32.mrf.mxu0
      %v5454 = vadd.f32 0.0, %v5453
      %5455 = vmatmul.bf16.gmra.mxu0 %v5246
      %v5456 = vpop.f32.mrf.mxu0
      %v5457 = vadd.f32 0.0, %v5456
      %v5458 = vpop.f32.mrf.mxu0
      %v5459 = vadd.f32 0.0, %v5458
      %5460 = vmatmul.bf16.gmra.mxu0 %v5249
      %v5461 = vpop.f32.mrf.mxu0
      %v5462 = vadd.f32 0.0, %v5461
      %v5463 = vpop.f32.mrf.mxu0
      %v5464 = vadd.f32 0.0, %v5463
      %5465 = vmatmul.bf16.gmra.mxu0 %v5252
      %v5466 = vpop.f32.mrf.mxu0
      %v5467 = vadd.f32 0.0, %v5466
      %v5468 = vpop.f32.mrf.mxu0
      %v5469 = vadd.f32 0.0, %v5468
      %5470 = vmatmul.bf16.gmra.mxu0 %v5255
      %v5471 = vpop.f32.mrf.mxu0
      %v5472 = vadd.f32 0.0, %v5471
      %v5473 = vpop.f32.mrf.mxu0
      %v5474 = vadd.f32 0.0, %v5473
      %5475 = vmatmul.bf16.gmra.mxu0 %v5258
      %v5476 = vpop.f32.mrf.mxu0
      %v5477 = vadd.f32 0.0, %v5476
      %v5478 = vpop.f32.mrf.mxu0
      %v5479 = vadd.f32 0.0, %v5478
      %5480 = vmatmul.bf16.gmra.mxu0 %v5261
      %v5481 = vpop.f32.mrf.mxu0
      %v5482 = vadd.f32 0.0, %v5481
      %v5483 = vpop.f32.mrf.mxu0
      %v5484 = vadd.f32 0.0, %v5483
      %5485 = vmatmul.bf16.gmra.mxu0 %v5264
      %v5486 = vpop.f32.mrf.mxu0
      %v5487 = vadd.f32 0.0, %v5486
      %v5488 = vpop.f32.mrf.mxu0
      %v5489 = vadd.f32 0.0, %v5488
      %5490 = vmatmul.bf16.gmra.mxu0 %v5267
      %v5491 = vpop.f32.mrf.mxu0
      %v5492 = vadd.f32 0.0, %v5491
      %v5493 = vpop.f32.mrf.mxu0
      %5494 = vdwg.mxu0
      %v5495 = vadd.f32 %v4890, %v5279
      %v5496 = vadd.f32 %v4891, %v5392
      %v5497 = vadd.f32 %v4892, %v5281
      %v5498 = vadd.f32 %v4893, %v5394
      %v5499 = vadd.f32 %v4894, %v5284
      %v5500 = vadd.f32 %v4895, %v5397
      %v5501 = vadd.f32 %v4896, %v5286
      %v5502 = vadd.f32 %v4897, %v5399
      %v5503 = vadd.f32 %v4898, %v5289
      %v5504 = vadd.f32 %v4899, %v5402
      %v5505 = vadd.f32 %v4900, %v5291
      %v5506 = vadd.f32 %v4901, %v5404
      %v5507 = vadd.f32 %v4902, %v5294
      %v5508 = vadd.f32 %v4903, %v5407
      %v5509 = vadd.f32 %v4904, %v5296
      %v5510 = vadd.f32 %v4905, %v5409
      %v5511 = vadd.f32 %v4906, %v5299
      %v5512 = vadd.f32 %v4907, %v5412
      %v5513 = vadd.f32 %v4908, %v5301
      %v5514 = vadd.f32 %v4909, %v5414
      %v5515 = vadd.f32 %v4910, %v5304
      %v5516 = vadd.f32 %v4911, %v5417
      %v5517 = vadd.f32 %v4912, %v5306
      %v5518 = vadd.f32 %v4913, %v5419
      %v5519 = vadd.f32 %v4914, %v5309
      %v5520 = vadd.f32 %v4915, %v5422
      %v5521 = vadd.f32 %v4916, %v5311
      %v5522 = vadd.f32 %v4917, %v5424
      %v5523 = vadd.f32 %v4918, %v5314
      %v5524 = vadd.f32 %v4919, %v5427
      %v5525 = vadd.f32 %v4920, %v5316
      %v5526 = vadd.f32 %v4921, %v5429
      %v5527 = vadd.f32 %v4922, %v5319
      %v5528 = vadd.f32 %v4923, %v5432
      %v5529 = vadd.f32 %v4924, %v5321
      %v5530 = vadd.f32 %v4925, %v5434
      %v5531 = vadd.f32 %v4926, %v5324
      %v5532 = vadd.f32 %v4927, %v5437
      %v5533 = vadd.f32 %v4928, %v5326
      %v5534 = vadd.f32 %v4929, %v5439
      %v5535 = vadd.f32 %v4930, %v5329
      %v5536 = vadd.f32 %v4931, %v5442
      %v5537 = vadd.f32 %v4932, %v5331
      %v5538 = vadd.f32 %v4933, %v5444
      %v5539 = vadd.f32 %v4934, %v5334
      %v5540 = vadd.f32 %v4935, %v5447
      %v5541 = vadd.f32 %v4936, %v5336
      %v5542 = vadd.f32 %v4937, %v5449
      %v5543 = vadd.f32 %v4938, %v5339
      %v5544 = vadd.f32 %v4939, %v5452
      %v5545 = vadd.f32 %v4940, %v5341
      %v5546 = vadd.f32 %v4941, %v5454
      %v5547 = vadd.f32 %v4942, %v5344
      %v5548 = vadd.f32 %v4943, %v5457
      %v5549 = vadd.f32 %v4944, %v5346
      %v5550 = vadd.f32 %v4945, %v5459
      %v5551 = vadd.f32 %v4946, %v5349
      %v5552 = vadd.f32 %v4947, %v5462
      %v5553 = vadd.f32 %v4948, %v5351
      %v5554 = vadd.f32 %v4949, %v5464
      %v5555 = vadd.f32 %v4950, %v5354
      %v5556 = vadd.f32 %v4951, %v5467
      %v5557 = vadd.f32 %v4952, %v5356
      %v5558 = vadd.f32 %v4953, %v5469
      %v5559 = vadd.f32 %v4954, %v5359
      %v5560 = vadd.f32 %v4955, %v5472
      %v5561 = vadd.f32 %v4956, %v5361
      %v5562 = vadd.f32 %v4957, %v5474
      %v5563 = vadd.f32 %v4958, %v5364
      %v5564 = vadd.f32 %v4959, %v5477
      %v5565 = vadd.f32 %v4960, %v5366
      %v5566 = vadd.f32 %v4961, %v5479
      %v5567 = vadd.f32 %v4962, %v5369
      %v5568 = vadd.f32 %v4963, %v5482
      %v5569 = vadd.f32 %v4964, %v5371
      %v5570 = vadd.f32 %v4965, %v5484
      %v5571 = vadd.f32 %v4966, %v5374
      %v5572 = vadd.f32 %v4967, %v5487
      %v5573 = vadd.f32 %v4968, %v5376
      %v5574 = vadd.f32 %v4969, %v5489
      %v5575 = vadd.f32 %v4970, %v5379
      %v5576 = vadd.f32 %v4971, %v5492
      %v5577 = vld [vmem:[#allocation2 + $0x10] sm:$0xc]
      %v5578 = vld [vmem:[#allocation2 + $0x14] sm:$0xf]
      %v5579 = vld [vmem:[#allocation2 + $0x18] sm:$0xf]
      %v5580 = vld [vmem:[#allocation2 + $0x1c] sm:$0xf]
      %v5581 = vld [vmem:[#allocation2 + $0x20] sm:$0xf]
      %v5582 = vld [vmem:[#allocation2 + $0x24] sm:$0xf]
      %v5583 = vld [vmem:[#allocation2 + $0x28] sm:$0xf]
      %v5584 = vld [vmem:[#allocation2 + $0x2c] sm:$0xf]
      %v5585 = vld [vmem:[#allocation2 + $0x30] sm:$0xf]
      %v5586 = vld [vmem:[#allocation2 + $0x34] sm:$0xf]
      %v5587 = vld [vmem:[#allocation2 + $0x38] sm:$0xf]
      %v5588 = vld [vmem:[#allocation2 + $0x3c] sm:$0xf]
      %v5589 = vld [vmem:[#allocation2 + $0x40] sm:$0xf]
      %v5590 = vld [vmem:[#allocation2 + $0x44] sm:$0xf]
      %v5591 = vld [vmem:[#allocation2 + $0x48] sm:$0xf]
      %v5592 = vld [vmem:[#allocation2 + $0x4c] sm:$0xf]
      %v5593 = vld [vmem:[#allocation2 + $0x50] sm:$0xf]
      %v5594 = vld [vmem:[#allocation2 + $0x54] sm:$0xf]
      %v5595 = vld [vmem:[#allocation2 + $0x58] sm:$0xf]
      %v5596 = vld [vmem:[#allocation2 + $0x5c] sm:$0xf]
      %v5597 = vld [vmem:[#allocation2 + $0x60] sm:$0xf]
      %v5598 = vld [vmem:[#allocation2 + $0x64] sm:$0xf]
      %v5599 = vld [vmem:[#allocation2 + $0x68] sm:$0xf]
      %v5600 = vld [vmem:[#allocation2 + $0x6c] sm:$0xf]
      %v5601 = vld [vmem:[#allocation2 + $0x70] sm:$0xf]
      %v5602 = vld [vmem:[#allocation2 + $0x74] sm:$0xf]
      %v5603 = vld [vmem:[#allocation2 + $0x78] sm:$0xf]
      %v5604 = vld [vmem:[#allocation2 + $0x7c] sm:$0xf]
      %v5605 = vld [vmem:[#allocation2 + $0x80] sm:$0xf]
      %v5606 = vld [vmem:[#allocation2 + $0x84] sm:$0xf]
      %v5607 = vld [vmem:[#allocation2 + $0x88] sm:$0xf]
      %v5608 = vld [vmem:[#allocation2 + $0x8c] sm:$0xf]
      %v5609 = vld [vmem:[#allocation2 + $0x90] sm:$0xf]
      %v5610 = vld [vmem:[#allocation2 + $0x94] sm:$0xf]
      %v5611 = vld [vmem:[#allocation2 + $0x98] sm:$0xf]
      %v5612 = vld [vmem:[#allocation2 + $0x9c] sm:$0xf]
      %v5613 = vld [vmem:[#allocation2 + $0xa0] sm:$0xf]
      %v5614 = vld [vmem:[#allocation2 + $0xa4] sm:$0xf]
      %v5615 = vld [vmem:[#allocation2 + $0xa8] sm:$0xf]
      %v5616 = vld [vmem:[#allocation2 + $0xac] sm:$0xf]
      %v5617 = vld [vmem:[#allocation2 + $0xb0] sm:$0xf]
      %v5618 = vld [vmem:[#allocation2 + $0xb4] sm:$0x1]
      %s5619 = scalar_lea.vmem %s8, 448
      %v5620 = vld [vmem:[%s5619] sm:$0xff]
      %v5621 = vld [vmem:[%s5619 + $0x8] sm:$0xff]
      %v5622 = vld [vmem:[%s5619 + $0x10] sm:$0xff]
      %v5623 = vld [vmem:[%s5619 + $0x18] sm:$0xff]
      %v5624 = vld [vmem:[%s5619 + $0x20] sm:$0xff]
      %v5625 = vld [vmem:[%s5619 + $0x28] sm:$0xff]
      %v5626 = vld [vmem:[%s5619 + $0x30] sm:$0xff]
      %v5627 = vld [vmem:[%s5619 + $0x38] sm:$0xff]
      %v5670 = vunpack.c.l.b16 %v5577
      %v5671 = vunpack.c.l.b16 %v5578
      %v5672 = vunpack.c.l.b16 %v5579
      %v5673 = vunpack.c.l.b16 %v5580
      %v5674 = vunpack.c.l.b16 %v5581
      %v5675 = vunpack.c.l.b16 %v5582
      %v5676 = vunpack.c.l.b16 %v5583
      %v5677 = vunpack.c.l.b16 %v5584
      %v5678 = vunpack.c.l.b16 %v5585
      %v5679 = vunpack.c.l.b16 %v5586
      %v5680 = vunpack.c.l.b16 %v5587
      %v5681 = vunpack.c.l.b16 %v5588
      %v5682 = vunpack.c.l.b16 %v5589
      %v5683 = vunpack.c.l.b16 %v5590
      %v5684 = vunpack.c.l.b16 %v5591
      %v5685 = vunpack.c.l.b16 %v5592
      %v5686 = vunpack.c.l.b16 %v5593
      %v5687 = vunpack.c.l.b16 %v5594
      %v5688 = vunpack.c.l.b16 %v5595
      %v5689 = vunpack.c.l.b16 %v5596
      %v5690 = vunpack.c.l.b16 %v5597
      %v5691 = vunpack.c.l.b16 %v5598
      %v5692 = vunpack.c.l.b16 %v5599
      %v5693 = vunpack.c.l.b16 %v5600
      %v5694 = vunpack.c.l.b16 %v5601
      %v5695 = vunpack.c.l.b16 %v5602
      %v5696 = vunpack.c.l.b16 %v5603
      %v5697 = vunpack.c.l.b16 %v5604
      %v5698 = vunpack.c.l.b16 %v5605
      %v5699 = vunpack.c.l.b16 %v5606
      %v5700 = vunpack.c.l.b16 %v5607
      %v5701 = vunpack.c.l.b16 %v5608
      %v5702 = vunpack.c.l.b16 %v5609
      %v5703 = vunpack.c.l.b16 %v5610
      %v5704 = vunpack.c.l.b16 %v5611
      %v5705 = vunpack.c.l.b16 %v5612
      %v5706 = vunpack.c.l.b16 %v5613
      %v5707 = vunpack.c.l.b16 %v5614
      %v5708 = vunpack.c.l.b16 %v5615
      %v5709 = vunpack.c.l.b16 %v5616
      %v5710 = vunpack.c.l.b16 %v5617
      %v5711 = vunpack.c.l.b16 %v5618
      %v5712 = vpack.c.b16 %v5671, %v5670
      %v5713 = vpack.c.b16 %v5673, %v5672
      %v5714 = vpack.c.b16 %v5675, %v5674
      %v5715 = vpack.c.b16 %v5677, %v5676
      %v5716 = vpack.c.b16 %v5679, %v5678
      %v5717 = vpack.c.b16 %v5681, %v5680
      %v5718 = vpack.c.b16 %v5683, %v5682
      %v5719 = vpack.c.b16 %v5685, %v5684
      %v5720 = vpack.c.b16 %v5687, %v5686
      %v5721 = vpack.c.b16 %v5689, %v5688
      %v5722 = vpack.c.b16 %v5691, %v5690
      %v5723 = vpack.c.b16 %v5693, %v5692
      %v5724 = vpack.c.b16 %v5695, %v5694
      %v5725 = vpack.c.b16 %v5697, %v5696
      %v5726 = vpack.c.b16 %v5699, %v5698
      %v5727 = vpack.c.b16 %v5701, %v5700
      %v5728 = vpack.c.b16 %v5703, %v5702
      %v5729 = vpack.c.b16 %v5705, %v5704
      %v5730 = vpack.c.b16 %v5707, %v5706
      %v5731 = vpack.c.b16 %v5709, %v5708
      %v5732 = vpack.c.b16 %v5711, %v5710
      %vm5733 = vsmask.f32 5376
      %v5735 = vshrl.u32 %v5712, 16
      %v5737 = vrot.slane %v5735, 2
      %v5738 = vshll.u32 %v5712, 16
      %v5740 = vrot.slane %v5738, 3
      %v5741 = vor.u32 %v5737, %v5740
      %v5743 = vshrl.u32 %v5713, 16
      %v5745 = vrot.slane %v5743, 2
      %v5746 = vshll.u32 %v5713, 16
      %v5748 = vrot.slane %v5746, 3
      %v5749 = vor.u32 %v5745, %v5748
      %v5750 = vsel %vm5733, %v5741, %v5749
      %v5752 = vshrl.u32 %v5714, 16
      %v5754 = vrot.slane %v5752, 2
      %v5755 = vshll.u32 %v5714, 16
      %v5757 = vrot.slane %v5755, 3
      %v5758 = vor.u32 %v5754, %v5757
      %v5759 = vsel %vm5733, %v5749, %v5758
      %v5761 = vshrl.u32 %v5715, 16
      %v5763 = vrot.slane %v5761, 2
      %v5764 = vshll.u32 %v5715, 16
      %v5766 = vrot.slane %v5764, 3
      %v5767 = vor.u32 %v5763, %v5766
      %v5768 = vsel %vm5733, %v5758, %v5767
      %v5770 = vshrl.u32 %v5716, 16
      %v5772 = vrot.slane %v5770, 2
      %v5773 = vshll.u32 %v5716, 16
      %v5775 = vrot.slane %v5773, 3
      %v5776 = vor.u32 %v5772, %v5775
      %v5777 = vsel %vm5733, %v5767, %v5776
      %v5779 = vshrl.u32 %v5717, 16
      %v5781 = vrot.slane %v5779, 2
      %v5782 = vshll.u32 %v5717, 16
      %v5784 = vrot.slane %v5782, 3
      %v5785 = vor.u32 %v5781, %v5784
      %v5786 = vsel %vm5733, %v5776, %v5785
      %v5788 = vshrl.u32 %v5718, 16
      %v5790 = vrot.slane %v5788, 2
      %v5791 = vshll.u32 %v5718, 16
      %v5793 = vrot.slane %v5791, 3
      %v5794 = vor.u32 %v5790, %v5793
      %v5795 = vsel %vm5733, %v5785, %v5794
      %v5797 = vshrl.u32 %v5719, 16
      %v5799 = vrot.slane %v5797, 2
      %v5800 = vshll.u32 %v5719, 16
      %v5802 = vrot.slane %v5800, 3
      %v5803 = vor.u32 %v5799, %v5802
      %v5804 = vsel %vm5733, %v5794, %v5803
      %v5806 = vshrl.u32 %v5720, 16
      %v5808 = vrot.slane %v5806, 2
      %v5809 = vshll.u32 %v5720, 16
      %v5811 = vrot.slane %v5809, 3
      %v5812 = vor.u32 %v5808, %v5811
      %v5813 = vsel %vm5733, %v5803, %v5812
      %v5815 = vshrl.u32 %v5721, 16
      %v5817 = vrot.slane %v5815, 2
      %v5818 = vshll.u32 %v5721, 16
      %v5820 = vrot.slane %v5818, 3
      %v5821 = vor.u32 %v5817, %v5820
      %v5822 = vsel %vm5733, %v5812, %v5821
      %v5824 = vshrl.u32 %v5722, 16
      %v5826 = vrot.slane %v5824, 2
      %v5827 = vshll.u32 %v5722, 16
      %v5829 = vrot.slane %v5827, 3
      %v5830 = vor.u32 %v5826, %v5829
      %v5831 = vsel %vm5733, %v5821, %v5830
      %v5833 = vshrl.u32 %v5723, 16
      %v5835 = vrot.slane %v5833, 2
      %v5836 = vshll.u32 %v5723, 16
      %v5838 = vrot.slane %v5836, 3
      %v5839 = vor.u32 %v5835, %v5838
      %v5840 = vsel %vm5733, %v5830, %v5839
      %v5842 = vshrl.u32 %v5724, 16
      %v5844 = vrot.slane %v5842, 2
      %v5845 = vshll.u32 %v5724, 16
      %v5847 = vrot.slane %v5845, 3
      %v5848 = vor.u32 %v5844, %v5847
      %v5849 = vsel %vm5733, %v5839, %v5848
      %v5851 = vshrl.u32 %v5725, 16
      %v5853 = vrot.slane %v5851, 2
      %v5854 = vshll.u32 %v5725, 16
      %v5856 = vrot.slane %v5854, 3
      %v5857 = vor.u32 %v5853, %v5856
      %v5858 = vsel %vm5733, %v5848, %v5857
      %v5860 = vshrl.u32 %v5726, 16
      %v5862 = vrot.slane %v5860, 2
      %v5863 = vshll.u32 %v5726, 16
      %v5865 = vrot.slane %v5863, 3
      %v5866 = vor.u32 %v5862, %v5865
      %v5867 = vsel %vm5733, %v5857, %v5866
      %v5869 = vshrl.u32 %v5727, 16
      %v5871 = vrot.slane %v5869, 2
      %v5872 = vshll.u32 %v5727, 16
      %v5874 = vrot.slane %v5872, 3
      %v5875 = vor.u32 %v5871, %v5874
      %v5876 = vsel %vm5733, %v5866, %v5875
      %v5878 = vshrl.u32 %v5728, 16
      %v5880 = vrot.slane %v5878, 2
      %v5881 = vshll.u32 %v5728, 16
      %v5883 = vrot.slane %v5881, 3
      %v5884 = vor.u32 %v5880, %v5883
      %v5885 = vsel %vm5733, %v5875, %v5884
      %v5887 = vshrl.u32 %v5729, 16
      %v5889 = vrot.slane %v5887, 2
      %v5890 = vshll.u32 %v5729, 16
      %v5892 = vrot.slane %v5890, 3
      %v5893 = vor.u32 %v5889, %v5892
      %v5894 = vsel %vm5733, %v5884, %v5893
      %v5896 = vshrl.u32 %v5730, 16
      %v5898 = vrot.slane %v5896, 2
      %v5899 = vshll.u32 %v5730, 16
      %v5901 = vrot.slane %v5899, 3
      %v5902 = vor.u32 %v5898, %v5901
      %v5903 = vsel %vm5733, %v5893, %v5902
      %v5905 = vshrl.u32 %v5731, 16
      %v5907 = vrot.slane %v5905, 2
      %v5908 = vshll.u32 %v5731, 16
      %v5910 = vrot.slane %v5908, 3
      %v5911 = vor.u32 %v5907, %v5910
      %v5912 = vsel %vm5733, %v5902, %v5911
      %v5914 = vshrl.u32 %v5732, 16
      %v5916 = vrot.slane %v5914, 2
      %v5917 = vshll.u32 %v5732, 16
      %v5919 = vrot.slane %v5917, 3
      %v5920 = vor.u32 %v5916, %v5919
      %v5921 = vsel %vm5733, %v5911, %v5920
      %v5930 = vunpack.c.l.b16 %v5620
      %v5931 = vunpack.c.h.b16 %v5620
      %v5932 = vunpack.c.l.b16 %v5621
      %v5933 = vunpack.c.h.b16 %v5621
      %v5934 = vunpack.c.l.b16 %v5622
      %v5935 = vunpack.c.h.b16 %v5622
      %v5936 = vunpack.c.l.b16 %v5623
      %v5937 = vunpack.c.h.b16 %v5623
      %v5938 = vunpack.c.l.b16 %v5624
      %v5939 = vunpack.c.h.b16 %v5624
      %v5940 = vunpack.c.l.b16 %v5625
      %v5941 = vunpack.c.h.b16 %v5625
      %v5942 = vunpack.c.l.b16 %v5626
      %v5943 = vunpack.c.h.b16 %v5626
      %v5944 = vunpack.c.l.b16 %v5627
      %v5945 = vunpack.c.h.b16 %v5627
      %v5946 = vpack.c.b16 %v5932, %v5930
      %v5947 = vpack.c.b16 %v5933, %v5931
      %v5948 = vpack.c.b16 %v5936, %v5934
      %v5949 = vpack.c.b16 %v5937, %v5935
      %v5950 = vpack.c.b16 %v5940, %v5938
      %v5951 = vpack.c.b16 %v5941, %v5939
      %v5952 = vpack.c.b16 %v5944, %v5942
      %v5953 = vpack.c.b16 %v5945, %v5943
      %v5963 = vsel %vm497, %v5750, 0
      %v5966 = vsel %vm497, %v5759, 0
      %v5969 = vsel %vm497, %v5768, 0
      %v5972 = vsel %vm497, %v5777, 0
      %v5975 = vsel %vm497, %v5786, 0
      %v5978 = vsel %vm497, %v5795, 0
      %v5981 = vsel %vm497, %v5804, 0
      %v5984 = vsel %vm497, %v5813, 0
      %v5987 = vsel %vm497, %v5822, 0
      %v5990 = vsel %vm497, %v5831, 0
      %v5993 = vsel %vm497, %v5840, 0
      %v5996 = vsel %vm497, %v5849, 0
      %v5999 = vsel %vm497, %v5858, 0
      %v6002 = vsel %vm497, %v5867, 0
      %v6005 = vsel %vm497, %v5876, 0
      %v6008 = vsel %vm497, %v5885, 0
      %v6011 = vsel %vm497, %v5894, 0
      %v6014 = vsel %vm497, %v5903, 0
      %v6017 = vsel %vm497, %v5912, 0
      %v6020 = vsel %vm497, %v5921, 0
      %v6023 = vsel %vm497, %v5920, 0
      %6025 = vmatpush.bf16.msra.mxu0 0
      %6026 = vmatpush.bf16.msra.mxu0 0
      %6027 = vmatpush.bf16.msra.mxu0 0
      %6028 = vmatpush.bf16.msra.mxu0 0
      %6029 = vmatpush.bf16.msra.mxu0 %v5952
      %6030 = vmatpush.bf16.msra.mxu0 %v5950
      %6031 = vmatpush.bf16.msra.mxu0 %v5948
      %6032 = vmatpush.bf16.msra.mxu0 %v5946
      %6033 = vmatmul.bf16.gmra.mxu0 %v5963
      %v6034 = vpop.f32.mrf.mxu0
      %v6035 = vadd.f32 0.0, %v6034
      %v6036 = vpop.f32.mrf.mxu0
      %v6037 = vadd.f32 0.0, %v6036
      %6038 = vmatmul.bf16.gmra.mxu0 %v5966
      %v6039 = vpop.f32.mrf.mxu0
      %v6040 = vadd.f32 0.0, %v6039
      %v6041 = vpop.f32.mrf.mxu0
      %v6042 = vadd.f32 0.0, %v6041
      %6043 = vmatmul.bf16.gmra.mxu0 %v5969
      %v6044 = vpop.f32.mrf.mxu0
      %v6045 = vadd.f32 0.0, %v6044
      %v6046 = vpop.f32.mrf.mxu0
      %v6047 = vadd.f32 0.0, %v6046
      %6048 = vmatmul.bf16.gmra.mxu0 %v5972
      %v6049 = vpop.f32.mrf.mxu0
      %v6050 = vadd.f32 0.0, %v6049
      %v6051 = vpop.f32.mrf.mxu0
      %v6052 = vadd.f32 0.0, %v6051
      %6053 = vmatmul.bf16.gmra.mxu0 %v5975
      %v6054 = vpop.f32.mrf.mxu0
      %v6055 = vadd.f32 0.0, %v6054
      %v6056 = vpop.f32.mrf.mxu0
      %v6057 = vadd.f32 0.0, %v6056
      %6058 = vmatmul.bf16.gmra.mxu0 %v5978
      %v6059 = vpop.f32.mrf.mxu0
      %v6060 = vadd.f32 0.0, %v6059
      %v6061 = vpop.f32.mrf.mxu0
      %v6062 = vadd.f32 0.0, %v6061
      %6063 = vmatmul.bf16.gmra.mxu0 %v5981
      %v6064 = vpop.f32.mrf.mxu0
      %v6065 = vadd.f32 0.0, %v6064
      %v6066 = vpop.f32.mrf.mxu0
      %v6067 = vadd.f32 0.0, %v6066
      %6068 = vmatmul.bf16.gmra.mxu0 %v5984
      %v6069 = vpop.f32.mrf.mxu0
      %v6070 = vadd.f32 0.0, %v6069
      %v6071 = vpop.f32.mrf.mxu0
      %v6072 = vadd.f32 0.0, %v6071
      %6073 = vmatmul.bf16.gmra.mxu0 %v5987
      %v6074 = vpop.f32.mrf.mxu0
      %v6075 = vadd.f32 0.0, %v6074
      %v6076 = vpop.f32.mrf.mxu0
      %v6077 = vadd.f32 0.0, %v6076
      %6078 = vmatmul.bf16.gmra.mxu0 %v5990
      %v6079 = vpop.f32.mrf.mxu0
      %v6080 = vadd.f32 0.0, %v6079
      %v6081 = vpop.f32.mrf.mxu0
      %v6082 = vadd.f32 0.0, %v6081
      %6083 = vmatmul.bf16.gmra.mxu0 %v5993
      %v6084 = vpop.f32.mrf.mxu0
      %v6085 = vadd.f32 0.0, %v6084
      %v6086 = vpop.f32.mrf.mxu0
      %v6087 = vadd.f32 0.0, %v6086
      %6088 = vmatmul.bf16.gmra.mxu0 %v5996
      %v6089 = vpop.f32.mrf.mxu0
      %v6090 = vadd.f32 0.0, %v6089
      %v6091 = vpop.f32.mrf.mxu0
      %v6092 = vadd.f32 0.0, %v6091
      %6093 = vmatmul.bf16.gmra.mxu0 %v5999
      %v6094 = vpop.f32.mrf.mxu0
      %v6095 = vadd.f32 0.0, %v6094
      %v6096 = vpop.f32.mrf.mxu0
      %v6097 = vadd.f32 0.0, %v6096
      %6098 = vmatmul.bf16.gmra.mxu0 %v6002
      %v6099 = vpop.f32.mrf.mxu0
      %v6100 = vadd.f32 0.0, %v6099
      %v6101 = vpop.f32.mrf.mxu0
      %v6102 = vadd.f32 0.0, %v6101
      %6103 = vmatmul.bf16.gmra.mxu0 %v6005
      %v6104 = vpop.f32.mrf.mxu0
      %v6105 = vadd.f32 0.0, %v6104
      %v6106 = vpop.f32.mrf.mxu0
      %v6107 = vadd.f32 0.0, %v6106
      %6108 = vmatmul.bf16.gmra.mxu0 %v6008
      %v6109 = vpop.f32.mrf.mxu0
      %v6110 = vadd.f32 0.0, %v6109
      %v6111 = vpop.f32.mrf.mxu0
      %v6112 = vadd.f32 0.0, %v6111
      %6113 = vmatmul.bf16.gmra.mxu0 %v6011
      %v6114 = vpop.f32.mrf.mxu0
      %v6115 = vadd.f32 0.0, %v6114
      %v6116 = vpop.f32.mrf.mxu0
      %v6117 = vadd.f32 0.0, %v6116
      %6118 = vmatmul.bf16.gmra.mxu0 %v6014
      %v6119 = vpop.f32.mrf.mxu0
      %v6120 = vadd.f32 0.0, %v6119
      %v6121 = vpop.f32.mrf.mxu0
      %v6122 = vadd.f32 0.0, %v6121
      %6123 = vmatmul.bf16.gmra.mxu0 %v6017
      %v6124 = vpop.f32.mrf.mxu0
      %v6125 = vadd.f32 0.0, %v6124
      %v6126 = vpop.f32.mrf.mxu0
      %v6127 = vadd.f32 0.0, %v6126
      %6128 = vmatmul.bf16.gmra.mxu0 %v6020
      %v6129 = vpop.f32.mrf.mxu0
      %v6130 = vadd.f32 0.0, %v6129
      %v6131 = vpop.f32.mrf.mxu0
      %v6132 = vadd.f32 0.0, %v6131
      %6133 = vmatmul.bf16.gmra.mxu0 %v6023
      %v6134 = vpop.f32.mrf.mxu0
      %v6135 = vadd.f32 0.0, %v6134
      %v6136 = vpop.f32.mrf.mxu0
      %6137 = vdwg.mxu0
      %6138 = vmatpush.bf16.msra.mxu0 0
      %6139 = vmatpush.bf16.msra.mxu0 0
      %6140 = vmatpush.bf16.msra.mxu0 0
      %6141 = vmatpush.bf16.msra.mxu0 0
      %6142 = vmatpush.bf16.msra.mxu0 %v5953
      %6143 = vmatpush.bf16.msra.mxu0 %v5951
      %6144 = vmatpush.bf16.msra.mxu0 %v5949
      %6145 = vmatpush.bf16.msra.mxu0 %v5947
      %6146 = vmatmul.bf16.gmra.mxu0 %v5963
      %v6147 = vpop.f32.mrf.mxu0
      %v6148 = vadd.f32 0.0, %v6147
      %v6149 = vpop.f32.mrf.mxu0
      %v6150 = vadd.f32 0.0, %v6149
      %6151 = vmatmul.bf16.gmra.mxu0 %v5966
      %v6152 = vpop.f32.mrf.mxu0
      %v6153 = vadd.f32 0.0, %v6152
      %v6154 = vpop.f32.mrf.mxu0
      %v6155 = vadd.f32 0.0, %v6154
      %6156 = vmatmul.bf16.gmra.mxu0 %v5969
      %v6157 = vpop.f32.mrf.mxu0
      %v6158 = vadd.f32 0.0, %v6157
      %v6159 = vpop.f32.mrf.mxu0
      %v6160 = vadd.f32 0.0, %v6159
      %6161 = vmatmul.bf16.gmra.mxu0 %v5972
      %v6162 = vpop.f32.mrf.mxu0
      %v6163 = vadd.f32 0.0, %v6162
      %v6164 = vpop.f32.mrf.mxu0
      %v6165 = vadd.f32 0.0, %v6164
      %6166 = vmatmul.bf16.gmra.mxu0 %v5975
      %v6167 = vpop.f32.mrf.mxu0
      %v6168 = vadd.f32 0.0, %v6167
      %v6169 = vpop.f32.mrf.mxu0
      %v6170 = vadd.f32 0.0, %v6169
      %6171 = vmatmul.bf16.gmra.mxu0 %v5978
      %v6172 = vpop.f32.mrf.mxu0
      %v6173 = vadd.f32 0.0, %v6172
      %v6174 = vpop.f32.mrf.mxu0
      %v6175 = vadd.f32 0.0, %v6174
      %6176 = vmatmul.bf16.gmra.mxu0 %v5981
      %v6177 = vpop.f32.mrf.mxu0
      %v6178 = vadd.f32 0.0, %v6177
      %v6179 = vpop.f32.mrf.mxu0
      %v6180 = vadd.f32 0.0, %v6179
      %6181 = vmatmul.bf16.gmra.mxu0 %v5984
      %v6182 = vpop.f32.mrf.mxu0
      %v6183 = vadd.f32 0.0, %v6182
      %v6184 = vpop.f32.mrf.mxu0
      %v6185 = vadd.f32 0.0, %v6184
      %6186 = vmatmul.bf16.gmra.mxu0 %v5987
      %v6187 = vpop.f32.mrf.mxu0
      %v6188 = vadd.f32 0.0, %v6187
      %v6189 = vpop.f32.mrf.mxu0
      %v6190 = vadd.f32 0.0, %v6189
      %6191 = vmatmul.bf16.gmra.mxu0 %v5990
      %v6192 = vpop.f32.mrf.mxu0
      %v6193 = vadd.f32 0.0, %v6192
      %v6194 = vpop.f32.mrf.mxu0
      %v6195 = vadd.f32 0.0, %v6194
      %6196 = vmatmul.bf16.gmra.mxu0 %v5993
      %v6197 = vpop.f32.mrf.mxu0
      %v6198 = vadd.f32 0.0, %v6197
      %v6199 = vpop.f32.mrf.mxu0
      %v6200 = vadd.f32 0.0, %v6199
      %6201 = vmatmul.bf16.gmra.mxu0 %v5996
      %v6202 = vpop.f32.mrf.mxu0
      %v6203 = vadd.f32 0.0, %v6202
      %v6204 = vpop.f32.mrf.mxu0
      %v6205 = vadd.f32 0.0, %v6204
      %6206 = vmatmul.bf16.gmra.mxu0 %v5999
      %v6207 = vpop.f32.mrf.mxu0
      %v6208 = vadd.f32 0.0, %v6207
      %v6209 = vpop.f32.mrf.mxu0
      %v6210 = vadd.f32 0.0, %v6209
      %6211 = vmatmul.bf16.gmra.mxu0 %v6002
      %v6212 = vpop.f32.mrf.mxu0
      %v6213 = vadd.f32 0.0, %v6212
      %v6214 = vpop.f32.mrf.mxu0
      %v6215 = vadd.f32 0.0, %v6214
      %6216 = vmatmul.bf16.gmra.mxu0 %v6005
      %v6217 = vpop.f32.mrf.mxu0
      %v6218 = vadd.f32 0.0, %v6217
      %v6219 = vpop.f32.mrf.mxu0
      %v6220 = vadd.f32 0.0, %v6219
      %6221 = vmatmul.bf16.gmra.mxu0 %v6008
      %v6222 = vpop.f32.mrf.mxu0
      %v6223 = vadd.f32 0.0, %v6222
      %v6224 = vpop.f32.mrf.mxu0
      %v6225 = vadd.f32 0.0, %v6224
      %6226 = vmatmul.bf16.gmra.mxu0 %v6011
      %v6227 = vpop.f32.mrf.mxu0
      %v6228 = vadd.f32 0.0, %v6227
      %v6229 = vpop.f32.mrf.mxu0
      %v6230 = vadd.f32 0.0, %v6229
      %6231 = vmatmul.bf16.gmra.mxu0 %v6014
      %v6232 = vpop.f32.mrf.mxu0
      %v6233 = vadd.f32 0.0, %v6232
      %v6234 = vpop.f32.mrf.mxu0
      %v6235 = vadd.f32 0.0, %v6234
      %6236 = vmatmul.bf16.gmra.mxu0 %v6017
      %v6237 = vpop.f32.mrf.mxu0
      %v6238 = vadd.f32 0.0, %v6237
      %v6239 = vpop.f32.mrf.mxu0
      %v6240 = vadd.f32 0.0, %v6239
      %6241 = vmatmul.bf16.gmra.mxu0 %v6020
      %v6242 = vpop.f32.mrf.mxu0
      %v6243 = vadd.f32 0.0, %v6242
      %v6244 = vpop.f32.mrf.mxu0
      %v6245 = vadd.f32 0.0, %v6244
      %6246 = vmatmul.bf16.gmra.mxu0 %v6023
      %v6247 = vpop.f32.mrf.mxu0
      %v6248 = vadd.f32 0.0, %v6247
      %v6249 = vpop.f32.mrf.mxu0
      %6250 = vdwg.mxu0
      %v6251 = vadd.f32 %v5495, %v6035
      %v6252 = vadd.f32 %v5496, %v6148
      %v6253 = vadd.f32 %v5497, %v6037
      %v6254 = vadd.f32 %v5498, %v6150
      %v6255 = vadd.f32 %v5499, %v6040
      %v6256 = vadd.f32 %v5500, %v6153
      %v6257 = vadd.f32 %v5501, %v6042
      %v6258 = vadd.f32 %v5502, %v6155
      %v6259 = vadd.f32 %v5503, %v6045
      %v6260 = vadd.f32 %v5504, %v6158
      %v6261 = vadd.f32 %v5505, %v6047
      %v6262 = vadd.f32 %v5506, %v6160
      %v6263 = vadd.f32 %v5507, %v6050
      %v6264 = vadd.f32 %v5508, %v6163
      %v6265 = vadd.f32 %v5509, %v6052
      %v6266 = vadd.f32 %v5510, %v6165
      %v6267 = vadd.f32 %v5511, %v6055
      %v6268 = vadd.f32 %v5512, %v6168
      %v6269 = vadd.f32 %v5513, %v6057
      %v6270 = vadd.f32 %v5514, %v6170
      %v6271 = vadd.f32 %v5515, %v6060
      %v6272 = vadd.f32 %v5516, %v6173
      %v6273 = vadd.f32 %v5517, %v6062
      %v6274 = vadd.f32 %v5518, %v6175
      %v6275 = vadd.f32 %v5519, %v6065
      %v6276 = vadd.f32 %v5520, %v6178
      %v6277 = vadd.f32 %v5521, %v6067
      %v6278 = vadd.f32 %v5522, %v6180
      %v6279 = vadd.f32 %v5523, %v6070
      %v6280 = vadd.f32 %v5524, %v6183
      %v6281 = vadd.f32 %v5525, %v6072
      %v6282 = vadd.f32 %v5526, %v6185
      %v6283 = vadd.f32 %v5527, %v6075
      %v6284 = vadd.f32 %v5528, %v6188
      %v6285 = vadd.f32 %v5529, %v6077
      %v6286 = vadd.f32 %v5530, %v6190
      %v6287 = vadd.f32 %v5531, %v6080
      %v6288 = vadd.f32 %v5532, %v6193
      %v6289 = vadd.f32 %v5533, %v6082
      %v6290 = vadd.f32 %v5534, %v6195
      %v6291 = vadd.f32 %v5535, %v6085
      %v6292 = vadd.f32 %v5536, %v6198
      %v6293 = vadd.f32 %v5537, %v6087
      %v6294 = vadd.f32 %v5538, %v6200
      %v6295 = vadd.f32 %v5539, %v6090
      %v6296 = vadd.f32 %v5540, %v6203
      %v6297 = vadd.f32 %v5541, %v6092
      %v6298 = vadd.f32 %v5542, %v6205
      %v6299 = vadd.f32 %v5543, %v6095
      %v6300 = vadd.f32 %v5544, %v6208
      %v6301 = vadd.f32 %v5545, %v6097
      %v6302 = vadd.f32 %v5546, %v6210
      %v6303 = vadd.f32 %v5547, %v6100
      %v6304 = vadd.f32 %v5548, %v6213
      %v6305 = vadd.f32 %v5549, %v6102
      %v6306 = vadd.f32 %v5550, %v6215
      %v6307 = vadd.f32 %v5551, %v6105
      %v6308 = vadd.f32 %v5552, %v6218
      %v6309 = vadd.f32 %v5553, %v6107
      %v6310 = vadd.f32 %v5554, %v6220
      %v6311 = vadd.f32 %v5555, %v6110
      %v6312 = vadd.f32 %v5556, %v6223
      %v6313 = vadd.f32 %v5557, %v6112
      %v6314 = vadd.f32 %v5558, %v6225
      %v6315 = vadd.f32 %v5559, %v6115
      %v6316 = vadd.f32 %v5560, %v6228
      %v6317 = vadd.f32 %v5561, %v6117
      %v6318 = vadd.f32 %v5562, %v6230
      %v6319 = vadd.f32 %v5563, %v6120
      %v6320 = vadd.f32 %v5564, %v6233
      %v6321 = vadd.f32 %v5565, %v6122
      %v6322 = vadd.f32 %v5566, %v6235
      %v6323 = vadd.f32 %v5567, %v6125
      %v6324 = vadd.f32 %v5568, %v6238
      %v6325 = vadd.f32 %v5569, %v6127
      %v6326 = vadd.f32 %v5570, %v6240
      %v6327 = vadd.f32 %v5571, %v6130
      %v6328 = vadd.f32 %v5572, %v6243
      %v6329 = vadd.f32 %v5573, %v6132
      %v6330 = vadd.f32 %v5574, %v6245
      %v6331 = vadd.f32 %v5575, %v6135
      %v6332 = vadd.f32 %v5576, %v6248
      %v6333 = vld [vmem:[#allocation2 + $0x10] sm:$0x8]
      %s6334 = scalar_lea.vmem %s8, 512
      %v6335 = vld [vmem:[%s6334] sm:$0xff]
      %v6336 = vld [vmem:[%s6334 + $0x8] sm:$0xff]
      %v6337 = vld [vmem:[%s6334 + $0x10] sm:$0xff]
      %v6338 = vld [vmem:[%s6334 + $0x18] sm:$0xff]
      %v6339 = vld [vmem:[%s6334 + $0x20] sm:$0xff]
      %v6340 = vld [vmem:[%s6334 + $0x28] sm:$0xff]
      %v6341 = vld [vmem:[%s6334 + $0x30] sm:$0xff]
      %v6342 = vld [vmem:[%s6334 + $0x38] sm:$0xff]
      %v6344 = vunpack.c.l.b16 %v6333
      %v6345 = vpack.c.b16 %v5671, %v6344
      %vm6346 = vcmask 1044480
      %v6347 = vrot.slane %v6345, 3
      %v6348 = vrot.slane %v5713, 3
      %v6349 = vsel %vm6346, %v6347, %v6348
      %v6350 = vrot.slane %v5714, 3
      %v6351 = vsel %vm6346, %v6348, %v6350
      %v6352 = vrot.slane %v5715, 3
      %v6353 = vsel %vm6346, %v6350, %v6352
      %v6354 = vrot.slane %v5716, 3
      %v6355 = vsel %vm6346, %v6352, %v6354
      %v6356 = vrot.slane %v5717, 3
      %v6357 = vsel %vm6346, %v6354, %v6356
      %v6358 = vrot.slane %v5718, 3
      %v6359 = vsel %vm6346, %v6356, %v6358
      %v6360 = vrot.slane %v5719, 3
      %v6361 = vsel %vm6346, %v6358, %v6360
      %v6362 = vrot.slane %v5720, 3
      %v6363 = vsel %vm6346, %v6360, %v6362
      %v6364 = vrot.slane %v5721, 3
      %v6365 = vsel %vm6346, %v6362, %v6364
      %v6366 = vrot.slane %v5722, 3
      %v6367 = vsel %vm6346, %v6364, %v6366
      %v6368 = vrot.slane %v5723, 3
      %v6369 = vsel %vm6346, %v6366, %v6368
      %v6370 = vrot.slane %v5724, 3
      %v6371 = vsel %vm6346, %v6368, %v6370
      %v6372 = vrot.slane %v5725, 3
      %v6373 = vsel %vm6346, %v6370, %v6372
      %v6374 = vrot.slane %v5726, 3
      %v6375 = vsel %vm6346, %v6372, %v6374
      %v6376 = vrot.slane %v5727, 3
      %v6377 = vsel %vm6346, %v6374, %v6376
      %v6378 = vrot.slane %v5728, 3
      %v6379 = vsel %vm6346, %v6376, %v6378
      %v6380 = vrot.slane %v5729, 3
      %v6381 = vsel %vm6346, %v6378, %v6380
      %v6382 = vrot.slane %v5730, 3
      %v6383 = vsel %vm6346, %v6380, %v6382
      %v6384 = vrot.slane %v5731, 3
      %v6385 = vsel %vm6346, %v6382, %v6384
      %v6386 = vrot.slane %v5732, 3
      %v6387 = vsel %vm6346, %v6384, %v6386
      %v6396 = vunpack.c.l.b16 %v6335
      %v6397 = vunpack.c.h.b16 %v6335
      %v6398 = vunpack.c.l.b16 %v6336
      %v6399 = vunpack.c.h.b16 %v6336
      %v6400 = vunpack.c.l.b16 %v6337
      %v6401 = vunpack.c.h.b16 %v6337
      %v6402 = vunpack.c.l.b16 %v6338
      %v6403 = vunpack.c.h.b16 %v6338
      %v6404 = vunpack.c.l.b16 %v6339
      %v6405 = vunpack.c.h.b16 %v6339
      %v6406 = vunpack.c.l.b16 %v6340
      %v6407 = vunpack.c.h.b16 %v6340
      %v6408 = vunpack.c.l.b16 %v6341
      %v6409 = vunpack.c.h.b16 %v6341
      %v6410 = vunpack.c.l.b16 %v6342
      %v6411 = vunpack.c.h.b16 %v6342
      %v6412 = vpack.c.b16 %v6398, %v6396
      %v6413 = vpack.c.b16 %v6399, %v6397
      %v6414 = vpack.c.b16 %v6402, %v6400
      %v6415 = vpack.c.b16 %v6403, %v6401
      %v6416 = vpack.c.b16 %v6406, %v6404
      %v6417 = vpack.c.b16 %v6407, %v6405
      %v6418 = vpack.c.b16 %v6410, %v6408
      %v6419 = vpack.c.b16 %v6411, %v6409
      %v6429 = vsel %vm497, %v6349, 0
      %v6432 = vsel %vm497, %v6351, 0
      %v6435 = vsel %vm497, %v6353, 0
      %v6438 = vsel %vm497, %v6355, 0
      %v6441 = vsel %vm497, %v6357, 0
      %v6444 = vsel %vm497, %v6359, 0
      %v6447 = vsel %vm497, %v6361, 0
      %v6450 = vsel %vm497, %v6363, 0
      %v6453 = vsel %vm497, %v6365, 0
      %v6456 = vsel %vm497, %v6367, 0
      %v6459 = vsel %vm497, %v6369, 0
      %v6462 = vsel %vm497, %v6371, 0
      %v6465 = vsel %vm497, %v6373, 0
      %v6468 = vsel %vm497, %v6375, 0
      %v6471 = vsel %vm497, %v6377, 0
      %v6474 = vsel %vm497, %v6379, 0
      %v6477 = vsel %vm497, %v6381, 0
      %v6480 = vsel %vm497, %v6383, 0
      %v6483 = vsel %vm497, %v6385, 0
      %v6486 = vsel %vm497, %v6387, 0
      %v6489 = vsel %vm497, %v6386, 0
      %6491 = vmatpush.bf16.msra.mxu0 0
      %6492 = vmatpush.bf16.msra.mxu0 0
      %6493 = vmatpush.bf16.msra.mxu0 0
      %6494 = vmatpush.bf16.msra.mxu0 0
      %6495 = vmatpush.bf16.msra.mxu0 %v6418
      %6496 = vmatpush.bf16.msra.mxu0 %v6416
      %6497 = vmatpush.bf16.msra.mxu0 %v6414
      %6498 = vmatpush.bf16.msra.mxu0 %v6412
      %6499 = vmatmul.bf16.gmra.mxu0 %v6429
      %v6500 = vpop.f32.mrf.mxu0
      %v6501 = vadd.f32 0.0, %v6500
      %v6502 = vpop.f32.mrf.mxu0
      %v6503 = vadd.f32 0.0, %v6502
      %6504 = vmatmul.bf16.gmra.mxu0 %v6432
      %v6505 = vpop.f32.mrf.mxu0
      %v6506 = vadd.f32 0.0, %v6505
      %v6507 = vpop.f32.mrf.mxu0
      %v6508 = vadd.f32 0.0, %v6507
      %6509 = vmatmul.bf16.gmra.mxu0 %v6435
      %v6510 = vpop.f32.mrf.mxu0
      %v6511 = vadd.f32 0.0, %v6510
      %v6512 = vpop.f32.mrf.mxu0
      %v6513 = vadd.f32 0.0, %v6512
      %6514 = vmatmul.bf16.gmra.mxu0 %v6438
      %v6515 = vpop.f32.mrf.mxu0
      %v6516 = vadd.f32 0.0, %v6515
      %v6517 = vpop.f32.mrf.mxu0
      %v6518 = vadd.f32 0.0, %v6517
      %6519 = vmatmul.bf16.gmra.mxu0 %v6441
      %v6520 = vpop.f32.mrf.mxu0
      %v6521 = vadd.f32 0.0, %v6520
      %v6522 = vpop.f32.mrf.mxu0
      %v6523 = vadd.f32 0.0, %v6522
      %6524 = vmatmul.bf16.gmra.mxu0 %v6444
      %v6525 = vpop.f32.mrf.mxu0
      %v6526 = vadd.f32 0.0, %v6525
      %v6527 = vpop.f32.mrf.mxu0
      %v6528 = vadd.f32 0.0, %v6527
      %6529 = vmatmul.bf16.gmra.mxu0 %v6447
      %v6530 = vpop.f32.mrf.mxu0
      %v6531 = vadd.f32 0.0, %v6530
      %v6532 = vpop.f32.mrf.mxu0
      %v6533 = vadd.f32 0.0, %v6532
      %6534 = vmatmul.bf16.gmra.mxu0 %v6450
      %v6535 = vpop.f32.mrf.mxu0
      %v6536 = vadd.f32 0.0, %v6535
      %v6537 = vpop.f32.mrf.mxu0
      %v6538 = vadd.f32 0.0, %v6537
      %6539 = vmatmul.bf16.gmra.mxu0 %v6453
      %v6540 = vpop.f32.mrf.mxu0
      %v6541 = vadd.f32 0.0, %v6540
      %v6542 = vpop.f32.mrf.mxu0
      %v6543 = vadd.f32 0.0, %v6542
      %6544 = vmatmul.bf16.gmra.mxu0 %v6456
      %v6545 = vpop.f32.mrf.mxu0
      %v6546 = vadd.f32 0.0, %v6545
      %v6547 = vpop.f32.mrf.mxu0
      %v6548 = vadd.f32 0.0, %v6547
      %6549 = vmatmul.bf16.gmra.mxu0 %v6459
      %v6550 = vpop.f32.mrf.mxu0
      %v6551 = vadd.f32 0.0, %v6550
      %v6552 = vpop.f32.mrf.mxu0
      %v6553 = vadd.f32 0.0, %v6552
      %6554 = vmatmul.bf16.gmra.mxu0 %v6462
      %v6555 = vpop.f32.mrf.mxu0
      %v6556 = vadd.f32 0.0, %v6555
      %v6557 = vpop.f32.mrf.mxu0
      %v6558 = vadd.f32 0.0, %v6557
      %6559 = vmatmul.bf16.gmra.mxu0 %v6465
      %v6560 = vpop.f32.mrf.mxu0
      %v6561 = vadd.f32 0.0, %v6560
      %v6562 = vpop.f32.mrf.mxu0
      %v6563 = vadd.f32 0.0, %v6562
      %6564 = vmatmul.bf16.gmra.mxu0 %v6468
      %v6565 = vpop.f32.mrf.mxu0
      %v6566 = vadd.f32 0.0, %v6565
      %v6567 = vpop.f32.mrf.mxu0
      %v6568 = vadd.f32 0.0, %v6567
      %6569 = vmatmul.bf16.gmra.mxu0 %v6471
      %v6570 = vpop.f32.mrf.mxu0
      %v6571 = vadd.f32 0.0, %v6570
      %v6572 = vpop.f32.mrf.mxu0
      %v6573 = vadd.f32 0.0, %v6572
      %6574 = vmatmul.bf16.gmra.mxu0 %v6474
      %v6575 = vpop.f32.mrf.mxu0
      %v6576 = vadd.f32 0.0, %v6575
      %v6577 = vpop.f32.mrf.mxu0
      %v6578 = vadd.f32 0.0, %v6577
      %6579 = vmatmul.bf16.gmra.mxu0 %v6477
      %v6580 = vpop.f32.mrf.mxu0
      %v6581 = vadd.f32 0.0, %v6580
      %v6582 = vpop.f32.mrf.mxu0
      %v6583 = vadd.f32 0.0, %v6582
      %6584 = vmatmul.bf16.gmra.mxu0 %v6480
      %v6585 = vpop.f32.mrf.mxu0
      %v6586 = vadd.f32 0.0, %v6585
      %v6587 = vpop.f32.mrf.mxu0
      %v6588 = vadd.f32 0.0, %v6587
      %6589 = vmatmul.bf16.gmra.mxu0 %v6483
      %v6590 = vpop.f32.mrf.mxu0
      %v6591 = vadd.f32 0.0, %v6590
      %v6592 = vpop.f32.mrf.mxu0
      %v6593 = vadd.f32 0.0, %v6592
      %6594 = vmatmul.bf16.gmra.mxu0 %v6486
      %v6595 = vpop.f32.mrf.mxu0
      %v6596 = vadd.f32 0.0, %v6595
      %v6597 = vpop.f32.mrf.mxu0
      %v6598 = vadd.f32 0.0, %v6597
      %6599 = vmatmul.bf16.gmra.mxu0 %v6489
      %v6600 = vpop.f32.mrf.mxu0
      %v6601 = vadd.f32 0.0, %v6600
      %v6602 = vpop.f32.mrf.mxu0
      %6603 = vdwg.mxu0
      %6604 = vmatpush.bf16.msra.mxu0 0
      %6605 = vmatpush.bf16.msra.mxu0 0
      %6606 = vmatpush.bf16.msra.mxu0 0
      %6607 = vmatpush.bf16.msra.mxu0 0
      %6608 = vmatpush.bf16.msra.mxu0 %v6419
      %6609 = vmatpush.bf16.msra.mxu0 %v6417
      %6610 = vmatpush.bf16.msra.mxu0 %v6415
      %6611 = vmatpush.bf16.msra.mxu0 %v6413
      %6612 = vmatmul.bf16.gmra.mxu0 %v6429
      %v6613 = vpop.f32.mrf.mxu0
      %v6614 = vadd.f32 0.0, %v6613
      %v6615 = vpop.f32.mrf.mxu0
      %v6616 = vadd.f32 0.0, %v6615
      %6617 = vmatmul.bf16.gmra.mxu0 %v6432
      %v6618 = vpop.f32.mrf.mxu0
      %v6619 = vadd.f32 0.0, %v6618
      %v6620 = vpop.f32.mrf.mxu0
      %v6621 = vadd.f32 0.0, %v6620
      %6622 = vmatmul.bf16.gmra.mxu0 %v6435
      %v6623 = vpop.f32.mrf.mxu0
      %v6624 = vadd.f32 0.0, %v6623
      %v6625 = vpop.f32.mrf.mxu0
      %v6626 = vadd.f32 0.0, %v6625
      %6627 = vmatmul.bf16.gmra.mxu0 %v6438
      %v6628 = vpop.f32.mrf.mxu0
      %v6629 = vadd.f32 0.0, %v6628
      %v6630 = vpop.f32.mrf.mxu0
      %v6631 = vadd.f32 0.0, %v6630
      %6632 = vmatmul.bf16.gmra.mxu0 %v6441
      %v6633 = vpop.f32.mrf.mxu0
      %v6634 = vadd.f32 0.0, %v6633
      %v6635 = vpop.f32.mrf.mxu0
      %v6636 = vadd.f32 0.0, %v6635
      %6637 = vmatmul.bf16.gmra.mxu0 %v6444
      %v6638 = vpop.f32.mrf.mxu0
      %v6639 = vadd.f32 0.0, %v6638
      %v6640 = vpop.f32.mrf.mxu0
      %v6641 = vadd.f32 0.0, %v6640
      %6642 = vmatmul.bf16.gmra.mxu0 %v6447
      %v6643 = vpop.f32.mrf.mxu0
      %v6644 = vadd.f32 0.0, %v6643
      %v6645 = vpop.f32.mrf.mxu0
      %v6646 = vadd.f32 0.0, %v6645
      %6647 = vmatmul.bf16.gmra.mxu0 %v6450
      %v6648 = vpop.f32.mrf.mxu0
      %v6649 = vadd.f32 0.0, %v6648
      %v6650 = vpop.f32.mrf.mxu0
      %v6651 = vadd.f32 0.0, %v6650
      %6652 = vmatmul.bf16.gmra.mxu0 %v6453
      %v6653 = vpop.f32.mrf.mxu0
      %v6654 = vadd.f32 0.0, %v6653
      %v6655 = vpop.f32.mrf.mxu0
      %v6656 = vadd.f32 0.0, %v6655
      %6657 = vmatmul.bf16.gmra.mxu0 %v6456
      %v6658 = vpop.f32.mrf.mxu0
      %v6659 = vadd.f32 0.0, %v6658
      %v6660 = vpop.f32.mrf.mxu0
      %v6661 = vadd.f32 0.0, %v6660
      %6662 = vmatmul.bf16.gmra.mxu0 %v6459
      %v6663 = vpop.f32.mrf.mxu0
      %v6664 = vadd.f32 0.0, %v6663
      %v6665 = vpop.f32.mrf.mxu0
      %v6666 = vadd.f32 0.0, %v6665
      %6667 = vmatmul.bf16.gmra.mxu0 %v6462
      %v6668 = vpop.f32.mrf.mxu0
      %v6669 = vadd.f32 0.0, %v6668
      %v6670 = vpop.f32.mrf.mxu0
      %v6671 = vadd.f32 0.0, %v6670
      %6672 = vmatmul.bf16.gmra.mxu0 %v6465
      %v6673 = vpop.f32.mrf.mxu0
      %v6674 = vadd.f32 0.0, %v6673
      %v6675 = vpop.f32.mrf.mxu0
      %v6676 = vadd.f32 0.0, %v6675
      %6677 = vmatmul.bf16.gmra.mxu0 %v6468
      %v6678 = vpop.f32.mrf.mxu0
      %v6679 = vadd.f32 0.0, %v6678
      %v6680 = vpop.f32.mrf.mxu0
      %v6681 = vadd.f32 0.0, %v6680
      %6682 = vmatmul.bf16.gmra.mxu0 %v6471
      %v6683 = vpop.f32.mrf.mxu0
      %v6684 = vadd.f32 0.0, %v6683
      %v6685 = vpop.f32.mrf.mxu0
      %v6686 = vadd.f32 0.0, %v6685
      %6687 = vmatmul.bf16.gmra.mxu0 %v6474
      %v6688 = vpop.f32.mrf.mxu0
      %v6689 = vadd.f32 0.0, %v6688
      %v6690 = vpop.f32.mrf.mxu0
      %v6691 = vadd.f32 0.0, %v6690
      %6692 = vmatmul.bf16.gmra.mxu0 %v6477
      %v6693 = vpop.f32.mrf.mxu0
      %v6694 = vadd.f32 0.0, %v6693
      %v6695 = vpop.f32.mrf.mxu0
      %v6696 = vadd.f32 0.0, %v6695
      %6697 = vmatmul.bf16.gmra.mxu0 %v6480
      %v6698 = vpop.f32.mrf.mxu0
      %v6699 = vadd.f32 0.0, %v6698
      %v6700 = vpop.f32.mrf.mxu0
      %v6701 = vadd.f32 0.0, %v6700
      %6702 = vmatmul.bf16.gmra.mxu0 %v6483
      %v6703 = vpop.f32.mrf.mxu0
      %v6704 = vadd.f32 0.0, %v6703
      %v6705 = vpop.f32.mrf.mxu0
      %v6706 = vadd.f32 0.0, %v6705
      %6707 = vmatmul.bf16.gmra.mxu0 %v6486
      %v6708 = vpop.f32.mrf.mxu0
      %v6709 = vadd.f32 0.0, %v6708
      %v6710 = vpop.f32.mrf.mxu0
      %v6711 = vadd.f32 0.0, %v6710
      %6712 = vmatmul.bf16.gmra.mxu0 %v6489
      %v6713 = vpop.f32.mrf.mxu0
      %v6714 = vadd.f32 0.0, %v6713
      %v6715 = vpop.f32.mrf.mxu0
      %6716 = vdwg.mxu0
      %v6717 = vadd.f32 %v6251, %v6501
      %v6718 = vadd.f32 %v6252, %v6614
      %v6719 = vadd.f32 %v6253, %v6503
      %v6720 = vadd.f32 %v6254, %v6616
      %v6721 = vadd.f32 %v6255, %v6506
      %v6722 = vadd.f32 %v6256, %v6619
      %v6723 = vadd.f32 %v6257, %v6508
      %v6724 = vadd.f32 %v6258, %v6621
      %v6725 = vadd.f32 %v6259, %v6511
      %v6726 = vadd.f32 %v6260, %v6624
      %v6727 = vadd.f32 %v6261, %v6513
      %v6728 = vadd.f32 %v6262, %v6626
      %v6729 = vadd.f32 %v6263, %v6516
      %v6730 = vadd.f32 %v6264, %v6629
      %v6731 = vadd.f32 %v6265, %v6518
      %v6732 = vadd.f32 %v6266, %v6631
      %v6733 = vadd.f32 %v6267, %v6521
      %v6734 = vadd.f32 %v6268, %v6634
      %v6735 = vadd.f32 %v6269, %v6523
      %v6736 = vadd.f32 %v6270, %v6636
      %v6737 = vadd.f32 %v6271, %v6526
      %v6738 = vadd.f32 %v6272, %v6639
      %v6739 = vadd.f32 %v6273, %v6528
      %v6740 = vadd.f32 %v6274, %v6641
      %v6741 = vadd.f32 %v6275, %v6531
      %v6742 = vadd.f32 %v6276, %v6644
      %v6743 = vadd.f32 %v6277, %v6533
      %v6744 = vadd.f32 %v6278, %v6646
      %v6745 = vadd.f32 %v6279, %v6536
      %v6746 = vadd.f32 %v6280, %v6649
      %v6747 = vadd.f32 %v6281, %v6538
      %v6748 = vadd.f32 %v6282, %v6651
      %v6749 = vadd.f32 %v6283, %v6541
      %v6750 = vadd.f32 %v6284, %v6654
      %v6751 = vadd.f32 %v6285, %v6543
      %v6752 = vadd.f32 %v6286, %v6656
      %v6753 = vadd.f32 %v6287, %v6546
      %v6754 = vadd.f32 %v6288, %v6659
      %v6755 = vadd.f32 %v6289, %v6548
      %v6756 = vadd.f32 %v6290, %v6661
      %v6757 = vadd.f32 %v6291, %v6551
      %v6758 = vadd.f32 %v6292, %v6664
      %v6759 = vadd.f32 %v6293, %v6553
      %v6760 = vadd.f32 %v6294, %v6666
      %v6761 = vadd.f32 %v6295, %v6556
      %v6762 = vadd.f32 %v6296, %v6669
      %v6763 = vadd.f32 %v6297, %v6558
      %v6764 = vadd.f32 %v6298, %v6671
      %v6765 = vadd.f32 %v6299, %v6561
      %v6766 = vadd.f32 %v6300, %v6674
      %v6767 = vadd.f32 %v6301, %v6563
      %v6768 = vadd.f32 %v6302, %v6676
      %v6769 = vadd.f32 %v6303, %v6566
      %v6770 = vadd.f32 %v6304, %v6679
      %v6771 = vadd.f32 %v6305, %v6568
      %v6772 = vadd.f32 %v6306, %v6681
      %v6773 = vadd.f32 %v6307, %v6571
      %v6774 = vadd.f32 %v6308, %v6684
      %v6775 = vadd.f32 %v6309, %v6573
      %v6776 = vadd.f32 %v6310, %v6686
      %v6777 = vadd.f32 %v6311, %v6576
      %v6778 = vadd.f32 %v6312, %v6689
      %v6779 = vadd.f32 %v6313, %v6578
      %v6780 = vadd.f32 %v6314, %v6691
      %v6781 = vadd.f32 %v6315, %v6581
      %v6782 = vadd.f32 %v6316, %v6694
      %v6783 = vadd.f32 %v6317, %v6583
      %v6784 = vadd.f32 %v6318, %v6696
      %v6785 = vadd.f32 %v6319, %v6586
      %v6786 = vadd.f32 %v6320, %v6699
      %v6787 = vadd.f32 %v6321, %v6588
      %v6788 = vadd.f32 %v6322, %v6701
      %v6789 = vadd.f32 %v6323, %v6591
      %v6790 = vadd.f32 %v6324, %v6704
      %v6791 = vadd.f32 %v6325, %v6593
      %v6792 = vadd.f32 %v6326, %v6706
      %v6793 = vadd.f32 %v6327, %v6596
      %v6794 = vadd.f32 %v6328, %v6709
      %v6795 = vadd.f32 %v6329, %v6598
      %v6796 = vadd.f32 %v6330, %v6711
      %v6797 = vadd.f32 %v6331, %v6601
      %v6798 = vadd.f32 %v6332, %v6714
      %v6799 = vld [vmem:[%s9] sm:$0x3]
      %v6801 = vperm.slane %v6799, 0
      %v6802 = vperm.slane %v6799, 1
      %v6805 = vadd.f32 %v6717, %v6801
      %v6806 = vadd.f32 %v6718, %v6802
      %v6807 = vadd.f32 %v6719, %v6801
      %v6808 = vadd.f32 %v6720, %v6802
      %v6809 = vadd.f32 %v6721, %v6801
      %v6810 = vadd.f32 %v6722, %v6802
      %v6811 = vadd.f32 %v6723, %v6801
      %v6812 = vadd.f32 %v6724, %v6802
      %v6813 = vadd.f32 %v6725, %v6801
      %v6814 = vadd.f32 %v6726, %v6802
      %v6815 = vadd.f32 %v6727, %v6801
      %v6816 = vadd.f32 %v6728, %v6802
      %v6817 = vadd.f32 %v6729, %v6801
      %v6818 = vadd.f32 %v6730, %v6802
      %v6819 = vadd.f32 %v6731, %v6801
      %v6820 = vadd.f32 %v6732, %v6802
      %v6821 = vadd.f32 %v6733, %v6801
      %v6822 = vadd.f32 %v6734, %v6802
      %v6823 = vadd.f32 %v6735, %v6801
      %v6824 = vadd.f32 %v6736, %v6802
      %v6825 = vadd.f32 %v6737, %v6801
      %v6826 = vadd.f32 %v6738, %v6802
      %v6827 = vadd.f32 %v6739, %v6801
      %v6828 = vadd.f32 %v6740, %v6802
      %v6829 = vadd.f32 %v6741, %v6801
      %v6830 = vadd.f32 %v6742, %v6802
      %v6831 = vadd.f32 %v6743, %v6801
      %v6832 = vadd.f32 %v6744, %v6802
      %v6833 = vadd.f32 %v6745, %v6801
      %v6834 = vadd.f32 %v6746, %v6802
      %v6835 = vadd.f32 %v6747, %v6801
      %v6836 = vadd.f32 %v6748, %v6802
      %v6837 = vadd.f32 %v6749, %v6801
      %v6838 = vadd.f32 %v6750, %v6802
      %v6839 = vadd.f32 %v6751, %v6801
      %v6840 = vadd.f32 %v6752, %v6802
      %v6841 = vadd.f32 %v6753, %v6801
      %v6842 = vadd.f32 %v6754, %v6802
      %v6843 = vadd.f32 %v6755, %v6801
      %v6844 = vadd.f32 %v6756, %v6802
      %v6845 = vadd.f32 %v6757, %v6801
      %v6846 = vadd.f32 %v6758, %v6802
      %v6847 = vadd.f32 %v6759, %v6801
      %v6848 = vadd.f32 %v6760, %v6802
      %v6849 = vadd.f32 %v6761, %v6801
      %v6850 = vadd.f32 %v6762, %v6802
      %v6851 = vadd.f32 %v6763, %v6801
      %v6852 = vadd.f32 %v6764, %v6802
      %v6853 = vadd.f32 %v6765, %v6801
      %v6854 = vadd.f32 %v6766, %v6802
      %v6855 = vadd.f32 %v6767, %v6801
      %v6856 = vadd.f32 %v6768, %v6802
      %v6857 = vadd.f32 %v6769, %v6801
      %v6858 = vadd.f32 %v6770, %v6802
      %v6859 = vadd.f32 %v6771, %v6801
      %v6860 = vadd.f32 %v6772, %v6802
      %v6861 = vadd.f32 %v6773, %v6801
      %v6862 = vadd.f32 %v6774, %v6802
      %v6863 = vadd.f32 %v6775, %v6801
      %v6864 = vadd.f32 %v6776, %v6802
      %v6865 = vadd.f32 %v6777, %v6801
      %v6866 = vadd.f32 %v6778, %v6802
      %v6867 = vadd.f32 %v6779, %v6801
      %v6868 = vadd.f32 %v6780, %v6802
      %v6869 = vadd.f32 %v6781, %v6801
      %v6870 = vadd.f32 %v6782, %v6802
      %v6871 = vadd.f32 %v6783, %v6801
      %v6872 = vadd.f32 %v6784, %v6802
      %v6873 = vadd.f32 %v6785, %v6801
      %v6874 = vadd.f32 %v6786, %v6802
      %v6875 = vadd.f32 %v6787, %v6801
      %v6876 = vadd.f32 %v6788, %v6802
      %v6877 = vadd.f32 %v6789, %v6801
      %v6878 = vadd.f32 %v6790, %v6802
      %v6879 = vadd.f32 %v6791, %v6801
      %v6880 = vadd.f32 %v6792, %v6802
      %v6881 = vadd.f32 %v6793, %v6801
      %v6882 = vadd.f32 %v6794, %v6802
      %v6883 = vadd.f32 %v6795, %v6801
      %v6884 = vadd.f32 %v6796, %v6802
      %v6885 = vadd.f32 %v6797, %v6801
      %v6886 = vadd.f32 %v6798, %v6802
      %v6887 = vmax.f32 %v6805, 0.0
      %v6888 = vmax.f32 %v6806, 0.0
      %v6889 = vmax.f32 %v6807, 0.0
      %v6890 = vmax.f32 %v6808, 0.0
      %v6891 = vmax.f32 %v6809, 0.0
      %v6892 = vmax.f32 %v6810, 0.0
      %v6893 = vmax.f32 %v6811, 0.0
      %v6894 = vmax.f32 %v6812, 0.0
      %v6895 = vmax.f32 %v6813, 0.0
      %v6896 = vmax.f32 %v6814, 0.0
      %v6897 = vmax.f32 %v6815, 0.0
      %v6898 = vmax.f32 %v6816, 0.0
      %v6899 = vmax.f32 %v6817, 0.0
      %v6900 = vmax.f32 %v6818, 0.0
      %v6901 = vmax.f32 %v6819, 0.0
      %v6902 = vmax.f32 %v6820, 0.0
      %v6903 = vmax.f32 %v6821, 0.0
      %v6904 = vmax.f32 %v6822, 0.0
      %v6905 = vmax.f32 %v6823, 0.0
      %v6906 = vmax.f32 %v6824, 0.0
      %v6907 = vmax.f32 %v6825, 0.0
      %v6908 = vmax.f32 %v6826, 0.0
      %v6909 = vmax.f32 %v6827, 0.0
      %v6910 = vmax.f32 %v6828, 0.0
      %v6911 = vmax.f32 %v6829, 0.0
      %v6912 = vmax.f32 %v6830, 0.0
      %v6913 = vmax.f32 %v6831, 0.0
      %v6914 = vmax.f32 %v6832, 0.0
      %v6915 = vmax.f32 %v6833, 0.0
      %v6916 = vmax.f32 %v6834, 0.0
      %v6917 = vmax.f32 %v6835, 0.0
      %v6918 = vmax.f32 %v6836, 0.0
      %v6919 = vmax.f32 %v6837, 0.0
      %v6920 = vmax.f32 %v6838, 0.0
      %v6921 = vmax.f32 %v6839, 0.0
      %v6922 = vmax.f32 %v6840, 0.0
      %v6923 = vmax.f32 %v6841, 0.0
      %v6924 = vmax.f32 %v6842, 0.0
      %v6925 = vmax.f32 %v6843, 0.0
      %v6926 = vmax.f32 %v6844, 0.0
      %v6927 = vmax.f32 %v6845, 0.0
      %v6928 = vmax.f32 %v6846, 0.0
      %v6929 = vmax.f32 %v6847, 0.0
      %v6930 = vmax.f32 %v6848, 0.0
      %v6931 = vmax.f32 %v6849, 0.0
      %v6932 = vmax.f32 %v6850, 0.0
      %v6933 = vmax.f32 %v6851, 0.0
      %v6934 = vmax.f32 %v6852, 0.0
      %v6935 = vmax.f32 %v6853, 0.0
      %v6936 = vmax.f32 %v6854, 0.0
      %v6937 = vmax.f32 %v6855, 0.0
      %v6938 = vmax.f32 %v6856, 0.0
      %v6939 = vmax.f32 %v6857, 0.0
      %v6940 = vmax.f32 %v6858, 0.0
      %v6941 = vmax.f32 %v6859, 0.0
      %v6942 = vmax.f32 %v6860, 0.0
      %v6943 = vmax.f32 %v6861, 0.0
      %v6944 = vmax.f32 %v6862, 0.0
      %v6945 = vmax.f32 %v6863, 0.0
      %v6946 = vmax.f32 %v6864, 0.0
      %v6947 = vmax.f32 %v6865, 0.0
      %v6948 = vmax.f32 %v6866, 0.0
      %v6949 = vmax.f32 %v6867, 0.0
      %v6950 = vmax.f32 %v6868, 0.0
      %v6951 = vmax.f32 %v6869, 0.0
      %v6952 = vmax.f32 %v6870, 0.0
      %v6953 = vmax.f32 %v6871, 0.0
      %v6954 = vmax.f32 %v6872, 0.0
      %v6955 = vmax.f32 %v6873, 0.0
      %v6956 = vmax.f32 %v6874, 0.0
      %v6957 = vmax.f32 %v6875, 0.0
      %v6958 = vmax.f32 %v6876, 0.0
      %v6959 = vmax.f32 %v6877, 0.0
      %v6960 = vmax.f32 %v6878, 0.0
      %v6961 = vmax.f32 %v6879, 0.0
      %v6962 = vmax.f32 %v6880, 0.0
      %v6963 = vmax.f32 %v6881, 0.0
      %v6964 = vmax.f32 %v6882, 0.0
      %v6965 = vmax.f32 %v6883, 0.0
      %v6966 = vmax.f32 %v6884, 0.0
      %v6967 = vmax.f32 %v6885, 0.0
      %v6968 = vmax.f32 %v6886, 0.0
      %v6969 = vpack.c.bf16 %v6889, %v6887
      %v6970 = vpack.c.bf16 %v6890, %v6888
      %v6971 = vpack.c.bf16 %v6893, %v6891
      %v6972 = vpack.c.bf16 %v6894, %v6892
      %v6973 = vpack.c.bf16 %v6897, %v6895
      %v6974 = vpack.c.bf16 %v6898, %v6896
      %v6975 = vpack.c.bf16 %v6901, %v6899
      %v6976 = vpack.c.bf16 %v6902, %v6900
      %v6977 = vpack.c.bf16 %v6905, %v6903
      %v6978 = vpack.c.bf16 %v6906, %v6904
      %v6979 = vpack.c.bf16 %v6909, %v6907
      %v6980 = vpack.c.bf16 %v6910, %v6908
      %v6981 = vpack.c.bf16 %v6913, %v6911
      %v6982 = vpack.c.bf16 %v6914, %v6912
      %v6983 = vpack.c.bf16 %v6917, %v6915
      %v6984 = vpack.c.bf16 %v6918, %v6916
      %v6985 = vpack.c.bf16 %v6921, %v6919
      %v6986 = vpack.c.bf16 %v6922, %v6920
      %v6987 = vpack.c.bf16 %v6925, %v6923
      %v6988 = vpack.c.bf16 %v6926, %v6924
      %v6989 = vpack.c.bf16 %v6929, %v6927
      %v6990 = vpack.c.bf16 %v6930, %v6928
      %v6991 = vpack.c.bf16 %v6933, %v6931
      %v6992 = vpack.c.bf16 %v6934, %v6932
      %v6993 = vpack.c.bf16 %v6937, %v6935
      %v6994 = vpack.c.bf16 %v6938, %v6936
      %v6995 = vpack.c.bf16 %v6941, %v6939
      %v6996 = vpack.c.bf16 %v6942, %v6940
      %v6997 = vpack.c.bf16 %v6945, %v6943
      %v6998 = vpack.c.bf16 %v6946, %v6944
      %v6999 = vpack.c.bf16 %v6949, %v6947
      %v7000 = vpack.c.bf16 %v6950, %v6948
      %v7001 = vpack.c.bf16 %v6953, %v6951
      %v7002 = vpack.c.bf16 %v6954, %v6952
      %v7003 = vpack.c.bf16 %v6957, %v6955
      %v7004 = vpack.c.bf16 %v6958, %v6956
      %v7005 = vpack.c.bf16 %v6961, %v6959
      %v7006 = vpack.c.bf16 %v6962, %v6960
      %v7007 = vpack.c.bf16 %v6965, %v6963
      %v7008 = vpack.c.bf16 %v6966, %v6964
      %v7009 = vpack.c.bf16 %v6967, %v6967
      %v7010 = vpack.c.bf16 %v6968, %v6968
      %v7011 = vld [vmem:[%s10] sm:$0xf]
      %v7012 = vld [vmem:[%s10 + $0x4] sm:$0xf]
      %v7013 = vld [vmem:[%s10 + $0x8] sm:$0xf]
      %v7014 = vld [vmem:[%s10 + $0xc] sm:$0xf]
      %v7015 = vld [vmem:[%s10 + $0x10] sm:$0xf]
      %v7016 = vld [vmem:[%s10 + $0x14] sm:$0xf]
      %v7017 = vld [vmem:[%s10 + $0x18] sm:$0xf]
      %v7018 = vld [vmem:[%s10 + $0x1c] sm:$0xf]
      %v7019 = vld [vmem:[%s10 + $0x20] sm:$0xf]
      %v7020 = vld [vmem:[%s10 + $0x24] sm:$0xf]
      %v7021 = vld [vmem:[%s10 + $0x28] sm:$0xf]
      %v7022 = vld [vmem:[%s10 + $0x2c] sm:$0xf]
      %v7023 = vld [vmem:[%s10 + $0x30] sm:$0xf]
      %v7024 = vld [vmem:[%s10 + $0x34] sm:$0xf]
      %v7025 = vld [vmem:[%s10 + $0x38] sm:$0xf]
      %v7026 = vld [vmem:[%s10 + $0x3c] sm:$0xf]
      %v7027 = vld [vmem:[%s10 + $0x40] sm:$0xf]
      %v7028 = vld [vmem:[%s10 + $0x44] sm:$0xf]
      %v7029 = vld [vmem:[%s10 + $0x48] sm:$0xf]
      %v7030 = vld [vmem:[%s10 + $0x4c] sm:$0xf]
      %v7031 = vld [vmem:[%s10 + $0x50] sm:$0xf]
      %v7032 = vld [vmem:[%s10 + $0x54] sm:$0xf]
      %v7033 = vld [vmem:[%s10 + $0x58] sm:$0xf]
      %v7034 = vld [vmem:[%s10 + $0x5c] sm:$0xf]
      %v7035 = vld [vmem:[%s10 + $0x60] sm:$0xf]
      %v7036 = vld [vmem:[%s10 + $0x64] sm:$0xf]
      %v7037 = vld [vmem:[%s10 + $0x68] sm:$0xf]
      %v7038 = vld [vmem:[%s10 + $0x6c] sm:$0xf]
      %v7039 = vld [vmem:[%s10 + $0x70] sm:$0xf]
      %v7040 = vld [vmem:[%s10 + $0x74] sm:$0xf]
      %v7041 = vld [vmem:[%s10 + $0x78] sm:$0xf]
      %v7042 = vld [vmem:[%s10 + $0x7c] sm:$0xf]
      %v7043 = vld [vmem:[%s11] sm:$0x1]
      %v7045 = vperm.slane %v7043, 0
      %v7079 = vunpack.c.l.b16 %v7011
      %v7080 = vunpack.c.l.b16 %v7012
      %v7081 = vunpack.c.l.b16 %v7013
      %v7082 = vunpack.c.l.b16 %v7014
      %v7083 = vunpack.c.l.b16 %v7015
      %v7084 = vunpack.c.l.b16 %v7016
      %v7085 = vunpack.c.l.b16 %v7017
      %v7086 = vunpack.c.l.b16 %v7018
      %v7087 = vunpack.c.l.b16 %v7019
      %v7088 = vunpack.c.l.b16 %v7020
      %v7089 = vunpack.c.l.b16 %v7021
      %v7090 = vunpack.c.l.b16 %v7022
      %v7091 = vunpack.c.l.b16 %v7023
      %v7092 = vunpack.c.l.b16 %v7024
      %v7093 = vunpack.c.l.b16 %v7025
      %v7094 = vunpack.c.l.b16 %v7026
      %v7095 = vunpack.c.l.b16 %v7027
      %v7096 = vunpack.c.l.b16 %v7028
      %v7097 = vunpack.c.l.b16 %v7029
      %v7098 = vunpack.c.l.b16 %v7030
      %v7099 = vunpack.c.l.b16 %v7031
      %v7100 = vunpack.c.l.b16 %v7032
      %v7101 = vunpack.c.l.b16 %v7033
      %v7102 = vunpack.c.l.b16 %v7034
      %v7103 = vunpack.c.l.b16 %v7035
      %v7104 = vunpack.c.l.b16 %v7036
      %v7105 = vunpack.c.l.b16 %v7037
      %v7106 = vunpack.c.l.b16 %v7038
      %v7107 = vunpack.c.l.b16 %v7039
      %v7108 = vunpack.c.l.b16 %v7040
      %v7109 = vunpack.c.l.b16 %v7041
      %v7110 = vunpack.c.l.b16 %v7042
      %v7111 = vpack.c.b16 %v7080, %v7079
      %v7112 = vpack.c.b16 %v7082, %v7081
      %v7113 = vpack.c.b16 %v7084, %v7083
      %v7114 = vpack.c.b16 %v7086, %v7085
      %v7115 = vpack.c.b16 %v7088, %v7087
      %v7116 = vpack.c.b16 %v7090, %v7089
      %v7117 = vpack.c.b16 %v7092, %v7091
      %v7118 = vpack.c.b16 %v7094, %v7093
      %v7119 = vpack.c.b16 %v7096, %v7095
      %v7120 = vpack.c.b16 %v7098, %v7097
      %v7121 = vpack.c.b16 %v7100, %v7099
      %v7122 = vpack.c.b16 %v7102, %v7101
      %v7123 = vpack.c.b16 %v7104, %v7103
      %v7124 = vpack.c.b16 %v7106, %v7105
      %v7125 = vpack.c.b16 %v7108, %v7107
      %v7126 = vpack.c.b16 %v7110, %v7109
      %7143 = vmatpush.bf16.msra.mxu0 %v7118
      %7144 = vmatpush.bf16.msra.mxu0 %v7117
      %7145 = vmatpush.bf16.msra.mxu0 %v7116
      %7146 = vmatpush.bf16.msra.mxu0 %v7115
      %7147 = vmatpush.bf16.msra.mxu0 %v7114
      %7148 = vmatpush.bf16.msra.mxu0 %v7113
      %7149 = vmatpush.bf16.msra.mxu0 %v7112
      %7150 = vmatpush.bf16.msra.mxu0 %v7111
      %7151 = vmatmul.bf16.gmra.mxu0 %v6969
      %v7152 = vpop.f32.mrf.mxu0
      %v7153 = vadd.f32 %v7045, %v7152
      %v7154 = vpop.f32.mrf.mxu0
      %v7155 = vadd.f32 %v7045, %v7154
      %7156 = vmatmul.bf16.gmra.mxu0 %v6971
      %v7157 = vpop.f32.mrf.mxu0
      %v7158 = vadd.f32 %v7045, %v7157
      %v7159 = vpop.f32.mrf.mxu0
      %v7160 = vadd.f32 %v7045, %v7159
      %7161 = vmatmul.bf16.gmra.mxu0 %v6973
      %v7162 = vpop.f32.mrf.mxu0
      %v7163 = vadd.f32 %v7045, %v7162
      %v7164 = vpop.f32.mrf.mxu0
      %v7165 = vadd.f32 %v7045, %v7164
      %7166 = vmatmul.bf16.gmra.mxu0 %v6975
      %v7167 = vpop.f32.mrf.mxu0
      %v7168 = vadd.f32 %v7045, %v7167
      %v7169 = vpop.f32.mrf.mxu0
      %v7170 = vadd.f32 %v7045, %v7169
      %7171 = vmatmul.bf16.gmra.mxu0 %v6977
      %v7172 = vpop.f32.mrf.mxu0
      %v7173 = vadd.f32 %v7045, %v7172
      %v7174 = vpop.f32.mrf.mxu0
      %v7175 = vadd.f32 %v7045, %v7174
      %7176 = vmatmul.bf16.gmra.mxu0 %v6979
      %v7177 = vpop.f32.mrf.mxu0
      %v7178 = vadd.f32 %v7045, %v7177
      %v7179 = vpop.f32.mrf.mxu0
      %v7180 = vadd.f32 %v7045, %v7179
      %7181 = vmatmul.bf16.gmra.mxu0 %v6981
      %v7182 = vpop.f32.mrf.mxu0
      %v7183 = vadd.f32 %v7045, %v7182
      %v7184 = vpop.f32.mrf.mxu0
      %v7185 = vadd.f32 %v7045, %v7184
      %7186 = vmatmul.bf16.gmra.mxu0 %v6983
      %v7187 = vpop.f32.mrf.mxu0
      %v7188 = vadd.f32 %v7045, %v7187
      %v7189 = vpop.f32.mrf.mxu0
      %v7190 = vadd.f32 %v7045, %v7189
      %7191 = vmatmul.bf16.gmra.mxu0 %v6985
      %v7192 = vpop.f32.mrf.mxu0
      %v7193 = vadd.f32 %v7045, %v7192
      %v7194 = vpop.f32.mrf.mxu0
      %v7195 = vadd.f32 %v7045, %v7194
      %7196 = vmatmul.bf16.gmra.mxu0 %v6987
      %v7197 = vpop.f32.mrf.mxu0
      %v7198 = vadd.f32 %v7045, %v7197
      %v7199 = vpop.f32.mrf.mxu0
      %v7200 = vadd.f32 %v7045, %v7199
      %7201 = vmatmul.bf16.gmra.mxu0 %v6989
      %v7202 = vpop.f32.mrf.mxu0
      %v7203 = vadd.f32 %v7045, %v7202
      %v7204 = vpop.f32.mrf.mxu0
      %v7205 = vadd.f32 %v7045, %v7204
      %7206 = vmatmul.bf16.gmra.mxu0 %v6991
      %v7207 = vpop.f32.mrf.mxu0
      %v7208 = vadd.f32 %v7045, %v7207
      %v7209 = vpop.f32.mrf.mxu0
      %v7210 = vadd.f32 %v7045, %v7209
      %7211 = vmatmul.bf16.gmra.mxu0 %v6993
      %v7212 = vpop.f32.mrf.mxu0
      %v7213 = vadd.f32 %v7045, %v7212
      %v7214 = vpop.f32.mrf.mxu0
      %v7215 = vadd.f32 %v7045, %v7214
      %7216 = vmatmul.bf16.gmra.mxu0 %v6995
      %v7217 = vpop.f32.mrf.mxu0
      %v7218 = vadd.f32 %v7045, %v7217
      %v7219 = vpop.f32.mrf.mxu0
      %v7220 = vadd.f32 %v7045, %v7219
      %7221 = vmatmul.bf16.gmra.mxu0 %v6997
      %v7222 = vpop.f32.mrf.mxu0
      %v7223 = vadd.f32 %v7045, %v7222
      %v7224 = vpop.f32.mrf.mxu0
      %v7225 = vadd.f32 %v7045, %v7224
      %7226 = vmatmul.bf16.gmra.mxu0 %v6999
      %v7227 = vpop.f32.mrf.mxu0
      %v7228 = vadd.f32 %v7045, %v7227
      %v7229 = vpop.f32.mrf.mxu0
      %v7230 = vadd.f32 %v7045, %v7229
      %7231 = vmatmul.bf16.gmra.mxu0 %v7001
      %v7232 = vpop.f32.mrf.mxu0
      %v7233 = vadd.f32 %v7045, %v7232
      %v7234 = vpop.f32.mrf.mxu0
      %v7235 = vadd.f32 %v7045, %v7234
      %7236 = vmatmul.bf16.gmra.mxu0 %v7003
      %v7237 = vpop.f32.mrf.mxu0
      %v7238 = vadd.f32 %v7045, %v7237
      %v7239 = vpop.f32.mrf.mxu0
      %v7240 = vadd.f32 %v7045, %v7239
      %7241 = vmatmul.bf16.gmra.mxu0 %v7005
      %v7242 = vpop.f32.mrf.mxu0
      %v7243 = vadd.f32 %v7045, %v7242
      %v7244 = vpop.f32.mrf.mxu0
      %v7245 = vadd.f32 %v7045, %v7244
      %7246 = vmatmul.bf16.gmra.mxu0 %v7007
      %v7247 = vpop.f32.mrf.mxu0
      %v7248 = vadd.f32 %v7045, %v7247
      %v7249 = vpop.f32.mrf.mxu0
      %v7250 = vadd.f32 %v7045, %v7249
      %7251 = vmatmul.bf16.gmra.mxu0 %v7009
      %v7252 = vpop.f32.mrf.mxu0
      %v7253 = vadd.f32 %v7045, %v7252
      %v7254 = vpop.f32.mrf.mxu0
      %7255 = vdwg.mxu0
      %7256 = vmatpush.bf16.msra.mxu0 %v7126
      %7257 = vmatpush.bf16.msra.mxu0 %v7125
      %7258 = vmatpush.bf16.msra.mxu0 %v7124
      %7259 = vmatpush.bf16.msra.mxu0 %v7123
      %7260 = vmatpush.bf16.msra.mxu0 %v7122
      %7261 = vmatpush.bf16.msra.mxu0 %v7121
      %7262 = vmatpush.bf16.msra.mxu0 %v7120
      %7263 = vmatpush.bf16.msra.mxu0 %v7119
      %7264 = vmatmul.bf16.gmra.mxu0 %v6970
      %v7265 = vpop.f32.mrf.mxu0
      %v7266 = vadd.f32 %v7153, %v7265
      %v7267 = vpop.f32.mrf.mxu0
      %v7268 = vadd.f32 %v7155, %v7267
      %7269 = vmatmul.bf16.gmra.mxu0 %v6972
      %v7270 = vpop.f32.mrf.mxu0
      %v7271 = vadd.f32 %v7158, %v7270
      %v7272 = vpop.f32.mrf.mxu0
      %v7273 = vadd.f32 %v7160, %v7272
      %7274 = vmatmul.bf16.gmra.mxu0 %v6974
      %v7275 = vpop.f32.mrf.mxu0
      %v7276 = vadd.f32 %v7163, %v7275
      %v7277 = vpop.f32.mrf.mxu0
      %v7278 = vadd.f32 %v7165, %v7277
      %7279 = vmatmul.bf16.gmra.mxu0 %v6976
      %v7280 = vpop.f32.mrf.mxu0
      %v7281 = vadd.f32 %v7168, %v7280
      %v7282 = vpop.f32.mrf.mxu0
      %v7283 = vadd.f32 %v7170, %v7282
      %7284 = vmatmul.bf16.gmra.mxu0 %v6978
      %v7285 = vpop.f32.mrf.mxu0
      %v7286 = vadd.f32 %v7173, %v7285
      %v7287 = vpop.f32.mrf.mxu0
      %v7288 = vadd.f32 %v7175, %v7287
      %7289 = vmatmul.bf16.gmra.mxu0 %v6980
      %v7290 = vpop.f32.mrf.mxu0
      %v7291 = vadd.f32 %v7178, %v7290
      %v7292 = vpop.f32.mrf.mxu0
      %v7293 = vadd.f32 %v7180, %v7292
      %7294 = vmatmul.bf16.gmra.mxu0 %v6982
      %v7295 = vpop.f32.mrf.mxu0
      %v7296 = vadd.f32 %v7183, %v7295
      %v7297 = vpop.f32.mrf.mxu0
      %v7298 = vadd.f32 %v7185, %v7297
      %7299 = vmatmul.bf16.gmra.mxu0 %v6984
      %v7300 = vpop.f32.mrf.mxu0
      %v7301 = vadd.f32 %v7188, %v7300
      %v7302 = vpop.f32.mrf.mxu0
      %v7303 = vadd.f32 %v7190, %v7302
      %7304 = vmatmul.bf16.gmra.mxu0 %v6986
      %v7305 = vpop.f32.mrf.mxu0
      %v7306 = vadd.f32 %v7193, %v7305
      %v7307 = vpop.f32.mrf.mxu0
      %v7308 = vadd.f32 %v7195, %v7307
      %7309 = vmatmul.bf16.gmra.mxu0 %v6988
      %v7310 = vpop.f32.mrf.mxu0
      %v7311 = vadd.f32 %v7198, %v7310
      %v7312 = vpop.f32.mrf.mxu0
      %v7313 = vadd.f32 %v7200, %v7312
      %7314 = vmatmul.bf16.gmra.mxu0 %v6990
      %v7315 = vpop.f32.mrf.mxu0
      %v7316 = vadd.f32 %v7203, %v7315
      %v7317 = vpop.f32.mrf.mxu0
      %v7318 = vadd.f32 %v7205, %v7317
      %7319 = vmatmul.bf16.gmra.mxu0 %v6992
      %v7320 = vpop.f32.mrf.mxu0
      %v7321 = vadd.f32 %v7208, %v7320
      %v7322 = vpop.f32.mrf.mxu0
      %v7323 = vadd.f32 %v7210, %v7322
      %7324 = vmatmul.bf16.gmra.mxu0 %v6994
      %v7325 = vpop.f32.mrf.mxu0
      %v7326 = vadd.f32 %v7213, %v7325
      %v7327 = vpop.f32.mrf.mxu0
      %v7328 = vadd.f32 %v7215, %v7327
      %7329 = vmatmul.bf16.gmra.mxu0 %v6996
      %v7330 = vpop.f32.mrf.mxu0
      %v7331 = vadd.f32 %v7218, %v7330
      %v7332 = vpop.f32.mrf.mxu0
      %v7333 = vadd.f32 %v7220, %v7332
      %7334 = vmatmul.bf16.gmra.mxu0 %v6998
      %v7335 = vpop.f32.mrf.mxu0
      %v7336 = vadd.f32 %v7223, %v7335
      %v7337 = vpop.f32.mrf.mxu0
      %v7338 = vadd.f32 %v7225, %v7337
      %7339 = vmatmul.bf16.gmra.mxu0 %v7000
      %v7340 = vpop.f32.mrf.mxu0
      %v7341 = vadd.f32 %v7228, %v7340
      %v7342 = vpop.f32.mrf.mxu0
      %v7343 = vadd.f32 %v7230, %v7342
      %7344 = vmatmul.bf16.gmra.mxu0 %v7002
      %v7345 = vpop.f32.mrf.mxu0
      %v7346 = vadd.f32 %v7233, %v7345
      %v7347 = vpop.f32.mrf.mxu0
      %v7348 = vadd.f32 %v7235, %v7347
      %7349 = vmatmul.bf16.gmra.mxu0 %v7004
      %v7350 = vpop.f32.mrf.mxu0
      %v7351 = vadd.f32 %v7238, %v7350
      %v7352 = vpop.f32.mrf.mxu0
      %v7353 = vadd.f32 %v7240, %v7352
      %7354 = vmatmul.bf16.gmra.mxu0 %v7006
      %v7355 = vpop.f32.mrf.mxu0
      %v7356 = vadd.f32 %v7243, %v7355
      %v7357 = vpop.f32.mrf.mxu0
      %v7358 = vadd.f32 %v7245, %v7357
      %7359 = vmatmul.bf16.gmra.mxu0 %v7008
      %v7360 = vpop.f32.mrf.mxu0
      %v7361 = vadd.f32 %v7248, %v7360
      %v7362 = vpop.f32.mrf.mxu0
      %v7363 = vadd.f32 %v7250, %v7362
      %7364 = vmatmul.bf16.gmra.mxu0 %v7010
      %v7365 = vpop.f32.mrf.mxu0
      %v7366 = vadd.f32 %v7253, %v7365
      %v7367 = vpop.f32.mrf.mxu0
      %7368 = vdwg.mxu0
      %v7369 = vmax.f32 %v7266, 0.0
      %v7370 = vmax.f32 %v7268, 0.0
      %v7371 = vmax.f32 %v7271, 0.0
      %v7372 = vmax.f32 %v7273, 0.0
      %v7373 = vmax.f32 %v7276, 0.0
      %v7374 = vmax.f32 %v7278, 0.0
      %v7375 = vmax.f32 %v7281, 0.0
      %v7376 = vmax.f32 %v7283, 0.0
      %v7377 = vmax.f32 %v7286, 0.0
      %v7378 = vmax.f32 %v7288, 0.0
      %v7379 = vmax.f32 %v7291, 0.0
      %v7380 = vmax.f32 %v7293, 0.0
      %v7381 = vmax.f32 %v7296, 0.0
      %v7382 = vmax.f32 %v7298, 0.0
      %v7383 = vmax.f32 %v7301, 0.0
      %v7384 = vmax.f32 %v7303, 0.0
      %v7385 = vmax.f32 %v7306, 0.0
      %v7386 = vmax.f32 %v7308, 0.0
      %v7387 = vmax.f32 %v7311, 0.0
      %v7388 = vmax.f32 %v7313, 0.0
      %v7389 = vmax.f32 %v7316, 0.0
      %v7390 = vmax.f32 %v7318, 0.0
      %v7391 = vmax.f32 %v7321, 0.0
      %v7392 = vmax.f32 %v7323, 0.0
      %v7393 = vmax.f32 %v7326, 0.0
      %v7394 = vmax.f32 %v7328, 0.0
      %v7395 = vmax.f32 %v7331, 0.0
      %v7396 = vmax.f32 %v7333, 0.0
      %v7397 = vmax.f32 %v7336, 0.0
      %v7398 = vmax.f32 %v7338, 0.0
      %v7399 = vmax.f32 %v7341, 0.0
      %v7400 = vmax.f32 %v7343, 0.0
      %v7401 = vmax.f32 %v7346, 0.0
      %v7402 = vmax.f32 %v7348, 0.0
      %v7403 = vmax.f32 %v7351, 0.0
      %v7404 = vmax.f32 %v7353, 0.0
      %v7405 = vmax.f32 %v7356, 0.0
      %v7406 = vmax.f32 %v7358, 0.0
      %v7407 = vmax.f32 %v7361, 0.0
      %v7408 = vmax.f32 %v7363, 0.0
      %v7409 = vmax.f32 %v7366, 0.0
      %7410 = vst.msk [vmem:[%s413] sm:$0xff] %vm497, %v7369
      %7411 = vst.msk [vmem:[%s413 + $0x8] sm:$0xff] %vm497, %v7370
      %7412 = vst.msk [vmem:[%s413 + $0x10] sm:$0xff] %vm497, %v7371
      %7413 = vst.msk [vmem:[%s413 + $0x18] sm:$0xff] %vm497, %v7372
      %7414 = vst.msk [vmem:[%s413 + $0x20] sm:$0xff] %vm497, %v7373
      %7415 = vst.msk [vmem:[%s413 + $0x28] sm:$0xff] %vm497, %v7374
      %7416 = vst.msk [vmem:[%s413 + $0x30] sm:$0xff] %vm497, %v7375
      %7417 = vst.msk [vmem:[%s413 + $0x38] sm:$0xff] %vm497, %v7376
      %7418 = vst.msk [vmem:[%s413 + $0x40] sm:$0xff] %vm497, %v7377
      %7419 = vst.msk [vmem:[%s413 + $0x48] sm:$0xff] %vm497, %v7378
      %7420 = vst.msk [vmem:[%s413 + $0x50] sm:$0xff] %vm497, %v7379
      %7421 = vst.msk [vmem:[%s413 + $0x58] sm:$0xff] %vm497, %v7380
      %7422 = vst.msk [vmem:[%s413 + $0x60] sm:$0xff] %vm497, %v7381
      %7423 = vst.msk [vmem:[%s413 + $0x68] sm:$0xff] %vm497, %v7382
      %7424 = vst.msk [vmem:[%s413 + $0x70] sm:$0xff] %vm497, %v7383
      %7425 = vst.msk [vmem:[%s413 + $0x78] sm:$0xff] %vm497, %v7384
      %7426 = vst.msk [vmem:[%s413 + $0x80] sm:$0xff] %vm497, %v7385
      %7427 = vst.msk [vmem:[%s413 + $0x88] sm:$0xff] %vm497, %v7386
      %7428 = vst.msk [vmem:[%s413 + $0x90] sm:$0xff] %vm497, %v7387
      %7429 = vst.msk [vmem:[%s413 + $0x98] sm:$0xff] %vm497, %v7388
      %7430 = vst.msk [vmem:[%s413 + $0xa0] sm:$0xff] %vm497, %v7389
      %7431 = vst.msk [vmem:[%s413 + $0xa8] sm:$0xff] %vm497, %v7390
      %7432 = vst.msk [vmem:[%s413 + $0xb0] sm:$0xff] %vm497, %v7391
      %7433 = vst.msk [vmem:[%s413 + $0xb8] sm:$0xff] %vm497, %v7392
      %7434 = vst.msk [vmem:[%s413 + $0xc0] sm:$0xff] %vm497, %v7393
      %7435 = vst.msk [vmem:[%s413 + $0xc8] sm:$0xff] %vm497, %v7394
      %7436 = vst.msk [vmem:[%s413 + $0xd0] sm:$0xff] %vm497, %v7395
      %7437 = vst.msk [vmem:[%s413 + $0xd8] sm:$0xff] %vm497, %v7396
      %7438 = vst.msk [vmem:[%s413 + $0xe0] sm:$0xff] %vm497, %v7397
      %7439 = vst.msk [vmem:[%s413 + $0xe8] sm:$0xff] %vm497, %v7398
      %7440 = vst.msk [vmem:[%s413 + $0xf0] sm:$0xff] %vm497, %v7399
      %7441 = vst.msk [vmem:[%s413 + $0xf8] sm:$0xff] %vm497, %v7400
      %7442 = vst.msk [vmem:[%s413 + $0x100] sm:$0xff] %vm497, %v7401
      %7443 = vst.msk [vmem:[%s413 + $0x108] sm:$0xff] %vm497, %v7402
      %7444 = vst.msk [vmem:[%s413 + $0x110] sm:$0xff] %vm497, %v7403
      %7445 = vst.msk [vmem:[%s413 + $0x118] sm:$0xff] %vm497, %v7404
      %7446 = vst.msk [vmem:[%s413 + $0x120] sm:$0xff] %vm497, %v7405
      %7447 = vst.msk [vmem:[%s413 + $0x128] sm:$0xff] %vm497, %v7406
      %7448 = vst.msk [vmem:[%s413 + $0x130] sm:$0xff] %vm497, %v7407
      %7449 = vst.msk [vmem:[%s413 + $0x138] sm:$0xff] %vm497, %v7408
      %7450 = vst.msk [vmem:[%s413 + $0x140] sm:$0xf] %vm577, %v7409
      %p7451 = scmp.lt.s32.totalorder %s23, 1
      %s7452 = scalar_select %p7451, %s23, 1
      %s7453 = smul.addr %s7452, 41
      %s7454 = smul.addr %s7453, 8
      %s7455 = scalar_lea.vmem %s12, %s7454
      // Predicated region
      $region69: #{upblock_forward.1} parent=67 // pred_check
        %p7456 = pneg %p298
      $region70: #{upblock_forward.1} parent=67 // pred_check_branch
        %7458 = sbr.rel (%p7456) target = $region72
      $region71: #{upblock_forward.1} parent=67 // pred_region
        _
      $region72: #{upblock_forward.1} parent=67 // pred_fallthru
        _
    $region68: #{upblock_forward.1} parent=5 // pred_fallthru
      _
    %p7459 = scmp.le.s32.totalorder 2, %s18
    // Predicated region
    $region73: #{upblock_forward.1} parent=5 // pred_check
      %p7460 = pneg %p7459
    $region74: #{upblock_forward.1} parent=5 // pred_check_branch
      %7462 = sbr.rel (%p7460) target = $region76
    $region75: #{upblock_forward.1} parent=5 // pred_region
      %s7463 = ssub.s32 %s18, 2
      // Predicated region
      $region77: #{upblock_forward.1} parent=75 // pred_check
        %p7464 = pneg %p304
      $region78: #{upblock_forward.1} parent=75 // pred_check_branch
        %7466 = sbr.rel (%p7464) target = $region80
      $region79: #{upblock_forward.1} parent=75 // pred_region
        %p7467 = scmp.lt.s32.totalorder %s24, 1
        %s7468 = scalar_select %p7467, %s24, 1
        %s7469 = smul.addr %s7468, 41
        %s7470 = smul.addr %s7469, 8
        %s7471 = scalar_lea.vmem %s12, %s7470
      $region80: #{upblock_forward.1} parent=75 // pred_fallthru
        _
    $region76: #{upblock_forward.1} parent=5 // pred_fallthru
      _
  $region6: #{upblock_forward.1} parent=0 // loop_footer
    %s22 = sadd.s32 1, %s18
  $region7: #{upblock_forward.1} parent=0 // loop_footer_branch
    %17 = sbr.rel target = $region3
  $region8: #{upblock_forward.1} parent=0 // loop_exit
    _

</llo_original>
